<compile_context>
chip_gen: v6e
topology: v6e:2x2x1
jax: 0.10.0
libtpu: 0.0.40
codegen_flags: <defaults>
</compile_context>

<pallas_src>
import functools

import jax
import jax.numpy as jnp
from jax.experimental import pallas as pl
from jax.experimental.pallas import tpu as pltpu


def _round_up(x, m):
    return (x + m - 1) // m * m


# --------------------------------------------------------------------------
# PatchEmbed: Conv2d(kernel==stride, padding=0)  ==  patch-matmul + bias
# --------------------------------------------------------------------------
def _patch_embed_kernel(x_ref, w_ref, b_ref, o_ref):
    acc = jnp.dot(x_ref[...], w_ref[...], preferred_element_type=jnp.float32)
    o_ref[...] = (acc + b_ref[...]).astype(o_ref.dtype)


def patch_embed(x, weight, bias, *, kernel_size, stride,
                compute_dtype=jnp.bfloat16):
    """x: (B,C,H,W) NCHW, weight: (E,C,kh,kw), bias: (E,) -> ((B,Hp,Wp,E), Hp, Wp)."""
    kh, kw = kernel_size
    sh, sw = stride
    assert (kh, kw) == (sh, sw), "PatchEmbed kernel assumes kernel_size == stride"
    B, C, H, W = x.shape
    embed_dim = weight.shape[0]
    Hp, Wp = H // kh, W // kw

    M = B * Hp * Wp
    K = C * kh * kw
    N = embed_dim
    N_pad = _round_up(N, 128)

    # patch extraction (layout only; folded into the input DMA)
    patches = x.reshape(B, C, Hp, kh, Wp, kw)
    patches = jnp.transpose(patches, (0, 2, 4, 1, 3, 5)).reshape(M, K)
    patches = patches.astype(compute_dtype)

    w_mat = weight.reshape(embed_dim, K).T.astype(compute_dtype)
    b_mat = bias.reshape(1, embed_dim).astype(jnp.float32)
    if N_pad != N:
        w_mat = jnp.pad(w_mat, ((0, 0), (0, N_pad - N)))
        b_mat = jnp.pad(b_mat, ((0, 0), (0, N_pad - N)))

    TM = M if M <= 512 else 512
    TN = N_pad if N_pad <= 2048 else 512
    grid = (pl.cdiv(M, TM), pl.cdiv(N_pad, TN))

    out = pl.pallas_call(
        _patch_embed_kernel,
        out_shape=jax.ShapeDtypeStruct((M, N_pad), x.dtype),
        grid_spec=pltpu.PrefetchScalarGridSpec(
            num_scalar_prefetch=0,
            grid=grid,
            in_specs=[
                pl.BlockSpec((TM, K), lambda i, j: (i, 0)),
                pl.BlockSpec((K, TN), lambda i, j: (0, j)),
                pl.BlockSpec((1, TN), lambda i, j: (0, j)),
            ],
            out_specs=pl.BlockSpec((TM, TN), lambda i, j: (i, j)),
        ),
        compiler_params=pltpu.CompilerParams(
            dimension_semantics=("parallel", "parallel"),
            allow_input_fusion=[True, False, False],
        ),
    )(patches, w_mat, b_mat)

    if N_pad != N:
        out = out[:, :N]
    return out.reshape(B, Hp, Wp, embed_dim), Hp, Wp


# --------------------------------------------------------------------------
# Generic fused Linear (+ optional GELU, optional residual)
# --------------------------------------------------------------------------
def _linear_kernel(x_ref, w_ref, b_ref, *rest, activation, has_residual):
    if has_residual:
        r_ref, o_ref = rest
    else:
        (o_ref,) = rest
    acc = jnp.dot(x_ref[...], w_ref[...], preferred_element_type=jnp.float32)
    acc = acc + b_ref[...]
    if activation == "gelu":
        acc = jax.nn.gelu(acc, approximate=True)
    if has_residual:
        acc = acc + r_ref[...].astype(jnp.float32)
    o_ref[...] = acc.astype(o_ref.dtype)


def linear(x, w, b, *, activation=None, residual=None,
           compute_dtype=jnp.bfloat16, out_dtype=None):
    """x: (M,K), w: (K,N) (already transposed vs torch), b: (N,)."""
    M, K = x.shape
    K2, N = w.shape
    assert K == K2
    out_dtype = out_dtype or x.dtype
    N_pad = _round_up(N, 128)

    xm = x.astype(compute_dtype)
    wm = w.astype(compute_dtype)
    bm = b.reshape(1, N).astype(jnp.float32)
    if N_pad != N:
        wm = jnp.pad(wm, ((0, 0), (0, N_pad - N)))
        bm = jnp.pad(bm, ((0, 0), (0, N_pad - N)))

    TM = M if M <= 512 else 512
    TN = N_pad if N_pad <= 2048 else 512
    grid = (pl.cdiv(M, TM), pl.cdiv(N_pad, TN))

    in_specs = [
        pl.BlockSpec((TM, K), lambda i, j: (i, 0)),
        pl.BlockSpec((K, TN), lambda i, j: (0, j)),
        pl.BlockSpec((1, TN), lambda i, j: (0, j)),
    ]
    args = [xm, wm, bm]
    if residual is not None:
        r = residual if N_pad == N else jnp.pad(residual, ((0, 0), (0, N_pad - N)))
        in_specs.append(pl.BlockSpec((TM, TN), lambda i, j: (i, j)))
        args.append(r)

    out = pl.pallas_call(
        functools.partial(_linear_kernel, activation=activation,
                          has_residual=residual is not None),
        out_shape=jax.ShapeDtypeStruct((M, N_pad), out_dtype),
        grid_spec=pltpu.PrefetchScalarGridSpec(
            num_scalar_prefetch=0, grid=grid,
            in_specs=in_specs,
            out_specs=pl.BlockSpec((TM, TN), lambda i, j: (i, j)),
        ),
        compiler_params=pltpu.CompilerParams(
            dimension_semantics=("parallel", "parallel")),
    )(*args)

    if N_pad != N:
        out = out[:, :N]
    return out


# --------------------------------------------------------------------------
# LayerNorm over the last dim, tiled over rows
# --------------------------------------------------------------------------
def _layernorm_kernel(x_ref, g_ref, b_ref, o_ref, *, eps):
    x = x_ref[...].astype(jnp.float32)
    mean = jnp.mean(x, axis=-1, keepdims=True)
    xc = x - mean
    var = jnp.mean(xc * xc, axis=-1, keepdims=True)
    inv = jax.lax.rsqrt(var + eps)
    o_ref[...] = (xc * inv * g_ref[...] + b_ref[...]).astype(o_ref.dtype)


def layer_norm(x, gamma, beta, *, eps=1e-5):
    M, D = x.shape
    TM = M if M <= 512 else 512
    grid = (pl.cdiv(M, TM),)
    return pl.pallas_call(
        functools.partial(_layernorm_kernel, eps=eps),
        out_shape=jax.ShapeDtypeStruct((M, D), x.dtype),
        grid_spec=pltpu.PrefetchScalarGridSpec(
            num_scalar_prefetch=0, grid=grid,
            in_specs=[
                pl.BlockSpec((TM, D), lambda i: (i, 0)),
                pl.BlockSpec((1, D), lambda i: (0, 0)),
                pl.BlockSpec((1, D), lambda i: (0, 0)),
            ],
            out_specs=pl.BlockSpec((TM, D), lambda i: (i, 0)),
        ),
        compiler_params=pltpu.CompilerParams(dimension_semantics=("parallel",)),
    )(x, gamma.reshape(1, D).astype(jnp.float32),
      beta.reshape(1, D).astype(jnp.float32))


# --------------------------------------------------------------------------
# Fused attention core: softmax(q@k^T * scale + bias) @ v   per (batch*head)
# --------------------------------------------------------------------------
def _attn_kernel(*refs, scale, has_bias):
    if has_bias:
        q_ref, k_ref, v_ref, bias_ref, o_ref = refs
    else:
        q_ref, k_ref, v_ref, o_ref = refs
        bias_ref = None
    s = jnp.einsum("qd,kd->qk", q_ref[...], k_ref[...],
                   preferred_element_type=jnp.float32) * scale
    if has_bias:
        s = s + bias_ref[...]
    m = jnp.max(s, axis=-1, keepdims=True)
    p = jnp.exp(s - m)
    l = jnp.sum(p, axis=-1, keepdims=True)
    p = p / l
    o = jnp.einsum("qk,kd->qd", p.astype(v_ref.dtype), v_ref[...],
                   preferred_element_type=jnp.float32)
    o_ref[...] = o.astype(o_ref.dtype)


def attention_core(q, k, v, bias, *, scale, compute_dtype=jnp.bfloat16):
    BH, S, Dh = q.shape
    args = [q.astype(compute_dtype), k.astype(compute_dtype),
            v.astype(compute_dtype)]
    in_specs = [pl.BlockSpec((None, S, Dh), lambda b: (b, 0, 0))
                for _ in range(3)]
    if bias is not None:
        args.append(bias.astype(jnp.float32))
        in_specs.append(pl.BlockSpec((None, S, S), lambda b: (b, 0, 0)))
    return pl.pallas_call(
        functools.partial(_attn_kernel, scale=scale, has_bias=bias is not None),
        out_shape=jax.ShapeDtypeStruct((BH, S, Dh), q.dtype),
        grid_spec=pltpu.PrefetchScalarGridSpec(
            num_scalar_prefetch=0, grid=(BH,),
            in_specs=in_specs,
            out_specs=pl.BlockSpec((None, S, Dh), lambda b: (b, 0, 0)),
        ),
        compiler_params=pltpu.CompilerParams(dimension_semantics=("parallel",)),
    )(*args)


# --------------------------------------------------------------------------
# Layout-only helpers (match the PyTorch reference functions)
# --------------------------------------------------------------------------
def window_partition(x, window_size):
    B, H, W, C = x.shape
    pad_h = (window_size - H % window_size) % window_size
    pad_w = (window_size - W % window_size) % window_size
    if pad_h or pad_w:
        x = jnp.pad(x, ((0, 0), (0, pad_h), (0, pad_w), (0, 0)))
    Hp, Wp = H + pad_h, W + pad_w
    x = x.reshape(B, Hp // window_size, window_size, Wp // window_size,
                  window_size, C)
    windows = jnp.transpose(x, (0, 1, 3, 2, 4, 5)).reshape(
        -1, window_size, window_size, C)
    return windows, (Hp, Wp)


def window_unpartition(windows, window_size, pad_hw, hw):
    Hp, Wp = pad_hw
    H, W = hw
    B = windows.shape[0] // (Hp * Wp // window_size // window_size)
    x = windows.reshape(B, Hp // window_size, Wp // window_size,
                        window_size, window_size, -1)
    x = jnp.transpose(x, (0, 1, 3, 2, 4, 5)).reshape(B, Hp, Wp, -1)
    if Hp > H or Wp > W:
        x = x[:, :H, :W, :]
    return x


def get_rel_pos(q_size, k_size, rel_pos):
    max_rel_dist = int(2 * max(q_size, k_size) - 1)
    # TODO(synk): linear-resize path when rel_pos.shape[0] != max_rel_dist.
    assert rel_pos.shape[0] == max_rel_dist
    q_coords = jnp.arange(q_size)[:, None] * max(k_size / q_size, 1.0)
    k_coords = jnp.arange(k_size)[None, :] * max(q_size / k_size, 1.0)
    rel = q_coords - k_coords + (k_size - 1) * max(q_size / k_size, 1.0)
    return rel_pos[rel.astype(jnp.int32)]


def rel_pos_bias(q, rel_pos_h, rel_pos_w, q_size, k_size):
    """q: (B*nH, S, head_dim) (un-scaled).  Returns (B*nH, S, S) f32 bias."""
    q_h, q_w = q_size
    k_h, k_w = k_size
    Rh = get_rel_pos(q_h, k_h, rel_pos_h).astype(jnp.float32)
    Rw = get_rel_pos(q_w, k_w, rel_pos_w).astype(jnp.float32)
    Bh, _, dim = q.shape
    r_q = q.reshape(Bh, q_h, q_w, dim).astype(jnp.float32)
    rel_h = jnp.einsum("bhwc,hkc->bhwk", r_q, Rh)
    rel_w = jnp.einsum("bhwc,wkc->bhwk", r_q, Rw)
    bias = rel_h[:, :, :, :, None] + rel_w[:, :, :, None, :]
    return bias.reshape(Bh, q_h * q_w, k_h * k_w)


# --------------------------------------------------------------------------
# Attention / Block / encoder forward (Pallas-backed)
# --------------------------------------------------------------------------
def attention_forward(x, p, *, num_heads, use_rel_pos, compute_dtype):
    Bw, h, w, D = x.shape
    S = h * w
    hd = D // num_heads
    scale = hd ** -0.5
    qkv = linear(x.reshape(-1, D), p["qkv_w"], p["qkv_b"],
                 compute_dtype=compute_dtype)
    qkv = qkv.reshape(Bw, S, 3, num_heads, hd)
    qkv = jnp.transpose(qkv, (2, 0, 3, 1, 4)).reshape(3, Bw * num_heads, S, hd)
    q, k, v = qkv[0], qkv[1], qkv[2]
    bias = None
    if use_rel_pos:
        bias = rel_pos_bias(q, p["rel_pos_h"], p["rel_pos_w"], (h, w), (h, w))
    o = attention_core(q, k, v, bias, scale=scale, compute_dtype=compute_dtype)
    o = o.reshape(Bw, num_heads, h, w, hd)
    o = jnp.transpose(o, (0, 2, 3, 1, 4)).reshape(Bw * S, D)
    o = linear(o, p["proj_w"], p["proj_b"], compute_dtype=compute_dtype)
    return o.reshape(Bw, h, w, D)


def block_forward(x, p, *, num_heads, window_size, use_rel_pos, compute_dtype):
    B, H, W, D = x.shape
    shortcut = x
    xn = layer_norm(x.reshape(-1, D), p["norm1_g"], p["norm1_b"]).reshape(
        B, H, W, D)
    if window_size > 0:
        xw, pad_hw = window_partition(xn, window_size)
    else:
        xw, pad_hw = xn, (H, W)
    a = attention_forward(xw, p, num_heads=num_heads, use_rel_pos=use_rel_pos,
                          compute_dtype=compute_dtype)
    if window_size > 0:
        a = window_unpartition(a, window_size, pad_hw, (H, W))
    x = shortcut + a
    xn2 = layer_norm(x.reshape(-1, D), p["norm2_g"], p["norm2_b"])
    hmid = linear(xn2, p["mlp_w1"], p["mlp_b1"], activation="gelu",
                  compute_dtype=compute_dtype)
    out = linear(hmid, p["mlp_w2"], p["mlp_b2"], residual=x.reshape(-1, D),
                 compute_dtype=compute_dtype)
    return out.reshape(B, H, W, D)


def encode(params, x, *, patch_size, num_heads, window_sizes, use_rel_pos,
           compute_dtype):
    out, Hp, Wp = patch_embed(
        x, params["patch_w"], params["patch_b"],
        kernel_size=(patch_size, patch_size), stride=(patch_size, patch_size),
        compute_dtype=compute_dtype)
    if params.get("pos_embed") is not None:
        # TODO(synk): bicubic interpolation when pos_embed grid != (Hp, Wp).
        out = out + params["pos_embed"].astype(out.dtype)
    for bi, ws in enumerate(window_sizes):
        out = block_forward(out, params["blocks"][bi], num_heads=num_heads,
                            window_size=ws, use_rel_pos=use_rel_pos,
                            compute_dtype=compute_dtype)
    return out


# --------------------------------------------------------------------------
# Pure-JAX reference (same rounding points as the kernels)
# --------------------------------------------------------------------------
def _bf(x, dt):
    return x.astype(dt).astype(jnp.float32)


def _ref_patch_embed(x, w, b, patch_size, dt):
    y = jax.lax.conv_general_dilated(
        _bf(x, dt), _bf(w, dt), window_strides=(patch_size, patch_size),
        padding="VALID", dimension_numbers=("NCHW", "OIHW", "NCHW"),
        precision=jax.lax.Precision.HIGHEST)
    y = y + b.astype(jnp.float32).reshape(1, -1, 1, 1)
    return jnp.transpose(y, (0, 2, 3, 1)).astype(x.dtype)


def _ref_linear(x, w, b, activation=None, residual=None, dt=jnp.bfloat16):
    acc = jnp.dot(_bf(x, dt), _bf(w, dt), precision=jax.lax.Precision.HIGHEST)
    acc = acc + b.astype(jnp.float32)
    if activation == "gelu":
        acc = jax.nn.gelu(acc, approximate=True)
    if residual is not None:
        acc = acc + residual.astype(jnp.float32)
    return acc.astype(x.dtype)


def _ref_layernorm(x, g, b, eps=1e-5):
    xf = x.astype(jnp.float32)
    mean = jnp.mean(xf, axis=-1, keepdims=True)
    xc = xf - mean
    var = jnp.mean(xc * xc, axis=-1, keepdims=True)
    y = xc * jax.lax.rsqrt(var + eps) * g.astype(jnp.float32) + b.astype(jnp.float32)
    return y.astype(x.dtype)


def _ref_attn_core(q, k, v, bias, scale, dt=jnp.bfloat16):
    s = jnp.einsum("bqd,bkd->bqk", _bf(q, dt), _bf(k, dt),
                   precision=jax.lax.Precision.HIGHEST) * scale
    if bias is not None:
        s = s + bias.astype(jnp.float32)
    s = s - jnp.max(s, axis=-1, keepdims=True)
    p = jnp.exp(s)
    p = p / jnp.sum(p, axis=-1, keepdims=True)
    o = jnp.einsum("bqk,bkd->bqd", _bf(p, dt), _bf(v, dt),
                   precision=jax.lax.Precision.HIGHEST)
    return o.astype(q.dtype)


def _ref_attention(x, p, num_heads, use_rel_pos, dt):
    Bw, h, w, D = x.shape
    S = h * w
    hd = D // num_heads
    scale = hd ** -0.5
    qkv = _ref_linear(x.reshape(-1, D), p["qkv_w"], p["qkv_b"], dt=dt)
    qkv = qkv.reshape(Bw, S, 3, num_heads, hd)
    qkv = jnp.transpose(qkv, (2, 0, 3, 1, 4)).reshape(3, Bw * num_heads, S, hd)
    q, k, v = qkv[0], qkv[1], qkv[2]
    bias = rel_pos_bias(q, p["rel_pos_h"], p["rel_pos_w"], (h, w), (h, w)) \
        if use_rel_pos else None
    o = _ref_attn_core(q, k, v, bias, scale, dt)
    o = o.reshape(Bw, num_heads, h, w, hd)
    o = jnp.transpose(o, (0, 2, 3, 1, 4)).reshape(Bw * S, D)
    o = _ref_linear(o, p["proj_w"], p["proj_b"], dt=dt)
    return o.reshape(Bw, h, w, D)


def _ref_block(x, p, num_heads, window_size, use_rel_pos, dt):
    B, H, W, D = x.shape
    shortcut = x
    xn = _ref_layernorm(x.reshape(-1, D), p["norm1_g"], p["norm1_b"]).reshape(
        B, H, W, D)
    if window_size > 0:
        xw, pad_hw = window_partition(xn, window_size)
    else:
        xw, pad_hw = xn, (H, W)
    a = _ref_attention(xw, p, num_heads, use_rel_pos, dt)
    if window_size > 0:
        a = window_unpartition(a, window_size, pad_hw, (H, W))
    x = shortcut + a
    xn2 = _ref_layernorm(x.reshape(-1, D), p["norm2_g"], p["norm2_b"])
    hmid = _ref_linear(xn2, p["mlp_w1"], p["mlp_b1"], activation="gelu", dt=dt)
    out = _ref_linear(hmid, p["mlp_w2"], p["mlp_b2"],
                      residual=x.reshape(-1, D), dt=dt)
    return out.reshape(B, H, W, D)


def _ref_encode(params, x, patch_size, num_heads, window_sizes, use_rel_pos, dt):
    out = _ref_patch_embed(x, params["patch_w"], params["patch_b"], patch_size, dt)
    if params.get("pos_embed") is not None:
        out = out + params["pos_embed"].astype(out.dtype)
    for bi, ws in enumerate(window_sizes):
        out = _ref_block(out, params["blocks"][bi], num_heads, ws, use_rel_pos, dt)
    return out


# --------------------------------------------------------------------------
# Parameter construction
# --------------------------------------------------------------------------
def make_params(key, *, in_chans, embed_dim, depth, num_heads, mlp_ratio,
                img_size, patch_size, window_sizes, use_rel_pos):
    Hp = Wp = img_size // patch_size
    hd = embed_dim // num_heads
    mlp_dim = int(embed_dim * mlp_ratio)
    keys = jax.random.split(key, 4 + depth)
    params = {
        "patch_w": 0.02 * jax.random.normal(
            keys[0], (embed_dim, in_chans, patch_size, patch_size), jnp.float32),
        "patch_b": 0.02 * jax.random.normal(keys[1], (embed_dim,), jnp.float32),
        "pos_embed": 0.02 * jax.random.normal(
            keys[2], (1, Hp, Wp, embed_dim), jnp.float32),
    }
    blocks = []
    for i in range(depth):
        bk = jax.random.split(keys[4 + i], 12)
        ws = window_sizes[i]
        sz = (Hp, Wp) if ws == 0 else (ws, ws)
        blk = dict(
            norm1_g=1.0 + 0.1 * jax.random.normal(bk[10], (embed_dim,), jnp.float32),
            norm1_b=0.02 * jax.random.normal(bk[11], (embed_dim,), jnp.float32),
            qkv_w=0.02 * jax.random.normal(bk[0], (embed_dim, 3 * embed_dim), jnp.float32),
            qkv_b=0.02 * jax.random.normal(bk[1], (3 * embed_dim,), jnp.float32),
            proj_w=0.02 * jax.random.normal(bk[2], (embed_dim, embed_dim), jnp.float32),
            proj_b=0.02 * jax.random.normal(bk[3], (embed_dim,), jnp.float32),
            norm2_g=1.0 + 0.1 * jax.random.normal(bk[8], (embed_dim,), jnp.float32),
            norm2_b=0.02 * jax.random.normal(bk[9], (embed_dim,), jnp.float32),
            mlp_w1=0.02 * jax.random.normal(bk[4], (embed_dim, mlp_dim), jnp.float32),
            mlp_b1=0.02 * jax.random.normal(bk[5], (mlp_dim,), jnp.float32),
            mlp_w2=0.02 * jax.random.normal(bk[6], (mlp_dim, embed_dim), jnp.float32),
            mlp_b2=0.02 * jax.random.normal(bk[7], (embed_dim,), jnp.float32),
        )
        if use_rel_pos:
            blk["rel_pos_h"] = 0.02 * jax.random.normal(
                bk[6], (2 * sz[0] - 1, hd), jnp.float32)
            blk["rel_pos_w"] = 0.02 * jax.random.normal(
                bk[7], (2 * sz[1] - 1, hd), jnp.float32)
        blocks.append(blk)
    params["blocks"] = blocks
    return params


if __name__ == "__main__":
    # Small shapes consistent with ImageEncoderViT: in_chans=3, patch_size=16,
    # block 0 uses global attention, block 1 uses window attention (ws=4),
    # decomposed rel-pos enabled, abs pos-embed enabled.
    B, C, img_size, patch_size = 2, 3, 128, 16
    embed_dim, num_heads, depth = 256, 8, 2
    mlp_ratio = 4.0
    window_sizes = (0, 4)
    use_rel_pos = True
    compute_dtype = jnp.bfloat16

    key = jax.random.PRNGKey(0)
    kx, kp = jax.random.split(key)
    x = jax.random.normal(kx, (B, C, img_size, img_size), dtype=jnp.float32)
    params = make_params(
        kp, in_chans=C, embed_dim=embed_dim, depth=depth, num_heads=num_heads,
        mlp_ratio=mlp_ratio, img_size=img_size, patch_size=patch_size,
        window_sizes=window_sizes, use_rel_pos=use_rel_pos)

    encode_fn = jax.jit(functools.partial(
        encode, patch_size=patch_size, num_heads=num_heads,
        window_sizes=window_sizes, use_rel_pos=use_rel_pos,
        compute_dtype=compute_dtype))

    out = jax.block_until_ready(encode_fn(params, x))

    Hp = Wp = img_size // patch_size
    assert out.shape == (B, Hp, Wp, embed_dim), out.shape

    ref = _ref_encode(params, x, patch_size, num_heads, window_sizes,
                      use_rel_pos, compute_dtype)
    ref = jax.block_until_ready(ref)
    assert jnp.allclose(out, ref, atol=2e-2, rtol=2e-2), (
        "mismatch vs reference; max abs diff = %s" % jnp.max(jnp.abs(out - ref)))

    print("KERNEL_OK")
</pallas_src>

<mosaic_0001>
module attributes {stable_mosaic.version = 11 : i64} {
  func.func @_patch_embed_kernel(%arg0: i32, %arg1: i32, %arg2: memref<128x768xbf16, #tpu.memory_space<vmem>>, %arg3: memref<768x256xbf16, #tpu.memory_space<vmem>>, %arg4: memref<1x256xf32, #tpu.memory_space<vmem>>, %arg5: memref<128x256xf32, #tpu.memory_space<vmem>>) attributes {dimension_semantics = [#tpu.dimension_semantics<parallel>, #tpu.dimension_semantics<parallel>], iteration_bounds = array<i64: 1, 1>, scalar_prefetch = 0 : i64, scratch_operands = 0 : i64, tpu.core_type = #tpu.core_type<tc>, window_params = [{transform_indices = @transform_0, window_bounds = array<i64: 128, 768>}, {transform_indices = @transform_1, window_bounds = array<i64: 768, 256>}, {transform_indices = @transform_2, window_bounds = array<i64: 1, 256>}, {transform_indices = @transform_3, window_bounds = array<i64: 128, 256>}]} {
    %c0 = arith.constant 0 : index
    %c0_0 = arith.constant 0 : index
    %0 = vector.load %arg2[%c0, %c0_0] : memref<128x768xbf16, #tpu.memory_space<vmem>>, vector<128x768xbf16>
    %c0_1 = arith.constant 0 : index
    %c0_2 = arith.constant 0 : index
    %1 = vector.load %arg3[%c0_1, %c0_2] : memref<768x256xbf16, #tpu.memory_space<vmem>>, vector<768x256xbf16>
    %cst = arith.constant dense<0.000000e+00> : vector<128x256xf32>
    %2 = tpu.matmul %0, %1, %cst {dimension_numbers = #tpu.dot_dimension_numbers<[1], [0], [0], [1], [0, 0, 1, 1], [], []>} : vector<128x768xbf16>, vector<768x256xbf16>, vector<128x256xf32> -> vector<128x256xf32>
    %c0_3 = arith.constant 0 : index
    %c0_4 = arith.constant 0 : index
    %3 = vector.load %arg4[%c0_3, %c0_4] : memref<1x256xf32, #tpu.memory_space<vmem>>, vector<1x256xf32>
    %4 = vector.broadcast %3 : vector<1x256xf32> to vector<128x256xf32>
    %5 = arith.addf %2, %4 : vector<128x256xf32>
    %c0_5 = arith.constant 0 : index
    %c0_6 = arith.constant 0 : index
    %6 = vector.load %arg5[%c0_5, %c0_6] : memref<128x256xf32, #tpu.memory_space<vmem>>, vector<128x256xf32>
    tpu.vector_store %arg5[%c0_5, %c0_6], %5 {strides = array<i32>} : memref<128x256xf32, #tpu.memory_space<vmem>>, vector<128x256xf32>,
    return
  }
  func.func @transform_0(%arg0: i32, %arg1: i32) -> (i32, i32) {
    %c0_i32 = arith.constant 0 : i32
    %c0_i32_0 = arith.constant 0 : i32
    return %arg0, %c0_i32 : i32, i32
  }
  func.func @transform_1(%arg0: i32, %arg1: i32) -> (i32, i32) {
    %c0_i32 = arith.constant 0 : i32
    %c0_i32_0 = arith.constant 0 : i32
    return %c0_i32, %arg1 : i32, i32
  }
  func.func @transform_2(%arg0: i32, %arg1: i32) -> (i32, i32) {
    %c0_i32 = arith.constant 0 : i32
    %c0_i32_0 = arith.constant 0 : i32
    return %c0_i32, %arg1 : i32, i32
  }
  func.func @transform_3(%arg0: i32, %arg1: i32) -> (i32, i32) {
    %c0_i32 = arith.constant 0 : i32
    return %arg0, %arg1 : i32, i32
  }
}

module attributes {stable_mosaic.version = 11 : i64} {
  func.func @_layernorm_kernel(%arg0: i32, %arg1: memref<128x256xf32, #tpu.memory_space<vmem>>, %arg2: memref<1x256xf32, #tpu.memory_space<vmem>>, %arg3: memref<1x256xf32, #tpu.memory_space<vmem>>, %arg4: memref<128x256xf32, #tpu.memory_space<vmem>>) attributes {dimension_semantics = [#tpu.dimension_semantics<parallel>], iteration_bounds = array<i64: 1>, scalar_prefetch = 0 : i64, scratch_operands = 0 : i64, tpu.core_type = #tpu.core_type<tc>, window_params = [{transform_indices = @transform_0, window_bounds = array<i64: 128, 256>}, {pipeline_mode = #tpu.pipeline_mode<synchronous>, transform_indices = @transform_1, window_bounds = array<i64: 1, 256>}, {pipeline_mode = #tpu.pipeline_mode<synchronous>, transform_indices = @transform_2, window_bounds = array<i64: 1, 256>}, {transform_indices = @transform_3, window_bounds = array<i64: 128, 256>}]} {
    %c0 = arith.constant 0 : index
    %c0_0 = arith.constant 0 : index
    %0 = vector.load %arg1[%c0, %c0_0] : memref<128x256xf32, #tpu.memory_space<vmem>>, vector<128x256xf32>
    %cst = arith.constant dense<0.000000e+00> : vector<128xf32>
    %1 = vector.multi_reduction <add>, %0, %cst [1] : vector<128x256xf32> to vector<128xf32>
    %2 = vector.shape_cast %1 : vector<128xf32> to vector<128x1xf32>
    %cst_1 = arith.constant 2.560000e+02 : f32
    %3 = vector.broadcast %cst_1 : f32 to vector<128x1xf32>
    %4 = arith.divf %2, %3 : vector<128x1xf32>
    %5 = vector.broadcast %4 : vector<128x1xf32> to vector<128x256xf32>
    %6 = arith.subf %0, %5 : vector<128x256xf32>
    %7 = arith.mulf %6, %6 : vector<128x256xf32>
    %cst_2 = arith.constant dense<0.000000e+00> : vector<128xf32>
    %8 = vector.multi_reduction <add>, %7, %cst_2 [1] : vector<128x256xf32> to vector<128xf32>
    %9 = vector.shape_cast %8 : vector<128xf32> to vector<128x1xf32>
    %cst_3 = arith.constant 2.560000e+02 : f32
    %10 = vector.broadcast %cst_3 : f32 to vector<128x1xf32>
    %11 = arith.divf %9, %10 : vector<128x1xf32>
    %cst_4 = arith.constant 9.99999974E-6 : f32
    %12 = vector.broadcast %cst_4 : f32 to vector<128x1xf32>
    %13 = arith.addf %11, %12 : vector<128x1xf32>
    %14 = math.rsqrt %13 : vector<128x1xf32>
    %15 = vector.broadcast %14 : vector<128x1xf32> to vector<128x256xf32>
    %16 = arith.mulf %6, %15 : vector<128x256xf32>
    %c0_5 = arith.constant 0 : index
    %c0_6 = arith.constant 0 : index
    %17 = vector.load %arg2[%c0_5, %c0_6] : memref<1x256xf32, #tpu.memory_space<vmem>>, vector<1x256xf32>
    %18 = vector.broadcast %17 : vector<1x256xf32> to vector<128x256xf32>
    %19 = arith.mulf %16, %18 : vector<128x256xf32>
    %c0_7 = arith.constant 0 : index
    %c0_8 = arith.constant 0 : index
    %20 = vector.load %arg3[%c0_7, %c0_8] : memref<1x256xf32, #tpu.memory_space<vmem>>, vector<1x256xf32>
    %21 = vector.broadcast %20 : vector<1x256xf32> to vector<128x256xf32>
    %22 = arith.addf %19, %21 : vector<128x256xf32>
    %c0_9 = arith.constant 0 : index
    %c0_10 = arith.constant 0 : index
    %23 = vector.load %arg4[%c0_9, %c0_10] : memref<128x256xf32, #tpu.memory_space<vmem>>, vector<128x256xf32>
    tpu.vector_store %arg4[%c0_9, %c0_10], %22 {strides = array<i32>} : memref<128x256xf32, #tpu.memory_space<vmem>>, vector<128x256xf32>,
    return
  }
  func.func @transform_0(%arg0: i32) -> (i32, i32) {
    %c0_i32 = arith.constant 0 : i32
    %c0_i32_0 = arith.constant 0 : i32
    return %arg0, %c0_i32 : i32, i32
  }
  func.func @transform_1(%arg0: i32) -> (i32, i32) {
    %c0_i32 = arith.constant 0 : i32
    %c0_i32_0 = arith.constant 0 : i32
    %c0_i32_1 = arith.constant 0 : i32
    return %c0_i32, %c0_i32_0 : i32, i32
  }
  func.func @transform_2(%arg0: i32) -> (i32, i32) {
    %c0_i32 = arith.constant 0 : i32
    %c0_i32_0 = arith.constant 0 : i32
    %c0_i32_1 = arith.constant 0 : i32
    return %c0_i32, %c0_i32_0 : i32, i32
  }
  func.func @transform_3(%arg0: i32) -> (i32, i32) {
    %c0_i32 = arith.constant 0 : i32
    %c0_i32_0 = arith.constant 0 : i32
    return %arg0, %c0_i32 : i32, i32
  }
}

module attributes {stable_mosaic.version = 11 : i64} {
  func.func @_linear_kernel(%arg0: i32, %arg1: i32, %arg2: memref<128x256xbf16, #tpu.memory_space<vmem>>, %arg3: memref<256x768xbf16, #tpu.memory_space<vmem>>, %arg4: memref<1x768xf32, #tpu.memory_space<vmem>>, %arg5: memref<128x768xf32, #tpu.memory_space<vmem>>) attributes {dimension_semantics = [#tpu.dimension_semantics<parallel>, #tpu.dimension_semantics<parallel>], iteration_bounds = array<i64: 1, 1>, scalar_prefetch = 0 : i64, scratch_operands = 0 : i64, tpu.core_type = #tpu.core_type<tc>, window_params = [{transform_indices = @transform_0, window_bounds = array<i64: 128, 256>}, {transform_indices = @transform_1, window_bounds = array<i64: 256, 768>}, {transform_indices = @transform_2, window_bounds = array<i64: 1, 768>}, {transform_indices = @transform_3, window_bounds = array<i64: 128, 768>}]} {
    %c0 = arith.constant 0 : index
    %c0_0 = arith.constant 0 : index
    %0 = vector.load %arg2[%c0, %c0_0] : memref<128x256xbf16, #tpu.memory_space<vmem>>, vector<128x256xbf16>
    %c0_1 = arith.constant 0 : index
    %c0_2 = arith.constant 0 : index
    %1 = vector.load %arg3[%c0_1, %c0_2] : memref<256x768xbf16, #tpu.memory_space<vmem>>, vector<256x768xbf16>
    %cst = arith.constant dense<0.000000e+00> : vector<128x768xf32>
    %2 = tpu.matmul %0, %1, %cst {dimension_numbers = #tpu.dot_dimension_numbers<[1], [0], [0], [1], [0, 0, 1, 1], [], []>} : vector<128x256xbf16>, vector<256x768xbf16>, vector<128x768xf32> -> vector<128x768xf32>
    %c0_3 = arith.constant 0 : index
    %c0_4 = arith.constant 0 : index
    %3 = vector.load %arg4[%c0_3, %c0_4] : memref<1x768xf32, #tpu.memory_space<vmem>>, vector<1x768xf32>
    %4 = vector.broadcast %3 : vector<1x768xf32> to vector<128x768xf32>
    %5 = arith.addf %2, %4 : vector<128x768xf32>
    %c0_5 = arith.constant 0 : index
    %c0_6 = arith.constant 0 : index
    %6 = vector.load %arg5[%c0_5, %c0_6] : memref<128x768xf32, #tpu.memory_space<vmem>>, vector<128x768xf32>
    tpu.vector_store %arg5[%c0_5, %c0_6], %5 {strides = array<i32>} : memref<128x768xf32, #tpu.memory_space<vmem>>, vector<128x768xf32>,
    return
  }
  func.func @transform_0(%arg0: i32, %arg1: i32) -> (i32, i32) {
    %c0_i32 = arith.constant 0 : i32
    %c0_i32_0 = arith.constant 0 : i32
    return %arg0, %c0_i32 : i32, i32
  }
  func.func @transform_1(%arg0: i32, %arg1: i32) -> (i32, i32) {
    %c0_i32 = arith.constant 0 : i32
    %c0_i32_0 = arith.constant 0 : i32
    return %c0_i32, %arg1 : i32, i32
  }
  func.func @transform_2(%arg0: i32, %arg1: i32) -> (i32, i32) {
    %c0_i32 = arith.constant 0 : i32
    %c0_i32_0 = arith.constant 0 : i32
    return %c0_i32, %arg1 : i32, i32
  }
  func.func @transform_3(%arg0: i32, %arg1: i32) -> (i32, i32) {
    %c0_i32 = arith.constant 0 : i32
    return %arg0, %arg1 : i32, i32
  }
}

module attributes {stable_mosaic.version = 11 : i64} {
  func.func @_attn_kernel(%arg0: i32, %arg1: memref<1x64x32xbf16, #tpu.memory_space<vmem>>, %arg2: memref<1x64x32xbf16, #tpu.memory_space<vmem>>, %arg3: memref<1x64x32xbf16, #tpu.memory_space<vmem>>, %arg4: memref<1x64x64xf32, #tpu.memory_space<vmem>>, %arg5: memref<1x64x32xf32, #tpu.memory_space<vmem>>) attributes {dimension_semantics = [#tpu.dimension_semantics<parallel>], iteration_bounds = array<i64: 16>, scalar_prefetch = 0 : i64, scratch_operands = 0 : i64, tpu.core_type = #tpu.core_type<tc>, window_params = [{transform_indices = @transform_0, window_bounds = array<i64: 1, 64, 32>}, {transform_indices = @transform_1, window_bounds = array<i64: 1, 64, 32>}, {transform_indices = @transform_2, window_bounds = array<i64: 1, 64, 32>}, {transform_indices = @transform_3, window_bounds = array<i64: 1, 64, 64>}, {transform_indices = @transform_4, window_bounds = array<i64: 1, 64, 32>}]} {
    %c0 = arith.constant 0 : index
    %c0_0 = arith.constant 0 : index
    %c0_1 = arith.constant 0 : index
    %0 = vector.load %arg1[%c0, %c0_0, %c0_1] : memref<1x64x32xbf16, #tpu.memory_space<vmem>>, vector<1x64x32xbf16>
    %1 = vector.shape_cast %0 : vector<1x64x32xbf16> to vector<64x32xbf16>
    %c0_2 = arith.constant 0 : index
    %c0_3 = arith.constant 0 : index
    %c0_4 = arith.constant 0 : index
    %2 = vector.load %arg2[%c0_2, %c0_3, %c0_4] : memref<1x64x32xbf16, #tpu.memory_space<vmem>>, vector<1x64x32xbf16>
    %3 = vector.shape_cast %2 : vector<1x64x32xbf16> to vector<64x32xbf16>
    "tpu.trace_start"() <{level = 10 : i32, message = "qd,kd->qk"}> : () -> ()
    %cst = arith.constant dense<0.000000e+00> : vector<64x64xf32>
    %4 = tpu.matmul %1, %3, %cst {dimension_numbers = #tpu.dot_dimension_numbers<[1], [1], [0], [0], [0, 0, 1, 0], [], []>} : vector<64x32xbf16>, vector<64x32xbf16>, vector<64x64xf32> -> vector<64x64xf32>
    "tpu.trace_stop"() : () -> ()
    %cst_5 = arith.constant 0.176776692 : f32
    %5 = vector.broadcast %cst_5 : f32 to vector<64x64xf32>
    %6 = arith.mulf %4, %5 : vector<64x64xf32>
    %c0_6 = arith.constant 0 : index
    %c0_7 = arith.constant 0 : index
    %c0_8 = arith.constant 0 : index
    %7 = vector.load %arg4[%c0_6, %c0_7, %c0_8] : memref<1x64x64xf32, #tpu.memory_space<vmem>>, vector<1x64x64xf32>
    %8 = vector.shape_cast %7 : vector<1x64x64xf32> to vector<64x64xf32>
    %9 = arith.addf %6, %8 : vector<64x64xf32>
    %cst_9 = arith.constant dense<0xFF800000> : vector<64xf32>
    %10 = vector.multi_reduction <maximumf>, %9, %cst_9 [1] : vector<64x64xf32> to vector<64xf32>
    %11 = vector.shape_cast %10 : vector<64xf32> to vector<64x1xf32>
    %12 = vector.broadcast %11 : vector<64x1xf32> to vector<64x64xf32>
    %13 = arith.subf %9, %12 : vector<64x64xf32>
    %14 = math.exp %13 : vector<64x64xf32>
    %cst_10 = arith.constant dense<0.000000e+00> : vector<64xf32>
    %15 = vector.multi_reduction <add>, %14, %cst_10 [1] : vector<64x64xf32> to vector<64xf32>
    %16 = vector.shape_cast %15 : vector<64xf32> to vector<64x1xf32>
    %17 = vector.broadcast %16 : vector<64x1xf32> to vector<64x64xf32>
    %18 = arith.divf %14, %17 : vector<64x64xf32>
    %19 = arith.truncf %18 : vector<64x64xf32> to vector<64x64xbf16>
    %c0_11 = arith.constant 0 : index
    %c0_12 = arith.constant 0 : index
    %c0_13 = arith.constant 0 : index
    %20 = vector.load %arg3[%c0_11, %c0_12, %c0_13] : memref<1x64x32xbf16, #tpu.memory_space<vmem>>, vector<1x64x32xbf16>
    %21 = vector.shape_cast %20 : vector<1x64x32xbf16> to vector<64x32xbf16>
    "tpu.trace_start"() <{level = 10 : i32, message = "qk,kd->qd"}> : () -> ()
    %cst_14 = arith.constant dense<0.000000e+00> : vector<64x32xf32>
    %22 = tpu.matmul %19, %21, %cst_14 {dimension_numbers = #tpu.dot_dimension_numbers<[1], [0], [0], [1], [0, 0, 1, 1], [], []>} : vector<64x64xbf16>, vector<64x32xbf16>, vector<64x32xf32> -> vector<64x32xf32>
    "tpu.trace_stop"() : () -> ()
    %c0_15 = arith.constant 0 : index
    %c0_16 = arith.constant 0 : index
    %c0_17 = arith.constant 0 : index
    %23 = vector.load %arg5[%c0_15, %c0_16, %c0_17] : memref<1x64x32xf32, #tpu.memory_space<vmem>>, vector<1x64x32xf32>
    %24 = vector.shape_cast %23 : vector<1x64x32xf32> to vector<64x32xf32>
    %25 = vector.shape_cast %22 : vector<64x32xf32> to vector<1x64x32xf32>
    tpu.vector_store %arg5[%c0_15, %c0_16, %c0_17], %25 {strides = array<i32>} : memref<1x64x32xf32, #tpu.memory_space<vmem>>, vector<1x64x32xf32>,
    return
  }
  func.func @transform_0(%arg0: i32) -> (i32, i32, i32) {
    %c0_i32 = arith.constant 0 : i32
    %c0_i32_0 = arith.constant 0 : i32
    %c0_i32_1 = arith.constant 0 : i32
    return %arg0, %c0_i32, %c0_i32_0 : i32, i32, i32
  }
  func.func @transform_1(%arg0: i32) -> (i32, i32, i32) {
    %c0_i32 = arith.constant 0 : i32
    %c0_i32_0 = arith.constant 0 : i32
    %c0_i32_1 = arith.constant 0 : i32
    return %arg0, %c0_i32, %c0_i32_0 : i32, i32, i32
  }
  func.func @transform_2(%arg0: i32) -> (i32, i32, i32) {
    %c0_i32 = arith.constant 0 : i32
    %c0_i32_0 = arith.constant 0 : i32
    %c0_i32_1 = arith.constant 0 : i32
    return %arg0, %c0_i32, %c0_i32_0 : i32, i32, i32
  }
  func.func @transform_3(%arg0: i32) -> (i32, i32, i32) {
    %c0_i32 = arith.constant 0 : i32
    %c0_i32_0 = arith.constant 0 : i32
    %c0_i32_1 = arith.constant 0 : i32
    return %arg0, %c0_i32, %c0_i32_0 : i32, i32, i32
  }
  func.func @transform_4(%arg0: i32) -> (i32, i32, i32) {
    %c0_i32 = arith.constant 0 : i32
    %c0_i32_0 = arith.constant 0 : i32
    %c0_i32_1 = arith.constant 0 : i32
    return %arg0, %c0_i32, %c0_i32_0 : i32, i32, i32
  }
}

module attributes {stable_mosaic.version = 11 : i64} {
  func.func @_linear_kernel(%arg0: i32, %arg1: i32, %arg2: memref<128x256xbf16, #tpu.memory_space<vmem>>, %arg3: memref<256x256xbf16, #tpu.memory_space<vmem>>, %arg4: memref<1x256xf32, #tpu.memory_space<vmem>>, %arg5: memref<128x256xf32, #tpu.memory_space<vmem>>) attributes {dimension_semantics = [#tpu.dimension_semantics<parallel>, #tpu.dimension_semantics<parallel>], iteration_bounds = array<i64: 1, 1>, scalar_prefetch = 0 : i64, scratch_operands = 0 : i64, tpu.core_type = #tpu.core_type<tc>, window_params = [{transform_indices = @transform_0, window_bounds = array<i64: 128, 256>}, {transform_indices = @transform_1, window_bounds = array<i64: 256, 256>}, {transform_indices = @transform_2, window_bounds = array<i64: 1, 256>}, {transform_indices = @transform_3, window_bounds = array<i64: 128, 256>}]} {
    %c0 = arith.constant 0 : index
    %c0_0 = arith.constant 0 : index
    %0 = vector.load %arg2[%c0, %c0_0] : memref<128x256xbf16, #tpu.memory_space<vmem>>, vector<128x256xbf16>
    %c0_1 = arith.constant 0 : index
    %c0_2 = arith.constant 0 : index
    %1 = vector.load %arg3[%c0_1, %c0_2] : memref<256x256xbf16, #tpu.memory_space<vmem>>, vector<256x256xbf16>
    %cst = arith.constant dense<0.000000e+00> : vector<128x256xf32>
    %2 = tpu.matmul %0, %1, %cst {dimension_numbers = #tpu.dot_dimension_numbers<[1], [0], [0], [1], [0, 0, 1, 1], [], []>} : vector<128x256xbf16>, vector<256x256xbf16>, vector<128x256xf32> -> vector<128x256xf32>
    %c0_3 = arith.constant 0 : index
    %c0_4 = arith.constant 0 : index
    %3 = vector.load %arg4[%c0_3, %c0_4] : memref<1x256xf32, #tpu.memory_space<vmem>>, vector<1x256xf32>
    %4 = vector.broadcast %3 : vector<1x256xf32> to vector<128x256xf32>
    %5 = arith.addf %2, %4 : vector<128x256xf32>
    %c0_5 = arith.constant 0 : index
    %c0_6 = arith.constant 0 : index
    %6 = vector.load %arg5[%c0_5, %c0_6] : memref<128x256xf32, #tpu.memory_space<vmem>>, vector<128x256xf32>
    tpu.vector_store %arg5[%c0_5, %c0_6], %5 {strides = array<i32>} : memref<128x256xf32, #tpu.memory_space<vmem>>, vector<128x256xf32>,
    return
  }
  func.func @transform_0(%arg0: i32, %arg1: i32) -> (i32, i32) {
    %c0_i32 = arith.constant 0 : i32
    %c0_i32_0 = arith.constant 0 : i32
    return %arg0, %c0_i32 : i32, i32
  }
  func.func @transform_1(%arg0: i32, %arg1: i32) -> (i32, i32) {
    %c0_i32 = arith.constant 0 : i32
    %c0_i32_0 = arith.constant 0 : i32
    return %c0_i32, %arg1 : i32, i32
  }
  func.func @transform_2(%arg0: i32, %arg1: i32) -> (i32, i32) {
    %c0_i32 = arith.constant 0 : i32
    %c0_i32_0 = arith.constant 0 : i32
    return %c0_i32, %arg1 : i32, i32
  }
  func.func @transform_3(%arg0: i32, %arg1: i32) -> (i32, i32) {
    %c0_i32 = arith.constant 0 : i32
    return %arg0, %arg1 : i32, i32
  }
}

module attributes {stable_mosaic.version = 11 : i64} {
  func.func @_linear_kernel(%arg0: i32, %arg1: i32, %arg2: memref<128x256xbf16, #tpu.memory_space<vmem>>, %arg3: memref<256x1024xbf16, #tpu.memory_space<vmem>>, %arg4: memref<1x1024xf32, #tpu.memory_space<vmem>>, %arg5: memref<128x1024xf32, #tpu.memory_space<vmem>>) attributes {dimension_semantics = [#tpu.dimension_semantics<parallel>, #tpu.dimension_semantics<parallel>], iteration_bounds = array<i64: 1, 1>, scalar_prefetch = 0 : i64, scratch_operands = 0 : i64, tpu.core_type = #tpu.core_type<tc>, window_params = [{transform_indices = @transform_0, window_bounds = array<i64: 128, 256>}, {transform_indices = @transform_1, window_bounds = array<i64: 256, 1024>}, {transform_indices = @transform_2, window_bounds = array<i64: 1, 1024>}, {transform_indices = @transform_3, window_bounds = array<i64: 128, 1024>}]} {
    %c0 = arith.constant 0 : index
    %c0_0 = arith.constant 0 : index
    %0 = vector.load %arg2[%c0, %c0_0] : memref<128x256xbf16, #tpu.memory_space<vmem>>, vector<128x256xbf16>
    %c0_1 = arith.constant 0 : index
    %c0_2 = arith.constant 0 : index
    %1 = vector.load %arg3[%c0_1, %c0_2] : memref<256x1024xbf16, #tpu.memory_space<vmem>>, vector<256x1024xbf16>
    %cst = arith.constant dense<0.000000e+00> : vector<128x1024xf32>
    %2 = tpu.matmul %0, %1, %cst {dimension_numbers = #tpu.dot_dimension_numbers<[1], [0], [0], [1], [0, 0, 1, 1], [], []>} : vector<128x256xbf16>, vector<256x1024xbf16>, vector<128x1024xf32> -> vector<128x1024xf32>
    %c0_3 = arith.constant 0 : index
    %c0_4 = arith.constant 0 : index
    %3 = vector.load %arg4[%c0_3, %c0_4] : memref<1x1024xf32, #tpu.memory_space<vmem>>, vector<1x1024xf32>
    %4 = vector.broadcast %3 : vector<1x1024xf32> to vector<128x1024xf32>
    %5 = arith.addf %2, %4 : vector<128x1024xf32>
    %6 = arith.mulf %5, %5 : vector<128x1024xf32>
    %7 = arith.mulf %5, %6 : vector<128x1024xf32>
    %cst_5 = arith.constant 4.471500e-02 : f32
    %8 = vector.broadcast %cst_5 : f32 to vector<128x1024xf32>
    %9 = arith.mulf %8, %7 : vector<128x1024xf32>
    %10 = arith.addf %5, %9 : vector<128x1024xf32>
    %cst_6 = arith.constant 0.797884583 : f32
    %11 = vector.broadcast %cst_6 : f32 to vector<128x1024xf32>
    %12 = arith.mulf %11, %10 : vector<128x1024xf32>
    %13 = math.tanh %12 : vector<128x1024xf32>
    %cst_7 = arith.constant 1.000000e+00 : f32
    %14 = vector.broadcast %cst_7 : f32 to vector<128x1024xf32>
    %15 = arith.addf %14, %13 : vector<128x1024xf32>
    %cst_8 = arith.constant 5.000000e-01 : f32
    %16 = vector.broadcast %cst_8 : f32 to vector<128x1024xf32>
    %17 = arith.mulf %16, %15 : vector<128x1024xf32>
    %18 = arith.mulf %5, %17 : vector<128x1024xf32>
    %c0_9 = arith.constant 0 : index
    %c0_10 = arith.constant 0 : index
    %19 = vector.load %arg5[%c0_9, %c0_10] : memref<128x1024xf32, #tpu.memory_space<vmem>>, vector<128x1024xf32>
    tpu.vector_store %arg5[%c0_9, %c0_10], %18 {strides = array<i32>} : memref<128x1024xf32, #tpu.memory_space<vmem>>, vector<128x1024xf32>,
    return
  }
  func.func @transform_0(%arg0: i32, %arg1: i32) -> (i32, i32) {
    %c0_i32 = arith.constant 0 : i32
    %c0_i32_0 = arith.constant 0 : i32
    return %arg0, %c0_i32 : i32, i32
  }
  func.func @transform_1(%arg0: i32, %arg1: i32) -> (i32, i32) {
    %c0_i32 = arith.constant 0 : i32
    %c0_i32_0 = arith.constant 0 : i32
    return %c0_i32, %arg1 : i32, i32
  }
  func.func @transform_2(%arg0: i32, %arg1: i32) -> (i32, i32) {
    %c0_i32 = arith.constant 0 : i32
    %c0_i32_0 = arith.constant 0 : i32
    return %c0_i32, %arg1 : i32, i32
  }
  func.func @transform_3(%arg0: i32, %arg1: i32) -> (i32, i32) {
    %c0_i32 = arith.constant 0 : i32
    return %arg0, %arg1 : i32, i32
  }
}

module attributes {stable_mosaic.version = 11 : i64} {
  func.func @_linear_kernel(%arg0: i32, %arg1: i32, %arg2: memref<128x1024xbf16, #tpu.memory_space<vmem>>, %arg3: memref<1024x256xbf16, #tpu.memory_space<vmem>>, %arg4: memref<1x256xf32, #tpu.memory_space<vmem>>, %arg5: memref<128x256xf32, #tpu.memory_space<vmem>>, %arg6: memref<128x256xf32, #tpu.memory_space<vmem>>) attributes {dimension_semantics = [#tpu.dimension_semantics<parallel>, #tpu.dimension_semantics<parallel>], iteration_bounds = array<i64: 1, 1>, scalar_prefetch = 0 : i64, scratch_operands = 0 : i64, tpu.core_type = #tpu.core_type<tc>, window_params = [{transform_indices = @transform_0, window_bounds = array<i64: 128, 1024>}, {transform_indices = @transform_1, window_bounds = array<i64: 1024, 256>}, {transform_indices = @transform_2, window_bounds = array<i64: 1, 256>}, {transform_indices = @transform_3, window_bounds = array<i64: 128, 256>}, {transform_indices = @transform_4, window_bounds = array<i64: 128, 256>}]} {
    %c0 = arith.constant 0 : index
    %c0_0 = arith.constant 0 : index
    %0 = vector.load %arg2[%c0, %c0_0] : memref<128x1024xbf16, #tpu.memory_space<vmem>>, vector<128x1024xbf16>
    %c0_1 = arith.constant 0 : index
    %c0_2 = arith.constant 0 : index
    %1 = vector.load %arg3[%c0_1, %c0_2] : memref<1024x256xbf16, #tpu.memory_space<vmem>>, vector<1024x256xbf16>
    %cst = arith.constant dense<0.000000e+00> : vector<128x256xf32>
    %2 = tpu.matmul %0, %1, %cst {dimension_numbers = #tpu.dot_dimension_numbers<[1], [0], [0], [1], [0, 0, 1, 1], [], []>} : vector<128x1024xbf16>, vector<1024x256xbf16>, vector<128x256xf32> -> vector<128x256xf32>
    %c0_3 = arith.constant 0 : index
    %c0_4 = arith.constant 0 : index
    %3 = vector.load %arg4[%c0_3, %c0_4] : memref<1x256xf32, #tpu.memory_space<vmem>>, vector<1x256xf32>
    %4 = vector.broadcast %3 : vector<1x256xf32> to vector<128x256xf32>
    %5 = arith.addf %2, %4 : vector<128x256xf32>
    %c0_5 = arith.constant 0 : index
    %c0_6 = arith.constant 0 : index
    %6 = vector.load %arg5[%c0_5, %c0_6] : memref<128x256xf32, #tpu.memory_space<vmem>>, vector<128x256xf32>
    %7 = arith.addf %5, %6 : vector<128x256xf32>
    %c0_7 = arith.constant 0 : index
    %c0_8 = arith.constant 0 : index
    %8 = vector.load %arg6[%c0_7, %c0_8] : memref<128x256xf32, #tpu.memory_space<vmem>>, vector<128x256xf32>
    tpu.vector_store %arg6[%c0_7, %c0_8], %7 {strides = array<i32>} : memref<128x256xf32, #tpu.memory_space<vmem>>, vector<128x256xf32>,
    return
  }
  func.func @transform_0(%arg0: i32, %arg1: i32) -> (i32, i32) {
    %c0_i32 = arith.constant 0 : i32
    %c0_i32_0 = arith.constant 0 : i32
    return %arg0, %c0_i32 : i32, i32
  }
  func.func @transform_1(%arg0: i32, %arg1: i32) -> (i32, i32) {
    %c0_i32 = arith.constant 0 : i32
    %c0_i32_0 = arith.constant 0 : i32
    return %c0_i32, %arg1 : i32, i32
  }
  func.func @transform_2(%arg0: i32, %arg1: i32) -> (i32, i32) {
    %c0_i32 = arith.constant 0 : i32
    %c0_i32_0 = arith.constant 0 : i32
    return %c0_i32, %arg1 : i32, i32
  }
  func.func @transform_3(%arg0: i32, %arg1: i32) -> (i32, i32) {
    %c0_i32 = arith.constant 0 : i32
    return %arg0, %arg1 : i32, i32
  }
  func.func @transform_4(%arg0: i32, %arg1: i32) -> (i32, i32) {
    %c0_i32 = arith.constant 0 : i32
    return %arg0, %arg1 : i32, i32
  }
}

module attributes {stable_mosaic.version = 11 : i64} {
  func.func @_attn_kernel(%arg0: i32, %arg1: memref<1x16x32xbf16, #tpu.memory_space<vmem>>, %arg2: memref<1x16x32xbf16, #tpu.memory_space<vmem>>, %arg3: memref<1x16x32xbf16, #tpu.memory_space<vmem>>, %arg4: memref<1x16x16xf32, #tpu.memory_space<vmem>>, %arg5: memref<1x16x32xf32, #tpu.memory_space<vmem>>) attributes {dimension_semantics = [#tpu.dimension_semantics<parallel>], iteration_bounds = array<i64: 64>, scalar_prefetch = 0 : i64, scratch_operands = 0 : i64, tpu.core_type = #tpu.core_type<tc>, window_params = [{transform_indices = @transform_0, window_bounds = array<i64: 1, 16, 32>}, {transform_indices = @transform_1, window_bounds = array<i64: 1, 16, 32>}, {transform_indices = @transform_2, window_bounds = array<i64: 1, 16, 32>}, {transform_indices = @transform_3, window_bounds = array<i64: 1, 16, 16>}, {transform_indices = @transform_4, window_bounds = array<i64: 1, 16, 32>}]} {
    %c0 = arith.constant 0 : index
    %c0_0 = arith.constant 0 : index
    %c0_1 = arith.constant 0 : index
    %0 = vector.load %arg1[%c0, %c0_0, %c0_1] : memref<1x16x32xbf16, #tpu.memory_space<vmem>>, vector<1x16x32xbf16>
    %1 = vector.shape_cast %0 : vector<1x16x32xbf16> to vector<16x32xbf16>
    %c0_2 = arith.constant 0 : index
    %c0_3 = arith.constant 0 : index
    %c0_4 = arith.constant 0 : index
    %2 = vector.load %arg2[%c0_2, %c0_3, %c0_4] : memref<1x16x32xbf16, #tpu.memory_space<vmem>>, vector<1x16x32xbf16>
    %3 = vector.shape_cast %2 : vector<1x16x32xbf16> to vector<16x32xbf16>
    "tpu.trace_start"() <{level = 10 : i32, message = "qd,kd->qk"}> : () -> ()
    %cst = arith.constant dense<0.000000e+00> : vector<16x16xf32>
    %4 = tpu.matmul %1, %3, %cst {dimension_numbers = #tpu.dot_dimension_numbers<[1], [1], [0], [0], [0, 0, 1, 0], [], []>} : vector<16x32xbf16>, vector<16x32xbf16>, vector<16x16xf32> -> vector<16x16xf32>
    "tpu.trace_stop"() : () -> ()
    %cst_5 = arith.constant 0.176776692 : f32
    %5 = vector.broadcast %cst_5 : f32 to vector<16x16xf32>
    %6 = arith.mulf %4, %5 : vector<16x16xf32>
    %c0_6 = arith.constant 0 : index
    %c0_7 = arith.constant 0 : index
    %c0_8 = arith.constant 0 : index
    %7 = vector.load %arg4[%c0_6, %c0_7, %c0_8] : memref<1x16x16xf32, #tpu.memory_space<vmem>>, vector<1x16x16xf32>
    %8 = vector.shape_cast %7 : vector<1x16x16xf32> to vector<16x16xf32>
    %9 = arith.addf %6, %8 : vector<16x16xf32>
    %cst_9 = arith.constant dense<0xFF800000> : vector<16xf32>
    %10 = vector.multi_reduction <maximumf>, %9, %cst_9 [1] : vector<16x16xf32> to vector<16xf32>
    %11 = vector.shape_cast %10 : vector<16xf32> to vector<16x1xf32>
    %12 = vector.broadcast %11 : vector<16x1xf32> to vector<16x16xf32>
    %13 = arith.subf %9, %12 : vector<16x16xf32>
    %14 = math.exp %13 : vector<16x16xf32>
    %cst_10 = arith.constant dense<0.000000e+00> : vector<16xf32>
    %15 = vector.multi_reduction <add>, %14, %cst_10 [1] : vector<16x16xf32> to vector<16xf32>
    %16 = vector.shape_cast %15 : vector<16xf32> to vector<16x1xf32>
    %17 = vector.broadcast %16 : vector<16x1xf32> to vector<16x16xf32>
    %18 = arith.divf %14, %17 : vector<16x16xf32>
    %19 = arith.truncf %18 : vector<16x16xf32> to vector<16x16xbf16>
    %c0_11 = arith.constant 0 : index
    %c0_12 = arith.constant 0 : index
    %c0_13 = arith.constant 0 : index
    %20 = vector.load %arg3[%c0_11, %c0_12, %c0_13] : memref<1x16x32xbf16, #tpu.memory_space<vmem>>, vector<1x16x32xbf16>
    %21 = vector.shape_cast %20 : vector<1x16x32xbf16> to vector<16x32xbf16>
    "tpu.trace_start"() <{level = 10 : i32, message = "qk,kd->qd"}> : () -> ()
    %cst_14 = arith.constant dense<0.000000e+00> : vector<16x32xf32>
    %22 = tpu.matmul %19, %21, %cst_14 {dimension_numbers = #tpu.dot_dimension_numbers<[1], [0], [0], [1], [0, 0, 1, 1], [], []>} : vector<16x16xbf16>, vector<16x32xbf16>, vector<16x32xf32> -> vector<16x32xf32>
    "tpu.trace_stop"() : () -> ()
    %c0_15 = arith.constant 0 : index
    %c0_16 = arith.constant 0 : index
    %c0_17 = arith.constant 0 : index
    %23 = vector.load %arg5[%c0_15, %c0_16, %c0_17] : memref<1x16x32xf32, #tpu.memory_space<vmem>>, vector<1x16x32xf32>
    %24 = vector.shape_cast %23 : vector<1x16x32xf32> to vector<16x32xf32>
    %25 = vector.shape_cast %22 : vector<16x32xf32> to vector<1x16x32xf32>
    tpu.vector_store %arg5[%c0_15, %c0_16, %c0_17], %25 {strides = array<i32>} : memref<1x16x32xf32, #tpu.memory_space<vmem>>, vector<1x16x32xf32>,
    return
  }
  func.func @transform_0(%arg0: i32) -> (i32, i32, i32) {
    %c0_i32 = arith.constant 0 : i32
    %c0_i32_0 = arith.constant 0 : i32
    %c0_i32_1 = arith.constant 0 : i32
    return %arg0, %c0_i32, %c0_i32_0 : i32, i32, i32
  }
  func.func @transform_1(%arg0: i32) -> (i32, i32, i32) {
    %c0_i32 = arith.constant 0 : i32
    %c0_i32_0 = arith.constant 0 : i32
    %c0_i32_1 = arith.constant 0 : i32
    return %arg0, %c0_i32, %c0_i32_0 : i32, i32, i32
  }
  func.func @transform_2(%arg0: i32) -> (i32, i32, i32) {
    %c0_i32 = arith.constant 0 : i32
    %c0_i32_0 = arith.constant 0 : i32
    %c0_i32_1 = arith.constant 0 : i32
    return %arg0, %c0_i32, %c0_i32_0 : i32, i32, i32
  }
  func.func @transform_3(%arg0: i32) -> (i32, i32, i32) {
    %c0_i32 = arith.constant 0 : i32
    %c0_i32_0 = arith.constant 0 : i32
    %c0_i32_1 = arith.constant 0 : i32
    return %arg0, %c0_i32, %c0_i32_0 : i32, i32, i32
  }
  func.func @transform_4(%arg0: i32) -> (i32, i32, i32) {
    %c0_i32 = arith.constant 0 : i32
    %c0_i32_0 = arith.constant 0 : i32
    %c0_i32_1 = arith.constant 0 : i32
    return %arg0, %c0_i32, %c0_i32_0 : i32, i32, i32
  }
}

module attributes {stable_mosaic.version = 11 : i64} {
  func.func @_linear_kernel(%arg0: i32, %arg1: i32, %arg2: memref<128x1024xbf16, #tpu.memory_space<vmem>>, %arg3: memref<1024x256xbf16, #tpu.memory_space<vmem>>, %arg4: memref<1x256xf32, #tpu.memory_space<vmem>>, %arg5: memref<128x256xf32, #tpu.memory_space<vmem>>, %arg6: memref<128x256xf32, #tpu.memory_space<vmem>>) attributes {dimension_semantics = [#tpu.dimension_semantics<parallel>, #tpu.dimension_semantics<parallel>], iteration_bounds = array<i64: 1, 1>, scalar_prefetch = 0 : i64, scratch_operands = 0 : i64, tpu.core_type = #tpu.core_type<tc>, window_params = [{transform_indices = @transform_0, window_bounds = array<i64: 128, 1024>}, {transform_indices = @transform_1, window_bounds = array<i64: 1024, 256>}, {transform_indices = @transform_2, window_bounds = array<i64: 1, 256>}, {transform_indices = @transform_3, window_bounds = array<i64: 128, 256>}, {transform_indices = @transform_4, window_bounds = array<i64: 128, 256>}]} {
    %c0 = arith.constant 0 : index
    %c0_0 = arith.constant 0 : index
    %0 = vector.load %arg2[%c0, %c0_0] : memref<128x1024xbf16, #tpu.memory_space<vmem>>, vector<128x1024xbf16>
    %c0_1 = arith.constant 0 : index
    %c0_2 = arith.constant 0 : index
    %1 = vector.load %arg3[%c0_1, %c0_2] : memref<1024x256xbf16, #tpu.memory_space<vmem>>, vector<1024x256xbf16>
    %cst = arith.constant dense<0.000000e+00> : vector<128x256xf32>
    %2 = tpu.matmul %0, %1, %cst {dimension_numbers = #tpu.dot_dimension_numbers<[1], [0], [0], [1], [0, 0, 1, 1], [], []>} : vector<128x1024xbf16>, vector<1024x256xbf16>, vector<128x256xf32> -> vector<128x256xf32>
    %c0_3 = arith.constant 0 : index
    %c0_4 = arith.constant 0 : index
    %3 = vector.load %arg4[%c0_3, %c0_4] : memref<1x256xf32, #tpu.memory_space<vmem>>, vector<1x256xf32>
    %4 = vector.broadcast %3 : vector<1x256xf32> to vector<128x256xf32>
    %5 = arith.addf %2, %4 : vector<128x256xf32>
    %c0_5 = arith.constant 0 : index
    %c0_6 = arith.constant 0 : index
    %6 = vector.load %arg5[%c0_5, %c0_6] : memref<128x256xf32, #tpu.memory_space<vmem>>, vector<128x256xf32>
    %7 = arith.addf %5, %6 : vector<128x256xf32>
    %c0_7 = arith.constant 0 : index
    %c0_8 = arith.constant 0 : index
    %8 = vector.load %arg6[%c0_7, %c0_8] : memref<128x256xf32, #tpu.memory_space<vmem>>, vector<128x256xf32>
    tpu.vector_store %arg6[%c0_7, %c0_8], %7 {strides = array<i32>} : memref<128x256xf32, #tpu.memory_space<vmem>>, vector<128x256xf32>,
    return
  }
  func.func @transform_0(%arg0: i32, %arg1: i32) -> (i32, i32) {
    %c0_i32 = arith.constant 0 : i32
    %c0_i32_0 = arith.constant 0 : i32
    return %arg0, %c0_i32 : i32, i32
  }
  func.func @transform_1(%arg0: i32, %arg1: i32) -> (i32, i32) {
    %c0_i32 = arith.constant 0 : i32
    %c0_i32_0 = arith.constant 0 : i32
    return %c0_i32, %arg1 : i32, i32
  }
  func.func @transform_2(%arg0: i32, %arg1: i32) -> (i32, i32) {
    %c0_i32 = arith.constant 0 : i32
    %c0_i32_0 = arith.constant 0 : i32
    return %c0_i32, %arg1 : i32, i32
  }
  func.func @transform_3(%arg0: i32, %arg1: i32) -> (i32, i32) {
    %c0_i32 = arith.constant 0 : i32
    return %arg0, %arg1 : i32, i32
  }
  func.func @transform_4(%arg0: i32, %arg1: i32) -> (i32, i32) {
    %c0_i32 = arith.constant 0 : i32
    return %arg0, %arg1 : i32, i32
  }
}

</mosaic_0001>

<llo_original>
// kernel: encode.15
$region0: #{encode.15}
  #allocation0 [shape = 'u32[]', space=smem, size = 0x4, offset = 0x4, fixed_abs, tag = 'smem constant byte address 0x4 - core index']
  #allocation1 [shape = 'u32[144,128]{1,0:T(1,128)}', space=vmem, size = 0x12000, scoped, tag = 'internal scratch']
  %s0 = inlined_call_operand.vmem [shape: bf16[128,768], index: 0, kind: input, shape index: {}]
  %s1 = inlined_call_operand.vmem [shape: bf16[768,256], index: 1, kind: input, shape index: {}]
  %s2 = inlined_call_operand.vmem [shape: f32[1,256], index: 2, kind: input, shape index: {}]
  %s3 = inlined_call_operand.vmem [shape: f32[128,256], index: 3, kind: output, shape index: {}]
  %s4 = sld [smem:[#allocation0]]
  $region22: #{encode.15} parent=0
    _
  %s6 = ssub.s32 1, %s4
  %s7 = scalar_select 0, %s6, %s4
  // Predicated region
  $region2: #{encode.15} parent=0 // pred_check
    _
  $region3: #{encode.15} parent=0 // pred_check_branch
    %9 = sbr.rel (0) target = $region5
  $region4: #{encode.15} parent=0 // pred_region
    _
  $region5: #{encode.15} parent=0 // pred_fallthru
    _
  // Predicated region
  $region6: #{encode.15} parent=0 // pred_check
    _
  $region7: #{encode.15} parent=0 // pred_check_branch
    %11 = sbr.rel (0) target = $region9
  $region8: #{encode.15} parent=0 // pred_region
    _
  $region9: #{encode.15} parent=0 // pred_fallthru
    _
  // Predicated region
  $region10: #{encode.15} parent=0 // pred_check
    _
  $region11: #{encode.15} parent=0 // pred_check_branch
    %13 = sbr.rel (0) target = $region13
  $region12: #{encode.15} parent=0 // pred_region
    _
  $region13: #{encode.15} parent=0 // pred_fallthru
    _
  %v14 = vld [vmem:[%s0] sm:$0xff]
  %v15 = vld [vmem:[%s0 + $0x8] sm:$0xff]
  %v16 = vld [vmem:[%s0 + $0x10] sm:$0xff]
  %v17 = vld [vmem:[%s0 + $0x18] sm:$0xff]
  %v18 = vld [vmem:[%s0 + $0x20] sm:$0xff]
  %v19 = vld [vmem:[%s0 + $0x28] sm:$0xff]
  %v20 = vld [vmem:[%s0 + $0x30] sm:$0xff]
  %v21 = vld [vmem:[%s0 + $0x38] sm:$0xff]
  %v22 = vld [vmem:[%s0 + $0x40] sm:$0xff]
  %v23 = vld [vmem:[%s0 + $0x48] sm:$0xff]
  %v24 = vld [vmem:[%s0 + $0x50] sm:$0xff]
  %v25 = vld [vmem:[%s0 + $0x58] sm:$0xff]
  %v26 = vld [vmem:[%s0 + $0x60] sm:$0xff]
  %v27 = vld [vmem:[%s0 + $0x68] sm:$0xff]
  %v28 = vld [vmem:[%s0 + $0x70] sm:$0xff]
  %v29 = vld [vmem:[%s0 + $0x78] sm:$0xff]
  %v30 = vld [vmem:[%s0 + $0x80] sm:$0xff]
  %v31 = vld [vmem:[%s0 + $0x88] sm:$0xff]
  %v32 = vld [vmem:[%s0 + $0x90] sm:$0xff]
  %v33 = vld [vmem:[%s0 + $0x98] sm:$0xff]
  %v34 = vld [vmem:[%s0 + $0xa0] sm:$0xff]
  %v35 = vld [vmem:[%s0 + $0xa8] sm:$0xff]
  %v36 = vld [vmem:[%s0 + $0xb0] sm:$0xff]
  %v37 = vld [vmem:[%s0 + $0xb8] sm:$0xff]
  %v38 = vld [vmem:[%s0 + $0xc0] sm:$0xff]
  %v39 = vld [vmem:[%s0 + $0xc8] sm:$0xff]
  %v40 = vld [vmem:[%s0 + $0xd0] sm:$0xff]
  %v41 = vld [vmem:[%s0 + $0xd8] sm:$0xff]
  %v42 = vld [vmem:[%s0 + $0xe0] sm:$0xff]
  %v43 = vld [vmem:[%s0 + $0xe8] sm:$0xff]
  %v44 = vld [vmem:[%s0 + $0xf0] sm:$0xff]
  %v45 = vld [vmem:[%s0 + $0xf8] sm:$0xff]
  %v46 = vld [vmem:[%s0 + $0x100] sm:$0xff]
  %v47 = vld [vmem:[%s0 + $0x108] sm:$0xff]
  %v48 = vld [vmem:[%s0 + $0x110] sm:$0xff]
  %v49 = vld [vmem:[%s0 + $0x118] sm:$0xff]
  %v50 = vld [vmem:[%s0 + $0x120] sm:$0xff]
  %v51 = vld [vmem:[%s0 + $0x128] sm:$0xff]
  %v52 = vld [vmem:[%s0 + $0x130] sm:$0xff]
  %v53 = vld [vmem:[%s0 + $0x138] sm:$0xff]
  %v54 = vld [vmem:[%s0 + $0x140] sm:$0xff]
  %v55 = vld [vmem:[%s0 + $0x148] sm:$0xff]
  %v56 = vld [vmem:[%s0 + $0x150] sm:$0xff]
  %v57 = vld [vmem:[%s0 + $0x158] sm:$0xff]
  %v58 = vld [vmem:[%s0 + $0x160] sm:$0xff]
  %v59 = vld [vmem:[%s0 + $0x168] sm:$0xff]
  %v60 = vld [vmem:[%s0 + $0x170] sm:$0xff]
  %v61 = vld [vmem:[%s0 + $0x178] sm:$0xff]
  %v62 = vld [vmem:[%s1] sm:$0xff]
  %v63 = vld [vmem:[%s1 + $0x8] sm:$0xff]
  %v64 = vld [vmem:[%s1 + $0x10] sm:$0xff]
  %v65 = vld [vmem:[%s1 + $0x18] sm:$0xff]
  %v66 = vld [vmem:[%s1 + $0x20] sm:$0xff]
  %v67 = vld [vmem:[%s1 + $0x28] sm:$0xff]
  %v68 = vld [vmem:[%s1 + $0x30] sm:$0xff]
  %v69 = vld [vmem:[%s1 + $0x38] sm:$0xff]
  %v70 = vld [vmem:[%s1 + $0x40] sm:$0xff]
  %v71 = vld [vmem:[%s1 + $0x48] sm:$0xff]
  %v72 = vld [vmem:[%s1 + $0x50] sm:$0xff]
  %v73 = vld [vmem:[%s1 + $0x58] sm:$0xff]
  %v74 = vld [vmem:[%s1 + $0x60] sm:$0xff]
  %v75 = vld [vmem:[%s1 + $0x68] sm:$0xff]
  %v76 = vld [vmem:[%s1 + $0x70] sm:$0xff]
  %v77 = vld [vmem:[%s1 + $0x78] sm:$0xff]
  %v78 = vld [vmem:[%s1 + $0x80] sm:$0xff]
  %v79 = vld [vmem:[%s1 + $0x88] sm:$0xff]
  %v80 = vld [vmem:[%s1 + $0x90] sm:$0xff]
  %v81 = vld [vmem:[%s1 + $0x98] sm:$0xff]
  %v82 = vld [vmem:[%s1 + $0xa0] sm:$0xff]
  %v83 = vld [vmem:[%s1 + $0xa8] sm:$0xff]
  %v84 = vld [vmem:[%s1 + $0xb0] sm:$0xff]
  %v85 = vld [vmem:[%s1 + $0xb8] sm:$0xff]
  %v86 = vld [vmem:[%s1 + $0xc0] sm:$0xff]
  %v87 = vld [vmem:[%s1 + $0xc8] sm:$0xff]
  %v88 = vld [vmem:[%s1 + $0xd0] sm:$0xff]
  %v89 = vld [vmem:[%s1 + $0xd8] sm:$0xff]
  %v90 = vld [vmem:[%s1 + $0xe0] sm:$0xff]
  %v91 = vld [vmem:[%s1 + $0xe8] sm:$0xff]
  %v92 = vld [vmem:[%s1 + $0xf0] sm:$0xff]
  %v93 = vld [vmem:[%s1 + $0xf8] sm:$0xff]
  %v94 = vld [vmem:[%s1 + $0x100] sm:$0xff]
  %v95 = vld [vmem:[%s1 + $0x108] sm:$0xff]
  %v96 = vld [vmem:[%s1 + $0x110] sm:$0xff]
  %v97 = vld [vmem:[%s1 + $0x118] sm:$0xff]
  %v98 = vld [vmem:[%s1 + $0x120] sm:$0xff]
  %v99 = vld [vmem:[%s1 + $0x128] sm:$0xff]
  %v100 = vld [vmem:[%s1 + $0x130] sm:$0xff]
  %v101 = vld [vmem:[%s1 + $0x138] sm:$0xff]
  %v102 = vld [vmem:[%s1 + $0x140] sm:$0xff]
  %v103 = vld [vmem:[%s1 + $0x148] sm:$0xff]
  %v104 = vld [vmem:[%s1 + $0x150] sm:$0xff]
  %v105 = vld [vmem:[%s1 + $0x158] sm:$0xff]
  %v106 = vld [vmem:[%s1 + $0x160] sm:$0xff]
  %v107 = vld [vmem:[%s1 + $0x168] sm:$0xff]
  %v108 = vld [vmem:[%s1 + $0x170] sm:$0xff]
  %v109 = vld [vmem:[%s1 + $0x178] sm:$0xff]
  %v110 = vld [vmem:[%s1 + $0x180] sm:$0xff]
  %v111 = vld [vmem:[%s1 + $0x188] sm:$0xff]
  %v112 = vld [vmem:[%s1 + $0x190] sm:$0xff]
  %v113 = vld [vmem:[%s1 + $0x198] sm:$0xff]
  %v114 = vld [vmem:[%s1 + $0x1a0] sm:$0xff]
  %v115 = vld [vmem:[%s1 + $0x1a8] sm:$0xff]
  %v116 = vld [vmem:[%s1 + $0x1b0] sm:$0xff]
  %v117 = vld [vmem:[%s1 + $0x1b8] sm:$0xff]
  %v118 = vld [vmem:[%s1 + $0x1c0] sm:$0xff]
  %v119 = vld [vmem:[%s1 + $0x1c8] sm:$0xff]
  %v120 = vld [vmem:[%s1 + $0x1d0] sm:$0xff]
  %v121 = vld [vmem:[%s1 + $0x1d8] sm:$0xff]
  %v122 = vld [vmem:[%s1 + $0x1e0] sm:$0xff]
  %v123 = vld [vmem:[%s1 + $0x1e8] sm:$0xff]
  %v124 = vld [vmem:[%s1 + $0x1f0] sm:$0xff]
  %v125 = vld [vmem:[%s1 + $0x1f8] sm:$0xff]
  %v126 = vld [vmem:[%s1 + $0x200] sm:$0xff]
  %v127 = vld [vmem:[%s1 + $0x208] sm:$0xff]
  %v128 = vld [vmem:[%s1 + $0x210] sm:$0xff]
  %v129 = vld [vmem:[%s1 + $0x218] sm:$0xff]
  %v130 = vld [vmem:[%s1 + $0x220] sm:$0xff]
  %v131 = vld [vmem:[%s1 + $0x228] sm:$0xff]
  %v132 = vld [vmem:[%s1 + $0x230] sm:$0xff]
  %v133 = vld [vmem:[%s1 + $0x238] sm:$0xff]
  %v134 = vld [vmem:[%s1 + $0x240] sm:$0xff]
  %v135 = vld [vmem:[%s1 + $0x248] sm:$0xff]
  %v136 = vld [vmem:[%s1 + $0x250] sm:$0xff]
  %v137 = vld [vmem:[%s1 + $0x258] sm:$0xff]
  %v138 = vld [vmem:[%s1 + $0x260] sm:$0xff]
  %v139 = vld [vmem:[%s1 + $0x268] sm:$0xff]
  %v140 = vld [vmem:[%s1 + $0x270] sm:$0xff]
  %v141 = vld [vmem:[%s1 + $0x278] sm:$0xff]
  %v142 = vld [vmem:[%s1 + $0x280] sm:$0xff]
  %v143 = vld [vmem:[%s1 + $0x288] sm:$0xff]
  %v144 = vld [vmem:[%s1 + $0x290] sm:$0xff]
  %v145 = vld [vmem:[%s1 + $0x298] sm:$0xff]
  %v146 = vld [vmem:[%s1 + $0x2a0] sm:$0xff]
  %v147 = vld [vmem:[%s1 + $0x2a8] sm:$0xff]
  %v148 = vld [vmem:[%s1 + $0x2b0] sm:$0xff]
  %v149 = vld [vmem:[%s1 + $0x2b8] sm:$0xff]
  %v150 = vld [vmem:[%s1 + $0x2c0] sm:$0xff]
  %v151 = vld [vmem:[%s1 + $0x2c8] sm:$0xff]
  %v152 = vld [vmem:[%s1 + $0x2d0] sm:$0xff]
  %v153 = vld [vmem:[%s1 + $0x2d8] sm:$0xff]
  %v154 = vld [vmem:[%s1 + $0x2e0] sm:$0xff]
  %v155 = vld [vmem:[%s1 + $0x2e8] sm:$0xff]
  %v156 = vld [vmem:[%s1 + $0x2f0] sm:$0xff]
  %v157 = vld [vmem:[%s1 + $0x2f8] sm:$0xff]
  %v158 = vld [vmem:[%s2] sm:$0x3]
  %v160 = vlaneseq
  %v161 = vshrl.u32 %v160, 7
  %v162 = vsub.s32 0, %v161
  %v163 = vrot.slane %v158, %v162
  %v164 = vlaneseq
  %v165 = vshrl.u32 %v164, 7
  %v166 = vsub.s32 1, %v165
  %v167 = vrot.slane %v158, %v166
  %v218 = vunpack.c.l.b16 %v14
  %v219 = vunpack.c.h.b16 %v14
  %v220 = vunpack.c.l.b16 %v15
  %v221 = vunpack.c.h.b16 %v15
  %v222 = vunpack.c.l.b16 %v16
  %v223 = vunpack.c.h.b16 %v16
  %v224 = vunpack.c.l.b16 %v17
  %v225 = vunpack.c.h.b16 %v17
  %v226 = vunpack.c.l.b16 %v18
  %v227 = vunpack.c.h.b16 %v18
  %v228 = vunpack.c.l.b16 %v19
  %v229 = vunpack.c.h.b16 %v19
  %v230 = vunpack.c.l.b16 %v20
  %v231 = vunpack.c.h.b16 %v20
  %v232 = vunpack.c.l.b16 %v21
  %v233 = vunpack.c.h.b16 %v21
  %v234 = vunpack.c.l.b16 %v22
  %v235 = vunpack.c.h.b16 %v22
  %v236 = vunpack.c.l.b16 %v23
  %v237 = vunpack.c.h.b16 %v23
  %v238 = vunpack.c.l.b16 %v24
  %v239 = vunpack.c.h.b16 %v24
  %v240 = vunpack.c.l.b16 %v25
  %v241 = vunpack.c.h.b16 %v25
  %v242 = vunpack.c.l.b16 %v26
  %v243 = vunpack.c.h.b16 %v26
  %v244 = vunpack.c.l.b16 %v27
  %v245 = vunpack.c.h.b16 %v27
  %v246 = vunpack.c.l.b16 %v28
  %v247 = vunpack.c.h.b16 %v28
  %v248 = vunpack.c.l.b16 %v29
  %v249 = vunpack.c.h.b16 %v29
  %v250 = vunpack.c.l.b16 %v30
  %v251 = vunpack.c.h.b16 %v30
  %v252 = vunpack.c.l.b16 %v31
  %v253 = vunpack.c.h.b16 %v31
  %v254 = vunpack.c.l.b16 %v32
  %v255 = vunpack.c.h.b16 %v32
  %v256 = vunpack.c.l.b16 %v33
  %v257 = vunpack.c.h.b16 %v33
  %v258 = vunpack.c.l.b16 %v34
  %v259 = vunpack.c.h.b16 %v34
  %v260 = vunpack.c.l.b16 %v35
  %v261 = vunpack.c.h.b16 %v35
  %v262 = vunpack.c.l.b16 %v36
  %v263 = vunpack.c.h.b16 %v36
  %v264 = vunpack.c.l.b16 %v37
  %v265 = vunpack.c.h.b16 %v37
  %v266 = vunpack.c.l.b16 %v38
  %v267 = vunpack.c.h.b16 %v38
  %v268 = vunpack.c.l.b16 %v39
  %v269 = vunpack.c.h.b16 %v39
  %v270 = vunpack.c.l.b16 %v40
  %v271 = vunpack.c.h.b16 %v40
  %v272 = vunpack.c.l.b16 %v41
  %v273 = vunpack.c.h.b16 %v41
  %v274 = vunpack.c.l.b16 %v42
  %v275 = vunpack.c.h.b16 %v42
  %v276 = vunpack.c.l.b16 %v43
  %v277 = vunpack.c.h.b16 %v43
  %v278 = vunpack.c.l.b16 %v44
  %v279 = vunpack.c.h.b16 %v44
  %v280 = vunpack.c.l.b16 %v45
  %v281 = vunpack.c.h.b16 %v45
  %v282 = vunpack.c.l.b16 %v46
  %v283 = vunpack.c.h.b16 %v46
  %v284 = vunpack.c.l.b16 %v47
  %v285 = vunpack.c.h.b16 %v47
  %v286 = vunpack.c.l.b16 %v48
  %v287 = vunpack.c.h.b16 %v48
  %v288 = vunpack.c.l.b16 %v49
  %v289 = vunpack.c.h.b16 %v49
  %v290 = vunpack.c.l.b16 %v50
  %v291 = vunpack.c.h.b16 %v50
  %v292 = vunpack.c.l.b16 %v51
  %v293 = vunpack.c.h.b16 %v51
  %v294 = vunpack.c.l.b16 %v52
  %v295 = vunpack.c.h.b16 %v52
  %v296 = vunpack.c.l.b16 %v53
  %v297 = vunpack.c.h.b16 %v53
  %v298 = vunpack.c.l.b16 %v54
  %v299 = vunpack.c.h.b16 %v54
  %v300 = vunpack.c.l.b16 %v55
  %v301 = vunpack.c.h.b16 %v55
  %v302 = vunpack.c.l.b16 %v56
  %v303 = vunpack.c.h.b16 %v56
  %v304 = vunpack.c.l.b16 %v57
  %v305 = vunpack.c.h.b16 %v57
  %v306 = vunpack.c.l.b16 %v58
  %v307 = vunpack.c.h.b16 %v58
  %v308 = vunpack.c.l.b16 %v59
  %v309 = vunpack.c.h.b16 %v59
  %v310 = vunpack.c.l.b16 %v60
  %v311 = vunpack.c.h.b16 %v60
  %v312 = vunpack.c.l.b16 %v61
  %v313 = vunpack.c.h.b16 %v61
  %v314 = vpack.c.b16 %v224, %v218
  %v315 = vpack.c.b16 %v225, %v219
  %v316 = vpack.c.b16 %v226, %v220
  %v317 = vpack.c.b16 %v227, %v221
  %v318 = vpack.c.b16 %v228, %v222
  %v319 = vpack.c.b16 %v229, %v223
  %v320 = vpack.c.b16 %v236, %v230
  %v321 = vpack.c.b16 %v237, %v231
  %v322 = vpack.c.b16 %v238, %v232
  %v323 = vpack.c.b16 %v239, %v233
  %v324 = vpack.c.b16 %v240, %v234
  %v325 = vpack.c.b16 %v241, %v235
  %v326 = vpack.c.b16 %v248, %v242
  %v327 = vpack.c.b16 %v249, %v243
  %v328 = vpack.c.b16 %v250, %v244
  %v329 = vpack.c.b16 %v251, %v245
  %v330 = vpack.c.b16 %v252, %v246
  %v331 = vpack.c.b16 %v253, %v247
  %v332 = vpack.c.b16 %v260, %v254
  %v333 = vpack.c.b16 %v261, %v255
  %v334 = vpack.c.b16 %v262, %v256
  %v335 = vpack.c.b16 %v263, %v257
  %v336 = vpack.c.b16 %v264, %v258
  %v337 = vpack.c.b16 %v265, %v259
  %v338 = vpack.c.b16 %v272, %v266
  %v339 = vpack.c.b16 %v273, %v267
  %v340 = vpack.c.b16 %v274, %v268
  %v341 = vpack.c.b16 %v275, %v269
  %v342 = vpack.c.b16 %v276, %v270
  %v343 = vpack.c.b16 %v277, %v271
  %v344 = vpack.c.b16 %v284, %v278
  %v345 = vpack.c.b16 %v285, %v279
  %v346 = vpack.c.b16 %v286, %v280
  %v347 = vpack.c.b16 %v287, %v281
  %v348 = vpack.c.b16 %v288, %v282
  %v349 = vpack.c.b16 %v289, %v283
  %v350 = vpack.c.b16 %v296, %v290
  %v351 = vpack.c.b16 %v297, %v291
  %v352 = vpack.c.b16 %v298, %v292
  %v353 = vpack.c.b16 %v299, %v293
  %v354 = vpack.c.b16 %v300, %v294
  %v355 = vpack.c.b16 %v301, %v295
  %v356 = vpack.c.b16 %v308, %v302
  %v357 = vpack.c.b16 %v309, %v303
  %v358 = vpack.c.b16 %v310, %v304
  %v359 = vpack.c.b16 %v311, %v305
  %v360 = vpack.c.b16 %v312, %v306
  %v361 = vpack.c.b16 %v313, %v307
  %v506 = vunpack.c.l.b16 %v62
  %v507 = vunpack.c.h.b16 %v62
  %v508 = vunpack.c.l.b16 %v63
  %v509 = vunpack.c.h.b16 %v63
  %v510 = vunpack.c.l.b16 %v64
  %v511 = vunpack.c.h.b16 %v64
  %v512 = vunpack.c.l.b16 %v65
  %v513 = vunpack.c.h.b16 %v65
  %v514 = vunpack.c.l.b16 %v66
  %v515 = vunpack.c.h.b16 %v66
  %v516 = vunpack.c.l.b16 %v67
  %v517 = vunpack.c.h.b16 %v67
  %v518 = vunpack.c.l.b16 %v68
  %v519 = vunpack.c.h.b16 %v68
  %v520 = vunpack.c.l.b16 %v69
  %v521 = vunpack.c.h.b16 %v69
  %v522 = vunpack.c.l.b16 %v70
  %v523 = vunpack.c.h.b16 %v70
  %v524 = vunpack.c.l.b16 %v71
  %v525 = vunpack.c.h.b16 %v71
  %v526 = vunpack.c.l.b16 %v72
  %v527 = vunpack.c.h.b16 %v72
  %v528 = vunpack.c.l.b16 %v73
  %v529 = vunpack.c.h.b16 %v73
  %v530 = vunpack.c.l.b16 %v74
  %v531 = vunpack.c.h.b16 %v74
  %v532 = vunpack.c.l.b16 %v75
  %v533 = vunpack.c.h.b16 %v75
  %v534 = vunpack.c.l.b16 %v76
  %v535 = vunpack.c.h.b16 %v76
  %v536 = vunpack.c.l.b16 %v77
  %v537 = vunpack.c.h.b16 %v77
  %v538 = vunpack.c.l.b16 %v78
  %v539 = vunpack.c.h.b16 %v78
  %v540 = vunpack.c.l.b16 %v79
  %v541 = vunpack.c.h.b16 %v79
  %v542 = vunpack.c.l.b16 %v80
  %v543 = vunpack.c.h.b16 %v80
  %v544 = vunpack.c.l.b16 %v81
  %v545 = vunpack.c.h.b16 %v81
  %v546 = vunpack.c.l.b16 %v82
  %v547 = vunpack.c.h.b16 %v82
  %v548 = vunpack.c.l.b16 %v83
  %v549 = vunpack.c.h.b16 %v83
  %v550 = vunpack.c.l.b16 %v84
  %v551 = vunpack.c.h.b16 %v84
  %v552 = vunpack.c.l.b16 %v85
  %v553 = vunpack.c.h.b16 %v85
  %v554 = vunpack.c.l.b16 %v86
  %v555 = vunpack.c.h.b16 %v86
  %v556 = vunpack.c.l.b16 %v87
  %v557 = vunpack.c.h.b16 %v87
  %v558 = vunpack.c.l.b16 %v88
  %v559 = vunpack.c.h.b16 %v88
  %v560 = vunpack.c.l.b16 %v89
  %v561 = vunpack.c.h.b16 %v89
  %v562 = vunpack.c.l.b16 %v90
  %v563 = vunpack.c.h.b16 %v90
  %v564 = vunpack.c.l.b16 %v91
  %v565 = vunpack.c.h.b16 %v91
  %v566 = vunpack.c.l.b16 %v92
  %v567 = vunpack.c.h.b16 %v92
  %v568 = vunpack.c.l.b16 %v93
  %v569 = vunpack.c.h.b16 %v93
  %v570 = vunpack.c.l.b16 %v94
  %v571 = vunpack.c.h.b16 %v94
  %v572 = vunpack.c.l.b16 %v95
  %v573 = vunpack.c.h.b16 %v95
  %v574 = vunpack.c.l.b16 %v96
  %v575 = vunpack.c.h.b16 %v96
  %v576 = vunpack.c.l.b16 %v97
  %v577 = vunpack.c.h.b16 %v97
  %v578 = vunpack.c.l.b16 %v98
  %v579 = vunpack.c.h.b16 %v98
  %v580 = vunpack.c.l.b16 %v99
  %v581 = vunpack.c.h.b16 %v99
  %v582 = vunpack.c.l.b16 %v100
  %v583 = vunpack.c.h.b16 %v100
  %v584 = vunpack.c.l.b16 %v101
  %v585 = vunpack.c.h.b16 %v101
  %v586 = vunpack.c.l.b16 %v102
  %v587 = vunpack.c.h.b16 %v102
  %v588 = vunpack.c.l.b16 %v103
  %v589 = vunpack.c.h.b16 %v103
  %v590 = vunpack.c.l.b16 %v104
  %v591 = vunpack.c.h.b16 %v104
  %v592 = vunpack.c.l.b16 %v105
  %v593 = vunpack.c.h.b16 %v105
  %v594 = vunpack.c.l.b16 %v106
  %v595 = vunpack.c.h.b16 %v106
  %v596 = vunpack.c.l.b16 %v107
  %v597 = vunpack.c.h.b16 %v107
  %v598 = vunpack.c.l.b16 %v108
  %v599 = vunpack.c.h.b16 %v108
  %v600 = vunpack.c.l.b16 %v109
  %v601 = vunpack.c.h.b16 %v109
  %v602 = vunpack.c.l.b16 %v110
  %v603 = vunpack.c.h.b16 %v110
  %v604 = vunpack.c.l.b16 %v111
  %v605 = vunpack.c.h.b16 %v111
  %v606 = vunpack.c.l.b16 %v112
  %v607 = vunpack.c.h.b16 %v112
  %v608 = vunpack.c.l.b16 %v113
  %v609 = vunpack.c.h.b16 %v113
  %v610 = vunpack.c.l.b16 %v114
  %v611 = vunpack.c.h.b16 %v114
  %v612 = vunpack.c.l.b16 %v115
  %v613 = vunpack.c.h.b16 %v115
  %v614 = vunpack.c.l.b16 %v116
  %v615 = vunpack.c.h.b16 %v116
  %v616 = vunpack.c.l.b16 %v117
  %v617 = vunpack.c.h.b16 %v117
  %v618 = vunpack.c.l.b16 %v118
  %v619 = vunpack.c.h.b16 %v118
  %v620 = vunpack.c.l.b16 %v119
  %v621 = vunpack.c.h.b16 %v119
  %v622 = vunpack.c.l.b16 %v120
  %v623 = vunpack.c.h.b16 %v120
  %v624 = vunpack.c.l.b16 %v121
  %v625 = vunpack.c.h.b16 %v121
  %v626 = vunpack.c.l.b16 %v122
  %v627 = vunpack.c.h.b16 %v122
  %v628 = vunpack.c.l.b16 %v123
  %v629 = vunpack.c.h.b16 %v123
  %v630 = vunpack.c.l.b16 %v124
  %v631 = vunpack.c.h.b16 %v124
  %v632 = vunpack.c.l.b16 %v125
  %v633 = vunpack.c.h.b16 %v125
  %v634 = vunpack.c.l.b16 %v126
  %v635 = vunpack.c.h.b16 %v126
  %v636 = vunpack.c.l.b16 %v127
  %v637 = vunpack.c.h.b16 %v127
  %v638 = vunpack.c.l.b16 %v128
  %v639 = vunpack.c.h.b16 %v128
  %v640 = vunpack.c.l.b16 %v129
  %v641 = vunpack.c.h.b16 %v129
  %v642 = vunpack.c.l.b16 %v130
  %v643 = vunpack.c.h.b16 %v130
  %v644 = vunpack.c.l.b16 %v131
  %v645 = vunpack.c.h.b16 %v131
  %v646 = vunpack.c.l.b16 %v132
  %v647 = vunpack.c.h.b16 %v132
  %v648 = vunpack.c.l.b16 %v133
  %v649 = vunpack.c.h.b16 %v133
  %v650 = vunpack.c.l.b16 %v134
  %v651 = vunpack.c.h.b16 %v134
  %v652 = vunpack.c.l.b16 %v135
  %v653 = vunpack.c.h.b16 %v135
  %v654 = vunpack.c.l.b16 %v136
  %v655 = vunpack.c.h.b16 %v136
  %v656 = vunpack.c.l.b16 %v137
  %v657 = vunpack.c.h.b16 %v137
  %v658 = vunpack.c.l.b16 %v138
  %v659 = vunpack.c.h.b16 %v138
  %v660 = vunpack.c.l.b16 %v139
  %v661 = vunpack.c.h.b16 %v139
  %v662 = vunpack.c.l.b16 %v140
  %v663 = vunpack.c.h.b16 %v140
  %v664 = vunpack.c.l.b16 %v141
  %v665 = vunpack.c.h.b16 %v141
  %v666 = vunpack.c.l.b16 %v142
  %v667 = vunpack.c.h.b16 %v142
  %v668 = vunpack.c.l.b16 %v143
  %v669 = vunpack.c.h.b16 %v143
  %v670 = vunpack.c.l.b16 %v144
  %v671 = vunpack.c.h.b16 %v144
  %v672 = vunpack.c.l.b16 %v145
  %v673 = vunpack.c.h.b16 %v145
  %v674 = vunpack.c.l.b16 %v146
  %v675 = vunpack.c.h.b16 %v146
  %v676 = vunpack.c.l.b16 %v147
  %v677 = vunpack.c.h.b16 %v147
  %v678 = vunpack.c.l.b16 %v148
  %v679 = vunpack.c.h.b16 %v148
  %v680 = vunpack.c.l.b16 %v149
  %v681 = vunpack.c.h.b16 %v149
  %v682 = vunpack.c.l.b16 %v150
  %v683 = vunpack.c.h.b16 %v150
  %v684 = vunpack.c.l.b16 %v151
  %v685 = vunpack.c.h.b16 %v151
  %v686 = vunpack.c.l.b16 %v152
  %v687 = vunpack.c.h.b16 %v152
  %v688 = vunpack.c.l.b16 %v153
  %v689 = vunpack.c.h.b16 %v153
  %v690 = vunpack.c.l.b16 %v154
  %v691 = vunpack.c.h.b16 %v154
  %v692 = vunpack.c.l.b16 %v155
  %v693 = vunpack.c.h.b16 %v155
  %v694 = vunpack.c.l.b16 %v156
  %v695 = vunpack.c.h.b16 %v156
  %v696 = vunpack.c.l.b16 %v157
  %v697 = vunpack.c.h.b16 %v157
  %v698 = vpack.c.b16 %v508, %v506
  %v699 = vpack.c.b16 %v509, %v507
  %v700 = vpack.c.b16 %v512, %v510
  %v701 = vpack.c.b16 %v513, %v511
  %v702 = vpack.c.b16 %v516, %v514
  %v703 = vpack.c.b16 %v517, %v515
  %v704 = vpack.c.b16 %v520, %v518
  %v705 = vpack.c.b16 %v521, %v519
  %v706 = vpack.c.b16 %v524, %v522
  %v707 = vpack.c.b16 %v525, %v523
  %v708 = vpack.c.b16 %v528, %v526
  %v709 = vpack.c.b16 %v529, %v527
  %v710 = vpack.c.b16 %v532, %v530
  %v711 = vpack.c.b16 %v533, %v531
  %v712 = vpack.c.b16 %v536, %v534
  %v713 = vpack.c.b16 %v537, %v535
  %v714 = vpack.c.b16 %v540, %v538
  %v715 = vpack.c.b16 %v541, %v539
  %v716 = vpack.c.b16 %v544, %v542
  %v717 = vpack.c.b16 %v545, %v543
  %v718 = vpack.c.b16 %v548, %v546
  %v719 = vpack.c.b16 %v549, %v547
  %v720 = vpack.c.b16 %v552, %v550
  %v721 = vpack.c.b16 %v553, %v551
  %v722 = vpack.c.b16 %v556, %v554
  %v723 = vpack.c.b16 %v557, %v555
  %v724 = vpack.c.b16 %v560, %v558
  %v725 = vpack.c.b16 %v561, %v559
  %v726 = vpack.c.b16 %v564, %v562
  %v727 = vpack.c.b16 %v565, %v563
  %v728 = vpack.c.b16 %v568, %v566
  %v729 = vpack.c.b16 %v569, %v567
  %v730 = vpack.c.b16 %v572, %v570
  %v731 = vpack.c.b16 %v573, %v571
  %v732 = vpack.c.b16 %v576, %v574
  %v733 = vpack.c.b16 %v577, %v575
  %v734 = vpack.c.b16 %v580, %v578
  %v735 = vpack.c.b16 %v581, %v579
  %v736 = vpack.c.b16 %v584, %v582
  %v737 = vpack.c.b16 %v585, %v583
  %v738 = vpack.c.b16 %v588, %v586
  %v739 = vpack.c.b16 %v589, %v587
  %v740 = vpack.c.b16 %v592, %v590
  %v741 = vpack.c.b16 %v593, %v591
  %v742 = vpack.c.b16 %v596, %v594
  %v743 = vpack.c.b16 %v597, %v595
  %v744 = vpack.c.b16 %v600, %v598
  %v745 = vpack.c.b16 %v601, %v599
  %v746 = vpack.c.b16 %v604, %v602
  %v747 = vpack.c.b16 %v605, %v603
  %v748 = vpack.c.b16 %v608, %v606
  %v749 = vpack.c.b16 %v609, %v607
  %v750 = vpack.c.b16 %v612, %v610
  %v751 = vpack.c.b16 %v613, %v611
  %v752 = vpack.c.b16 %v616, %v614
  %v753 = vpack.c.b16 %v617, %v615
  %v754 = vpack.c.b16 %v620, %v618
  %v755 = vpack.c.b16 %v621, %v619
  %v756 = vpack.c.b16 %v624, %v622
  %v757 = vpack.c.b16 %v625, %v623
  %v758 = vpack.c.b16 %v628, %v626
  %v759 = vpack.c.b16 %v629, %v627
  %v760 = vpack.c.b16 %v632, %v630
  %v761 = vpack.c.b16 %v633, %v631
  %v762 = vpack.c.b16 %v636, %v634
  %v763 = vpack.c.b16 %v637, %v635
  %v764 = vpack.c.b16 %v640, %v638
  %v765 = vpack.c.b16 %v641, %v639
  %v766 = vpack.c.b16 %v644, %v642
  %v767 = vpack.c.b16 %v645, %v643
  %v768 = vpack.c.b16 %v648, %v646
  %v769 = vpack.c.b16 %v649, %v647
  %v770 = vpack.c.b16 %v652, %v650
  %v771 = vpack.c.b16 %v653, %v651
  %v772 = vpack.c.b16 %v656, %v654
  %v773 = vpack.c.b16 %v657, %v655
  %v774 = vpack.c.b16 %v660, %v658
  %v775 = vpack.c.b16 %v661, %v659
  %v776 = vpack.c.b16 %v664, %v662
  %v777 = vpack.c.b16 %v665, %v663
  %v778 = vpack.c.b16 %v668, %v666
  %v779 = vpack.c.b16 %v669, %v667
  %v780 = vpack.c.b16 %v672, %v670
  %v781 = vpack.c.b16 %v673, %v671
  %v782 = vpack.c.b16 %v676, %v674
  %v783 = vpack.c.b16 %v677, %v675
  %v784 = vpack.c.b16 %v680, %v678
  %v785 = vpack.c.b16 %v681, %v679
  %v786 = vpack.c.b16 %v684, %v682
  %v787 = vpack.c.b16 %v685, %v683
  %v788 = vpack.c.b16 %v688, %v686
  %v789 = vpack.c.b16 %v689, %v687
  %v790 = vpack.c.b16 %v692, %v690
  %v791 = vpack.c.b16 %v693, %v691
  %v792 = vpack.c.b16 %v696, %v694
  %v793 = vpack.c.b16 %v697, %v695
  %890 = vmatprep.subr.bf16.mxu0 %v713
  %891 = vmatpush1.bf16.msra.mxu0 %v712
  %892 = vmatprep.subr.bf16.mxu0 %v711
  %893 = vmatpush1.bf16.msra.mxu0 %v710
  %894 = vmatprep.subr.bf16.mxu0 %v709
  %895 = vmatpush1.bf16.msra.mxu0 %v708
  %896 = vmatprep.subr.bf16.mxu0 %v707
  %897 = vmatpush1.bf16.msra.mxu0 %v706
  %898 = vmatprep.subr.bf16.mxu0 %v705
  %899 = vmatpush1.bf16.msra.mxu0 %v704
  %900 = vmatprep.subr.bf16.mxu0 %v703
  %901 = vmatpush1.bf16.msra.mxu0 %v702
  %902 = vmatprep.subr.bf16.mxu0 %v701
  %903 = vmatpush1.bf16.msra.mxu0 %v700
  %904 = vmatprep.subr.bf16.mxu0 %v699
  %905 = vmatpush1.bf16.msra.mxu0 %v698
  %906 = vmatprep.subr.bf16.mxu0 %v729
  %907 = vmatpush2.bf16.msra.mxu0 %v728
  %908 = vmatprep.subr.bf16.mxu0 %v727
  %909 = vmatpush2.bf16.msra.mxu0 %v726
  %910 = vmatprep.subr.bf16.mxu0 %v725
  %911 = vmatpush2.bf16.msra.mxu0 %v724
  %912 = vmatprep.subr.bf16.mxu0 %v723
  %913 = vmatpush2.bf16.msra.mxu0 %v722
  %914 = vmatprep.subr.bf16.mxu0 %v721
  %915 = vmatpush2.bf16.msra.mxu0 %v720
  %916 = vmatprep.subr.bf16.mxu0 %v719
  %917 = vmatpush2.bf16.msra.mxu0 %v718
  %918 = vmatprep.subr.bf16.mxu0 %v717
  %919 = vmatpush2.bf16.msra.mxu0 %v716
  %920 = vmatprep.subr.bf16.mxu0 %v715
  %921 = vmatpush2.bf16.msra.mxu0 %v714
  %922 = vmatprep.mubr.bf16.mxu0 %v315
  %923 = vmatmul.mubr.bf16.gmra.mxu0 %v314
  %v924 = vpop.f32.mrf.mxu0
  %v925 = vadd.f32 %v163, %v924
  %v926 = vpop.f32.mrf.mxu0
  %v927 = vadd.f32 %v167, %v926
  %v928 = vpop.f32.mrf.mxu0
  %v929 = vadd.f32 %v163, %v928
  %v930 = vpop.f32.mrf.mxu0
  %v931 = vadd.f32 %v167, %v930
  %932 = vmatprep.mubr.bf16.mxu0 %v321
  %933 = vmatmul.mubr.bf16.gmra.mxu0 %v320
  %v934 = vpop.f32.mrf.mxu0
  %v935 = vadd.f32 %v163, %v934
  %v936 = vpop.f32.mrf.mxu0
  %v937 = vadd.f32 %v167, %v936
  %v938 = vpop.f32.mrf.mxu0
  %v939 = vadd.f32 %v163, %v938
  %v940 = vpop.f32.mrf.mxu0
  %v941 = vadd.f32 %v167, %v940
  %942 = vmatprep.mubr.bf16.mxu0 %v327
  %943 = vmatmul.mubr.bf16.gmra.mxu0 %v326
  %v944 = vpop.f32.mrf.mxu0
  %v945 = vadd.f32 %v163, %v944
  %v946 = vpop.f32.mrf.mxu0
  %v947 = vadd.f32 %v167, %v946
  %v948 = vpop.f32.mrf.mxu0
  %v949 = vadd.f32 %v163, %v948
  %v950 = vpop.f32.mrf.mxu0
  %v951 = vadd.f32 %v167, %v950
  %952 = vmatprep.mubr.bf16.mxu0 %v333
  %953 = vmatmul.mubr.bf16.gmra.mxu0 %v332
  %v954 = vpop.f32.mrf.mxu0
  %v955 = vadd.f32 %v163, %v954
  %v956 = vpop.f32.mrf.mxu0
  %v957 = vadd.f32 %v167, %v956
  %v958 = vpop.f32.mrf.mxu0
  %v959 = vadd.f32 %v163, %v958
  %v960 = vpop.f32.mrf.mxu0
  %v961 = vadd.f32 %v167, %v960
  %962 = vmatprep.mubr.bf16.mxu0 %v339
  %963 = vmatmul.mubr.bf16.gmra.mxu0 %v338
  %v964 = vpop.f32.mrf.mxu0
  %v965 = vadd.f32 %v163, %v964
  %v966 = vpop.f32.mrf.mxu0
  %v967 = vadd.f32 %v167, %v966
  %v968 = vpop.f32.mrf.mxu0
  %v969 = vadd.f32 %v163, %v968
  %v970 = vpop.f32.mrf.mxu0
  %v971 = vadd.f32 %v167, %v970
  %972 = vmatprep.mubr.bf16.mxu0 %v345
  %973 = vmatmul.mubr.bf16.gmra.mxu0 %v344
  %v974 = vpop.f32.mrf.mxu0
  %v975 = vadd.f32 %v163, %v974
  %v976 = vpop.f32.mrf.mxu0
  %v977 = vadd.f32 %v167, %v976
  %v978 = vpop.f32.mrf.mxu0
  %v979 = vadd.f32 %v163, %v978
  %v980 = vpop.f32.mrf.mxu0
  %v981 = vadd.f32 %v167, %v980
  %982 = vmatprep.mubr.bf16.mxu0 %v351
  %983 = vmatmul.mubr.bf16.gmra.mxu0 %v350
  %v984 = vpop.f32.mrf.mxu0
  %v985 = vadd.f32 %v163, %v984
  %v986 = vpop.f32.mrf.mxu0
  %v987 = vadd.f32 %v167, %v986
  %v988 = vpop.f32.mrf.mxu0
  %v989 = vadd.f32 %v163, %v988
  %v990 = vpop.f32.mrf.mxu0
  %v991 = vadd.f32 %v167, %v990
  %992 = vmatprep.mubr.bf16.mxu0 %v357
  %993 = vmatmul.mubr.bf16.gmra.mxu0 %v356
  %v994 = vpop.f32.mrf.mxu0
  %v995 = vadd.f32 %v163, %v994
  %v996 = vpop.f32.mrf.mxu0
  %v997 = vadd.f32 %v167, %v996
  %v998 = vpop.f32.mrf.mxu0
  %v999 = vadd.f32 %v163, %v998
  %v1000 = vpop.f32.mrf.mxu0
  %v1001 = vadd.f32 %v167, %v1000
  %1002 = vdwg.mxu0
  %1003 = vmatprep.subr.bf16.mxu0 %v745
  %1004 = vmatpush1.bf16.msra.mxu0 %v744
  %1005 = vmatprep.subr.bf16.mxu0 %v743
  %1006 = vmatpush1.bf16.msra.mxu0 %v742
  %1007 = vmatprep.subr.bf16.mxu0 %v741
  %1008 = vmatpush1.bf16.msra.mxu0 %v740
  %1009 = vmatprep.subr.bf16.mxu0 %v739
  %1010 = vmatpush1.bf16.msra.mxu0 %v738
  %1011 = vmatprep.subr.bf16.mxu0 %v737
  %1012 = vmatpush1.bf16.msra.mxu0 %v736
  %1013 = vmatprep.subr.bf16.mxu0 %v735
  %1014 = vmatpush1.bf16.msra.mxu0 %v734
  %1015 = vmatprep.subr.bf16.mxu0 %v733
  %1016 = vmatpush1.bf16.msra.mxu0 %v732
  %1017 = vmatprep.subr.bf16.mxu0 %v731
  %1018 = vmatpush1.bf16.msra.mxu0 %v730
  %1019 = vmatprep.subr.bf16.mxu0 %v761
  %1020 = vmatpush2.bf16.msra.mxu0 %v760
  %1021 = vmatprep.subr.bf16.mxu0 %v759
  %1022 = vmatpush2.bf16.msra.mxu0 %v758
  %1023 = vmatprep.subr.bf16.mxu0 %v757
  %1024 = vmatpush2.bf16.msra.mxu0 %v756
  %1025 = vmatprep.subr.bf16.mxu0 %v755
  %1026 = vmatpush2.bf16.msra.mxu0 %v754
  %1027 = vmatprep.subr.bf16.mxu0 %v753
  %1028 = vmatpush2.bf16.msra.mxu0 %v752
  %1029 = vmatprep.subr.bf16.mxu0 %v751
  %1030 = vmatpush2.bf16.msra.mxu0 %v750
  %1031 = vmatprep.subr.bf16.mxu0 %v749
  %1032 = vmatpush2.bf16.msra.mxu0 %v748
  %1033 = vmatprep.subr.bf16.mxu0 %v747
  %1034 = vmatpush2.bf16.msra.mxu0 %v746
  %1035 = vmatprep.mubr.bf16.mxu0 %v317
  %1036 = vmatmul.mubr.bf16.gmra.mxu0 %v316
  %v1037 = vpop.f32.mrf.mxu0
  %v1038 = vadd.f32 %v925, %v1037
  %v1039 = vpop.f32.mrf.mxu0
  %v1040 = vadd.f32 %v927, %v1039
  %v1041 = vpop.f32.mrf.mxu0
  %v1042 = vadd.f32 %v929, %v1041
  %v1043 = vpop.f32.mrf.mxu0
  %v1044 = vadd.f32 %v931, %v1043
  %1045 = vmatprep.mubr.bf16.mxu0 %v323
  %1046 = vmatmul.mubr.bf16.gmra.mxu0 %v322
  %v1047 = vpop.f32.mrf.mxu0
  %v1048 = vadd.f32 %v935, %v1047
  %v1049 = vpop.f32.mrf.mxu0
  %v1050 = vadd.f32 %v937, %v1049
  %v1051 = vpop.f32.mrf.mxu0
  %v1052 = vadd.f32 %v939, %v1051
  %v1053 = vpop.f32.mrf.mxu0
  %v1054 = vadd.f32 %v941, %v1053
  %1055 = vmatprep.mubr.bf16.mxu0 %v329
  %1056 = vmatmul.mubr.bf16.gmra.mxu0 %v328
  %v1057 = vpop.f32.mrf.mxu0
  %v1058 = vadd.f32 %v945, %v1057
  %v1059 = vpop.f32.mrf.mxu0
  %v1060 = vadd.f32 %v947, %v1059
  %v1061 = vpop.f32.mrf.mxu0
  %v1062 = vadd.f32 %v949, %v1061
  %v1063 = vpop.f32.mrf.mxu0
  %v1064 = vadd.f32 %v951, %v1063
  %1065 = vmatprep.mubr.bf16.mxu0 %v335
  %1066 = vmatmul.mubr.bf16.gmra.mxu0 %v334
  %v1067 = vpop.f32.mrf.mxu0
  %v1068 = vadd.f32 %v955, %v1067
  %v1069 = vpop.f32.mrf.mxu0
  %v1070 = vadd.f32 %v957, %v1069
  %v1071 = vpop.f32.mrf.mxu0
  %v1072 = vadd.f32 %v959, %v1071
  %v1073 = vpop.f32.mrf.mxu0
  %v1074 = vadd.f32 %v961, %v1073
  %1075 = vmatprep.mubr.bf16.mxu0 %v341
  %1076 = vmatmul.mubr.bf16.gmra.mxu0 %v340
  %v1077 = vpop.f32.mrf.mxu0
  %v1078 = vadd.f32 %v965, %v1077
  %v1079 = vpop.f32.mrf.mxu0
  %v1080 = vadd.f32 %v967, %v1079
  %v1081 = vpop.f32.mrf.mxu0
  %v1082 = vadd.f32 %v969, %v1081
  %v1083 = vpop.f32.mrf.mxu0
  %v1084 = vadd.f32 %v971, %v1083
  %1085 = vmatprep.mubr.bf16.mxu0 %v347
  %1086 = vmatmul.mubr.bf16.gmra.mxu0 %v346
  %v1087 = vpop.f32.mrf.mxu0
  %v1088 = vadd.f32 %v975, %v1087
  %v1089 = vpop.f32.mrf.mxu0
  %v1090 = vadd.f32 %v977, %v1089
  %v1091 = vpop.f32.mrf.mxu0
  %v1092 = vadd.f32 %v979, %v1091
  %v1093 = vpop.f32.mrf.mxu0
  %v1094 = vadd.f32 %v981, %v1093
  %1095 = vmatprep.mubr.bf16.mxu0 %v353
  %1096 = vmatmul.mubr.bf16.gmra.mxu0 %v352
  %v1097 = vpop.f32.mrf.mxu0
  %v1098 = vadd.f32 %v985, %v1097
  %v1099 = vpop.f32.mrf.mxu0
  %v1100 = vadd.f32 %v987, %v1099
  %v1101 = vpop.f32.mrf.mxu0
  %v1102 = vadd.f32 %v989, %v1101
  %v1103 = vpop.f32.mrf.mxu0
  %v1104 = vadd.f32 %v991, %v1103
  %1105 = vmatprep.mubr.bf16.mxu0 %v359
  %1106 = vmatmul.mubr.bf16.gmra.mxu0 %v358
  %v1107 = vpop.f32.mrf.mxu0
  %v1108 = vadd.f32 %v995, %v1107
  %v1109 = vpop.f32.mrf.mxu0
  %v1110 = vadd.f32 %v997, %v1109
  %v1111 = vpop.f32.mrf.mxu0
  %v1112 = vadd.f32 %v999, %v1111
  %v1113 = vpop.f32.mrf.mxu0
  %v1114 = vadd.f32 %v1001, %v1113
  %1115 = vdwg.mxu0
  %1116 = vmatprep.subr.bf16.mxu0 %v777
  %1117 = vmatpush1.bf16.msra.mxu0 %v776
  %1118 = vmatprep.subr.bf16.mxu0 %v775
  %1119 = vmatpush1.bf16.msra.mxu0 %v774
  %1120 = vmatprep.subr.bf16.mxu0 %v773
  %1121 = vmatpush1.bf16.msra.mxu0 %v772
  %1122 = vmatprep.subr.bf16.mxu0 %v771
  %1123 = vmatpush1.bf16.msra.mxu0 %v770
  %1124 = vmatprep.subr.bf16.mxu0 %v769
  %1125 = vmatpush1.bf16.msra.mxu0 %v768
  %1126 = vmatprep.subr.bf16.mxu0 %v767
  %1127 = vmatpush1.bf16.msra.mxu0 %v766
  %1128 = vmatprep.subr.bf16.mxu0 %v765
  %1129 = vmatpush1.bf16.msra.mxu0 %v764
  %1130 = vmatprep.subr.bf16.mxu0 %v763
  %1131 = vmatpush1.bf16.msra.mxu0 %v762
  %1132 = vmatprep.subr.bf16.mxu0 %v793
  %1133 = vmatpush2.bf16.msra.mxu0 %v792
  %1134 = vmatprep.subr.bf16.mxu0 %v791
  %1135 = vmatpush2.bf16.msra.mxu0 %v790
  %1136 = vmatprep.subr.bf16.mxu0 %v789
  %1137 = vmatpush2.bf16.msra.mxu0 %v788
  %1138 = vmatprep.subr.bf16.mxu0 %v787
  %1139 = vmatpush2.bf16.msra.mxu0 %v786
  %1140 = vmatprep.subr.bf16.mxu0 %v785
  %1141 = vmatpush2.bf16.msra.mxu0 %v784
  %1142 = vmatprep.subr.bf16.mxu0 %v783
  %1143 = vmatpush2.bf16.msra.mxu0 %v782
  %1144 = vmatprep.subr.bf16.mxu0 %v781
  %1145 = vmatpush2.bf16.msra.mxu0 %v780
  %1146 = vmatprep.subr.bf16.mxu0 %v779
  %1147 = vmatpush2.bf16.msra.mxu0 %v778
  %1148 = vmatprep.mubr.bf16.mxu0 %v319
  %1149 = vmatmul.mubr.bf16.gmra.mxu0 %v318
  %v1150 = vpop.f32.mrf.mxu0
  %v1151 = vadd.f32 %v1038, %v1150
  %v1152 = vpop.f32.mrf.mxu0
  %v1153 = vadd.f32 %v1040, %v1152
  %v1154 = vpop.f32.mrf.mxu0
  %v1155 = vadd.f32 %v1042, %v1154
  %v1156 = vpop.f32.mrf.mxu0
  %v1157 = vadd.f32 %v1044, %v1156
  %1158 = vmatprep.mubr.bf16.mxu0 %v325
  %1159 = vmatmul.mubr.bf16.gmra.mxu0 %v324
  %v1160 = vpop.f32.mrf.mxu0
  %v1161 = vadd.f32 %v1048, %v1160
  %v1162 = vpop.f32.mrf.mxu0
  %v1163 = vadd.f32 %v1050, %v1162
  %v1164 = vpop.f32.mrf.mxu0
  %v1165 = vadd.f32 %v1052, %v1164
  %v1166 = vpop.f32.mrf.mxu0
  %v1167 = vadd.f32 %v1054, %v1166
  %1168 = vmatprep.mubr.bf16.mxu0 %v331
  %1169 = vmatmul.mubr.bf16.gmra.mxu0 %v330
  %v1170 = vpop.f32.mrf.mxu0
  %v1171 = vadd.f32 %v1058, %v1170
  %v1172 = vpop.f32.mrf.mxu0
  %v1173 = vadd.f32 %v1060, %v1172
  %v1174 = vpop.f32.mrf.mxu0
  %v1175 = vadd.f32 %v1062, %v1174
  %v1176 = vpop.f32.mrf.mxu0
  %v1177 = vadd.f32 %v1064, %v1176
  %1178 = vmatprep.mubr.bf16.mxu0 %v337
  %1179 = vmatmul.mubr.bf16.gmra.mxu0 %v336
  %v1180 = vpop.f32.mrf.mxu0
  %v1181 = vadd.f32 %v1068, %v1180
  %v1182 = vpop.f32.mrf.mxu0
  %v1183 = vadd.f32 %v1070, %v1182
  %v1184 = vpop.f32.mrf.mxu0
  %v1185 = vadd.f32 %v1072, %v1184
  %v1186 = vpop.f32.mrf.mxu0
  %v1187 = vadd.f32 %v1074, %v1186
  %1188 = vmatprep.mubr.bf16.mxu0 %v343
  %1189 = vmatmul.mubr.bf16.gmra.mxu0 %v342
  %v1190 = vpop.f32.mrf.mxu0
  %v1191 = vadd.f32 %v1078, %v1190
  %v1192 = vpop.f32.mrf.mxu0
  %v1193 = vadd.f32 %v1080, %v1192
  %v1194 = vpop.f32.mrf.mxu0
  %v1195 = vadd.f32 %v1082, %v1194
  %v1196 = vpop.f32.mrf.mxu0
  %v1197 = vadd.f32 %v1084, %v1196
  %1198 = vmatprep.mubr.bf16.mxu0 %v349
  %1199 = vmatmul.mubr.bf16.gmra.mxu0 %v348
  %v1200 = vpop.f32.mrf.mxu0
  %v1201 = vadd.f32 %v1088, %v1200
  %v1202 = vpop.f32.mrf.mxu0
  %v1203 = vadd.f32 %v1090, %v1202
  %v1204 = vpop.f32.mrf.mxu0
  %v1205 = vadd.f32 %v1092, %v1204
  %v1206 = vpop.f32.mrf.mxu0
  %v1207 = vadd.f32 %v1094, %v1206
  %1208 = vmatprep.mubr.bf16.mxu0 %v355
  %1209 = vmatmul.mubr.bf16.gmra.mxu0 %v354
  %v1210 = vpop.f32.mrf.mxu0
  %v1211 = vadd.f32 %v1098, %v1210
  %v1212 = vpop.f32.mrf.mxu0
  %v1213 = vadd.f32 %v1100, %v1212
  %v1214 = vpop.f32.mrf.mxu0
  %v1215 = vadd.f32 %v1102, %v1214
  %v1216 = vpop.f32.mrf.mxu0
  %v1217 = vadd.f32 %v1104, %v1216
  %1218 = vmatprep.mubr.bf16.mxu0 %v361
  %1219 = vmatmul.mubr.bf16.gmra.mxu0 %v360
  %v1220 = vpop.f32.mrf.mxu0
  %v1221 = vadd.f32 %v1108, %v1220
  %v1222 = vpop.f32.mrf.mxu0
  %v1223 = vadd.f32 %v1110, %v1222
  %v1224 = vpop.f32.mrf.mxu0
  %v1225 = vadd.f32 %v1112, %v1224
  %v1226 = vpop.f32.mrf.mxu0
  %v1227 = vadd.f32 %v1114, %v1226
  %1228 = vdwg.mxu0
  %1229 = vst [vmem:[%s3] sm:$0xff] %v1151
  %1230 = vst [vmem:[%s3 + $0x8] sm:$0xff] %v1153
  %1231 = vst [vmem:[%s3 + $0x10] sm:$0xff] %v1155
  %1232 = vst [vmem:[%s3 + $0x18] sm:$0xff] %v1157
  %1233 = vst [vmem:[%s3 + $0x20] sm:$0xff] %v1161
  %1234 = vst [vmem:[%s3 + $0x28] sm:$0xff] %v1163
  %1235 = vst [vmem:[%s3 + $0x30] sm:$0xff] %v1165
  %1236 = vst [vmem:[%s3 + $0x38] sm:$0xff] %v1167
  %1237 = vst [vmem:[%s3 + $0x40] sm:$0xff] %v1171
  %1238 = vst [vmem:[%s3 + $0x48] sm:$0xff] %v1173
  %1239 = vst [vmem:[%s3 + $0x50] sm:$0xff] %v1175
  %1240 = vst [vmem:[%s3 + $0x58] sm:$0xff] %v1177
  %1241 = vst [vmem:[%s3 + $0x60] sm:$0xff] %v1181
  %1242 = vst [vmem:[%s3 + $0x68] sm:$0xff] %v1183
  %1243 = vst [vmem:[%s3 + $0x70] sm:$0xff] %v1185
  %1244 = vst [vmem:[%s3 + $0x78] sm:$0xff] %v1187
  %1245 = vst [vmem:[%s3 + $0x80] sm:$0xff] %v1191
  %1246 = vst [vmem:[%s3 + $0x88] sm:$0xff] %v1193
  %1247 = vst [vmem:[%s3 + $0x90] sm:$0xff] %v1195
  %1248 = vst [vmem:[%s3 + $0x98] sm:$0xff] %v1197
  %1249 = vst [vmem:[%s3 + $0xa0] sm:$0xff] %v1201
  %1250 = vst [vmem:[%s3 + $0xa8] sm:$0xff] %v1203
  %1251 = vst [vmem:[%s3 + $0xb0] sm:$0xff] %v1205
  %1252 = vst [vmem:[%s3 + $0xb8] sm:$0xff] %v1207
  %1253 = vst [vmem:[%s3 + $0xc0] sm:$0xff] %v1211
  %1254 = vst [vmem:[%s3 + $0xc8] sm:$0xff] %v1213
  %1255 = vst [vmem:[%s3 + $0xd0] sm:$0xff] %v1215
  %1256 = vst [vmem:[%s3 + $0xd8] sm:$0xff] %v1217
  %1257 = vst [vmem:[%s3 + $0xe0] sm:$0xff] %v1221
  %1258 = vst [vmem:[%s3 + $0xe8] sm:$0xff] %v1223
  %1259 = vst [vmem:[%s3 + $0xf0] sm:$0xff] %v1225
  %1260 = vst [vmem:[%s3 + $0xf8] sm:$0xff] %v1227
  // Predicated region
  $region14: #{encode.15} parent=0 // pred_check
    _
  $region15: #{encode.15} parent=0 // pred_check_branch
    %1262 = sbr.rel (0) target = $region17
  $region16: #{encode.15} parent=0 // pred_region
    _
  $region17: #{encode.15} parent=0 // pred_fallthru
    _
  // Predicated region
  $region18: #{encode.15} parent=0 // pred_check
    _
  $region19: #{encode.15} parent=0 // pred_check_branch
    %1264 = sbr.rel (0) target = $region21
  $region20: #{encode.15} parent=0 // pred_region
    _
  $region21: #{encode.15} parent=0 // pred_fallthru
    _

// kernel: encode.16
$region0: #{encode.16}
  #allocation0 [shape = 'u32[]', space=smem, size = 0x4, offset = 0x4, fixed_abs, tag = 'smem constant byte address 0x4 - core index']
  #allocation1 [shape = 'u32[144,128]{1,0:T(1,128)}', space=vmem, size = 0x12000, scoped, tag = 'internal scratch']
  %s0 = inlined_call_operand.vmem [shape: f32[128,256], index: 0, kind: input, shape index: {}]
  %s1 = inlined_call_operand.vmem [shape: f32[1,256], index: 1, kind: input, shape index: {}]
  %s2 = inlined_call_operand.vmem [shape: f32[1,256], index: 2, kind: input, shape index: {}]
  %s3 = inlined_call_operand.vmem [shape: f32[128,256], index: 3, kind: output, shape index: {}]
  %s4 = sld [smem:[#allocation0]]
  $region22: #{encode.16} parent=0
    _
  %s6 = ssub.s32 1, %s4
  %s7 = scalar_select 0, %s6, %s4
  // Predicated region
  $region2: #{encode.16} parent=0 // pred_check
    _
  $region3: #{encode.16} parent=0 // pred_check_branch
    %9 = sbr.rel (0) target = $region5
  $region4: #{encode.16} parent=0 // pred_region
    _
  $region5: #{encode.16} parent=0 // pred_fallthru
    _
  // Predicated region
  $region6: #{encode.16} parent=0 // pred_check
    _
  $region7: #{encode.16} parent=0 // pred_check_branch
    %11 = sbr.rel (0) target = $region9
  $region8: #{encode.16} parent=0 // pred_region
    _
  $region9: #{encode.16} parent=0 // pred_fallthru
    _
  // Predicated region
  $region10: #{encode.16} parent=0 // pred_check
    _
  $region11: #{encode.16} parent=0 // pred_check_branch
    %13 = sbr.rel (0) target = $region13
  $region12: #{encode.16} parent=0 // pred_region
    _
  $region13: #{encode.16} parent=0 // pred_fallthru
    _
  %v14 = vld [vmem:[%s0] sm:$0xff]
  %v15 = vld [vmem:[%s0 + $0x8] sm:$0xff]
  %v16 = vld [vmem:[%s0 + $0x10] sm:$0xff]
  %v17 = vld [vmem:[%s0 + $0x18] sm:$0xff]
  %v18 = vld [vmem:[%s0 + $0x20] sm:$0xff]
  %v19 = vld [vmem:[%s0 + $0x28] sm:$0xff]
  %v20 = vld [vmem:[%s0 + $0x30] sm:$0xff]
  %v21 = vld [vmem:[%s0 + $0x38] sm:$0xff]
  %v22 = vld [vmem:[%s0 + $0x40] sm:$0xff]
  %v23 = vld [vmem:[%s0 + $0x48] sm:$0xff]
  %v24 = vld [vmem:[%s0 + $0x50] sm:$0xff]
  %v25 = vld [vmem:[%s0 + $0x58] sm:$0xff]
  %v26 = vld [vmem:[%s0 + $0x60] sm:$0xff]
  %v27 = vld [vmem:[%s0 + $0x68] sm:$0xff]
  %v28 = vld [vmem:[%s0 + $0x70] sm:$0xff]
  %v29 = vld [vmem:[%s0 + $0x78] sm:$0xff]
  %v30 = vld [vmem:[%s0 + $0x80] sm:$0xff]
  %v31 = vld [vmem:[%s0 + $0x88] sm:$0xff]
  %v32 = vld [vmem:[%s0 + $0x90] sm:$0xff]
  %v33 = vld [vmem:[%s0 + $0x98] sm:$0xff]
  %v34 = vld [vmem:[%s0 + $0xa0] sm:$0xff]
  %v35 = vld [vmem:[%s0 + $0xa8] sm:$0xff]
  %v36 = vld [vmem:[%s0 + $0xb0] sm:$0xff]
  %v37 = vld [vmem:[%s0 + $0xb8] sm:$0xff]
  %v38 = vld [vmem:[%s0 + $0xc0] sm:$0xff]
  %v39 = vld [vmem:[%s0 + $0xc8] sm:$0xff]
  %v40 = vld [vmem:[%s0 + $0xd0] sm:$0xff]
  %v41 = vld [vmem:[%s0 + $0xd8] sm:$0xff]
  %v42 = vld [vmem:[%s0 + $0xe0] sm:$0xff]
  %v43 = vld [vmem:[%s0 + $0xe8] sm:$0xff]
  %v44 = vld [vmem:[%s0 + $0xf0] sm:$0xff]
  %v45 = vld [vmem:[%s0 + $0xf8] sm:$0xff]
  %v46 = vadd.f32 %v14, %v15
  %47 = vadd.xlane.f32.xlu0 %v46
  %v48 = vpop.xlane.xlu0 %47
  %v49 = vadd.f32 %v16, %v17
  %50 = vadd.xlane.f32.xlu0 %v49
  %v51 = vpop.xlane.xlu0 %50
  %v52 = vadd.f32 %v18, %v19
  %53 = vadd.xlane.f32.xlu0 %v52
  %v54 = vpop.xlane.xlu0 %53
  %v55 = vadd.f32 %v20, %v21
  %56 = vadd.xlane.f32.xlu0 %v55
  %v57 = vpop.xlane.xlu0 %56
  %v58 = vadd.f32 %v22, %v23
  %59 = vadd.xlane.f32.xlu0 %v58
  %v60 = vpop.xlane.xlu0 %59
  %v61 = vadd.f32 %v24, %v25
  %62 = vadd.xlane.f32.xlu0 %v61
  %v63 = vpop.xlane.xlu0 %62
  %v64 = vadd.f32 %v26, %v27
  %65 = vadd.xlane.f32.xlu0 %v64
  %v66 = vpop.xlane.xlu0 %65
  %v67 = vadd.f32 %v28, %v29
  %68 = vadd.xlane.f32.xlu0 %v67
  %v69 = vpop.xlane.xlu0 %68
  %v70 = vadd.f32 %v30, %v31
  %71 = vadd.xlane.f32.xlu0 %v70
  %v72 = vpop.xlane.xlu0 %71
  %v73 = vadd.f32 %v32, %v33
  %74 = vadd.xlane.f32.xlu0 %v73
  %v75 = vpop.xlane.xlu0 %74
  %v76 = vadd.f32 %v34, %v35
  %77 = vadd.xlane.f32.xlu0 %v76
  %v78 = vpop.xlane.xlu0 %77
  %v79 = vadd.f32 %v36, %v37
  %80 = vadd.xlane.f32.xlu0 %v79
  %v81 = vpop.xlane.xlu0 %80
  %v82 = vadd.f32 %v38, %v39
  %83 = vadd.xlane.f32.xlu0 %v82
  %v84 = vpop.xlane.xlu0 %83
  %v85 = vadd.f32 %v40, %v41
  %86 = vadd.xlane.f32.xlu0 %v85
  %v87 = vpop.xlane.xlu0 %86
  %v88 = vadd.f32 %v42, %v43
  %89 = vadd.xlane.f32.xlu0 %v88
  %v90 = vpop.xlane.xlu0 %89
  %v91 = vadd.f32 %v44, %v45
  %92 = vadd.xlane.f32.xlu0 %v91
  %v93 = vpop.xlane.xlu0 %92
  %v94 = vrcp.pop 256.0
  %v95 = vmul.f32 %v48, %v94
  %v96 = vmul.f32 %v51, %v94
  %v97 = vmul.f32 %v54, %v94
  %v98 = vmul.f32 %v57, %v94
  %v99 = vmul.f32 %v60, %v94
  %v100 = vmul.f32 %v63, %v94
  %v101 = vmul.f32 %v66, %v94
  %v102 = vmul.f32 %v69, %v94
  %v103 = vmul.f32 %v72, %v94
  %v104 = vmul.f32 %v75, %v94
  %v105 = vmul.f32 %v78, %v94
  %v106 = vmul.f32 %v81, %v94
  %v107 = vmul.f32 %v84, %v94
  %v108 = vmul.f32 %v87, %v94
  %v109 = vmul.f32 %v90, %v94
  %v110 = vmul.f32 %v93, %v94
  %v111 = vsub.f32 %v14, %v95
  %v112 = vsub.f32 %v15, %v95
  %v113 = vsub.f32 %v16, %v96
  %v114 = vsub.f32 %v17, %v96
  %v115 = vsub.f32 %v18, %v97
  %v116 = vsub.f32 %v19, %v97
  %v117 = vsub.f32 %v20, %v98
  %v118 = vsub.f32 %v21, %v98
  %v119 = vsub.f32 %v22, %v99
  %v120 = vsub.f32 %v23, %v99
  %v121 = vsub.f32 %v24, %v100
  %v122 = vsub.f32 %v25, %v100
  %v123 = vsub.f32 %v26, %v101
  %v124 = vsub.f32 %v27, %v101
  %v125 = vsub.f32 %v28, %v102
  %v126 = vsub.f32 %v29, %v102
  %v127 = vsub.f32 %v30, %v103
  %v128 = vsub.f32 %v31, %v103
  %v129 = vsub.f32 %v32, %v104
  %v130 = vsub.f32 %v33, %v104
  %v131 = vsub.f32 %v34, %v105
  %v132 = vsub.f32 %v35, %v105
  %v133 = vsub.f32 %v36, %v106
  %v134 = vsub.f32 %v37, %v106
  %v135 = vsub.f32 %v38, %v107
  %v136 = vsub.f32 %v39, %v107
  %v137 = vsub.f32 %v40, %v108
  %v138 = vsub.f32 %v41, %v108
  %v139 = vsub.f32 %v42, %v109
  %v140 = vsub.f32 %v43, %v109
  %v141 = vsub.f32 %v44, %v110
  %v142 = vsub.f32 %v45, %v110
  %v143 = vmul.f32 %v111, %v111
  %v144 = vmul.f32 %v112, %v112
  %v145 = vmul.f32 %v113, %v113
  %v146 = vmul.f32 %v114, %v114
  %v147 = vmul.f32 %v115, %v115
  %v148 = vmul.f32 %v116, %v116
  %v149 = vmul.f32 %v117, %v117
  %v150 = vmul.f32 %v118, %v118
  %v151 = vmul.f32 %v119, %v119
  %v152 = vmul.f32 %v120, %v120
  %v153 = vmul.f32 %v121, %v121
  %v154 = vmul.f32 %v122, %v122
  %v155 = vmul.f32 %v123, %v123
  %v156 = vmul.f32 %v124, %v124
  %v157 = vmul.f32 %v125, %v125
  %v158 = vmul.f32 %v126, %v126
  %v159 = vmul.f32 %v127, %v127
  %v160 = vmul.f32 %v128, %v128
  %v161 = vmul.f32 %v129, %v129
  %v162 = vmul.f32 %v130, %v130
  %v163 = vmul.f32 %v131, %v131
  %v164 = vmul.f32 %v132, %v132
  %v165 = vmul.f32 %v133, %v133
  %v166 = vmul.f32 %v134, %v134
  %v167 = vmul.f32 %v135, %v135
  %v168 = vmul.f32 %v136, %v136
  %v169 = vmul.f32 %v137, %v137
  %v170 = vmul.f32 %v138, %v138
  %v171 = vmul.f32 %v139, %v139
  %v172 = vmul.f32 %v140, %v140
  %v173 = vmul.f32 %v141, %v141
  %v174 = vmul.f32 %v142, %v142
  %v175 = vadd.f32 %v143, %v144
  %176 = vadd.xlane.f32.xlu0 %v175
  %v177 = vpop.xlane.xlu0 %176
  %v178 = vadd.f32 %v145, %v146
  %179 = vadd.xlane.f32.xlu0 %v178
  %v180 = vpop.xlane.xlu0 %179
  %v181 = vadd.f32 %v147, %v148
  %182 = vadd.xlane.f32.xlu0 %v181
  %v183 = vpop.xlane.xlu0 %182
  %v184 = vadd.f32 %v149, %v150
  %185 = vadd.xlane.f32.xlu0 %v184
  %v186 = vpop.xlane.xlu0 %185
  %v187 = vadd.f32 %v151, %v152
  %188 = vadd.xlane.f32.xlu0 %v187
  %v189 = vpop.xlane.xlu0 %188
  %v190 = vadd.f32 %v153, %v154
  %191 = vadd.xlane.f32.xlu0 %v190
  %v192 = vpop.xlane.xlu0 %191
  %v193 = vadd.f32 %v155, %v156
  %194 = vadd.xlane.f32.xlu0 %v193
  %v195 = vpop.xlane.xlu0 %194
  %v196 = vadd.f32 %v157, %v158
  %197 = vadd.xlane.f32.xlu0 %v196
  %v198 = vpop.xlane.xlu0 %197
  %v199 = vadd.f32 %v159, %v160
  %200 = vadd.xlane.f32.xlu0 %v199
  %v201 = vpop.xlane.xlu0 %200
  %v202 = vadd.f32 %v161, %v162
  %203 = vadd.xlane.f32.xlu0 %v202
  %v204 = vpop.xlane.xlu0 %203
  %v205 = vadd.f32 %v163, %v164
  %206 = vadd.xlane.f32.xlu0 %v205
  %v207 = vpop.xlane.xlu0 %206
  %v208 = vadd.f32 %v165, %v166
  %209 = vadd.xlane.f32.xlu0 %v208
  %v210 = vpop.xlane.xlu0 %209
  %v211 = vadd.f32 %v167, %v168
  %212 = vadd.xlane.f32.xlu0 %v211
  %v213 = vpop.xlane.xlu0 %212
  %v214 = vadd.f32 %v169, %v170
  %215 = vadd.xlane.f32.xlu0 %v214
  %v216 = vpop.xlane.xlu0 %215
  %v217 = vadd.f32 %v171, %v172
  %218 = vadd.xlane.f32.xlu0 %v217
  %v219 = vpop.xlane.xlu0 %218
  %v220 = vadd.f32 %v173, %v174
  %221 = vadd.xlane.f32.xlu0 %v220
  %v222 = vpop.xlane.xlu0 %221
  %v223 = vmul.f32 %v177, %v94
  %v224 = vmul.f32 %v180, %v94
  %v225 = vmul.f32 %v183, %v94
  %v226 = vmul.f32 %v186, %v94
  %v227 = vmul.f32 %v189, %v94
  %v228 = vmul.f32 %v192, %v94
  %v229 = vmul.f32 %v195, %v94
  %v230 = vmul.f32 %v198, %v94
  %v231 = vmul.f32 %v201, %v94
  %v232 = vmul.f32 %v204, %v94
  %v233 = vmul.f32 %v207, %v94
  %v234 = vmul.f32 %v210, %v94
  %v235 = vmul.f32 %v213, %v94
  %v236 = vmul.f32 %v216, %v94
  %v237 = vmul.f32 %v219, %v94
  %v238 = vmul.f32 %v222, %v94
  %v239 = vadd.f32 %v223, 1e-05
  %v240 = vadd.f32 %v224, 1e-05
  %v241 = vadd.f32 %v225, 1e-05
  %v242 = vadd.f32 %v226, 1e-05
  %v243 = vadd.f32 %v227, 1e-05
  %v244 = vadd.f32 %v228, 1e-05
  %v245 = vadd.f32 %v229, 1e-05
  %v246 = vadd.f32 %v230, 1e-05
  %v247 = vadd.f32 %v231, 1e-05
  %v248 = vadd.f32 %v232, 1e-05
  %v249 = vadd.f32 %v233, 1e-05
  %v250 = vadd.f32 %v234, 1e-05
  %v251 = vadd.f32 %v235, 1e-05
  %v252 = vadd.f32 %v236, 1e-05
  %v253 = vadd.f32 %v237, 1e-05
  %v254 = vadd.f32 %v238, 1e-05
  %v255 = vrsqrt.pop %v239
  %v256 = vrsqrt.pop %v240
  %v257 = vrsqrt.pop %v241
  %v258 = vrsqrt.pop %v242
  %v259 = vrsqrt.pop %v243
  %v260 = vrsqrt.pop %v244
  %v261 = vrsqrt.pop %v245
  %v262 = vrsqrt.pop %v246
  %v263 = vrsqrt.pop %v247
  %v264 = vrsqrt.pop %v248
  %v265 = vrsqrt.pop %v249
  %v266 = vrsqrt.pop %v250
  %v267 = vrsqrt.pop %v251
  %v268 = vrsqrt.pop %v252
  %v269 = vrsqrt.pop %v253
  %v270 = vrsqrt.pop %v254
  %v271 = vmul.f32 %v111, %v255
  %v272 = vmul.f32 %v112, %v255
  %v273 = vmul.f32 %v113, %v256
  %v274 = vmul.f32 %v114, %v256
  %v275 = vmul.f32 %v115, %v257
  %v276 = vmul.f32 %v116, %v257
  %v277 = vmul.f32 %v117, %v258
  %v278 = vmul.f32 %v118, %v258
  %v279 = vmul.f32 %v119, %v259
  %v280 = vmul.f32 %v120, %v259
  %v281 = vmul.f32 %v121, %v260
  %v282 = vmul.f32 %v122, %v260
  %v283 = vmul.f32 %v123, %v261
  %v284 = vmul.f32 %v124, %v261
  %v285 = vmul.f32 %v125, %v262
  %v286 = vmul.f32 %v126, %v262
  %v287 = vmul.f32 %v127, %v263
  %v288 = vmul.f32 %v128, %v263
  %v289 = vmul.f32 %v129, %v264
  %v290 = vmul.f32 %v130, %v264
  %v291 = vmul.f32 %v131, %v265
  %v292 = vmul.f32 %v132, %v265
  %v293 = vmul.f32 %v133, %v266
  %v294 = vmul.f32 %v134, %v266
  %v295 = vmul.f32 %v135, %v267
  %v296 = vmul.f32 %v136, %v267
  %v297 = vmul.f32 %v137, %v268
  %v298 = vmul.f32 %v138, %v268
  %v299 = vmul.f32 %v139, %v269
  %v300 = vmul.f32 %v140, %v269
  %v301 = vmul.f32 %v141, %v270
  %v302 = vmul.f32 %v142, %v270
  %v303 = vld [vmem:[%s1] sm:$0x3]
  %v305 = vlaneseq
  %v306 = vshrl.u32 %v305, 7
  %v307 = vsub.s32 0, %v306
  %v308 = vrot.slane %v303, %v307
  %v309 = vlaneseq
  %v310 = vshrl.u32 %v309, 7
  %v311 = vsub.s32 1, %v310
  %v312 = vrot.slane %v303, %v311
  %v315 = vmul.f32 %v271, %v308
  %v316 = vmul.f32 %v272, %v312
  %v317 = vmul.f32 %v273, %v308
  %v318 = vmul.f32 %v274, %v312
  %v319 = vmul.f32 %v275, %v308
  %v320 = vmul.f32 %v276, %v312
  %v321 = vmul.f32 %v277, %v308
  %v322 = vmul.f32 %v278, %v312
  %v323 = vmul.f32 %v279, %v308
  %v324 = vmul.f32 %v280, %v312
  %v325 = vmul.f32 %v281, %v308
  %v326 = vmul.f32 %v282, %v312
  %v327 = vmul.f32 %v283, %v308
  %v328 = vmul.f32 %v284, %v312
  %v329 = vmul.f32 %v285, %v308
  %v330 = vmul.f32 %v286, %v312
  %v331 = vmul.f32 %v287, %v308
  %v332 = vmul.f32 %v288, %v312
  %v333 = vmul.f32 %v289, %v308
  %v334 = vmul.f32 %v290, %v312
  %v335 = vmul.f32 %v291, %v308
  %v336 = vmul.f32 %v292, %v312
  %v337 = vmul.f32 %v293, %v308
  %v338 = vmul.f32 %v294, %v312
  %v339 = vmul.f32 %v295, %v308
  %v340 = vmul.f32 %v296, %v312
  %v341 = vmul.f32 %v297, %v308
  %v342 = vmul.f32 %v298, %v312
  %v343 = vmul.f32 %v299, %v308
  %v344 = vmul.f32 %v300, %v312
  %v345 = vmul.f32 %v301, %v308
  %v346 = vmul.f32 %v302, %v312
  %v347 = vld [vmem:[%s2] sm:$0x3]
  %v349 = vlaneseq
  %v350 = vshrl.u32 %v349, 7
  %v351 = vsub.s32 0, %v350
  %v352 = vrot.slane %v347, %v351
  %v353 = vlaneseq
  %v354 = vshrl.u32 %v353, 7
  %v355 = vsub.s32 1, %v354
  %v356 = vrot.slane %v347, %v355
  %v359 = vadd.f32 %v315, %v352
  %v360 = vadd.f32 %v316, %v356
  %v361 = vadd.f32 %v317, %v352
  %v362 = vadd.f32 %v318, %v356
  %v363 = vadd.f32 %v319, %v352
  %v364 = vadd.f32 %v320, %v356
  %v365 = vadd.f32 %v321, %v352
  %v366 = vadd.f32 %v322, %v356
  %v367 = vadd.f32 %v323, %v352
  %v368 = vadd.f32 %v324, %v356
  %v369 = vadd.f32 %v325, %v352
  %v370 = vadd.f32 %v326, %v356
  %v371 = vadd.f32 %v327, %v352
  %v372 = vadd.f32 %v328, %v356
  %v373 = vadd.f32 %v329, %v352
  %v374 = vadd.f32 %v330, %v356
  %v375 = vadd.f32 %v331, %v352
  %v376 = vadd.f32 %v332, %v356
  %v377 = vadd.f32 %v333, %v352
  %v378 = vadd.f32 %v334, %v356
  %v379 = vadd.f32 %v335, %v352
  %v380 = vadd.f32 %v336, %v356
  %v381 = vadd.f32 %v337, %v352
  %v382 = vadd.f32 %v338, %v356
  %v383 = vadd.f32 %v339, %v352
  %v384 = vadd.f32 %v340, %v356
  %v385 = vadd.f32 %v341, %v352
  %v386 = vadd.f32 %v342, %v356
  %v387 = vadd.f32 %v343, %v352
  %v388 = vadd.f32 %v344, %v356
  %v389 = vadd.f32 %v345, %v352
  %v390 = vadd.f32 %v346, %v356
  %391 = vst [vmem:[%s3] sm:$0xff] %v359
  %392 = vst [vmem:[%s3 + $0x8] sm:$0xff] %v360
  %393 = vst [vmem:[%s3 + $0x10] sm:$0xff] %v361
  %394 = vst [vmem:[%s3 + $0x18] sm:$0xff] %v362
  %395 = vst [vmem:[%s3 + $0x20] sm:$0xff] %v363
  %396 = vst [vmem:[%s3 + $0x28] sm:$0xff] %v364
  %397 = vst [vmem:[%s3 + $0x30] sm:$0xff] %v365
  %398 = vst [vmem:[%s3 + $0x38] sm:$0xff] %v366
  %399 = vst [vmem:[%s3 + $0x40] sm:$0xff] %v367
  %400 = vst [vmem:[%s3 + $0x48] sm:$0xff] %v368
  %401 = vst [vmem:[%s3 + $0x50] sm:$0xff] %v369
  %402 = vst [vmem:[%s3 + $0x58] sm:$0xff] %v370
  %403 = vst [vmem:[%s3 + $0x60] sm:$0xff] %v371
  %404 = vst [vmem:[%s3 + $0x68] sm:$0xff] %v372
  %405 = vst [vmem:[%s3 + $0x70] sm:$0xff] %v373
  %406 = vst [vmem:[%s3 + $0x78] sm:$0xff] %v374
  %407 = vst [vmem:[%s3 + $0x80] sm:$0xff] %v375
  %408 = vst [vmem:[%s3 + $0x88] sm:$0xff] %v376
  %409 = vst [vmem:[%s3 + $0x90] sm:$0xff] %v377
  %410 = vst [vmem:[%s3 + $0x98] sm:$0xff] %v378
  %411 = vst [vmem:[%s3 + $0xa0] sm:$0xff] %v379
  %412 = vst [vmem:[%s3 + $0xa8] sm:$0xff] %v380
  %413 = vst [vmem:[%s3 + $0xb0] sm:$0xff] %v381
  %414 = vst [vmem:[%s3 + $0xb8] sm:$0xff] %v382
  %415 = vst [vmem:[%s3 + $0xc0] sm:$0xff] %v383
  %416 = vst [vmem:[%s3 + $0xc8] sm:$0xff] %v384
  %417 = vst [vmem:[%s3 + $0xd0] sm:$0xff] %v385
  %418 = vst [vmem:[%s3 + $0xd8] sm:$0xff] %v386
  %419 = vst [vmem:[%s3 + $0xe0] sm:$0xff] %v387
  %420 = vst [vmem:[%s3 + $0xe8] sm:$0xff] %v388
  %421 = vst [vmem:[%s3 + $0xf0] sm:$0xff] %v389
  %422 = vst [vmem:[%s3 + $0xf8] sm:$0xff] %v390
  // Predicated region
  $region14: #{encode.16} parent=0 // pred_check
    _
  $region15: #{encode.16} parent=0 // pred_check_branch
    %424 = sbr.rel (0) target = $region17
  $region16: #{encode.16} parent=0 // pred_region
    _
  $region17: #{encode.16} parent=0 // pred_fallthru
    _
  // Predicated region
  $region18: #{encode.16} parent=0 // pred_check
    _
  $region19: #{encode.16} parent=0 // pred_check_branch
    %426 = sbr.rel (0) target = $region21
  $region20: #{encode.16} parent=0 // pred_region
    _
  $region21: #{encode.16} parent=0 // pred_fallthru
    _

// kernel: encode.17
$region0: #{encode.17}
  #allocation0 [shape = 'u32[]', space=smem, size = 0x4, offset = 0x4, fixed_abs, tag = 'smem constant byte address 0x4 - core index']
  #allocation1 [shape = 'u32[144,128]{1,0:T(1,128)}', space=vmem, size = 0x12000, scoped, tag = 'internal scratch']
  %s0 = inlined_call_operand.vmem [shape: bf16[128,256], index: 0, kind: input, shape index: {}]
  %s1 = inlined_call_operand.vmem [shape: bf16[256,768], index: 1, kind: input, shape index: {}]
  %s2 = inlined_call_operand.vmem [shape: f32[1,768], index: 2, kind: input, shape index: {}]
  %s3 = inlined_call_operand.vmem [shape: f32[128,768], index: 3, kind: output, shape index: {}]
  %s4 = sld [smem:[#allocation0]]
  $region22: #{encode.17} parent=0
    _
  %s6 = ssub.s32 1, %s4
  %s7 = scalar_select 0, %s6, %s4
  // Predicated region
  $region2: #{encode.17} parent=0 // pred_check
    _
  $region3: #{encode.17} parent=0 // pred_check_branch
    %9 = sbr.rel (0) target = $region5
  $region4: #{encode.17} parent=0 // pred_region
    _
  $region5: #{encode.17} parent=0 // pred_fallthru
    _
  // Predicated region
  $region6: #{encode.17} parent=0 // pred_check
    _
  $region7: #{encode.17} parent=0 // pred_check_branch
    %11 = sbr.rel (0) target = $region9
  $region8: #{encode.17} parent=0 // pred_region
    _
  $region9: #{encode.17} parent=0 // pred_fallthru
    _
  // Predicated region
  $region10: #{encode.17} parent=0 // pred_check
    _
  $region11: #{encode.17} parent=0 // pred_check_branch
    %13 = sbr.rel (0) target = $region13
  $region12: #{encode.17} parent=0 // pred_region
    _
  $region13: #{encode.17} parent=0 // pred_fallthru
    _
  %v14 = vld [vmem:[%s0] sm:$0xff]
  %v15 = vld [vmem:[%s0 + $0x8] sm:$0xff]
  %v16 = vld [vmem:[%s0 + $0x10] sm:$0xff]
  %v17 = vld [vmem:[%s0 + $0x18] sm:$0xff]
  %v18 = vld [vmem:[%s0 + $0x20] sm:$0xff]
  %v19 = vld [vmem:[%s0 + $0x28] sm:$0xff]
  %v20 = vld [vmem:[%s0 + $0x30] sm:$0xff]
  %v21 = vld [vmem:[%s0 + $0x38] sm:$0xff]
  %v22 = vld [vmem:[%s0 + $0x40] sm:$0xff]
  %v23 = vld [vmem:[%s0 + $0x48] sm:$0xff]
  %v24 = vld [vmem:[%s0 + $0x50] sm:$0xff]
  %v25 = vld [vmem:[%s0 + $0x58] sm:$0xff]
  %v26 = vld [vmem:[%s0 + $0x60] sm:$0xff]
  %v27 = vld [vmem:[%s0 + $0x68] sm:$0xff]
  %v28 = vld [vmem:[%s0 + $0x70] sm:$0xff]
  %v29 = vld [vmem:[%s0 + $0x78] sm:$0xff]
  %v30 = vld [vmem:[%s1] sm:$0xff]
  %v31 = vld [vmem:[%s1 + $0x8] sm:$0xff]
  %v32 = vld [vmem:[%s1 + $0x10] sm:$0xff]
  %v33 = vld [vmem:[%s1 + $0x18] sm:$0xff]
  %v34 = vld [vmem:[%s1 + $0x20] sm:$0xff]
  %v35 = vld [vmem:[%s1 + $0x28] sm:$0xff]
  %v36 = vld [vmem:[%s1 + $0x30] sm:$0xff]
  %v37 = vld [vmem:[%s1 + $0x38] sm:$0xff]
  %v38 = vld [vmem:[%s1 + $0x40] sm:$0xff]
  %v39 = vld [vmem:[%s1 + $0x48] sm:$0xff]
  %v40 = vld [vmem:[%s1 + $0x50] sm:$0xff]
  %v41 = vld [vmem:[%s1 + $0x58] sm:$0xff]
  %v42 = vld [vmem:[%s1 + $0x60] sm:$0xff]
  %v43 = vld [vmem:[%s1 + $0x68] sm:$0xff]
  %v44 = vld [vmem:[%s1 + $0x70] sm:$0xff]
  %v45 = vld [vmem:[%s1 + $0x78] sm:$0xff]
  %v46 = vld [vmem:[%s1 + $0x80] sm:$0xff]
  %v47 = vld [vmem:[%s1 + $0x88] sm:$0xff]
  %v48 = vld [vmem:[%s1 + $0x90] sm:$0xff]
  %v49 = vld [vmem:[%s1 + $0x98] sm:$0xff]
  %v50 = vld [vmem:[%s1 + $0xa0] sm:$0xff]
  %v51 = vld [vmem:[%s1 + $0xa8] sm:$0xff]
  %v52 = vld [vmem:[%s1 + $0xb0] sm:$0xff]
  %v53 = vld [vmem:[%s1 + $0xb8] sm:$0xff]
  %v54 = vld [vmem:[%s1 + $0xc0] sm:$0xff]
  %v55 = vld [vmem:[%s1 + $0xc8] sm:$0xff]
  %v56 = vld [vmem:[%s1 + $0xd0] sm:$0xff]
  %v57 = vld [vmem:[%s1 + $0xd8] sm:$0xff]
  %v58 = vld [vmem:[%s1 + $0xe0] sm:$0xff]
  %v59 = vld [vmem:[%s1 + $0xe8] sm:$0xff]
  %v60 = vld [vmem:[%s1 + $0xf0] sm:$0xff]
  %v61 = vld [vmem:[%s1 + $0xf8] sm:$0xff]
  %v62 = vld [vmem:[%s1 + $0x100] sm:$0xff]
  %v63 = vld [vmem:[%s1 + $0x108] sm:$0xff]
  %v64 = vld [vmem:[%s1 + $0x110] sm:$0xff]
  %v65 = vld [vmem:[%s1 + $0x118] sm:$0xff]
  %v66 = vld [vmem:[%s1 + $0x120] sm:$0xff]
  %v67 = vld [vmem:[%s1 + $0x128] sm:$0xff]
  %v68 = vld [vmem:[%s1 + $0x130] sm:$0xff]
  %v69 = vld [vmem:[%s1 + $0x138] sm:$0xff]
  %v70 = vld [vmem:[%s1 + $0x140] sm:$0xff]
  %v71 = vld [vmem:[%s1 + $0x148] sm:$0xff]
  %v72 = vld [vmem:[%s1 + $0x150] sm:$0xff]
  %v73 = vld [vmem:[%s1 + $0x158] sm:$0xff]
  %v74 = vld [vmem:[%s1 + $0x160] sm:$0xff]
  %v75 = vld [vmem:[%s1 + $0x168] sm:$0xff]
  %v76 = vld [vmem:[%s1 + $0x170] sm:$0xff]
  %v77 = vld [vmem:[%s1 + $0x178] sm:$0xff]
  %v78 = vld [vmem:[%s1 + $0x180] sm:$0xff]
  %v79 = vld [vmem:[%s1 + $0x188] sm:$0xff]
  %v80 = vld [vmem:[%s1 + $0x190] sm:$0xff]
  %v81 = vld [vmem:[%s1 + $0x198] sm:$0xff]
  %v82 = vld [vmem:[%s1 + $0x1a0] sm:$0xff]
  %v83 = vld [vmem:[%s1 + $0x1a8] sm:$0xff]
  %v84 = vld [vmem:[%s1 + $0x1b0] sm:$0xff]
  %v85 = vld [vmem:[%s1 + $0x1b8] sm:$0xff]
  %v86 = vld [vmem:[%s1 + $0x1c0] sm:$0xff]
  %v87 = vld [vmem:[%s1 + $0x1c8] sm:$0xff]
  %v88 = vld [vmem:[%s1 + $0x1d0] sm:$0xff]
  %v89 = vld [vmem:[%s1 + $0x1d8] sm:$0xff]
  %v90 = vld [vmem:[%s1 + $0x1e0] sm:$0xff]
  %v91 = vld [vmem:[%s1 + $0x1e8] sm:$0xff]
  %v92 = vld [vmem:[%s1 + $0x1f0] sm:$0xff]
  %v93 = vld [vmem:[%s1 + $0x1f8] sm:$0xff]
  %v94 = vld [vmem:[%s1 + $0x200] sm:$0xff]
  %v95 = vld [vmem:[%s1 + $0x208] sm:$0xff]
  %v96 = vld [vmem:[%s1 + $0x210] sm:$0xff]
  %v97 = vld [vmem:[%s1 + $0x218] sm:$0xff]
  %v98 = vld [vmem:[%s1 + $0x220] sm:$0xff]
  %v99 = vld [vmem:[%s1 + $0x228] sm:$0xff]
  %v100 = vld [vmem:[%s1 + $0x230] sm:$0xff]
  %v101 = vld [vmem:[%s1 + $0x238] sm:$0xff]
  %v102 = vld [vmem:[%s1 + $0x240] sm:$0xff]
  %v103 = vld [vmem:[%s1 + $0x248] sm:$0xff]
  %v104 = vld [vmem:[%s1 + $0x250] sm:$0xff]
  %v105 = vld [vmem:[%s1 + $0x258] sm:$0xff]
  %v106 = vld [vmem:[%s1 + $0x260] sm:$0xff]
  %v107 = vld [vmem:[%s1 + $0x268] sm:$0xff]
  %v108 = vld [vmem:[%s1 + $0x270] sm:$0xff]
  %v109 = vld [vmem:[%s1 + $0x278] sm:$0xff]
  %v110 = vld [vmem:[%s1 + $0x280] sm:$0xff]
  %v111 = vld [vmem:[%s1 + $0x288] sm:$0xff]
  %v112 = vld [vmem:[%s1 + $0x290] sm:$0xff]
  %v113 = vld [vmem:[%s1 + $0x298] sm:$0xff]
  %v114 = vld [vmem:[%s1 + $0x2a0] sm:$0xff]
  %v115 = vld [vmem:[%s1 + $0x2a8] sm:$0xff]
  %v116 = vld [vmem:[%s1 + $0x2b0] sm:$0xff]
  %v117 = vld [vmem:[%s1 + $0x2b8] sm:$0xff]
  %v118 = vld [vmem:[%s1 + $0x2c0] sm:$0xff]
  %v119 = vld [vmem:[%s1 + $0x2c8] sm:$0xff]
  %v120 = vld [vmem:[%s1 + $0x2d0] sm:$0xff]
  %v121 = vld [vmem:[%s1 + $0x2d8] sm:$0xff]
  %v122 = vld [vmem:[%s1 + $0x2e0] sm:$0xff]
  %v123 = vld [vmem:[%s1 + $0x2e8] sm:$0xff]
  %v124 = vld [vmem:[%s1 + $0x2f0] sm:$0xff]
  %v125 = vld [vmem:[%s1 + $0x2f8] sm:$0xff]
  %v126 = vld [vmem:[%s2] sm:$0x3f]
  %v128 = vlaneseq
  %v129 = vshrl.u32 %v128, 7
  %v130 = vsub.s32 0, %v129
  %v131 = vrot.slane %v126, %v130
  %v132 = vlaneseq
  %v133 = vshrl.u32 %v132, 7
  %v134 = vsub.s32 1, %v133
  %v135 = vrot.slane %v126, %v134
  %v136 = vlaneseq
  %v137 = vshrl.u32 %v136, 7
  %v138 = vsub.s32 2, %v137
  %v139 = vrot.slane %v126, %v138
  %v140 = vlaneseq
  %v141 = vshrl.u32 %v140, 7
  %v142 = vsub.s32 3, %v141
  %v143 = vrot.slane %v126, %v142
  %v144 = vlaneseq
  %v145 = vshrl.u32 %v144, 7
  %v146 = vsub.s32 4, %v145
  %v147 = vrot.slane %v126, %v146
  %v148 = vlaneseq
  %v149 = vshrl.u32 %v148, 7
  %v150 = vsub.s32 5, %v149
  %v151 = vrot.slane %v126, %v150
  %v174 = vunpack.c.l.b16 %v14
  %v175 = vunpack.c.h.b16 %v14
  %v176 = vunpack.c.l.b16 %v15
  %v177 = vunpack.c.h.b16 %v15
  %v178 = vunpack.c.l.b16 %v16
  %v179 = vunpack.c.h.b16 %v16
  %v180 = vunpack.c.l.b16 %v17
  %v181 = vunpack.c.h.b16 %v17
  %v182 = vunpack.c.l.b16 %v18
  %v183 = vunpack.c.h.b16 %v18
  %v184 = vunpack.c.l.b16 %v19
  %v185 = vunpack.c.h.b16 %v19
  %v186 = vunpack.c.l.b16 %v20
  %v187 = vunpack.c.h.b16 %v20
  %v188 = vunpack.c.l.b16 %v21
  %v189 = vunpack.c.h.b16 %v21
  %v190 = vunpack.c.l.b16 %v22
  %v191 = vunpack.c.h.b16 %v22
  %v192 = vunpack.c.l.b16 %v23
  %v193 = vunpack.c.h.b16 %v23
  %v194 = vunpack.c.l.b16 %v24
  %v195 = vunpack.c.h.b16 %v24
  %v196 = vunpack.c.l.b16 %v25
  %v197 = vunpack.c.h.b16 %v25
  %v198 = vunpack.c.l.b16 %v26
  %v199 = vunpack.c.h.b16 %v26
  %v200 = vunpack.c.l.b16 %v27
  %v201 = vunpack.c.h.b16 %v27
  %v202 = vunpack.c.l.b16 %v28
  %v203 = vunpack.c.h.b16 %v28
  %v204 = vunpack.c.l.b16 %v29
  %v205 = vunpack.c.h.b16 %v29
  %v206 = vpack.c.b16 %v176, %v174
  %v207 = vpack.c.b16 %v177, %v175
  %v208 = vpack.c.b16 %v180, %v178
  %v209 = vpack.c.b16 %v181, %v179
  %v210 = vpack.c.b16 %v184, %v182
  %v211 = vpack.c.b16 %v185, %v183
  %v212 = vpack.c.b16 %v188, %v186
  %v213 = vpack.c.b16 %v189, %v187
  %v214 = vpack.c.b16 %v192, %v190
  %v215 = vpack.c.b16 %v193, %v191
  %v216 = vpack.c.b16 %v196, %v194
  %v217 = vpack.c.b16 %v197, %v195
  %v218 = vpack.c.b16 %v200, %v198
  %v219 = vpack.c.b16 %v201, %v199
  %v220 = vpack.c.b16 %v204, %v202
  %v221 = vpack.c.b16 %v205, %v203
  %v334 = vunpack.c.l.b16 %v30
  %v335 = vunpack.c.h.b16 %v30
  %v336 = vunpack.c.l.b16 %v31
  %v337 = vunpack.c.h.b16 %v31
  %v338 = vunpack.c.l.b16 %v32
  %v339 = vunpack.c.h.b16 %v32
  %v340 = vunpack.c.l.b16 %v33
  %v341 = vunpack.c.h.b16 %v33
  %v342 = vunpack.c.l.b16 %v34
  %v343 = vunpack.c.h.b16 %v34
  %v344 = vunpack.c.l.b16 %v35
  %v345 = vunpack.c.h.b16 %v35
  %v346 = vunpack.c.l.b16 %v36
  %v347 = vunpack.c.h.b16 %v36
  %v348 = vunpack.c.l.b16 %v37
  %v349 = vunpack.c.h.b16 %v37
  %v350 = vunpack.c.l.b16 %v38
  %v351 = vunpack.c.h.b16 %v38
  %v352 = vunpack.c.l.b16 %v39
  %v353 = vunpack.c.h.b16 %v39
  %v354 = vunpack.c.l.b16 %v40
  %v355 = vunpack.c.h.b16 %v40
  %v356 = vunpack.c.l.b16 %v41
  %v357 = vunpack.c.h.b16 %v41
  %v358 = vunpack.c.l.b16 %v42
  %v359 = vunpack.c.h.b16 %v42
  %v360 = vunpack.c.l.b16 %v43
  %v361 = vunpack.c.h.b16 %v43
  %v362 = vunpack.c.l.b16 %v44
  %v363 = vunpack.c.h.b16 %v44
  %v364 = vunpack.c.l.b16 %v45
  %v365 = vunpack.c.h.b16 %v45
  %v366 = vunpack.c.l.b16 %v46
  %v367 = vunpack.c.h.b16 %v46
  %v368 = vunpack.c.l.b16 %v47
  %v369 = vunpack.c.h.b16 %v47
  %v370 = vunpack.c.l.b16 %v48
  %v371 = vunpack.c.h.b16 %v48
  %v372 = vunpack.c.l.b16 %v49
  %v373 = vunpack.c.h.b16 %v49
  %v374 = vunpack.c.l.b16 %v50
  %v375 = vunpack.c.h.b16 %v50
  %v376 = vunpack.c.l.b16 %v51
  %v377 = vunpack.c.h.b16 %v51
  %v378 = vunpack.c.l.b16 %v52
  %v379 = vunpack.c.h.b16 %v52
  %v380 = vunpack.c.l.b16 %v53
  %v381 = vunpack.c.h.b16 %v53
  %v382 = vunpack.c.l.b16 %v54
  %v383 = vunpack.c.h.b16 %v54
  %v384 = vunpack.c.l.b16 %v55
  %v385 = vunpack.c.h.b16 %v55
  %v386 = vunpack.c.l.b16 %v56
  %v387 = vunpack.c.h.b16 %v56
  %v388 = vunpack.c.l.b16 %v57
  %v389 = vunpack.c.h.b16 %v57
  %v390 = vunpack.c.l.b16 %v58
  %v391 = vunpack.c.h.b16 %v58
  %v392 = vunpack.c.l.b16 %v59
  %v393 = vunpack.c.h.b16 %v59
  %v394 = vunpack.c.l.b16 %v60
  %v395 = vunpack.c.h.b16 %v60
  %v396 = vunpack.c.l.b16 %v61
  %v397 = vunpack.c.h.b16 %v61
  %v398 = vunpack.c.l.b16 %v62
  %v399 = vunpack.c.h.b16 %v62
  %v400 = vunpack.c.l.b16 %v63
  %v401 = vunpack.c.h.b16 %v63
  %v402 = vunpack.c.l.b16 %v64
  %v403 = vunpack.c.h.b16 %v64
  %v404 = vunpack.c.l.b16 %v65
  %v405 = vunpack.c.h.b16 %v65
  %v406 = vunpack.c.l.b16 %v66
  %v407 = vunpack.c.h.b16 %v66
  %v408 = vunpack.c.l.b16 %v67
  %v409 = vunpack.c.h.b16 %v67
  %v410 = vunpack.c.l.b16 %v68
  %v411 = vunpack.c.h.b16 %v68
  %v412 = vunpack.c.l.b16 %v69
  %v413 = vunpack.c.h.b16 %v69
  %v414 = vunpack.c.l.b16 %v70
  %v415 = vunpack.c.h.b16 %v70
  %v416 = vunpack.c.l.b16 %v71
  %v417 = vunpack.c.h.b16 %v71
  %v418 = vunpack.c.l.b16 %v72
  %v419 = vunpack.c.h.b16 %v72
  %v420 = vunpack.c.l.b16 %v73
  %v421 = vunpack.c.h.b16 %v73
  %v422 = vunpack.c.l.b16 %v74
  %v423 = vunpack.c.h.b16 %v74
  %v424 = vunpack.c.l.b16 %v75
  %v425 = vunpack.c.h.b16 %v75
  %v426 = vunpack.c.l.b16 %v76
  %v427 = vunpack.c.h.b16 %v76
  %v428 = vunpack.c.l.b16 %v77
  %v429 = vunpack.c.h.b16 %v77
  %v430 = vunpack.c.l.b16 %v78
  %v431 = vunpack.c.h.b16 %v78
  %v432 = vunpack.c.l.b16 %v79
  %v433 = vunpack.c.h.b16 %v79
  %v434 = vunpack.c.l.b16 %v80
  %v435 = vunpack.c.h.b16 %v80
  %v436 = vunpack.c.l.b16 %v81
  %v437 = vunpack.c.h.b16 %v81
  %v438 = vunpack.c.l.b16 %v82
  %v439 = vunpack.c.h.b16 %v82
  %v440 = vunpack.c.l.b16 %v83
  %v441 = vunpack.c.h.b16 %v83
  %v442 = vunpack.c.l.b16 %v84
  %v443 = vunpack.c.h.b16 %v84
  %v444 = vunpack.c.l.b16 %v85
  %v445 = vunpack.c.h.b16 %v85
  %v446 = vunpack.c.l.b16 %v86
  %v447 = vunpack.c.h.b16 %v86
  %v448 = vunpack.c.l.b16 %v87
  %v449 = vunpack.c.h.b16 %v87
  %v450 = vunpack.c.l.b16 %v88
  %v451 = vunpack.c.h.b16 %v88
  %v452 = vunpack.c.l.b16 %v89
  %v453 = vunpack.c.h.b16 %v89
  %v454 = vunpack.c.l.b16 %v90
  %v455 = vunpack.c.h.b16 %v90
  %v456 = vunpack.c.l.b16 %v91
  %v457 = vunpack.c.h.b16 %v91
  %v458 = vunpack.c.l.b16 %v92
  %v459 = vunpack.c.h.b16 %v92
  %v460 = vunpack.c.l.b16 %v93
  %v461 = vunpack.c.h.b16 %v93
  %v462 = vunpack.c.l.b16 %v94
  %v463 = vunpack.c.h.b16 %v94
  %v464 = vunpack.c.l.b16 %v95
  %v465 = vunpack.c.h.b16 %v95
  %v466 = vunpack.c.l.b16 %v96
  %v467 = vunpack.c.h.b16 %v96
  %v468 = vunpack.c.l.b16 %v97
  %v469 = vunpack.c.h.b16 %v97
  %v470 = vunpack.c.l.b16 %v98
  %v471 = vunpack.c.h.b16 %v98
  %v472 = vunpack.c.l.b16 %v99
  %v473 = vunpack.c.h.b16 %v99
  %v474 = vunpack.c.l.b16 %v100
  %v475 = vunpack.c.h.b16 %v100
  %v476 = vunpack.c.l.b16 %v101
  %v477 = vunpack.c.h.b16 %v101
  %v478 = vunpack.c.l.b16 %v102
  %v479 = vunpack.c.h.b16 %v102
  %v480 = vunpack.c.l.b16 %v103
  %v481 = vunpack.c.h.b16 %v103
  %v482 = vunpack.c.l.b16 %v104
  %v483 = vunpack.c.h.b16 %v104
  %v484 = vunpack.c.l.b16 %v105
  %v485 = vunpack.c.h.b16 %v105
  %v486 = vunpack.c.l.b16 %v106
  %v487 = vunpack.c.h.b16 %v106
  %v488 = vunpack.c.l.b16 %v107
  %v489 = vunpack.c.h.b16 %v107
  %v490 = vunpack.c.l.b16 %v108
  %v491 = vunpack.c.h.b16 %v108
  %v492 = vunpack.c.l.b16 %v109
  %v493 = vunpack.c.h.b16 %v109
  %v494 = vunpack.c.l.b16 %v110
  %v495 = vunpack.c.h.b16 %v110
  %v496 = vunpack.c.l.b16 %v111
  %v497 = vunpack.c.h.b16 %v111
  %v498 = vunpack.c.l.b16 %v112
  %v499 = vunpack.c.h.b16 %v112
  %v500 = vunpack.c.l.b16 %v113
  %v501 = vunpack.c.h.b16 %v113
  %v502 = vunpack.c.l.b16 %v114
  %v503 = vunpack.c.h.b16 %v114
  %v504 = vunpack.c.l.b16 %v115
  %v505 = vunpack.c.h.b16 %v115
  %v506 = vunpack.c.l.b16 %v116
  %v507 = vunpack.c.h.b16 %v116
  %v508 = vunpack.c.l.b16 %v117
  %v509 = vunpack.c.h.b16 %v117
  %v510 = vunpack.c.l.b16 %v118
  %v511 = vunpack.c.h.b16 %v118
  %v512 = vunpack.c.l.b16 %v119
  %v513 = vunpack.c.h.b16 %v119
  %v514 = vunpack.c.l.b16 %v120
  %v515 = vunpack.c.h.b16 %v120
  %v516 = vunpack.c.l.b16 %v121
  %v517 = vunpack.c.h.b16 %v121
  %v518 = vunpack.c.l.b16 %v122
  %v519 = vunpack.c.h.b16 %v122
  %v520 = vunpack.c.l.b16 %v123
  %v521 = vunpack.c.h.b16 %v123
  %v522 = vunpack.c.l.b16 %v124
  %v523 = vunpack.c.h.b16 %v124
  %v524 = vunpack.c.l.b16 %v125
  %v525 = vunpack.c.h.b16 %v125
  %v526 = vpack.c.b16 %v340, %v334
  %v527 = vpack.c.b16 %v341, %v335
  %v528 = vpack.c.b16 %v342, %v336
  %v529 = vpack.c.b16 %v343, %v337
  %v530 = vpack.c.b16 %v344, %v338
  %v531 = vpack.c.b16 %v345, %v339
  %v532 = vpack.c.b16 %v352, %v346
  %v533 = vpack.c.b16 %v353, %v347
  %v534 = vpack.c.b16 %v354, %v348
  %v535 = vpack.c.b16 %v355, %v349
  %v536 = vpack.c.b16 %v356, %v350
  %v537 = vpack.c.b16 %v357, %v351
  %v538 = vpack.c.b16 %v364, %v358
  %v539 = vpack.c.b16 %v365, %v359
  %v540 = vpack.c.b16 %v366, %v360
  %v541 = vpack.c.b16 %v367, %v361
  %v542 = vpack.c.b16 %v368, %v362
  %v543 = vpack.c.b16 %v369, %v363
  %v544 = vpack.c.b16 %v376, %v370
  %v545 = vpack.c.b16 %v377, %v371
  %v546 = vpack.c.b16 %v378, %v372
  %v547 = vpack.c.b16 %v379, %v373
  %v548 = vpack.c.b16 %v380, %v374
  %v549 = vpack.c.b16 %v381, %v375
  %v550 = vpack.c.b16 %v388, %v382
  %v551 = vpack.c.b16 %v389, %v383
  %v552 = vpack.c.b16 %v390, %v384
  %v553 = vpack.c.b16 %v391, %v385
  %v554 = vpack.c.b16 %v392, %v386
  %v555 = vpack.c.b16 %v393, %v387
  %v556 = vpack.c.b16 %v400, %v394
  %v557 = vpack.c.b16 %v401, %v395
  %v558 = vpack.c.b16 %v402, %v396
  %v559 = vpack.c.b16 %v403, %v397
  %v560 = vpack.c.b16 %v404, %v398
  %v561 = vpack.c.b16 %v405, %v399
  %v562 = vpack.c.b16 %v412, %v406
  %v563 = vpack.c.b16 %v413, %v407
  %v564 = vpack.c.b16 %v414, %v408
  %v565 = vpack.c.b16 %v415, %v409
  %v566 = vpack.c.b16 %v416, %v410
  %v567 = vpack.c.b16 %v417, %v411
  %v568 = vpack.c.b16 %v424, %v418
  %v569 = vpack.c.b16 %v425, %v419
  %v570 = vpack.c.b16 %v426, %v420
  %v571 = vpack.c.b16 %v427, %v421
  %v572 = vpack.c.b16 %v428, %v422
  %v573 = vpack.c.b16 %v429, %v423
  %v574 = vpack.c.b16 %v436, %v430
  %v575 = vpack.c.b16 %v437, %v431
  %v576 = vpack.c.b16 %v438, %v432
  %v577 = vpack.c.b16 %v439, %v433
  %v578 = vpack.c.b16 %v440, %v434
  %v579 = vpack.c.b16 %v441, %v435
  %v580 = vpack.c.b16 %v448, %v442
  %v581 = vpack.c.b16 %v449, %v443
  %v582 = vpack.c.b16 %v450, %v444
  %v583 = vpack.c.b16 %v451, %v445
  %v584 = vpack.c.b16 %v452, %v446
  %v585 = vpack.c.b16 %v453, %v447
  %v586 = vpack.c.b16 %v460, %v454
  %v587 = vpack.c.b16 %v461, %v455
  %v588 = vpack.c.b16 %v462, %v456
  %v589 = vpack.c.b16 %v463, %v457
  %v590 = vpack.c.b16 %v464, %v458
  %v591 = vpack.c.b16 %v465, %v459
  %v592 = vpack.c.b16 %v472, %v466
  %v593 = vpack.c.b16 %v473, %v467
  %v594 = vpack.c.b16 %v474, %v468
  %v595 = vpack.c.b16 %v475, %v469
  %v596 = vpack.c.b16 %v476, %v470
  %v597 = vpack.c.b16 %v477, %v471
  %v598 = vpack.c.b16 %v484, %v478
  %v599 = vpack.c.b16 %v485, %v479
  %v600 = vpack.c.b16 %v486, %v480
  %v601 = vpack.c.b16 %v487, %v481
  %v602 = vpack.c.b16 %v488, %v482
  %v603 = vpack.c.b16 %v489, %v483
  %v604 = vpack.c.b16 %v496, %v490
  %v605 = vpack.c.b16 %v497, %v491
  %v606 = vpack.c.b16 %v498, %v492
  %v607 = vpack.c.b16 %v499, %v493
  %v608 = vpack.c.b16 %v500, %v494
  %v609 = vpack.c.b16 %v501, %v495
  %v610 = vpack.c.b16 %v508, %v502
  %v611 = vpack.c.b16 %v509, %v503
  %v612 = vpack.c.b16 %v510, %v504
  %v613 = vpack.c.b16 %v511, %v505
  %v614 = vpack.c.b16 %v512, %v506
  %v615 = vpack.c.b16 %v513, %v507
  %v616 = vpack.c.b16 %v520, %v514
  %v617 = vpack.c.b16 %v521, %v515
  %v618 = vpack.c.b16 %v522, %v516
  %v619 = vpack.c.b16 %v523, %v517
  %v620 = vpack.c.b16 %v524, %v518
  %v621 = vpack.c.b16 %v525, %v519
  %718 = vmatprep.subr.bf16.mxu0 %v569
  %719 = vmatpush1.bf16.msra.mxu0 %v568
  %720 = vmatprep.subr.bf16.mxu0 %v563
  %721 = vmatpush1.bf16.msra.mxu0 %v562
  %722 = vmatprep.subr.bf16.mxu0 %v557
  %723 = vmatpush1.bf16.msra.mxu0 %v556
  %724 = vmatprep.subr.bf16.mxu0 %v551
  %725 = vmatpush1.bf16.msra.mxu0 %v550
  %726 = vmatprep.subr.bf16.mxu0 %v545
  %727 = vmatpush1.bf16.msra.mxu0 %v544
  %728 = vmatprep.subr.bf16.mxu0 %v539
  %729 = vmatpush1.bf16.msra.mxu0 %v538
  %730 = vmatprep.subr.bf16.mxu0 %v533
  %731 = vmatpush1.bf16.msra.mxu0 %v532
  %732 = vmatprep.subr.bf16.mxu0 %v527
  %733 = vmatpush1.bf16.msra.mxu0 %v526
  %734 = vmatprep.subr.bf16.mxu0 %v617
  %735 = vmatpush2.bf16.msra.mxu0 %v616
  %736 = vmatprep.subr.bf16.mxu0 %v611
  %737 = vmatpush2.bf16.msra.mxu0 %v610
  %738 = vmatprep.subr.bf16.mxu0 %v605
  %739 = vmatpush2.bf16.msra.mxu0 %v604
  %740 = vmatprep.subr.bf16.mxu0 %v599
  %741 = vmatpush2.bf16.msra.mxu0 %v598
  %742 = vmatprep.subr.bf16.mxu0 %v593
  %743 = vmatpush2.bf16.msra.mxu0 %v592
  %744 = vmatprep.subr.bf16.mxu0 %v587
  %745 = vmatpush2.bf16.msra.mxu0 %v586
  %746 = vmatprep.subr.bf16.mxu0 %v581
  %747 = vmatpush2.bf16.msra.mxu0 %v580
  %748 = vmatprep.subr.bf16.mxu0 %v575
  %749 = vmatpush2.bf16.msra.mxu0 %v574
  %750 = vmatprep.mubr.bf16.mxu0 %v207
  %751 = vmatmul.mubr.bf16.gmra.mxu0 %v206
  %v752 = vpop.f32.mrf.mxu0
  %v753 = vadd.f32 %v131, %v752
  %v754 = vpop.f32.mrf.mxu0
  %v755 = vadd.f32 %v135, %v754
  %v756 = vpop.f32.mrf.mxu0
  %v757 = vadd.f32 %v131, %v756
  %v758 = vpop.f32.mrf.mxu0
  %v759 = vadd.f32 %v135, %v758
  %760 = vmatprep.mubr.bf16.mxu0 %v209
  %761 = vmatmul.mubr.bf16.gmra.mxu0 %v208
  %v762 = vpop.f32.mrf.mxu0
  %v763 = vadd.f32 %v131, %v762
  %v764 = vpop.f32.mrf.mxu0
  %v765 = vadd.f32 %v135, %v764
  %v766 = vpop.f32.mrf.mxu0
  %v767 = vadd.f32 %v131, %v766
  %v768 = vpop.f32.mrf.mxu0
  %v769 = vadd.f32 %v135, %v768
  %770 = vmatprep.mubr.bf16.mxu0 %v211
  %771 = vmatmul.mubr.bf16.gmra.mxu0 %v210
  %v772 = vpop.f32.mrf.mxu0
  %v773 = vadd.f32 %v131, %v772
  %v774 = vpop.f32.mrf.mxu0
  %v775 = vadd.f32 %v135, %v774
  %v776 = vpop.f32.mrf.mxu0
  %v777 = vadd.f32 %v131, %v776
  %v778 = vpop.f32.mrf.mxu0
  %v779 = vadd.f32 %v135, %v778
  %780 = vmatprep.mubr.bf16.mxu0 %v213
  %781 = vmatmul.mubr.bf16.gmra.mxu0 %v212
  %v782 = vpop.f32.mrf.mxu0
  %v783 = vadd.f32 %v131, %v782
  %v784 = vpop.f32.mrf.mxu0
  %v785 = vadd.f32 %v135, %v784
  %v786 = vpop.f32.mrf.mxu0
  %v787 = vadd.f32 %v131, %v786
  %v788 = vpop.f32.mrf.mxu0
  %v789 = vadd.f32 %v135, %v788
  %790 = vmatprep.mubr.bf16.mxu0 %v215
  %791 = vmatmul.mubr.bf16.gmra.mxu0 %v214
  %v792 = vpop.f32.mrf.mxu0
  %v793 = vadd.f32 %v131, %v792
  %v794 = vpop.f32.mrf.mxu0
  %v795 = vadd.f32 %v135, %v794
  %v796 = vpop.f32.mrf.mxu0
  %v797 = vadd.f32 %v131, %v796
  %v798 = vpop.f32.mrf.mxu0
  %v799 = vadd.f32 %v135, %v798
  %800 = vmatprep.mubr.bf16.mxu0 %v217
  %801 = vmatmul.mubr.bf16.gmra.mxu0 %v216
  %v802 = vpop.f32.mrf.mxu0
  %v803 = vadd.f32 %v131, %v802
  %v804 = vpop.f32.mrf.mxu0
  %v805 = vadd.f32 %v135, %v804
  %v806 = vpop.f32.mrf.mxu0
  %v807 = vadd.f32 %v131, %v806
  %v808 = vpop.f32.mrf.mxu0
  %v809 = vadd.f32 %v135, %v808
  %810 = vmatprep.mubr.bf16.mxu0 %v219
  %811 = vmatmul.mubr.bf16.gmra.mxu0 %v218
  %v812 = vpop.f32.mrf.mxu0
  %v813 = vadd.f32 %v131, %v812
  %v814 = vpop.f32.mrf.mxu0
  %v815 = vadd.f32 %v135, %v814
  %v816 = vpop.f32.mrf.mxu0
  %v817 = vadd.f32 %v131, %v816
  %v818 = vpop.f32.mrf.mxu0
  %v819 = vadd.f32 %v135, %v818
  %820 = vmatprep.mubr.bf16.mxu0 %v221
  %821 = vmatmul.mubr.bf16.gmra.mxu0 %v220
  %v822 = vpop.f32.mrf.mxu0
  %v823 = vadd.f32 %v131, %v822
  %v824 = vpop.f32.mrf.mxu0
  %v825 = vadd.f32 %v135, %v824
  %v826 = vpop.f32.mrf.mxu0
  %v827 = vadd.f32 %v131, %v826
  %v828 = vpop.f32.mrf.mxu0
  %v829 = vadd.f32 %v135, %v828
  %830 = vdwg.mxu0
  %831 = vmatprep.subr.bf16.mxu0 %v571
  %832 = vmatpush1.bf16.msra.mxu0 %v570
  %833 = vmatprep.subr.bf16.mxu0 %v565
  %834 = vmatpush1.bf16.msra.mxu0 %v564
  %835 = vmatprep.subr.bf16.mxu0 %v559
  %836 = vmatpush1.bf16.msra.mxu0 %v558
  %837 = vmatprep.subr.bf16.mxu0 %v553
  %838 = vmatpush1.bf16.msra.mxu0 %v552
  %839 = vmatprep.subr.bf16.mxu0 %v547
  %840 = vmatpush1.bf16.msra.mxu0 %v546
  %841 = vmatprep.subr.bf16.mxu0 %v541
  %842 = vmatpush1.bf16.msra.mxu0 %v540
  %843 = vmatprep.subr.bf16.mxu0 %v535
  %844 = vmatpush1.bf16.msra.mxu0 %v534
  %845 = vmatprep.subr.bf16.mxu0 %v529
  %846 = vmatpush1.bf16.msra.mxu0 %v528
  %847 = vmatprep.subr.bf16.mxu0 %v619
  %848 = vmatpush2.bf16.msra.mxu0 %v618
  %849 = vmatprep.subr.bf16.mxu0 %v613
  %850 = vmatpush2.bf16.msra.mxu0 %v612
  %851 = vmatprep.subr.bf16.mxu0 %v607
  %852 = vmatpush2.bf16.msra.mxu0 %v606
  %853 = vmatprep.subr.bf16.mxu0 %v601
  %854 = vmatpush2.bf16.msra.mxu0 %v600
  %855 = vmatprep.subr.bf16.mxu0 %v595
  %856 = vmatpush2.bf16.msra.mxu0 %v594
  %857 = vmatprep.subr.bf16.mxu0 %v589
  %858 = vmatpush2.bf16.msra.mxu0 %v588
  %859 = vmatprep.subr.bf16.mxu0 %v583
  %860 = vmatpush2.bf16.msra.mxu0 %v582
  %861 = vmatprep.subr.bf16.mxu0 %v577
  %862 = vmatpush2.bf16.msra.mxu0 %v576
  %863 = vmatprep.mubr.bf16.mxu0 %v207
  %864 = vmatmul.mubr.bf16.gmra.mxu0 %v206
  %v865 = vpop.f32.mrf.mxu0
  %v866 = vadd.f32 %v139, %v865
  %v867 = vpop.f32.mrf.mxu0
  %v868 = vadd.f32 %v143, %v867
  %v869 = vpop.f32.mrf.mxu0
  %v870 = vadd.f32 %v139, %v869
  %v871 = vpop.f32.mrf.mxu0
  %v872 = vadd.f32 %v143, %v871
  %873 = vmatprep.mubr.bf16.mxu0 %v209
  %874 = vmatmul.mubr.bf16.gmra.mxu0 %v208
  %v875 = vpop.f32.mrf.mxu0
  %v876 = vadd.f32 %v139, %v875
  %v877 = vpop.f32.mrf.mxu0
  %v878 = vadd.f32 %v143, %v877
  %v879 = vpop.f32.mrf.mxu0
  %v880 = vadd.f32 %v139, %v879
  %v881 = vpop.f32.mrf.mxu0
  %v882 = vadd.f32 %v143, %v881
  %883 = vmatprep.mubr.bf16.mxu0 %v211
  %884 = vmatmul.mubr.bf16.gmra.mxu0 %v210
  %v885 = vpop.f32.mrf.mxu0
  %v886 = vadd.f32 %v139, %v885
  %v887 = vpop.f32.mrf.mxu0
  %v888 = vadd.f32 %v143, %v887
  %v889 = vpop.f32.mrf.mxu0
  %v890 = vadd.f32 %v139, %v889
  %v891 = vpop.f32.mrf.mxu0
  %v892 = vadd.f32 %v143, %v891
  %893 = vmatprep.mubr.bf16.mxu0 %v213
  %894 = vmatmul.mubr.bf16.gmra.mxu0 %v212
  %v895 = vpop.f32.mrf.mxu0
  %v896 = vadd.f32 %v139, %v895
  %v897 = vpop.f32.mrf.mxu0
  %v898 = vadd.f32 %v143, %v897
  %v899 = vpop.f32.mrf.mxu0
  %v900 = vadd.f32 %v139, %v899
  %v901 = vpop.f32.mrf.mxu0
  %v902 = vadd.f32 %v143, %v901
  %903 = vmatprep.mubr.bf16.mxu0 %v215
  %904 = vmatmul.mubr.bf16.gmra.mxu0 %v214
  %v905 = vpop.f32.mrf.mxu0
  %v906 = vadd.f32 %v139, %v905
  %v907 = vpop.f32.mrf.mxu0
  %v908 = vadd.f32 %v143, %v907
  %v909 = vpop.f32.mrf.mxu0
  %v910 = vadd.f32 %v139, %v909
  %v911 = vpop.f32.mrf.mxu0
  %v912 = vadd.f32 %v143, %v911
  %913 = vmatprep.mubr.bf16.mxu0 %v217
  %914 = vmatmul.mubr.bf16.gmra.mxu0 %v216
  %v915 = vpop.f32.mrf.mxu0
  %v916 = vadd.f32 %v139, %v915
  %v917 = vpop.f32.mrf.mxu0
  %v918 = vadd.f32 %v143, %v917
  %v919 = vpop.f32.mrf.mxu0
  %v920 = vadd.f32 %v139, %v919
  %v921 = vpop.f32.mrf.mxu0
  %v922 = vadd.f32 %v143, %v921
  %923 = vmatprep.mubr.bf16.mxu0 %v219
  %924 = vmatmul.mubr.bf16.gmra.mxu0 %v218
  %v925 = vpop.f32.mrf.mxu0
  %v926 = vadd.f32 %v139, %v925
  %v927 = vpop.f32.mrf.mxu0
  %v928 = vadd.f32 %v143, %v927
  %v929 = vpop.f32.mrf.mxu0
  %v930 = vadd.f32 %v139, %v929
  %v931 = vpop.f32.mrf.mxu0
  %v932 = vadd.f32 %v143, %v931
  %933 = vmatprep.mubr.bf16.mxu0 %v221
  %934 = vmatmul.mubr.bf16.gmra.mxu0 %v220
  %v935 = vpop.f32.mrf.mxu0
  %v936 = vadd.f32 %v139, %v935
  %v937 = vpop.f32.mrf.mxu0
  %v938 = vadd.f32 %v143, %v937
  %v939 = vpop.f32.mrf.mxu0
  %v940 = vadd.f32 %v139, %v939
  %v941 = vpop.f32.mrf.mxu0
  %v942 = vadd.f32 %v143, %v941
  %943 = vdwg.mxu0
  %944 = vmatprep.subr.bf16.mxu0 %v573
  %945 = vmatpush1.bf16.msra.mxu0 %v572
  %946 = vmatprep.subr.bf16.mxu0 %v567
  %947 = vmatpush1.bf16.msra.mxu0 %v566
  %948 = vmatprep.subr.bf16.mxu0 %v561
  %949 = vmatpush1.bf16.msra.mxu0 %v560
  %950 = vmatprep.subr.bf16.mxu0 %v555
  %951 = vmatpush1.bf16.msra.mxu0 %v554
  %952 = vmatprep.subr.bf16.mxu0 %v549
  %953 = vmatpush1.bf16.msra.mxu0 %v548
  %954 = vmatprep.subr.bf16.mxu0 %v543
  %955 = vmatpush1.bf16.msra.mxu0 %v542
  %956 = vmatprep.subr.bf16.mxu0 %v537
  %957 = vmatpush1.bf16.msra.mxu0 %v536
  %958 = vmatprep.subr.bf16.mxu0 %v531
  %959 = vmatpush1.bf16.msra.mxu0 %v530
  %960 = vmatprep.subr.bf16.mxu0 %v621
  %961 = vmatpush2.bf16.msra.mxu0 %v620
  %962 = vmatprep.subr.bf16.mxu0 %v615
  %963 = vmatpush2.bf16.msra.mxu0 %v614
  %964 = vmatprep.subr.bf16.mxu0 %v609
  %965 = vmatpush2.bf16.msra.mxu0 %v608
  %966 = vmatprep.subr.bf16.mxu0 %v603
  %967 = vmatpush2.bf16.msra.mxu0 %v602
  %968 = vmatprep.subr.bf16.mxu0 %v597
  %969 = vmatpush2.bf16.msra.mxu0 %v596
  %970 = vmatprep.subr.bf16.mxu0 %v591
  %971 = vmatpush2.bf16.msra.mxu0 %v590
  %972 = vmatprep.subr.bf16.mxu0 %v585
  %973 = vmatpush2.bf16.msra.mxu0 %v584
  %974 = vmatprep.subr.bf16.mxu0 %v579
  %975 = vmatpush2.bf16.msra.mxu0 %v578
  %976 = vmatprep.mubr.bf16.mxu0 %v207
  %977 = vmatmul.mubr.bf16.gmra.mxu0 %v206
  %v978 = vpop.f32.mrf.mxu0
  %v979 = vadd.f32 %v147, %v978
  %v980 = vpop.f32.mrf.mxu0
  %v981 = vadd.f32 %v151, %v980
  %v982 = vpop.f32.mrf.mxu0
  %v983 = vadd.f32 %v147, %v982
  %v984 = vpop.f32.mrf.mxu0
  %v985 = vadd.f32 %v151, %v984
  %986 = vmatprep.mubr.bf16.mxu0 %v209
  %987 = vmatmul.mubr.bf16.gmra.mxu0 %v208
  %v988 = vpop.f32.mrf.mxu0
  %v989 = vadd.f32 %v147, %v988
  %v990 = vpop.f32.mrf.mxu0
  %v991 = vadd.f32 %v151, %v990
  %v992 = vpop.f32.mrf.mxu0
  %v993 = vadd.f32 %v147, %v992
  %v994 = vpop.f32.mrf.mxu0
  %v995 = vadd.f32 %v151, %v994
  %996 = vmatprep.mubr.bf16.mxu0 %v211
  %997 = vmatmul.mubr.bf16.gmra.mxu0 %v210
  %v998 = vpop.f32.mrf.mxu0
  %v999 = vadd.f32 %v147, %v998
  %v1000 = vpop.f32.mrf.mxu0
  %v1001 = vadd.f32 %v151, %v1000
  %v1002 = vpop.f32.mrf.mxu0
  %v1003 = vadd.f32 %v147, %v1002
  %v1004 = vpop.f32.mrf.mxu0
  %v1005 = vadd.f32 %v151, %v1004
  %1006 = vmatprep.mubr.bf16.mxu0 %v213
  %1007 = vmatmul.mubr.bf16.gmra.mxu0 %v212
  %v1008 = vpop.f32.mrf.mxu0
  %v1009 = vadd.f32 %v147, %v1008
  %v1010 = vpop.f32.mrf.mxu0
  %v1011 = vadd.f32 %v151, %v1010
  %v1012 = vpop.f32.mrf.mxu0
  %v1013 = vadd.f32 %v147, %v1012
  %v1014 = vpop.f32.mrf.mxu0
  %v1015 = vadd.f32 %v151, %v1014
  %1016 = vmatprep.mubr.bf16.mxu0 %v215
  %1017 = vmatmul.mubr.bf16.gmra.mxu0 %v214
  %v1018 = vpop.f32.mrf.mxu0
  %v1019 = vadd.f32 %v147, %v1018
  %v1020 = vpop.f32.mrf.mxu0
  %v1021 = vadd.f32 %v151, %v1020
  %v1022 = vpop.f32.mrf.mxu0
  %v1023 = vadd.f32 %v147, %v1022
  %v1024 = vpop.f32.mrf.mxu0
  %v1025 = vadd.f32 %v151, %v1024
  %1026 = vmatprep.mubr.bf16.mxu0 %v217
  %1027 = vmatmul.mubr.bf16.gmra.mxu0 %v216
  %v1028 = vpop.f32.mrf.mxu0
  %v1029 = vadd.f32 %v147, %v1028
  %v1030 = vpop.f32.mrf.mxu0
  %v1031 = vadd.f32 %v151, %v1030
  %v1032 = vpop.f32.mrf.mxu0
  %v1033 = vadd.f32 %v147, %v1032
  %v1034 = vpop.f32.mrf.mxu0
  %v1035 = vadd.f32 %v151, %v1034
  %1036 = vmatprep.mubr.bf16.mxu0 %v219
  %1037 = vmatmul.mubr.bf16.gmra.mxu0 %v218
  %v1038 = vpop.f32.mrf.mxu0
  %v1039 = vadd.f32 %v147, %v1038
  %v1040 = vpop.f32.mrf.mxu0
  %v1041 = vadd.f32 %v151, %v1040
  %v1042 = vpop.f32.mrf.mxu0
  %v1043 = vadd.f32 %v147, %v1042
  %v1044 = vpop.f32.mrf.mxu0
  %v1045 = vadd.f32 %v151, %v1044
  %1046 = vmatprep.mubr.bf16.mxu0 %v221
  %1047 = vmatmul.mubr.bf16.gmra.mxu0 %v220
  %v1048 = vpop.f32.mrf.mxu0
  %v1049 = vadd.f32 %v147, %v1048
  %v1050 = vpop.f32.mrf.mxu0
  %v1051 = vadd.f32 %v151, %v1050
  %v1052 = vpop.f32.mrf.mxu0
  %v1053 = vadd.f32 %v147, %v1052
  %v1054 = vpop.f32.mrf.mxu0
  %v1055 = vadd.f32 %v151, %v1054
  %1056 = vdwg.mxu0
  %1057 = vst [vmem:[%s3] sm:$0xff] %v753
  %1058 = vst [vmem:[%s3 + $0x8] sm:$0xff] %v755
  %1059 = vst [vmem:[%s3 + $0x10] sm:$0xff] %v866
  %1060 = vst [vmem:[%s3 + $0x18] sm:$0xff] %v868
  %1061 = vst [vmem:[%s3 + $0x20] sm:$0xff] %v979
  %1062 = vst [vmem:[%s3 + $0x28] sm:$0xff] %v981
  %1063 = vst [vmem:[%s3 + $0x30] sm:$0xff] %v757
  %1064 = vst [vmem:[%s3 + $0x38] sm:$0xff] %v759
  %1065 = vst [vmem:[%s3 + $0x40] sm:$0xff] %v870
  %1066 = vst [vmem:[%s3 + $0x48] sm:$0xff] %v872
  %1067 = vst [vmem:[%s3 + $0x50] sm:$0xff] %v983
  %1068 = vst [vmem:[%s3 + $0x58] sm:$0xff] %v985
  %1069 = vst [vmem:[%s3 + $0x60] sm:$0xff] %v763
  %1070 = vst [vmem:[%s3 + $0x68] sm:$0xff] %v765
  %1071 = vst [vmem:[%s3 + $0x70] sm:$0xff] %v876
  %1072 = vst [vmem:[%s3 + $0x78] sm:$0xff] %v878
  %1073 = vst [vmem:[%s3 + $0x80] sm:$0xff] %v989
  %1074 = vst [vmem:[%s3 + $0x88] sm:$0xff] %v991
  %1075 = vst [vmem:[%s3 + $0x90] sm:$0xff] %v767
  %1076 = vst [vmem:[%s3 + $0x98] sm:$0xff] %v769
  %1077 = vst [vmem:[%s3 + $0xa0] sm:$0xff] %v880
  %1078 = vst [vmem:[%s3 + $0xa8] sm:$0xff] %v882
  %1079 = vst [vmem:[%s3 + $0xb0] sm:$0xff] %v993
  %1080 = vst [vmem:[%s3 + $0xb8] sm:$0xff] %v995
  %1081 = vst [vmem:[%s3 + $0xc0] sm:$0xff] %v773
  %1082 = vst [vmem:[%s3 + $0xc8] sm:$0xff] %v775
  %1083 = vst [vmem:[%s3 + $0xd0] sm:$0xff] %v886
  %1084 = vst [vmem:[%s3 + $0xd8] sm:$0xff] %v888
  %1085 = vst [vmem:[%s3 + $0xe0] sm:$0xff] %v999
  %1086 = vst [vmem:[%s3 + $0xe8] sm:$0xff] %v1001
  %1087 = vst [vmem:[%s3 + $0xf0] sm:$0xff] %v777
  %1088 = vst [vmem:[%s3 + $0xf8] sm:$0xff] %v779
  %1089 = vst [vmem:[%s3 + $0x100] sm:$0xff] %v890
  %1090 = vst [vmem:[%s3 + $0x108] sm:$0xff] %v892
  %1091 = vst [vmem:[%s3 + $0x110] sm:$0xff] %v1003
  %1092 = vst [vmem:[%s3 + $0x118] sm:$0xff] %v1005
  %1093 = vst [vmem:[%s3 + $0x120] sm:$0xff] %v783
  %1094 = vst [vmem:[%s3 + $0x128] sm:$0xff] %v785
  %1095 = vst [vmem:[%s3 + $0x130] sm:$0xff] %v896
  %1096 = vst [vmem:[%s3 + $0x138] sm:$0xff] %v898
  %1097 = vst [vmem:[%s3 + $0x140] sm:$0xff] %v1009
  %1098 = vst [vmem:[%s3 + $0x148] sm:$0xff] %v1011
  %1099 = vst [vmem:[%s3 + $0x150] sm:$0xff] %v787
  %1100 = vst [vmem:[%s3 + $0x158] sm:$0xff] %v789
  %1101 = vst [vmem:[%s3 + $0x160] sm:$0xff] %v900
  %1102 = vst [vmem:[%s3 + $0x168] sm:$0xff] %v902
  %1103 = vst [vmem:[%s3 + $0x170] sm:$0xff] %v1013
  %1104 = vst [vmem:[%s3 + $0x178] sm:$0xff] %v1015
  %1105 = vst [vmem:[%s3 + $0x180] sm:$0xff] %v793
  %1106 = vst [vmem:[%s3 + $0x188] sm:$0xff] %v795
  %1107 = vst [vmem:[%s3 + $0x190] sm:$0xff] %v906
  %1108 = vst [vmem:[%s3 + $0x198] sm:$0xff] %v908
  %1109 = vst [vmem:[%s3 + $0x1a0] sm:$0xff] %v1019
  %1110 = vst [vmem:[%s3 + $0x1a8] sm:$0xff] %v1021
  %1111 = vst [vmem:[%s3 + $0x1b0] sm:$0xff] %v797
  %1112 = vst [vmem:[%s3 + $0x1b8] sm:$0xff] %v799
  %1113 = vst [vmem:[%s3 + $0x1c0] sm:$0xff] %v910
  %1114 = vst [vmem:[%s3 + $0x1c8] sm:$0xff] %v912
  %1115 = vst [vmem:[%s3 + $0x1d0] sm:$0xff] %v1023
  %1116 = vst [vmem:[%s3 + $0x1d8] sm:$0xff] %v1025
  %1117 = vst [vmem:[%s3 + $0x1e0] sm:$0xff] %v803
  %1118 = vst [vmem:[%s3 + $0x1e8] sm:$0xff] %v805
  %1119 = vst [vmem:[%s3 + $0x1f0] sm:$0xff] %v916
  %1120 = vst [vmem:[%s3 + $0x1f8] sm:$0xff] %v918
  %1121 = vst [vmem:[%s3 + $0x200] sm:$0xff] %v1029
  %1122 = vst [vmem:[%s3 + $0x208] sm:$0xff] %v1031
  %1123 = vst [vmem:[%s3 + $0x210] sm:$0xff] %v807
  %1124 = vst [vmem:[%s3 + $0x218] sm:$0xff] %v809
  %1125 = vst [vmem:[%s3 + $0x220] sm:$0xff] %v920
  %1126 = vst [vmem:[%s3 + $0x228] sm:$0xff] %v922
  %1127 = vst [vmem:[%s3 + $0x230] sm:$0xff] %v1033
  %1128 = vst [vmem:[%s3 + $0x238] sm:$0xff] %v1035
  %1129 = vst [vmem:[%s3 + $0x240] sm:$0xff] %v813
  %1130 = vst [vmem:[%s3 + $0x248] sm:$0xff] %v815
  %1131 = vst [vmem:[%s3 + $0x250] sm:$0xff] %v926
  %1132 = vst [vmem:[%s3 + $0x258] sm:$0xff] %v928
  %1133 = vst [vmem:[%s3 + $0x260] sm:$0xff] %v1039
  %1134 = vst [vmem:[%s3 + $0x268] sm:$0xff] %v1041
  %1135 = vst [vmem:[%s3 + $0x270] sm:$0xff] %v817
  %1136 = vst [vmem:[%s3 + $0x278] sm:$0xff] %v819
  %1137 = vst [vmem:[%s3 + $0x280] sm:$0xff] %v930
  %1138 = vst [vmem:[%s3 + $0x288] sm:$0xff] %v932
  %1139 = vst [vmem:[%s3 + $0x290] sm:$0xff] %v1043
  %1140 = vst [vmem:[%s3 + $0x298] sm:$0xff] %v1045
  %1141 = vst [vmem:[%s3 + $0x2a0] sm:$0xff] %v823
  %1142 = vst [vmem:[%s3 + $0x2a8] sm:$0xff] %v825
  %1143 = vst [vmem:[%s3 + $0x2b0] sm:$0xff] %v936
  %1144 = vst [vmem:[%s3 + $0x2b8] sm:$0xff] %v938
  %1145 = vst [vmem:[%s3 + $0x2c0] sm:$0xff] %v1049
  %1146 = vst [vmem:[%s3 + $0x2c8] sm:$0xff] %v1051
  %1147 = vst [vmem:[%s3 + $0x2d0] sm:$0xff] %v827
  %1148 = vst [vmem:[%s3 + $0x2d8] sm:$0xff] %v829
  %1149 = vst [vmem:[%s3 + $0x2e0] sm:$0xff] %v940
  %1150 = vst [vmem:[%s3 + $0x2e8] sm:$0xff] %v942
  %1151 = vst [vmem:[%s3 + $0x2f0] sm:$0xff] %v1053
  %1152 = vst [vmem:[%s3 + $0x2f8] sm:$0xff] %v1055
  // Predicated region
  $region14: #{encode.17} parent=0 // pred_check
    _
  $region15: #{encode.17} parent=0 // pred_check_branch
    %1154 = sbr.rel (0) target = $region17
  $region16: #{encode.17} parent=0 // pred_region
    _
  $region17: #{encode.17} parent=0 // pred_fallthru
    _
  // Predicated region
  $region18: #{encode.17} parent=0 // pred_check
    _
  $region19: #{encode.17} parent=0 // pred_check_branch
    %1156 = sbr.rel (0) target = $region21
  $region20: #{encode.17} parent=0 // pred_region
    _
  $region21: #{encode.17} parent=0 // pred_fallthru
    _

// kernel: encode.18
$region0: #{encode.18}
  #allocation0 [shape = 'u32[]', space=smem, size = 0x4, offset = 0x4, fixed_abs, tag = 'smem constant byte address 0x4 - core index']
  #allocation1 [shape = 'u32[144,128]{1,0:T(1,128)}', space=vmem, size = 0x12000, scoped, tag = 'internal scratch']
  %s0 = inlined_call_operand.vmem [shape: bf16[16,64,32], index: 0, kind: input, shape index: {}]
  %s1 = inlined_call_operand.vmem [shape: bf16[16,64,32], index: 1, kind: input, shape index: {}]
  %s2 = inlined_call_operand.vmem [shape: bf16[16,64,32], index: 2, kind: input, shape index: {}]
  %s3 = inlined_call_operand.vmem [shape: f32[16,64,64], index: 3, kind: input, shape index: {}]
  %s4 = inlined_call_operand.vmem [shape: f32[16,64,32], index: 4, kind: output, shape index: {}]
  %s5 = sld [smem:[#allocation0]]
  $region49: #{encode.18} parent=0
    _
  %s7 = ssub.s32 1, %s5
  %s8 = scalar_select 0, %s7, %s5
  loop: start=0, step=1, limit=18
  $region2: #{encode.18} parent=0 // loop_pre_header
    _
  $region3: #{encode.18} parent=0 // loop_header
    %s10 = sphi 0, %s14
    %p11 = scmp.ge.s32.totalorder %s10, 18
    %s20 = sphi 0, %s22
    %s23 = sphi 0, %s20
    %s24 = sphi 0, %s23
    %s40 = sphi 0, %s24
    %s46 = sphi 0, %s48
    %s49 = sphi 0, %s46
    %s50 = sphi 0, %s49
    %s66 = sphi 0, %s50
    %s72 = sphi 0, %s74
    %s75 = sphi 0, %s72
    %s76 = sphi 0, %s75
    %s92 = sphi 0, %s76
    %s98 = sphi 0, %s100
    %s101 = sphi 0, %s98
    %s102 = sphi 0, %s101
    %s118 = sphi 0, %s102
    %s124 = sphi 0, %s126
    %s127 = sphi 0, %s124
    %s128 = sphi 0, %s127
    %s144 = sphi 0, %s128
  $region4: #{encode.18} parent=0 // loop_header_branch
    %13 = sbr.rel (%p11) target = $region8
  $region5: #{encode.18} parent=0 // loop_body
    %s15 = ssub.s32 %s10, 1
    %s16 = ssub.s32 %s10, 2
    %s17 = sadd.s32 %s10, 1
    %s18 = ssub.s32 %s10, %s17
    %p19 = scmp.eq.s32.totalorder %s18, 0
    %s21 = sadd.s32 %s20, 1
    %s22 = scalar_select %p19, %s20, %s21
    %p25 = pneg %p19
    %p26 = scmp.eq.s32.totalorder %s10, 15
    %p27 = por %p25, %p26
    %p28 = scmp.ne.s32.totalorder %s20, %s23
    %p29 = scmp.eq.s32.totalorder %s10, 0
    %p30 = por %p28, %p29
    %p31 = scmp.ne.s32.totalorder %s20, %s23
    %p32 = scmp.eq.s32.totalorder %s15, 15
    %p33 = por %p31, %p32
    %p34 = scmp.ne.s32.totalorder %s23, %s24
    %p35 = scmp.eq.s32.totalorder %s15, 0
    %p36 = por %p34, %p35
    %p37 = scmp.ne.s32.totalorder %s23, %s24
    %p38 = scmp.eq.s32.totalorder %s16, 15
    %p39 = por %p37, %p38
    %p41 = scmp.ne.s32.totalorder %s24, %s40
    %p42 = scmp.eq.s32.totalorder %s16, 0
    %p43 = por %p41, %p42
    %s44 = ssub.s32 %s10, %s17
    %p45 = scmp.eq.s32.totalorder %s44, 0
    %s47 = sadd.s32 %s46, 1
    %s48 = scalar_select %p45, %s46, %s47
    %p51 = pneg %p45
    %p52 = scmp.eq.s32.totalorder %s10, 15
    %p53 = por %p51, %p52
    %p54 = scmp.ne.s32.totalorder %s46, %s49
    %p55 = scmp.eq.s32.totalorder %s10, 0
    %p56 = por %p54, %p55
    %p57 = scmp.ne.s32.totalorder %s46, %s49
    %p58 = scmp.eq.s32.totalorder %s15, 15
    %p59 = por %p57, %p58
    %p60 = scmp.ne.s32.totalorder %s49, %s50
    %p61 = scmp.eq.s32.totalorder %s15, 0
    %p62 = por %p60, %p61
    %p63 = scmp.ne.s32.totalorder %s49, %s50
    %p64 = scmp.eq.s32.totalorder %s16, 15
    %p65 = por %p63, %p64
    %p67 = scmp.ne.s32.totalorder %s50, %s66
    %p68 = scmp.eq.s32.totalorder %s16, 0
    %p69 = por %p67, %p68
    %s70 = ssub.s32 %s10, %s17
    %p71 = scmp.eq.s32.totalorder %s70, 0
    %s73 = sadd.s32 %s72, 1
    %s74 = scalar_select %p71, %s72, %s73
    %p77 = pneg %p71
    %p78 = scmp.eq.s32.totalorder %s10, 15
    %p79 = por %p77, %p78
    %p80 = scmp.ne.s32.totalorder %s72, %s75
    %p81 = scmp.eq.s32.totalorder %s10, 0
    %p82 = por %p80, %p81
    %p83 = scmp.ne.s32.totalorder %s72, %s75
    %p84 = scmp.eq.s32.totalorder %s15, 15
    %p85 = por %p83, %p84
    %p86 = scmp.ne.s32.totalorder %s75, %s76
    %p87 = scmp.eq.s32.totalorder %s15, 0
    %p88 = por %p86, %p87
    %p89 = scmp.ne.s32.totalorder %s75, %s76
    %p90 = scmp.eq.s32.totalorder %s16, 15
    %p91 = por %p89, %p90
    %p93 = scmp.ne.s32.totalorder %s76, %s92
    %p94 = scmp.eq.s32.totalorder %s16, 0
    %p95 = por %p93, %p94
    %s96 = ssub.s32 %s10, %s17
    %p97 = scmp.eq.s32.totalorder %s96, 0
    %s99 = sadd.s32 %s98, 1
    %s100 = scalar_select %p97, %s98, %s99
    %p103 = pneg %p97
    %p104 = scmp.eq.s32.totalorder %s10, 15
    %p105 = por %p103, %p104
    %p106 = scmp.ne.s32.totalorder %s98, %s101
    %p107 = scmp.eq.s32.totalorder %s10, 0
    %p108 = por %p106, %p107
    %p109 = scmp.ne.s32.totalorder %s98, %s101
    %p110 = scmp.eq.s32.totalorder %s15, 15
    %p111 = por %p109, %p110
    %p112 = scmp.ne.s32.totalorder %s101, %s102
    %p113 = scmp.eq.s32.totalorder %s15, 0
    %p114 = por %p112, %p113
    %p115 = scmp.ne.s32.totalorder %s101, %s102
    %p116 = scmp.eq.s32.totalorder %s16, 15
    %p117 = por %p115, %p116
    %p119 = scmp.ne.s32.totalorder %s102, %s118
    %p120 = scmp.eq.s32.totalorder %s16, 0
    %p121 = por %p119, %p120
    %s122 = ssub.s32 %s10, %s17
    %p123 = scmp.eq.s32.totalorder %s122, 0
    %s125 = sadd.s32 %s124, 1
    %s126 = scalar_select %p123, %s124, %s125
    %p129 = pneg %p123
    %p130 = scmp.eq.s32.totalorder %s10, 15
    %p131 = por %p129, %p130
    %p132 = scmp.ne.s32.totalorder %s124, %s127
    %p133 = scmp.eq.s32.totalorder %s10, 0
    %p134 = por %p132, %p133
    %p135 = scmp.ne.s32.totalorder %s124, %s127
    %p136 = scmp.eq.s32.totalorder %s15, 15
    %p137 = por %p135, %p136
    %p138 = scmp.ne.s32.totalorder %s127, %s128
    %p139 = scmp.eq.s32.totalorder %s15, 0
    %p140 = por %p138, %p139
    %p141 = scmp.ne.s32.totalorder %s127, %s128
    %p142 = scmp.eq.s32.totalorder %s16, 15
    %p143 = por %p141, %p142
    %p145 = scmp.ne.s32.totalorder %s128, %s144
    %p146 = scmp.eq.s32.totalorder %s16, 0
    %p147 = por %p145, %p146
    %p148 = scmp.le.s32.totalorder 1, %s10
    %p149 = scmp.lt.s32.totalorder %s10, 17
    %p150 = pnand %p148, %p149
    %p151 = pneg %p150
    // Predicated region
    $region9: #{encode.18} parent=5 // pred_check
      _
    $region10: #{encode.18} parent=5 // pred_check_branch
      %153 = sbr.rel (%p150) target = $region12
    $region11: #{encode.18} parent=5 // pred_region
      %s154 = ssub.s32 %s10, 1
    $region12: #{encode.18} parent=5 // pred_fallthru
      _
    %p155 = scmp.lt.s32.totalorder %s10, 16
    // Predicated region
    $region13: #{encode.18} parent=5 // pred_check
      %p156 = pneg %p155
    $region14: #{encode.18} parent=5 // pred_check_branch
      %158 = sbr.rel (%p156) target = $region16
    $region15: #{encode.18} parent=5 // pred_region
      // Predicated region
      $region17: #{encode.18} parent=15 // pred_check
        %p159 = pneg %p30
      $region18: #{encode.18} parent=15 // pred_check_branch
        %161 = sbr.rel (%p159) target = $region20
      $region19: #{encode.18} parent=15 // pred_region
        %p162 = scmp.lt.s32.totalorder %s10, 15
        %s163 = scalar_select %p162, %s10, 15
        %s164 = smul.addr %s163, 8
        %s165 = smul.addr %s164, 4
        %s166 = scalar_lea.vmem %s0, %s165
      $region20: #{encode.18} parent=15 // pred_fallthru
        _
      // Predicated region
      $region21: #{encode.18} parent=15 // pred_check
        %p167 = pneg %p56
      $region22: #{encode.18} parent=15 // pred_check_branch
        %169 = sbr.rel (%p167) target = $region24
      $region23: #{encode.18} parent=15 // pred_region
        %p170 = scmp.lt.s32.totalorder %s10, 15
        %s171 = scalar_select %p170, %s10, 15
        %s172 = smul.addr %s171, 8
        %s173 = smul.addr %s172, 4
        %s174 = scalar_lea.vmem %s1, %s173
      $region24: #{encode.18} parent=15 // pred_fallthru
        _
      // Predicated region
      $region25: #{encode.18} parent=15 // pred_check
        %p175 = pneg %p82
      $region26: #{encode.18} parent=15 // pred_check_branch
        %177 = sbr.rel (%p175) target = $region28
      $region27: #{encode.18} parent=15 // pred_region
        %p178 = scmp.lt.s32.totalorder %s10, 15
        %s179 = scalar_select %p178, %s10, 15
        %s180 = smul.addr %s179, 8
        %s181 = smul.addr %s180, 4
        %s182 = scalar_lea.vmem %s2, %s181
      $region28: #{encode.18} parent=15 // pred_fallthru
        _
      // Predicated region
      $region29: #{encode.18} parent=15 // pred_check
        %p183 = pneg %p108
      $region30: #{encode.18} parent=15 // pred_check_branch
        %185 = sbr.rel (%p183) target = $region32
      $region31: #{encode.18} parent=15 // pred_region
        %p186 = scmp.lt.s32.totalorder %s10, 15
        %s187 = scalar_select %p186, %s10, 15
        %s188 = smul.addr %s187, 8
        %s189 = smul.addr %s188, 8
        %s190 = scalar_lea.vmem %s3, %s189
      $region32: #{encode.18} parent=15 // pred_fallthru
        _
    $region16: #{encode.18} parent=5 // pred_fallthru
      _
    %p191 = scmp.le.s32.totalorder 1, %s10
    %p192 = scmp.lt.s32.totalorder %s10, 17
    %p193 = pnand %p191, %p192
    %p194 = pneg %p193
    // Predicated region
    $region33: #{encode.18} parent=5 // pred_check
      _
    $region34: #{encode.18} parent=5 // pred_check_branch
      %196 = sbr.rel (%p193) target = $region36
    $region35: #{encode.18} parent=5 // pred_region
      %s197 = ssub.s32 %s10, 1
      %p198 = scmp.lt.s32.totalorder %s15, 15
      %s199 = scalar_select %p198, %s15, 15
      %s200 = smul.addr %s199, 8
      %s201 = smul.addr %s200, 4
      %s202 = scalar_lea.vmem %s0, %s201
      %p203 = pneg %p36
      %p204 = pneg %p33
      %p205 = scmp.lt.s32.totalorder %s15, 15
      %s206 = scalar_select %p205, %s15, 15
      %s207 = smul.addr %s206, 8
      %s208 = smul.addr %s207, 4
      %s209 = scalar_lea.vmem %s1, %s208
      %p210 = pneg %p62
      %p211 = pneg %p59
      %p212 = scmp.lt.s32.totalorder %s15, 15
      %s213 = scalar_select %p212, %s15, 15
      %s214 = smul.addr %s213, 8
      %s215 = smul.addr %s214, 4
      %s216 = scalar_lea.vmem %s2, %s215
      %p217 = pneg %p88
      %p218 = pneg %p85
      %p219 = scmp.lt.s32.totalorder %s15, 15
      %s220 = scalar_select %p219, %s15, 15
      %s221 = smul.addr %s220, 8
      %s222 = smul.addr %s221, 8
      %s223 = scalar_lea.vmem %s3, %s222
      %p224 = pneg %p114
      %p225 = pneg %p111
      %p226 = pneg %p140
      %p227 = pneg %p137
      %p228 = scmp.lt.s32.totalorder %s15, 15
      %s229 = scalar_select %p228, %s15, 15
      %s230 = smul.addr %s229, 8
      %s231 = smul.addr %s230, 8
      %s232 = scalar_lea.vmem %s4, %s231
      %p233 = scmp.lt.s32.totalorder %s15, 15
      %s234 = scalar_select %p233, %s15, 15
      %s235 = smul.addr %s234, 8
      %s236 = smul.addr %s235, 4
      %s237 = scalar_lea.vmem %s0, %s236
      %p238 = scmp.lt.s32.totalorder %s15, 15
      %s239 = scalar_select %p238, %s15, 15
      %s240 = smul.addr %s239, 8
      %s241 = smul.addr %s240, 4
      %s242 = scalar_lea.vmem %s1, %s241
      %p243 = scmp.lt.s32.totalorder %s15, 15
      %s244 = scalar_select %p243, %s15, 15
      %s245 = smul.addr %s244, 8
      %s246 = smul.addr %s245, 4
      %s247 = scalar_lea.vmem %s2, %s246
      %p248 = scmp.lt.s32.totalorder %s15, 15
      %s249 = scalar_select %p248, %s15, 15
      %s250 = smul.addr %s249, 8
      %s251 = smul.addr %s250, 8
      %s252 = scalar_lea.vmem %s3, %s251
      %p253 = scmp.lt.s32.totalorder %s15, 15
      %s254 = scalar_select %p253, %s15, 15
      %s255 = smul.addr %s254, 8
      %s256 = smul.addr %s255, 8
      %s257 = scalar_lea.vmem %s4, %s256
      %v259 = vld [vmem:[%s237] sm:$0xf]
      %v260 = vld [vmem:[%s237 + $0x4] sm:$0xf]
      %v261 = vld [vmem:[%s237 + $0x8] sm:$0xf]
      %v262 = vld [vmem:[%s237 + $0xc] sm:$0xf]
      %v263 = vld [vmem:[%s237 + $0x10] sm:$0xf]
      %v264 = vld [vmem:[%s237 + $0x14] sm:$0xf]
      %v265 = vld [vmem:[%s237 + $0x18] sm:$0xf]
      %v266 = vld [vmem:[%s237 + $0x1c] sm:$0xf]
      %v267 = vld [vmem:[%s242] sm:$0xf]
      %v268 = vld [vmem:[%s242 + $0x4] sm:$0xf]
      %v269 = vld [vmem:[%s242 + $0x8] sm:$0xf]
      %v270 = vld [vmem:[%s242 + $0xc] sm:$0xf]
      %v271 = vld [vmem:[%s242 + $0x10] sm:$0xf]
      %v272 = vld [vmem:[%s242 + $0x14] sm:$0xf]
      %v273 = vld [vmem:[%s242 + $0x18] sm:$0xf]
      %v274 = vld [vmem:[%s242 + $0x1c] sm:$0xf]
      %v283 = vunpack.c.l.b16 %v259
      %v284 = vunpack.c.l.b16 %v260
      %v285 = vunpack.c.l.b16 %v261
      %v286 = vunpack.c.l.b16 %v262
      %v287 = vunpack.c.l.b16 %v263
      %v288 = vunpack.c.l.b16 %v264
      %v289 = vunpack.c.l.b16 %v265
      %v290 = vunpack.c.l.b16 %v266
      %v291 = vpack.c.b16 %v284, %v283
      %v292 = vpack.c.b16 %v286, %v285
      %v293 = vpack.c.b16 %v288, %v287
      %v294 = vpack.c.b16 %v290, %v289
      %v303 = vunpack.c.l.b16 %v267
      %v304 = vunpack.c.l.b16 %v268
      %v305 = vunpack.c.l.b16 %v269
      %v306 = vunpack.c.l.b16 %v270
      %v307 = vunpack.c.l.b16 %v271
      %v308 = vunpack.c.l.b16 %v272
      %v309 = vunpack.c.l.b16 %v273
      %v310 = vunpack.c.l.b16 %v274
      %v311 = vpack.c.b16 %v304, %v303
      %v312 = vpack.c.b16 %v306, %v305
      %v313 = vpack.c.b16 %v308, %v307
      %v314 = vpack.c.b16 %v310, %v309
      %vm315 = vcmask 261120
      %v317 = vsel %vm315, %v291, 0
      %v320 = vsel %vm315, %v292, 0
      %v323 = vsel %vm315, %v293, 0
      %v326 = vsel %vm315, %v294, 0
      %v329 = vsel %vm315, %v311, 0
      %v332 = vsel %vm315, %v312, 0
      %v335 = vsel %vm315, %v313, 0
      %v338 = vsel %vm315, %v314, 0
      %340 = vmatprep.subr.bf16.mxu0 0
      %341 = vmatpush1.bf16.xpose.msra.mxu0 0
      %342 = vmatprep.subr.bf16.mxu0 0
      %343 = vmatpush1.bf16.xpose.msra.mxu0 0
      %344 = vmatprep.subr.bf16.mxu0 0
      %345 = vmatpush1.bf16.xpose.msra.mxu0 0
      %346 = vmatprep.subr.bf16.mxu0 0
      %347 = vmatpush1.bf16.xpose.msra.mxu0 0
      %348 = vmatprep.subr.bf16.mxu0 0
      %349 = vmatpush1.bf16.xpose.msra.mxu0 %v338
      %350 = vmatprep.subr.bf16.mxu0 0
      %351 = vmatpush1.bf16.xpose.msra.mxu0 %v335
      %352 = vmatprep.subr.bf16.mxu0 0
      %353 = vmatpush1.bf16.xpose.msra.mxu0 %v332
      %354 = vmatprep.subr.bf16.mxu0 0
      %355 = vmatpush1.bf16.xpose.msra.mxu0 %v329
      %356 = vmatprep.subr.bf16.mxu0 0
      %357 = vmatpush2.bf16.xpose.msra.mxu0 0
      %358 = vmatprep.subr.bf16.mxu0 0
      %359 = vmatpush2.bf16.xpose.msra.mxu0 0
      %360 = vmatprep.subr.bf16.mxu0 0
      %361 = vmatpush2.bf16.xpose.msra.mxu0 0
      %362 = vmatprep.subr.bf16.mxu0 0
      %363 = vmatpush2.bf16.xpose.msra.mxu0 0
      %364 = vmatprep.subr.bf16.mxu0 0
      %365 = vmatpush2.bf16.xpose.msra.mxu0 0
      %366 = vmatprep.subr.bf16.mxu0 0
      %367 = vmatpush2.bf16.xpose.msra.mxu0 0
      %368 = vmatprep.subr.bf16.mxu0 0
      %369 = vmatpush2.bf16.xpose.msra.mxu0 0
      %370 = vmatprep.subr.bf16.mxu0 0
      %371 = vmatpush2.bf16.xpose.msra.mxu0 0
      %372 = vmatprep.mubr.bf16.mxu0 0
      %373 = vmatmul.mubr.bf16.gmra.mxu0 %v317
      %v374 = vpop.f32.mrf.mxu0
      %v375 = vadd.f32 0.0, %v374
      %v376 = vpop.f32.mrf.mxu0
      %v377 = vpop.f32.mrf.mxu0
      %v378 = vadd.f32 0.0, %v377
      %v379 = vpop.f32.mrf.mxu0
      %380 = vmatprep.mubr.bf16.mxu0 0
      %381 = vmatmul.mubr.bf16.gmra.mxu0 %v320
      %v382 = vpop.f32.mrf.mxu0
      %v383 = vadd.f32 0.0, %v382
      %v384 = vpop.f32.mrf.mxu0
      %v385 = vpop.f32.mrf.mxu0
      %v386 = vadd.f32 0.0, %v385
      %v387 = vpop.f32.mrf.mxu0
      %388 = vmatprep.mubr.bf16.mxu0 0
      %389 = vmatmul.mubr.bf16.gmra.mxu0 %v323
      %v390 = vpop.f32.mrf.mxu0
      %v391 = vadd.f32 0.0, %v390
      %v392 = vpop.f32.mrf.mxu0
      %v393 = vpop.f32.mrf.mxu0
      %v394 = vadd.f32 0.0, %v393
      %v395 = vpop.f32.mrf.mxu0
      %396 = vmatprep.mubr.bf16.mxu0 0
      %397 = vmatmul.mubr.bf16.gmra.mxu0 %v326
      %v398 = vpop.f32.mrf.mxu0
      %v399 = vadd.f32 0.0, %v398
      %v400 = vpop.f32.mrf.mxu0
      %v401 = vpop.f32.mrf.mxu0
      %v402 = vadd.f32 0.0, %v401
      %v403 = vpop.f32.mrf.mxu0
      %404 = vdwg.mxu0
      %v405 = vmul.f32 %v375, 0.17677669
      %v406 = vmul.f32 %v378, 0.17677669
      %v407 = vmul.f32 %v383, 0.17677669
      %v408 = vmul.f32 %v386, 0.17677669
      %v409 = vmul.f32 %v391, 0.17677669
      %v410 = vmul.f32 %v394, 0.17677669
      %v411 = vmul.f32 %v399, 0.17677669
      %v412 = vmul.f32 %v402, 0.17677669
      %v413 = vld [vmem:[%s252] sm:$0xff]
      %v414 = vld [vmem:[%s252 + $0x8] sm:$0xff]
      %v415 = vld [vmem:[%s252 + $0x10] sm:$0xff]
      %v416 = vld [vmem:[%s252 + $0x18] sm:$0xff]
      %v417 = vld [vmem:[%s252 + $0x20] sm:$0xff]
      %v418 = vld [vmem:[%s252 + $0x28] sm:$0xff]
      %v419 = vld [vmem:[%s252 + $0x30] sm:$0xff]
      %v420 = vld [vmem:[%s252 + $0x38] sm:$0xff]
      %v421 = vadd.f32 %v405, %v413
      %v422 = vadd.f32 %v406, %v414
      %v423 = vadd.f32 %v407, %v415
      %v424 = vadd.f32 %v408, %v416
      %v425 = vadd.f32 %v409, %v417
      %v426 = vadd.f32 %v410, %v418
      %v427 = vadd.f32 %v411, %v419
      %v428 = vadd.f32 %v412, %v420
      %vm429 = vcmask 523264
      %v430 = vsel %vm429, %v421, -inf
      %431 = vmax.xlane.f32.xlu0 %v430
      %v432 = vpop.xlane.xlu0 %431
      %v433 = vsel %vm429, %v422, -inf
      %434 = vmax.xlane.f32.xlu0 %v433
      %v435 = vpop.xlane.xlu0 %434
      %v436 = vsel %vm429, %v423, -inf
      %437 = vmax.xlane.f32.xlu0 %v436
      %v438 = vpop.xlane.xlu0 %437
      %v439 = vsel %vm429, %v424, -inf
      %440 = vmax.xlane.f32.xlu0 %v439
      %v441 = vpop.xlane.xlu0 %440
      %v442 = vsel %vm429, %v425, -inf
      %443 = vmax.xlane.f32.xlu0 %v442
      %v444 = vpop.xlane.xlu0 %443
      %v445 = vsel %vm429, %v426, -inf
      %446 = vmax.xlane.f32.xlu0 %v445
      %v447 = vpop.xlane.xlu0 %446
      %v448 = vsel %vm429, %v427, -inf
      %449 = vmax.xlane.f32.xlu0 %v448
      %v450 = vpop.xlane.xlu0 %449
      %v451 = vsel %vm429, %v428, -inf
      %452 = vmax.xlane.f32.xlu0 %v451
      %v453 = vpop.xlane.xlu0 %452
      %v454 = vsub.f32 %v421, %v432
      %v455 = vsub.f32 %v422, %v435
      %v456 = vsub.f32 %v423, %v438
      %v457 = vsub.f32 %v424, %v441
      %v458 = vsub.f32 %v425, %v444
      %v459 = vsub.f32 %v426, %v447
      %v460 = vsub.f32 %v427, %v450
      %v461 = vsub.f32 %v428, %v453
      %v462 = vmul.f32 %v454, 1.442695
      %v463 = vpow.pop %v462
      %v464 = vmul.f32 %v455, 1.442695
      %v465 = vpow.pop %v464
      %v466 = vmul.f32 %v456, 1.442695
      %v467 = vpow.pop %v466
      %v468 = vmul.f32 %v457, 1.442695
      %v469 = vpow.pop %v468
      %v470 = vmul.f32 %v458, 1.442695
      %v471 = vpow.pop %v470
      %v472 = vmul.f32 %v459, 1.442695
      %v473 = vpow.pop %v472
      %v474 = vmul.f32 %v460, 1.442695
      %v475 = vpow.pop %v474
      %v476 = vmul.f32 %v461, 1.442695
      %v477 = vpow.pop %v476
      %v478 = vsel %vm429, %v463, 0.0
      %479 = vadd.xlane.f32.xlu0 %v478
      %v480 = vpop.xlane.xlu0 %479
      %v481 = vsel %vm429, %v465, 0.0
      %482 = vadd.xlane.f32.xlu0 %v481
      %v483 = vpop.xlane.xlu0 %482
      %v484 = vsel %vm429, %v467, 0.0
      %485 = vadd.xlane.f32.xlu0 %v484
      %v486 = vpop.xlane.xlu0 %485
      %v487 = vsel %vm429, %v469, 0.0
      %488 = vadd.xlane.f32.xlu0 %v487
      %v489 = vpop.xlane.xlu0 %488
      %v490 = vsel %vm429, %v471, 0.0
      %491 = vadd.xlane.f32.xlu0 %v490
      %v492 = vpop.xlane.xlu0 %491
      %v493 = vsel %vm429, %v473, 0.0
      %494 = vadd.xlane.f32.xlu0 %v493
      %v495 = vpop.xlane.xlu0 %494
      %v496 = vsel %vm429, %v475, 0.0
      %497 = vadd.xlane.f32.xlu0 %v496
      %v498 = vpop.xlane.xlu0 %497
      %v499 = vsel %vm429, %v477, 0.0
      %500 = vadd.xlane.f32.xlu0 %v499
      %v501 = vpop.xlane.xlu0 %500
      %v502 = vrcp.pop %v480
      %v503 = vmul.f32 %v463, %v502
      %v504 = vrcp.pop %v483
      %v505 = vmul.f32 %v465, %v504
      %v506 = vrcp.pop %v486
      %v507 = vmul.f32 %v467, %v506
      %v508 = vrcp.pop %v489
      %v509 = vmul.f32 %v469, %v508
      %v510 = vrcp.pop %v492
      %v511 = vmul.f32 %v471, %v510
      %v512 = vrcp.pop %v495
      %v513 = vmul.f32 %v473, %v512
      %v514 = vrcp.pop %v498
      %v515 = vmul.f32 %v475, %v514
      %v516 = vrcp.pop %v501
      %v517 = vmul.f32 %v477, %v516
      %v518 = vpack.c.bf16 %v505, %v503
      %v519 = vpack.c.bf16 %v509, %v507
      %v520 = vpack.c.bf16 %v513, %v511
      %v521 = vpack.c.bf16 %v517, %v515
      %v522 = vld [vmem:[%s247] sm:$0xf]
      %v523 = vld [vmem:[%s247 + $0x4] sm:$0xf]
      %v524 = vld [vmem:[%s247 + $0x8] sm:$0xf]
      %v525 = vld [vmem:[%s247 + $0xc] sm:$0xf]
      %v526 = vld [vmem:[%s247 + $0x10] sm:$0xf]
      %v527 = vld [vmem:[%s247 + $0x14] sm:$0xf]
      %v528 = vld [vmem:[%s247 + $0x18] sm:$0xf]
      %v529 = vld [vmem:[%s247 + $0x1c] sm:$0xf]
      %v538 = vunpack.c.l.b16 %v522
      %v539 = vunpack.c.l.b16 %v523
      %v540 = vunpack.c.l.b16 %v524
      %v541 = vunpack.c.l.b16 %v525
      %v542 = vunpack.c.l.b16 %v526
      %v543 = vunpack.c.l.b16 %v527
      %v544 = vunpack.c.l.b16 %v528
      %v545 = vunpack.c.l.b16 %v529
      %v546 = vpack.c.b16 %v539, %v538
      %v547 = vpack.c.b16 %v541, %v540
      %v548 = vpack.c.b16 %v543, %v542
      %v549 = vpack.c.b16 %v545, %v544
      %v555 = vsel %vm429, %v518, 0
      %v558 = vsel %vm429, %v519, 0
      %v561 = vsel %vm429, %v520, 0
      %v564 = vsel %vm429, %v521, 0
      %566 = vmatprep.subr.bf16.mxu0 0
      %567 = vmatpush1.bf16.msra.mxu0 0
      %568 = vmatprep.subr.bf16.mxu0 0
      %569 = vmatpush1.bf16.msra.mxu0 0
      %570 = vmatprep.subr.bf16.mxu0 0
      %571 = vmatpush1.bf16.msra.mxu0 0
      %572 = vmatprep.subr.bf16.mxu0 0
      %573 = vmatpush1.bf16.msra.mxu0 0
      %574 = vmatprep.subr.bf16.mxu0 0
      %575 = vmatpush1.bf16.msra.mxu0 %v549
      %576 = vmatprep.subr.bf16.mxu0 0
      %577 = vmatpush1.bf16.msra.mxu0 %v548
      %578 = vmatprep.subr.bf16.mxu0 0
      %579 = vmatpush1.bf16.msra.mxu0 %v547
      %580 = vmatprep.subr.bf16.mxu0 0
      %581 = vmatpush1.bf16.msra.mxu0 %v546
      %582 = vmatprep.subr.bf16.mxu0 0
      %583 = vmatpush2.bf16.msra.mxu0 0
      %584 = vmatprep.subr.bf16.mxu0 0
      %585 = vmatpush2.bf16.msra.mxu0 0
      %586 = vmatprep.subr.bf16.mxu0 0
      %587 = vmatpush2.bf16.msra.mxu0 0
      %588 = vmatprep.subr.bf16.mxu0 0
      %589 = vmatpush2.bf16.msra.mxu0 0
      %590 = vmatprep.subr.bf16.mxu0 0
      %591 = vmatpush2.bf16.msra.mxu0 0
      %592 = vmatprep.subr.bf16.mxu0 0
      %593 = vmatpush2.bf16.msra.mxu0 0
      %594 = vmatprep.subr.bf16.mxu0 0
      %595 = vmatpush2.bf16.msra.mxu0 0
      %596 = vmatprep.subr.bf16.mxu0 0
      %597 = vmatpush2.bf16.msra.mxu0 0
      %598 = vmatprep.mubr.bf16.mxu0 0
      %599 = vmatmul.mubr.bf16.gmra.mxu0 %v555
      %v600 = vpop.f32.mrf.mxu0
      %v601 = vadd.f32 0.0, %v600
      %v602 = vpop.f32.mrf.mxu0
      %v603 = vpop.f32.mrf.mxu0
      %v604 = vadd.f32 0.0, %v603
      %v605 = vpop.f32.mrf.mxu0
      %606 = vmatprep.mubr.bf16.mxu0 0
      %607 = vmatmul.mubr.bf16.gmra.mxu0 %v558
      %v608 = vpop.f32.mrf.mxu0
      %v609 = vadd.f32 0.0, %v608
      %v610 = vpop.f32.mrf.mxu0
      %v611 = vpop.f32.mrf.mxu0
      %v612 = vadd.f32 0.0, %v611
      %v613 = vpop.f32.mrf.mxu0
      %614 = vmatprep.mubr.bf16.mxu0 0
      %615 = vmatmul.mubr.bf16.gmra.mxu0 %v561
      %v616 = vpop.f32.mrf.mxu0
      %v617 = vadd.f32 0.0, %v616
      %v618 = vpop.f32.mrf.mxu0
      %v619 = vpop.f32.mrf.mxu0
      %v620 = vadd.f32 0.0, %v619
      %v621 = vpop.f32.mrf.mxu0
      %622 = vmatprep.mubr.bf16.mxu0 0
      %623 = vmatmul.mubr.bf16.gmra.mxu0 %v564
      %v624 = vpop.f32.mrf.mxu0
      %v625 = vadd.f32 0.0, %v624
      %v626 = vpop.f32.mrf.mxu0
      %v627 = vpop.f32.mrf.mxu0
      %v628 = vadd.f32 0.0, %v627
      %v629 = vpop.f32.mrf.mxu0
      %630 = vdwg.mxu0
      %631 = vst.msk [vmem:[%s257] sm:$0xff] %vm315, %v601
      %632 = vst.msk [vmem:[%s257 + $0x8] sm:$0xff] %vm315, %v604
      %633 = vst.msk [vmem:[%s257 + $0x10] sm:$0xff] %vm315, %v609
      %634 = vst.msk [vmem:[%s257 + $0x18] sm:$0xff] %vm315, %v612
      %635 = vst.msk [vmem:[%s257 + $0x20] sm:$0xff] %vm315, %v617
      %636 = vst.msk [vmem:[%s257 + $0x28] sm:$0xff] %vm315, %v620
      %637 = vst.msk [vmem:[%s257 + $0x30] sm:$0xff] %vm315, %v625
      %638 = vst.msk [vmem:[%s257 + $0x38] sm:$0xff] %vm315, %v628
      %p639 = scmp.lt.s32.totalorder %s15, 15
      %s640 = scalar_select %p639, %s15, 15
      %s641 = smul.addr %s640, 8
      %s642 = smul.addr %s641, 8
      %s643 = scalar_lea.vmem %s4, %s642
      // Predicated region
      $region37: #{encode.18} parent=35 // pred_check
        %p644 = pneg %p137
      $region38: #{encode.18} parent=35 // pred_check_branch
        %646 = sbr.rel (%p644) target = $region40
      $region39: #{encode.18} parent=35 // pred_region
        _
      $region40: #{encode.18} parent=35 // pred_fallthru
        _
    $region36: #{encode.18} parent=5 // pred_fallthru
      _
    %p647 = scmp.le.s32.totalorder 2, %s10
    // Predicated region
    $region41: #{encode.18} parent=5 // pred_check
      %p648 = pneg %p647
    $region42: #{encode.18} parent=5 // pred_check_branch
      %650 = sbr.rel (%p648) target = $region44
    $region43: #{encode.18} parent=5 // pred_region
      %s651 = ssub.s32 %s10, 2
      // Predicated region
      $region45: #{encode.18} parent=43 // pred_check
        %p652 = pneg %p143
      $region46: #{encode.18} parent=43 // pred_check_branch
        %654 = sbr.rel (%p652) target = $region48
      $region47: #{encode.18} parent=43 // pred_region
        %p655 = scmp.lt.s32.totalorder %s16, 15
        %s656 = scalar_select %p655, %s16, 15
        %s657 = smul.addr %s656, 8
        %s658 = smul.addr %s657, 8
        %s659 = scalar_lea.vmem %s4, %s658
      $region48: #{encode.18} parent=43 // pred_fallthru
        _
    $region44: #{encode.18} parent=5 // pred_fallthru
      _
  $region6: #{encode.18} parent=0 // loop_footer
    %s14 = sadd.s32 1, %s10
  $region7: #{encode.18} parent=0 // loop_footer_branch
    %9 = sbr.rel target = $region3
  $region8: #{encode.18} parent=0 // loop_exit
    _

// kernel: encode.19
$region0: #{encode.19}
  #allocation0 [shape = 'u32[]', space=smem, size = 0x4, offset = 0x4, fixed_abs, tag = 'smem constant byte address 0x4 - core index']
  #allocation1 [shape = 'u32[144,128]{1,0:T(1,128)}', space=vmem, size = 0x12000, scoped, tag = 'internal scratch']
  %s0 = inlined_call_operand.vmem [shape: bf16[128,256], index: 0, kind: input, shape index: {}]
  %s1 = inlined_call_operand.vmem [shape: bf16[256,256], index: 1, kind: input, shape index: {}]
  %s2 = inlined_call_operand.vmem [shape: f32[1,256], index: 2, kind: input, shape index: {}]
  %s3 = inlined_call_operand.vmem [shape: f32[128,256], index: 3, kind: output, shape index: {}]
  %s4 = sld [smem:[#allocation0]]
  $region22: #{encode.19} parent=0
    _
  %s6 = ssub.s32 1, %s4
  %s7 = scalar_select 0, %s6, %s4
  // Predicated region
  $region2: #{encode.19} parent=0 // pred_check
    _
  $region3: #{encode.19} parent=0 // pred_check_branch
    %9 = sbr.rel (0) target = $region5
  $region4: #{encode.19} parent=0 // pred_region
    _
  $region5: #{encode.19} parent=0 // pred_fallthru
    _
  // Predicated region
  $region6: #{encode.19} parent=0 // pred_check
    _
  $region7: #{encode.19} parent=0 // pred_check_branch
    %11 = sbr.rel (0) target = $region9
  $region8: #{encode.19} parent=0 // pred_region
    _
  $region9: #{encode.19} parent=0 // pred_fallthru
    _
  // Predicated region
  $region10: #{encode.19} parent=0 // pred_check
    _
  $region11: #{encode.19} parent=0 // pred_check_branch
    %13 = sbr.rel (0) target = $region13
  $region12: #{encode.19} parent=0 // pred_region
    _
  $region13: #{encode.19} parent=0 // pred_fallthru
    _
  %v14 = vld [vmem:[%s0] sm:$0xff]
  %v15 = vld [vmem:[%s0 + $0x8] sm:$0xff]
  %v16 = vld [vmem:[%s0 + $0x10] sm:$0xff]
  %v17 = vld [vmem:[%s0 + $0x18] sm:$0xff]
  %v18 = vld [vmem:[%s0 + $0x20] sm:$0xff]
  %v19 = vld [vmem:[%s0 + $0x28] sm:$0xff]
  %v20 = vld [vmem:[%s0 + $0x30] sm:$0xff]
  %v21 = vld [vmem:[%s0 + $0x38] sm:$0xff]
  %v22 = vld [vmem:[%s0 + $0x40] sm:$0xff]
  %v23 = vld [vmem:[%s0 + $0x48] sm:$0xff]
  %v24 = vld [vmem:[%s0 + $0x50] sm:$0xff]
  %v25 = vld [vmem:[%s0 + $0x58] sm:$0xff]
  %v26 = vld [vmem:[%s0 + $0x60] sm:$0xff]
  %v27 = vld [vmem:[%s0 + $0x68] sm:$0xff]
  %v28 = vld [vmem:[%s0 + $0x70] sm:$0xff]
  %v29 = vld [vmem:[%s0 + $0x78] sm:$0xff]
  %v30 = vld [vmem:[%s1] sm:$0xff]
  %v31 = vld [vmem:[%s1 + $0x8] sm:$0xff]
  %v32 = vld [vmem:[%s1 + $0x10] sm:$0xff]
  %v33 = vld [vmem:[%s1 + $0x18] sm:$0xff]
  %v34 = vld [vmem:[%s1 + $0x20] sm:$0xff]
  %v35 = vld [vmem:[%s1 + $0x28] sm:$0xff]
  %v36 = vld [vmem:[%s1 + $0x30] sm:$0xff]
  %v37 = vld [vmem:[%s1 + $0x38] sm:$0xff]
  %v38 = vld [vmem:[%s1 + $0x40] sm:$0xff]
  %v39 = vld [vmem:[%s1 + $0x48] sm:$0xff]
  %v40 = vld [vmem:[%s1 + $0x50] sm:$0xff]
  %v41 = vld [vmem:[%s1 + $0x58] sm:$0xff]
  %v42 = vld [vmem:[%s1 + $0x60] sm:$0xff]
  %v43 = vld [vmem:[%s1 + $0x68] sm:$0xff]
  %v44 = vld [vmem:[%s1 + $0x70] sm:$0xff]
  %v45 = vld [vmem:[%s1 + $0x78] sm:$0xff]
  %v46 = vld [vmem:[%s1 + $0x80] sm:$0xff]
  %v47 = vld [vmem:[%s1 + $0x88] sm:$0xff]
  %v48 = vld [vmem:[%s1 + $0x90] sm:$0xff]
  %v49 = vld [vmem:[%s1 + $0x98] sm:$0xff]
  %v50 = vld [vmem:[%s1 + $0xa0] sm:$0xff]
  %v51 = vld [vmem:[%s1 + $0xa8] sm:$0xff]
  %v52 = vld [vmem:[%s1 + $0xb0] sm:$0xff]
  %v53 = vld [vmem:[%s1 + $0xb8] sm:$0xff]
  %v54 = vld [vmem:[%s1 + $0xc0] sm:$0xff]
  %v55 = vld [vmem:[%s1 + $0xc8] sm:$0xff]
  %v56 = vld [vmem:[%s1 + $0xd0] sm:$0xff]
  %v57 = vld [vmem:[%s1 + $0xd8] sm:$0xff]
  %v58 = vld [vmem:[%s1 + $0xe0] sm:$0xff]
  %v59 = vld [vmem:[%s1 + $0xe8] sm:$0xff]
  %v60 = vld [vmem:[%s1 + $0xf0] sm:$0xff]
  %v61 = vld [vmem:[%s1 + $0xf8] sm:$0xff]
  %v62 = vld [vmem:[%s2] sm:$0x3]
  %v64 = vlaneseq
  %v65 = vshrl.u32 %v64, 7
  %v66 = vsub.s32 0, %v65
  %v67 = vrot.slane %v62, %v66
  %v68 = vlaneseq
  %v69 = vshrl.u32 %v68, 7
  %v70 = vsub.s32 1, %v69
  %v71 = vrot.slane %v62, %v70
  %v90 = vunpack.c.l.b16 %v14
  %v91 = vunpack.c.h.b16 %v14
  %v92 = vunpack.c.l.b16 %v15
  %v93 = vunpack.c.h.b16 %v15
  %v94 = vunpack.c.l.b16 %v16
  %v95 = vunpack.c.h.b16 %v16
  %v96 = vunpack.c.l.b16 %v17
  %v97 = vunpack.c.h.b16 %v17
  %v98 = vunpack.c.l.b16 %v18
  %v99 = vunpack.c.h.b16 %v18
  %v100 = vunpack.c.l.b16 %v19
  %v101 = vunpack.c.h.b16 %v19
  %v102 = vunpack.c.l.b16 %v20
  %v103 = vunpack.c.h.b16 %v20
  %v104 = vunpack.c.l.b16 %v21
  %v105 = vunpack.c.h.b16 %v21
  %v106 = vunpack.c.l.b16 %v22
  %v107 = vunpack.c.h.b16 %v22
  %v108 = vunpack.c.l.b16 %v23
  %v109 = vunpack.c.h.b16 %v23
  %v110 = vunpack.c.l.b16 %v24
  %v111 = vunpack.c.h.b16 %v24
  %v112 = vunpack.c.l.b16 %v25
  %v113 = vunpack.c.h.b16 %v25
  %v114 = vunpack.c.l.b16 %v26
  %v115 = vunpack.c.h.b16 %v26
  %v116 = vunpack.c.l.b16 %v27
  %v117 = vunpack.c.h.b16 %v27
  %v118 = vunpack.c.l.b16 %v28
  %v119 = vunpack.c.h.b16 %v28
  %v120 = vunpack.c.l.b16 %v29
  %v121 = vunpack.c.h.b16 %v29
  %v122 = vpack.c.b16 %v92, %v90
  %v123 = vpack.c.b16 %v93, %v91
  %v124 = vpack.c.b16 %v96, %v94
  %v125 = vpack.c.b16 %v97, %v95
  %v126 = vpack.c.b16 %v100, %v98
  %v127 = vpack.c.b16 %v101, %v99
  %v128 = vpack.c.b16 %v104, %v102
  %v129 = vpack.c.b16 %v105, %v103
  %v130 = vpack.c.b16 %v108, %v106
  %v131 = vpack.c.b16 %v109, %v107
  %v132 = vpack.c.b16 %v112, %v110
  %v133 = vpack.c.b16 %v113, %v111
  %v134 = vpack.c.b16 %v116, %v114
  %v135 = vpack.c.b16 %v117, %v115
  %v136 = vpack.c.b16 %v120, %v118
  %v137 = vpack.c.b16 %v121, %v119
  %v186 = vunpack.c.l.b16 %v30
  %v187 = vunpack.c.h.b16 %v30
  %v188 = vunpack.c.l.b16 %v31
  %v189 = vunpack.c.h.b16 %v31
  %v190 = vunpack.c.l.b16 %v32
  %v191 = vunpack.c.h.b16 %v32
  %v192 = vunpack.c.l.b16 %v33
  %v193 = vunpack.c.h.b16 %v33
  %v194 = vunpack.c.l.b16 %v34
  %v195 = vunpack.c.h.b16 %v34
  %v196 = vunpack.c.l.b16 %v35
  %v197 = vunpack.c.h.b16 %v35
  %v198 = vunpack.c.l.b16 %v36
  %v199 = vunpack.c.h.b16 %v36
  %v200 = vunpack.c.l.b16 %v37
  %v201 = vunpack.c.h.b16 %v37
  %v202 = vunpack.c.l.b16 %v38
  %v203 = vunpack.c.h.b16 %v38
  %v204 = vunpack.c.l.b16 %v39
  %v205 = vunpack.c.h.b16 %v39
  %v206 = vunpack.c.l.b16 %v40
  %v207 = vunpack.c.h.b16 %v40
  %v208 = vunpack.c.l.b16 %v41
  %v209 = vunpack.c.h.b16 %v41
  %v210 = vunpack.c.l.b16 %v42
  %v211 = vunpack.c.h.b16 %v42
  %v212 = vunpack.c.l.b16 %v43
  %v213 = vunpack.c.h.b16 %v43
  %v214 = vunpack.c.l.b16 %v44
  %v215 = vunpack.c.h.b16 %v44
  %v216 = vunpack.c.l.b16 %v45
  %v217 = vunpack.c.h.b16 %v45
  %v218 = vunpack.c.l.b16 %v46
  %v219 = vunpack.c.h.b16 %v46
  %v220 = vunpack.c.l.b16 %v47
  %v221 = vunpack.c.h.b16 %v47
  %v222 = vunpack.c.l.b16 %v48
  %v223 = vunpack.c.h.b16 %v48
  %v224 = vunpack.c.l.b16 %v49
  %v225 = vunpack.c.h.b16 %v49
  %v226 = vunpack.c.l.b16 %v50
  %v227 = vunpack.c.h.b16 %v50
  %v228 = vunpack.c.l.b16 %v51
  %v229 = vunpack.c.h.b16 %v51
  %v230 = vunpack.c.l.b16 %v52
  %v231 = vunpack.c.h.b16 %v52
  %v232 = vunpack.c.l.b16 %v53
  %v233 = vunpack.c.h.b16 %v53
  %v234 = vunpack.c.l.b16 %v54
  %v235 = vunpack.c.h.b16 %v54
  %v236 = vunpack.c.l.b16 %v55
  %v237 = vunpack.c.h.b16 %v55
  %v238 = vunpack.c.l.b16 %v56
  %v239 = vunpack.c.h.b16 %v56
  %v240 = vunpack.c.l.b16 %v57
  %v241 = vunpack.c.h.b16 %v57
  %v242 = vunpack.c.l.b16 %v58
  %v243 = vunpack.c.h.b16 %v58
  %v244 = vunpack.c.l.b16 %v59
  %v245 = vunpack.c.h.b16 %v59
  %v246 = vunpack.c.l.b16 %v60
  %v247 = vunpack.c.h.b16 %v60
  %v248 = vunpack.c.l.b16 %v61
  %v249 = vunpack.c.h.b16 %v61
  %v250 = vpack.c.b16 %v188, %v186
  %v251 = vpack.c.b16 %v189, %v187
  %v252 = vpack.c.b16 %v192, %v190
  %v253 = vpack.c.b16 %v193, %v191
  %v254 = vpack.c.b16 %v196, %v194
  %v255 = vpack.c.b16 %v197, %v195
  %v256 = vpack.c.b16 %v200, %v198
  %v257 = vpack.c.b16 %v201, %v199
  %v258 = vpack.c.b16 %v204, %v202
  %v259 = vpack.c.b16 %v205, %v203
  %v260 = vpack.c.b16 %v208, %v206
  %v261 = vpack.c.b16 %v209, %v207
  %v262 = vpack.c.b16 %v212, %v210
  %v263 = vpack.c.b16 %v213, %v211
  %v264 = vpack.c.b16 %v216, %v214
  %v265 = vpack.c.b16 %v217, %v215
  %v266 = vpack.c.b16 %v220, %v218
  %v267 = vpack.c.b16 %v221, %v219
  %v268 = vpack.c.b16 %v224, %v222
  %v269 = vpack.c.b16 %v225, %v223
  %v270 = vpack.c.b16 %v228, %v226
  %v271 = vpack.c.b16 %v229, %v227
  %v272 = vpack.c.b16 %v232, %v230
  %v273 = vpack.c.b16 %v233, %v231
  %v274 = vpack.c.b16 %v236, %v234
  %v275 = vpack.c.b16 %v237, %v235
  %v276 = vpack.c.b16 %v240, %v238
  %v277 = vpack.c.b16 %v241, %v239
  %v278 = vpack.c.b16 %v244, %v242
  %v279 = vpack.c.b16 %v245, %v243
  %v280 = vpack.c.b16 %v248, %v246
  %v281 = vpack.c.b16 %v249, %v247
  %314 = vmatprep.subr.bf16.mxu0 %v265
  %315 = vmatpush1.bf16.msra.mxu0 %v264
  %316 = vmatprep.subr.bf16.mxu0 %v263
  %317 = vmatpush1.bf16.msra.mxu0 %v262
  %318 = vmatprep.subr.bf16.mxu0 %v261
  %319 = vmatpush1.bf16.msra.mxu0 %v260
  %320 = vmatprep.subr.bf16.mxu0 %v259
  %321 = vmatpush1.bf16.msra.mxu0 %v258
  %322 = vmatprep.subr.bf16.mxu0 %v257
  %323 = vmatpush1.bf16.msra.mxu0 %v256
  %324 = vmatprep.subr.bf16.mxu0 %v255
  %325 = vmatpush1.bf16.msra.mxu0 %v254
  %326 = vmatprep.subr.bf16.mxu0 %v253
  %327 = vmatpush1.bf16.msra.mxu0 %v252
  %328 = vmatprep.subr.bf16.mxu0 %v251
  %329 = vmatpush1.bf16.msra.mxu0 %v250
  %330 = vmatprep.subr.bf16.mxu0 %v281
  %331 = vmatpush2.bf16.msra.mxu0 %v280
  %332 = vmatprep.subr.bf16.mxu0 %v279
  %333 = vmatpush2.bf16.msra.mxu0 %v278
  %334 = vmatprep.subr.bf16.mxu0 %v277
  %335 = vmatpush2.bf16.msra.mxu0 %v276
  %336 = vmatprep.subr.bf16.mxu0 %v275
  %337 = vmatpush2.bf16.msra.mxu0 %v274
  %338 = vmatprep.subr.bf16.mxu0 %v273
  %339 = vmatpush2.bf16.msra.mxu0 %v272
  %340 = vmatprep.subr.bf16.mxu0 %v271
  %341 = vmatpush2.bf16.msra.mxu0 %v270
  %342 = vmatprep.subr.bf16.mxu0 %v269
  %343 = vmatpush2.bf16.msra.mxu0 %v268
  %344 = vmatprep.subr.bf16.mxu0 %v267
  %345 = vmatpush2.bf16.msra.mxu0 %v266
  %346 = vmatprep.mubr.bf16.mxu0 %v123
  %347 = vmatmul.mubr.bf16.gmra.mxu0 %v122
  %v348 = vpop.f32.mrf.mxu0
  %v349 = vadd.f32 %v67, %v348
  %v350 = vpop.f32.mrf.mxu0
  %v351 = vadd.f32 %v71, %v350
  %v352 = vpop.f32.mrf.mxu0
  %v353 = vadd.f32 %v67, %v352
  %v354 = vpop.f32.mrf.mxu0
  %v355 = vadd.f32 %v71, %v354
  %356 = vmatprep.mubr.bf16.mxu0 %v125
  %357 = vmatmul.mubr.bf16.gmra.mxu0 %v124
  %v358 = vpop.f32.mrf.mxu0
  %v359 = vadd.f32 %v67, %v358
  %v360 = vpop.f32.mrf.mxu0
  %v361 = vadd.f32 %v71, %v360
  %v362 = vpop.f32.mrf.mxu0
  %v363 = vadd.f32 %v67, %v362
  %v364 = vpop.f32.mrf.mxu0
  %v365 = vadd.f32 %v71, %v364
  %366 = vmatprep.mubr.bf16.mxu0 %v127
  %367 = vmatmul.mubr.bf16.gmra.mxu0 %v126
  %v368 = vpop.f32.mrf.mxu0
  %v369 = vadd.f32 %v67, %v368
  %v370 = vpop.f32.mrf.mxu0
  %v371 = vadd.f32 %v71, %v370
  %v372 = vpop.f32.mrf.mxu0
  %v373 = vadd.f32 %v67, %v372
  %v374 = vpop.f32.mrf.mxu0
  %v375 = vadd.f32 %v71, %v374
  %376 = vmatprep.mubr.bf16.mxu0 %v129
  %377 = vmatmul.mubr.bf16.gmra.mxu0 %v128
  %v378 = vpop.f32.mrf.mxu0
  %v379 = vadd.f32 %v67, %v378
  %v380 = vpop.f32.mrf.mxu0
  %v381 = vadd.f32 %v71, %v380
  %v382 = vpop.f32.mrf.mxu0
  %v383 = vadd.f32 %v67, %v382
  %v384 = vpop.f32.mrf.mxu0
  %v385 = vadd.f32 %v71, %v384
  %386 = vmatprep.mubr.bf16.mxu0 %v131
  %387 = vmatmul.mubr.bf16.gmra.mxu0 %v130
  %v388 = vpop.f32.mrf.mxu0
  %v389 = vadd.f32 %v67, %v388
  %v390 = vpop.f32.mrf.mxu0
  %v391 = vadd.f32 %v71, %v390
  %v392 = vpop.f32.mrf.mxu0
  %v393 = vadd.f32 %v67, %v392
  %v394 = vpop.f32.mrf.mxu0
  %v395 = vadd.f32 %v71, %v394
  %396 = vmatprep.mubr.bf16.mxu0 %v133
  %397 = vmatmul.mubr.bf16.gmra.mxu0 %v132
  %v398 = vpop.f32.mrf.mxu0
  %v399 = vadd.f32 %v67, %v398
  %v400 = vpop.f32.mrf.mxu0
  %v401 = vadd.f32 %v71, %v400
  %v402 = vpop.f32.mrf.mxu0
  %v403 = vadd.f32 %v67, %v402
  %v404 = vpop.f32.mrf.mxu0
  %v405 = vadd.f32 %v71, %v404
  %406 = vmatprep.mubr.bf16.mxu0 %v135
  %407 = vmatmul.mubr.bf16.gmra.mxu0 %v134
  %v408 = vpop.f32.mrf.mxu0
  %v409 = vadd.f32 %v67, %v408
  %v410 = vpop.f32.mrf.mxu0
  %v411 = vadd.f32 %v71, %v410
  %v412 = vpop.f32.mrf.mxu0
  %v413 = vadd.f32 %v67, %v412
  %v414 = vpop.f32.mrf.mxu0
  %v415 = vadd.f32 %v71, %v414
  %416 = vmatprep.mubr.bf16.mxu0 %v137
  %417 = vmatmul.mubr.bf16.gmra.mxu0 %v136
  %v418 = vpop.f32.mrf.mxu0
  %v419 = vadd.f32 %v67, %v418
  %v420 = vpop.f32.mrf.mxu0
  %v421 = vadd.f32 %v71, %v420
  %v422 = vpop.f32.mrf.mxu0
  %v423 = vadd.f32 %v67, %v422
  %v424 = vpop.f32.mrf.mxu0
  %v425 = vadd.f32 %v71, %v424
  %426 = vdwg.mxu0
  %427 = vst [vmem:[%s3] sm:$0xff] %v349
  %428 = vst [vmem:[%s3 + $0x8] sm:$0xff] %v351
  %429 = vst [vmem:[%s3 + $0x10] sm:$0xff] %v353
  %430 = vst [vmem:[%s3 + $0x18] sm:$0xff] %v355
  %431 = vst [vmem:[%s3 + $0x20] sm:$0xff] %v359
  %432 = vst [vmem:[%s3 + $0x28] sm:$0xff] %v361
  %433 = vst [vmem:[%s3 + $0x30] sm:$0xff] %v363
  %434 = vst [vmem:[%s3 + $0x38] sm:$0xff] %v365
  %435 = vst [vmem:[%s3 + $0x40] sm:$0xff] %v369
  %436 = vst [vmem:[%s3 + $0x48] sm:$0xff] %v371
  %437 = vst [vmem:[%s3 + $0x50] sm:$0xff] %v373
  %438 = vst [vmem:[%s3 + $0x58] sm:$0xff] %v375
  %439 = vst [vmem:[%s3 + $0x60] sm:$0xff] %v379
  %440 = vst [vmem:[%s3 + $0x68] sm:$0xff] %v381
  %441 = vst [vmem:[%s3 + $0x70] sm:$0xff] %v383
  %442 = vst [vmem:[%s3 + $0x78] sm:$0xff] %v385
  %443 = vst [vmem:[%s3 + $0x80] sm:$0xff] %v389
  %444 = vst [vmem:[%s3 + $0x88] sm:$0xff] %v391
  %445 = vst [vmem:[%s3 + $0x90] sm:$0xff] %v393
  %446 = vst [vmem:[%s3 + $0x98] sm:$0xff] %v395
  %447 = vst [vmem:[%s3 + $0xa0] sm:$0xff] %v399
  %448 = vst [vmem:[%s3 + $0xa8] sm:$0xff] %v401
  %449 = vst [vmem:[%s3 + $0xb0] sm:$0xff] %v403
  %450 = vst [vmem:[%s3 + $0xb8] sm:$0xff] %v405
  %451 = vst [vmem:[%s3 + $0xc0] sm:$0xff] %v409
  %452 = vst [vmem:[%s3 + $0xc8] sm:$0xff] %v411
  %453 = vst [vmem:[%s3 + $0xd0] sm:$0xff] %v413
  %454 = vst [vmem:[%s3 + $0xd8] sm:$0xff] %v415
  %455 = vst [vmem:[%s3 + $0xe0] sm:$0xff] %v419
  %456 = vst [vmem:[%s3 + $0xe8] sm:$0xff] %v421
  %457 = vst [vmem:[%s3 + $0xf0] sm:$0xff] %v423
  %458 = vst [vmem:[%s3 + $0xf8] sm:$0xff] %v425
  // Predicated region
  $region14: #{encode.19} parent=0 // pred_check
    _
  $region15: #{encode.19} parent=0 // pred_check_branch
    %460 = sbr.rel (0) target = $region17
  $region16: #{encode.19} parent=0 // pred_region
    _
  $region17: #{encode.19} parent=0 // pred_fallthru
    _
  // Predicated region
  $region18: #{encode.19} parent=0 // pred_check
    _
  $region19: #{encode.19} parent=0 // pred_check_branch
    %462 = sbr.rel (0) target = $region21
  $region20: #{encode.19} parent=0 // pred_region
    _
  $region21: #{encode.19} parent=0 // pred_fallthru
    _

// kernel: encode.21
$region0: #{encode.21}
  #allocation0 [shape = 'u32[]', space=smem, size = 0x4, offset = 0x4, fixed_abs, tag = 'smem constant byte address 0x4 - core index']
  #allocation1 [shape = 'u32[144,128]{1,0:T(1,128)}', space=vmem, size = 0x12000, scoped, tag = 'internal scratch']
  %s0 = inlined_call_operand.vmem [shape: bf16[128,256], index: 0, kind: input, shape index: {}]
  %s1 = inlined_call_operand.vmem [shape: bf16[256,1024], index: 1, kind: input, shape index: {}]
  %s2 = inlined_call_operand.vmem [shape: f32[1,1024], index: 2, kind: input, shape index: {}]
  %s3 = inlined_call_operand.vmem [shape: f32[128,1024], index: 3, kind: output, shape index: {}]
  %s4 = sld [smem:[#allocation0]]
  $region22: #{encode.21} parent=0
    _
  %s6 = ssub.s32 1, %s4
  %s7 = scalar_select 0, %s6, %s4
  // Predicated region
  $region2: #{encode.21} parent=0 // pred_check
    _
  $region3: #{encode.21} parent=0 // pred_check_branch
    %9 = sbr.rel (0) target = $region5
  $region4: #{encode.21} parent=0 // pred_region
    _
  $region5: #{encode.21} parent=0 // pred_fallthru
    _
  // Predicated region
  $region6: #{encode.21} parent=0 // pred_check
    _
  $region7: #{encode.21} parent=0 // pred_check_branch
    %11 = sbr.rel (0) target = $region9
  $region8: #{encode.21} parent=0 // pred_region
    _
  $region9: #{encode.21} parent=0 // pred_fallthru
    _
  // Predicated region
  $region10: #{encode.21} parent=0 // pred_check
    _
  $region11: #{encode.21} parent=0 // pred_check_branch
    %13 = sbr.rel (0) target = $region13
  $region12: #{encode.21} parent=0 // pred_region
    _
  $region13: #{encode.21} parent=0 // pred_fallthru
    _
  %v14 = vld [vmem:[%s0] sm:$0xff]
  %v15 = vld [vmem:[%s0 + $0x8] sm:$0xff]
  %v16 = vld [vmem:[%s0 + $0x10] sm:$0xff]
  %v17 = vld [vmem:[%s0 + $0x18] sm:$0xff]
  %v18 = vld [vmem:[%s0 + $0x20] sm:$0xff]
  %v19 = vld [vmem:[%s0 + $0x28] sm:$0xff]
  %v20 = vld [vmem:[%s0 + $0x30] sm:$0xff]
  %v21 = vld [vmem:[%s0 + $0x38] sm:$0xff]
  %v22 = vld [vmem:[%s0 + $0x40] sm:$0xff]
  %v23 = vld [vmem:[%s0 + $0x48] sm:$0xff]
  %v24 = vld [vmem:[%s0 + $0x50] sm:$0xff]
  %v25 = vld [vmem:[%s0 + $0x58] sm:$0xff]
  %v26 = vld [vmem:[%s0 + $0x60] sm:$0xff]
  %v27 = vld [vmem:[%s0 + $0x68] sm:$0xff]
  %v28 = vld [vmem:[%s0 + $0x70] sm:$0xff]
  %v29 = vld [vmem:[%s0 + $0x78] sm:$0xff]
  %v30 = vld [vmem:[%s1] sm:$0xff]
  %v31 = vld [vmem:[%s1 + $0x8] sm:$0xff]
  %v32 = vld [vmem:[%s1 + $0x10] sm:$0xff]
  %v33 = vld [vmem:[%s1 + $0x18] sm:$0xff]
  %v34 = vld [vmem:[%s1 + $0x20] sm:$0xff]
  %v35 = vld [vmem:[%s1 + $0x28] sm:$0xff]
  %v36 = vld [vmem:[%s1 + $0x30] sm:$0xff]
  %v37 = vld [vmem:[%s1 + $0x38] sm:$0xff]
  %v38 = vld [vmem:[%s1 + $0x40] sm:$0xff]
  %v39 = vld [vmem:[%s1 + $0x48] sm:$0xff]
  %v40 = vld [vmem:[%s1 + $0x50] sm:$0xff]
  %v41 = vld [vmem:[%s1 + $0x58] sm:$0xff]
  %v42 = vld [vmem:[%s1 + $0x60] sm:$0xff]
  %v43 = vld [vmem:[%s1 + $0x68] sm:$0xff]
  %v44 = vld [vmem:[%s1 + $0x70] sm:$0xff]
  %v45 = vld [vmem:[%s1 + $0x78] sm:$0xff]
  %v46 = vld [vmem:[%s1 + $0x80] sm:$0xff]
  %v47 = vld [vmem:[%s1 + $0x88] sm:$0xff]
  %v48 = vld [vmem:[%s1 + $0x90] sm:$0xff]
  %v49 = vld [vmem:[%s1 + $0x98] sm:$0xff]
  %v50 = vld [vmem:[%s1 + $0xa0] sm:$0xff]
  %v51 = vld [vmem:[%s1 + $0xa8] sm:$0xff]
  %v52 = vld [vmem:[%s1 + $0xb0] sm:$0xff]
  %v53 = vld [vmem:[%s1 + $0xb8] sm:$0xff]
  %v54 = vld [vmem:[%s1 + $0xc0] sm:$0xff]
  %v55 = vld [vmem:[%s1 + $0xc8] sm:$0xff]
  %v56 = vld [vmem:[%s1 + $0xd0] sm:$0xff]
  %v57 = vld [vmem:[%s1 + $0xd8] sm:$0xff]
  %v58 = vld [vmem:[%s1 + $0xe0] sm:$0xff]
  %v59 = vld [vmem:[%s1 + $0xe8] sm:$0xff]
  %v60 = vld [vmem:[%s1 + $0xf0] sm:$0xff]
  %v61 = vld [vmem:[%s1 + $0xf8] sm:$0xff]
  %v62 = vld [vmem:[%s1 + $0x100] sm:$0xff]
  %v63 = vld [vmem:[%s1 + $0x108] sm:$0xff]
  %v64 = vld [vmem:[%s1 + $0x110] sm:$0xff]
  %v65 = vld [vmem:[%s1 + $0x118] sm:$0xff]
  %v66 = vld [vmem:[%s1 + $0x120] sm:$0xff]
  %v67 = vld [vmem:[%s1 + $0x128] sm:$0xff]
  %v68 = vld [vmem:[%s1 + $0x130] sm:$0xff]
  %v69 = vld [vmem:[%s1 + $0x138] sm:$0xff]
  %v70 = vld [vmem:[%s1 + $0x140] sm:$0xff]
  %v71 = vld [vmem:[%s1 + $0x148] sm:$0xff]
  %v72 = vld [vmem:[%s1 + $0x150] sm:$0xff]
  %v73 = vld [vmem:[%s1 + $0x158] sm:$0xff]
  %v74 = vld [vmem:[%s1 + $0x160] sm:$0xff]
  %v75 = vld [vmem:[%s1 + $0x168] sm:$0xff]
  %v76 = vld [vmem:[%s1 + $0x170] sm:$0xff]
  %v77 = vld [vmem:[%s1 + $0x178] sm:$0xff]
  %v78 = vld [vmem:[%s1 + $0x180] sm:$0xff]
  %v79 = vld [vmem:[%s1 + $0x188] sm:$0xff]
  %v80 = vld [vmem:[%s1 + $0x190] sm:$0xff]
  %v81 = vld [vmem:[%s1 + $0x198] sm:$0xff]
  %v82 = vld [vmem:[%s1 + $0x1a0] sm:$0xff]
  %v83 = vld [vmem:[%s1 + $0x1a8] sm:$0xff]
  %v84 = vld [vmem:[%s1 + $0x1b0] sm:$0xff]
  %v85 = vld [vmem:[%s1 + $0x1b8] sm:$0xff]
  %v86 = vld [vmem:[%s1 + $0x1c0] sm:$0xff]
  %v87 = vld [vmem:[%s1 + $0x1c8] sm:$0xff]
  %v88 = vld [vmem:[%s1 + $0x1d0] sm:$0xff]
  %v89 = vld [vmem:[%s1 + $0x1d8] sm:$0xff]
  %v90 = vld [vmem:[%s1 + $0x1e0] sm:$0xff]
  %v91 = vld [vmem:[%s1 + $0x1e8] sm:$0xff]
  %v92 = vld [vmem:[%s1 + $0x1f0] sm:$0xff]
  %v93 = vld [vmem:[%s1 + $0x1f8] sm:$0xff]
  %v94 = vld [vmem:[%s1 + $0x200] sm:$0xff]
  %v95 = vld [vmem:[%s1 + $0x208] sm:$0xff]
  %v96 = vld [vmem:[%s1 + $0x210] sm:$0xff]
  %v97 = vld [vmem:[%s1 + $0x218] sm:$0xff]
  %v98 = vld [vmem:[%s1 + $0x220] sm:$0xff]
  %v99 = vld [vmem:[%s1 + $0x228] sm:$0xff]
  %v100 = vld [vmem:[%s1 + $0x230] sm:$0xff]
  %v101 = vld [vmem:[%s1 + $0x238] sm:$0xff]
  %v102 = vld [vmem:[%s1 + $0x240] sm:$0xff]
  %v103 = vld [vmem:[%s1 + $0x248] sm:$0xff]
  %v104 = vld [vmem:[%s1 + $0x250] sm:$0xff]
  %v105 = vld [vmem:[%s1 + $0x258] sm:$0xff]
  %v106 = vld [vmem:[%s1 + $0x260] sm:$0xff]
  %v107 = vld [vmem:[%s1 + $0x268] sm:$0xff]
  %v108 = vld [vmem:[%s1 + $0x270] sm:$0xff]
  %v109 = vld [vmem:[%s1 + $0x278] sm:$0xff]
  %v110 = vld [vmem:[%s1 + $0x280] sm:$0xff]
  %v111 = vld [vmem:[%s1 + $0x288] sm:$0xff]
  %v112 = vld [vmem:[%s1 + $0x290] sm:$0xff]
  %v113 = vld [vmem:[%s1 + $0x298] sm:$0xff]
  %v114 = vld [vmem:[%s1 + $0x2a0] sm:$0xff]
  %v115 = vld [vmem:[%s1 + $0x2a8] sm:$0xff]
  %v116 = vld [vmem:[%s1 + $0x2b0] sm:$0xff]
  %v117 = vld [vmem:[%s1 + $0x2b8] sm:$0xff]
  %v118 = vld [vmem:[%s1 + $0x2c0] sm:$0xff]
  %v119 = vld [vmem:[%s1 + $0x2c8] sm:$0xff]
  %v120 = vld [vmem:[%s1 + $0x2d0] sm:$0xff]
  %v121 = vld [vmem:[%s1 + $0x2d8] sm:$0xff]
  %v122 = vld [vmem:[%s1 + $0x2e0] sm:$0xff]
  %v123 = vld [vmem:[%s1 + $0x2e8] sm:$0xff]
  %v124 = vld [vmem:[%s1 + $0x2f0] sm:$0xff]
  %v125 = vld [vmem:[%s1 + $0x2f8] sm:$0xff]
  %v126 = vld [vmem:[%s1 + $0x300] sm:$0xff]
  %v127 = vld [vmem:[%s1 + $0x308] sm:$0xff]
  %v128 = vld [vmem:[%s1 + $0x310] sm:$0xff]
  %v129 = vld [vmem:[%s1 + $0x318] sm:$0xff]
  %v130 = vld [vmem:[%s1 + $0x320] sm:$0xff]
  %v131 = vld [vmem:[%s1 + $0x328] sm:$0xff]
  %v132 = vld [vmem:[%s1 + $0x330] sm:$0xff]
  %v133 = vld [vmem:[%s1 + $0x338] sm:$0xff]
  %v134 = vld [vmem:[%s1 + $0x340] sm:$0xff]
  %v135 = vld [vmem:[%s1 + $0x348] sm:$0xff]
  %v136 = vld [vmem:[%s1 + $0x350] sm:$0xff]
  %v137 = vld [vmem:[%s1 + $0x358] sm:$0xff]
  %v138 = vld [vmem:[%s1 + $0x360] sm:$0xff]
  %v139 = vld [vmem:[%s1 + $0x368] sm:$0xff]
  %v140 = vld [vmem:[%s1 + $0x370] sm:$0xff]
  %v141 = vld [vmem:[%s1 + $0x378] sm:$0xff]
  %v142 = vld [vmem:[%s1 + $0x380] sm:$0xff]
  %v143 = vld [vmem:[%s1 + $0x388] sm:$0xff]
  %v144 = vld [vmem:[%s1 + $0x390] sm:$0xff]
  %v145 = vld [vmem:[%s1 + $0x398] sm:$0xff]
  %v146 = vld [vmem:[%s1 + $0x3a0] sm:$0xff]
  %v147 = vld [vmem:[%s1 + $0x3a8] sm:$0xff]
  %v148 = vld [vmem:[%s1 + $0x3b0] sm:$0xff]
  %v149 = vld [vmem:[%s1 + $0x3b8] sm:$0xff]
  %v150 = vld [vmem:[%s1 + $0x3c0] sm:$0xff]
  %v151 = vld [vmem:[%s1 + $0x3c8] sm:$0xff]
  %v152 = vld [vmem:[%s1 + $0x3d0] sm:$0xff]
  %v153 = vld [vmem:[%s1 + $0x3d8] sm:$0xff]
  %v154 = vld [vmem:[%s1 + $0x3e0] sm:$0xff]
  %v155 = vld [vmem:[%s1 + $0x3e8] sm:$0xff]
  %v156 = vld [vmem:[%s1 + $0x3f0] sm:$0xff]
  %v157 = vld [vmem:[%s1 + $0x3f8] sm:$0xff]
  %v158 = vld [vmem:[%s2] sm:$0xff]
  %v160 = vlaneseq
  %v161 = vshrl.u32 %v160, 7
  %v162 = vsub.s32 0, %v161
  %v163 = vrot.slane %v158, %v162
  %v164 = vlaneseq
  %v165 = vshrl.u32 %v164, 7
  %v166 = vsub.s32 1, %v165
  %v167 = vrot.slane %v158, %v166
  %v168 = vlaneseq
  %v169 = vshrl.u32 %v168, 7
  %v170 = vsub.s32 2, %v169
  %v171 = vrot.slane %v158, %v170
  %v172 = vlaneseq
  %v173 = vshrl.u32 %v172, 7
  %v174 = vsub.s32 3, %v173
  %v175 = vrot.slane %v158, %v174
  %v176 = vlaneseq
  %v177 = vshrl.u32 %v176, 7
  %v178 = vsub.s32 4, %v177
  %v179 = vrot.slane %v158, %v178
  %v180 = vlaneseq
  %v181 = vshrl.u32 %v180, 7
  %v182 = vsub.s32 5, %v181
  %v183 = vrot.slane %v158, %v182
  %v184 = vlaneseq
  %v185 = vshrl.u32 %v184, 7
  %v186 = vsub.s32 6, %v185
  %v187 = vrot.slane %v158, %v186
  %v188 = vlaneseq
  %v189 = vshrl.u32 %v188, 7
  %v190 = vsub.s32 7, %v189
  %v191 = vrot.slane %v158, %v190
  %v216 = vunpack.c.l.b16 %v14
  %v217 = vunpack.c.h.b16 %v14
  %v218 = vunpack.c.l.b16 %v15
  %v219 = vunpack.c.h.b16 %v15
  %v220 = vunpack.c.l.b16 %v16
  %v221 = vunpack.c.h.b16 %v16
  %v222 = vunpack.c.l.b16 %v17
  %v223 = vunpack.c.h.b16 %v17
  %v224 = vunpack.c.l.b16 %v18
  %v225 = vunpack.c.h.b16 %v18
  %v226 = vunpack.c.l.b16 %v19
  %v227 = vunpack.c.h.b16 %v19
  %v228 = vunpack.c.l.b16 %v20
  %v229 = vunpack.c.h.b16 %v20
  %v230 = vunpack.c.l.b16 %v21
  %v231 = vunpack.c.h.b16 %v21
  %v232 = vunpack.c.l.b16 %v22
  %v233 = vunpack.c.h.b16 %v22
  %v234 = vunpack.c.l.b16 %v23
  %v235 = vunpack.c.h.b16 %v23
  %v236 = vunpack.c.l.b16 %v24
  %v237 = vunpack.c.h.b16 %v24
  %v238 = vunpack.c.l.b16 %v25
  %v239 = vunpack.c.h.b16 %v25
  %v240 = vunpack.c.l.b16 %v26
  %v241 = vunpack.c.h.b16 %v26
  %v242 = vunpack.c.l.b16 %v27
  %v243 = vunpack.c.h.b16 %v27
  %v244 = vunpack.c.l.b16 %v28
  %v245 = vunpack.c.h.b16 %v28
  %v246 = vunpack.c.l.b16 %v29
  %v247 = vunpack.c.h.b16 %v29
  %v248 = vpack.c.b16 %v218, %v216
  %v249 = vpack.c.b16 %v219, %v217
  %v250 = vpack.c.b16 %v222, %v220
  %v251 = vpack.c.b16 %v223, %v221
  %v252 = vpack.c.b16 %v226, %v224
  %v253 = vpack.c.b16 %v227, %v225
  %v254 = vpack.c.b16 %v230, %v228
  %v255 = vpack.c.b16 %v231, %v229
  %v256 = vpack.c.b16 %v234, %v232
  %v257 = vpack.c.b16 %v235, %v233
  %v258 = vpack.c.b16 %v238, %v236
  %v259 = vpack.c.b16 %v239, %v237
  %v260 = vpack.c.b16 %v242, %v240
  %v261 = vpack.c.b16 %v243, %v241
  %v262 = vpack.c.b16 %v246, %v244
  %v263 = vpack.c.b16 %v247, %v245
  %v408 = vunpack.c.l.b16 %v30
  %v409 = vunpack.c.h.b16 %v30
  %v410 = vunpack.c.l.b16 %v31
  %v411 = vunpack.c.h.b16 %v31
  %v412 = vunpack.c.l.b16 %v32
  %v413 = vunpack.c.h.b16 %v32
  %v414 = vunpack.c.l.b16 %v33
  %v415 = vunpack.c.h.b16 %v33
  %v416 = vunpack.c.l.b16 %v34
  %v417 = vunpack.c.h.b16 %v34
  %v418 = vunpack.c.l.b16 %v35
  %v419 = vunpack.c.h.b16 %v35
  %v420 = vunpack.c.l.b16 %v36
  %v421 = vunpack.c.h.b16 %v36
  %v422 = vunpack.c.l.b16 %v37
  %v423 = vunpack.c.h.b16 %v37
  %v424 = vunpack.c.l.b16 %v38
  %v425 = vunpack.c.h.b16 %v38
  %v426 = vunpack.c.l.b16 %v39
  %v427 = vunpack.c.h.b16 %v39
  %v428 = vunpack.c.l.b16 %v40
  %v429 = vunpack.c.h.b16 %v40
  %v430 = vunpack.c.l.b16 %v41
  %v431 = vunpack.c.h.b16 %v41
  %v432 = vunpack.c.l.b16 %v42
  %v433 = vunpack.c.h.b16 %v42
  %v434 = vunpack.c.l.b16 %v43
  %v435 = vunpack.c.h.b16 %v43
  %v436 = vunpack.c.l.b16 %v44
  %v437 = vunpack.c.h.b16 %v44
  %v438 = vunpack.c.l.b16 %v45
  %v439 = vunpack.c.h.b16 %v45
  %v440 = vunpack.c.l.b16 %v46
  %v441 = vunpack.c.h.b16 %v46
  %v442 = vunpack.c.l.b16 %v47
  %v443 = vunpack.c.h.b16 %v47
  %v444 = vunpack.c.l.b16 %v48
  %v445 = vunpack.c.h.b16 %v48
  %v446 = vunpack.c.l.b16 %v49
  %v447 = vunpack.c.h.b16 %v49
  %v448 = vunpack.c.l.b16 %v50
  %v449 = vunpack.c.h.b16 %v50
  %v450 = vunpack.c.l.b16 %v51
  %v451 = vunpack.c.h.b16 %v51
  %v452 = vunpack.c.l.b16 %v52
  %v453 = vunpack.c.h.b16 %v52
  %v454 = vunpack.c.l.b16 %v53
  %v455 = vunpack.c.h.b16 %v53
  %v456 = vunpack.c.l.b16 %v54
  %v457 = vunpack.c.h.b16 %v54
  %v458 = vunpack.c.l.b16 %v55
  %v459 = vunpack.c.h.b16 %v55
  %v460 = vunpack.c.l.b16 %v56
  %v461 = vunpack.c.h.b16 %v56
  %v462 = vunpack.c.l.b16 %v57
  %v463 = vunpack.c.h.b16 %v57
  %v464 = vunpack.c.l.b16 %v58
  %v465 = vunpack.c.h.b16 %v58
  %v466 = vunpack.c.l.b16 %v59
  %v467 = vunpack.c.h.b16 %v59
  %v468 = vunpack.c.l.b16 %v60
  %v469 = vunpack.c.h.b16 %v60
  %v470 = vunpack.c.l.b16 %v61
  %v471 = vunpack.c.h.b16 %v61
  %v472 = vunpack.c.l.b16 %v62
  %v473 = vunpack.c.h.b16 %v62
  %v474 = vunpack.c.l.b16 %v63
  %v475 = vunpack.c.h.b16 %v63
  %v476 = vunpack.c.l.b16 %v64
  %v477 = vunpack.c.h.b16 %v64
  %v478 = vunpack.c.l.b16 %v65
  %v479 = vunpack.c.h.b16 %v65
  %v480 = vunpack.c.l.b16 %v66
  %v481 = vunpack.c.h.b16 %v66
  %v482 = vunpack.c.l.b16 %v67
  %v483 = vunpack.c.h.b16 %v67
  %v484 = vunpack.c.l.b16 %v68
  %v485 = vunpack.c.h.b16 %v68
  %v486 = vunpack.c.l.b16 %v69
  %v487 = vunpack.c.h.b16 %v69
  %v488 = vunpack.c.l.b16 %v70
  %v489 = vunpack.c.h.b16 %v70
  %v490 = vunpack.c.l.b16 %v71
  %v491 = vunpack.c.h.b16 %v71
  %v492 = vunpack.c.l.b16 %v72
  %v493 = vunpack.c.h.b16 %v72
  %v494 = vunpack.c.l.b16 %v73
  %v495 = vunpack.c.h.b16 %v73
  %v496 = vunpack.c.l.b16 %v74
  %v497 = vunpack.c.h.b16 %v74
  %v498 = vunpack.c.l.b16 %v75
  %v499 = vunpack.c.h.b16 %v75
  %v500 = vunpack.c.l.b16 %v76
  %v501 = vunpack.c.h.b16 %v76
  %v502 = vunpack.c.l.b16 %v77
  %v503 = vunpack.c.h.b16 %v77
  %v504 = vunpack.c.l.b16 %v78
  %v505 = vunpack.c.h.b16 %v78
  %v506 = vunpack.c.l.b16 %v79
  %v507 = vunpack.c.h.b16 %v79
  %v508 = vunpack.c.l.b16 %v80
  %v509 = vunpack.c.h.b16 %v80
  %v510 = vunpack.c.l.b16 %v81
  %v511 = vunpack.c.h.b16 %v81
  %v512 = vunpack.c.l.b16 %v82
  %v513 = vunpack.c.h.b16 %v82
  %v514 = vunpack.c.l.b16 %v83
  %v515 = vunpack.c.h.b16 %v83
  %v516 = vunpack.c.l.b16 %v84
  %v517 = vunpack.c.h.b16 %v84
  %v518 = vunpack.c.l.b16 %v85
  %v519 = vunpack.c.h.b16 %v85
  %v520 = vunpack.c.l.b16 %v86
  %v521 = vunpack.c.h.b16 %v86
  %v522 = vunpack.c.l.b16 %v87
  %v523 = vunpack.c.h.b16 %v87
  %v524 = vunpack.c.l.b16 %v88
  %v525 = vunpack.c.h.b16 %v88
  %v526 = vunpack.c.l.b16 %v89
  %v527 = vunpack.c.h.b16 %v89
  %v528 = vunpack.c.l.b16 %v90
  %v529 = vunpack.c.h.b16 %v90
  %v530 = vunpack.c.l.b16 %v91
  %v531 = vunpack.c.h.b16 %v91
  %v532 = vunpack.c.l.b16 %v92
  %v533 = vunpack.c.h.b16 %v92
  %v534 = vunpack.c.l.b16 %v93
  %v535 = vunpack.c.h.b16 %v93
  %v536 = vunpack.c.l.b16 %v94
  %v537 = vunpack.c.h.b16 %v94
  %v538 = vunpack.c.l.b16 %v95
  %v539 = vunpack.c.h.b16 %v95
  %v540 = vunpack.c.l.b16 %v96
  %v541 = vunpack.c.h.b16 %v96
  %v542 = vunpack.c.l.b16 %v97
  %v543 = vunpack.c.h.b16 %v97
  %v544 = vunpack.c.l.b16 %v98
  %v545 = vunpack.c.h.b16 %v98
  %v546 = vunpack.c.l.b16 %v99
  %v547 = vunpack.c.h.b16 %v99
  %v548 = vunpack.c.l.b16 %v100
  %v549 = vunpack.c.h.b16 %v100
  %v550 = vunpack.c.l.b16 %v101
  %v551 = vunpack.c.h.b16 %v101
  %v552 = vunpack.c.l.b16 %v102
  %v553 = vunpack.c.h.b16 %v102
  %v554 = vunpack.c.l.b16 %v103
  %v555 = vunpack.c.h.b16 %v103
  %v556 = vunpack.c.l.b16 %v104
  %v557 = vunpack.c.h.b16 %v104
  %v558 = vunpack.c.l.b16 %v105
  %v559 = vunpack.c.h.b16 %v105
  %v560 = vunpack.c.l.b16 %v106
  %v561 = vunpack.c.h.b16 %v106
  %v562 = vunpack.c.l.b16 %v107
  %v563 = vunpack.c.h.b16 %v107
  %v564 = vunpack.c.l.b16 %v108
  %v565 = vunpack.c.h.b16 %v108
  %v566 = vunpack.c.l.b16 %v109
  %v567 = vunpack.c.h.b16 %v109
  %v568 = vunpack.c.l.b16 %v110
  %v569 = vunpack.c.h.b16 %v110
  %v570 = vunpack.c.l.b16 %v111
  %v571 = vunpack.c.h.b16 %v111
  %v572 = vunpack.c.l.b16 %v112
  %v573 = vunpack.c.h.b16 %v112
  %v574 = vunpack.c.l.b16 %v113
  %v575 = vunpack.c.h.b16 %v113
  %v576 = vunpack.c.l.b16 %v114
  %v577 = vunpack.c.h.b16 %v114
  %v578 = vunpack.c.l.b16 %v115
  %v579 = vunpack.c.h.b16 %v115
  %v580 = vunpack.c.l.b16 %v116
  %v581 = vunpack.c.h.b16 %v116
  %v582 = vunpack.c.l.b16 %v117
  %v583 = vunpack.c.h.b16 %v117
  %v584 = vunpack.c.l.b16 %v118
  %v585 = vunpack.c.h.b16 %v118
  %v586 = vunpack.c.l.b16 %v119
  %v587 = vunpack.c.h.b16 %v119
  %v588 = vunpack.c.l.b16 %v120
  %v589 = vunpack.c.h.b16 %v120
  %v590 = vunpack.c.l.b16 %v121
  %v591 = vunpack.c.h.b16 %v121
  %v592 = vunpack.c.l.b16 %v122
  %v593 = vunpack.c.h.b16 %v122
  %v594 = vunpack.c.l.b16 %v123
  %v595 = vunpack.c.h.b16 %v123
  %v596 = vunpack.c.l.b16 %v124
  %v597 = vunpack.c.h.b16 %v124
  %v598 = vunpack.c.l.b16 %v125
  %v599 = vunpack.c.h.b16 %v125
  %v600 = vunpack.c.l.b16 %v126
  %v601 = vunpack.c.h.b16 %v126
  %v602 = vunpack.c.l.b16 %v127
  %v603 = vunpack.c.h.b16 %v127
  %v604 = vunpack.c.l.b16 %v128
  %v605 = vunpack.c.h.b16 %v128
  %v606 = vunpack.c.l.b16 %v129
  %v607 = vunpack.c.h.b16 %v129
  %v608 = vunpack.c.l.b16 %v130
  %v609 = vunpack.c.h.b16 %v130
  %v610 = vunpack.c.l.b16 %v131
  %v611 = vunpack.c.h.b16 %v131
  %v612 = vunpack.c.l.b16 %v132
  %v613 = vunpack.c.h.b16 %v132
  %v614 = vunpack.c.l.b16 %v133
  %v615 = vunpack.c.h.b16 %v133
  %v616 = vunpack.c.l.b16 %v134
  %v617 = vunpack.c.h.b16 %v134
  %v618 = vunpack.c.l.b16 %v135
  %v619 = vunpack.c.h.b16 %v135
  %v620 = vunpack.c.l.b16 %v136
  %v621 = vunpack.c.h.b16 %v136
  %v622 = vunpack.c.l.b16 %v137
  %v623 = vunpack.c.h.b16 %v137
  %v624 = vunpack.c.l.b16 %v138
  %v625 = vunpack.c.h.b16 %v138
  %v626 = vunpack.c.l.b16 %v139
  %v627 = vunpack.c.h.b16 %v139
  %v628 = vunpack.c.l.b16 %v140
  %v629 = vunpack.c.h.b16 %v140
  %v630 = vunpack.c.l.b16 %v141
  %v631 = vunpack.c.h.b16 %v141
  %v632 = vunpack.c.l.b16 %v142
  %v633 = vunpack.c.h.b16 %v142
  %v634 = vunpack.c.l.b16 %v143
  %v635 = vunpack.c.h.b16 %v143
  %v636 = vunpack.c.l.b16 %v144
  %v637 = vunpack.c.h.b16 %v144
  %v638 = vunpack.c.l.b16 %v145
  %v639 = vunpack.c.h.b16 %v145
  %v640 = vunpack.c.l.b16 %v146
  %v641 = vunpack.c.h.b16 %v146
  %v642 = vunpack.c.l.b16 %v147
  %v643 = vunpack.c.h.b16 %v147
  %v644 = vunpack.c.l.b16 %v148
  %v645 = vunpack.c.h.b16 %v148
  %v646 = vunpack.c.l.b16 %v149
  %v647 = vunpack.c.h.b16 %v149
  %v648 = vunpack.c.l.b16 %v150
  %v649 = vunpack.c.h.b16 %v150
  %v650 = vunpack.c.l.b16 %v151
  %v651 = vunpack.c.h.b16 %v151
  %v652 = vunpack.c.l.b16 %v152
  %v653 = vunpack.c.h.b16 %v152
  %v654 = vunpack.c.l.b16 %v153
  %v655 = vunpack.c.h.b16 %v153
  %v656 = vunpack.c.l.b16 %v154
  %v657 = vunpack.c.h.b16 %v154
  %v658 = vunpack.c.l.b16 %v155
  %v659 = vunpack.c.h.b16 %v155
  %v660 = vunpack.c.l.b16 %v156
  %v661 = vunpack.c.h.b16 %v156
  %v662 = vunpack.c.l.b16 %v157
  %v663 = vunpack.c.h.b16 %v157
  %v664 = vpack.c.b16 %v416, %v408
  %v665 = vpack.c.b16 %v417, %v409
  %v666 = vpack.c.b16 %v418, %v410
  %v667 = vpack.c.b16 %v419, %v411
  %v668 = vpack.c.b16 %v420, %v412
  %v669 = vpack.c.b16 %v421, %v413
  %v670 = vpack.c.b16 %v422, %v414
  %v671 = vpack.c.b16 %v423, %v415
  %v672 = vpack.c.b16 %v432, %v424
  %v673 = vpack.c.b16 %v433, %v425
  %v674 = vpack.c.b16 %v434, %v426
  %v675 = vpack.c.b16 %v435, %v427
  %v676 = vpack.c.b16 %v436, %v428
  %v677 = vpack.c.b16 %v437, %v429
  %v678 = vpack.c.b16 %v438, %v430
  %v679 = vpack.c.b16 %v439, %v431
  %v680 = vpack.c.b16 %v448, %v440
  %v681 = vpack.c.b16 %v449, %v441
  %v682 = vpack.c.b16 %v450, %v442
  %v683 = vpack.c.b16 %v451, %v443
  %v684 = vpack.c.b16 %v452, %v444
  %v685 = vpack.c.b16 %v453, %v445
  %v686 = vpack.c.b16 %v454, %v446
  %v687 = vpack.c.b16 %v455, %v447
  %v688 = vpack.c.b16 %v464, %v456
  %v689 = vpack.c.b16 %v465, %v457
  %v690 = vpack.c.b16 %v466, %v458
  %v691 = vpack.c.b16 %v467, %v459
  %v692 = vpack.c.b16 %v468, %v460
  %v693 = vpack.c.b16 %v469, %v461
  %v694 = vpack.c.b16 %v470, %v462
  %v695 = vpack.c.b16 %v471, %v463
  %v696 = vpack.c.b16 %v480, %v472
  %v697 = vpack.c.b16 %v481, %v473
  %v698 = vpack.c.b16 %v482, %v474
  %v699 = vpack.c.b16 %v483, %v475
  %v700 = vpack.c.b16 %v484, %v476
  %v701 = vpack.c.b16 %v485, %v477
  %v702 = vpack.c.b16 %v486, %v478
  %v703 = vpack.c.b16 %v487, %v479
  %v704 = vpack.c.b16 %v496, %v488
  %v705 = vpack.c.b16 %v497, %v489
  %v706 = vpack.c.b16 %v498, %v490
  %v707 = vpack.c.b16 %v499, %v491
  %v708 = vpack.c.b16 %v500, %v492
  %v709 = vpack.c.b16 %v501, %v493
  %v710 = vpack.c.b16 %v502, %v494
  %v711 = vpack.c.b16 %v503, %v495
  %v712 = vpack.c.b16 %v512, %v504
  %v713 = vpack.c.b16 %v513, %v505
  %v714 = vpack.c.b16 %v514, %v506
  %v715 = vpack.c.b16 %v515, %v507
  %v716 = vpack.c.b16 %v516, %v508
  %v717 = vpack.c.b16 %v517, %v509
  %v718 = vpack.c.b16 %v518, %v510
  %v719 = vpack.c.b16 %v519, %v511
  %v720 = vpack.c.b16 %v528, %v520
  %v721 = vpack.c.b16 %v529, %v521
  %v722 = vpack.c.b16 %v530, %v522
  %v723 = vpack.c.b16 %v531, %v523
  %v724 = vpack.c.b16 %v532, %v524
  %v725 = vpack.c.b16 %v533, %v525
  %v726 = vpack.c.b16 %v534, %v526
  %v727 = vpack.c.b16 %v535, %v527
  %v728 = vpack.c.b16 %v544, %v536
  %v729 = vpack.c.b16 %v545, %v537
  %v730 = vpack.c.b16 %v546, %v538
  %v731 = vpack.c.b16 %v547, %v539
  %v732 = vpack.c.b16 %v548, %v540
  %v733 = vpack.c.b16 %v549, %v541
  %v734 = vpack.c.b16 %v550, %v542
  %v735 = vpack.c.b16 %v551, %v543
  %v736 = vpack.c.b16 %v560, %v552
  %v737 = vpack.c.b16 %v561, %v553
  %v738 = vpack.c.b16 %v562, %v554
  %v739 = vpack.c.b16 %v563, %v555
  %v740 = vpack.c.b16 %v564, %v556
  %v741 = vpack.c.b16 %v565, %v557
  %v742 = vpack.c.b16 %v566, %v558
  %v743 = vpack.c.b16 %v567, %v559
  %v744 = vpack.c.b16 %v576, %v568
  %v745 = vpack.c.b16 %v577, %v569
  %v746 = vpack.c.b16 %v578, %v570
  %v747 = vpack.c.b16 %v579, %v571
  %v748 = vpack.c.b16 %v580, %v572
  %v749 = vpack.c.b16 %v581, %v573
  %v750 = vpack.c.b16 %v582, %v574
  %v751 = vpack.c.b16 %v583, %v575
  %v752 = vpack.c.b16 %v592, %v584
  %v753 = vpack.c.b16 %v593, %v585
  %v754 = vpack.c.b16 %v594, %v586
  %v755 = vpack.c.b16 %v595, %v587
  %v756 = vpack.c.b16 %v596, %v588
  %v757 = vpack.c.b16 %v597, %v589
  %v758 = vpack.c.b16 %v598, %v590
  %v759 = vpack.c.b16 %v599, %v591
  %v760 = vpack.c.b16 %v608, %v600
  %v761 = vpack.c.b16 %v609, %v601
  %v762 = vpack.c.b16 %v610, %v602
  %v763 = vpack.c.b16 %v611, %v603
  %v764 = vpack.c.b16 %v612, %v604
  %v765 = vpack.c.b16 %v613, %v605
  %v766 = vpack.c.b16 %v614, %v606
  %v767 = vpack.c.b16 %v615, %v607
  %v768 = vpack.c.b16 %v624, %v616
  %v769 = vpack.c.b16 %v625, %v617
  %v770 = vpack.c.b16 %v626, %v618
  %v771 = vpack.c.b16 %v627, %v619
  %v772 = vpack.c.b16 %v628, %v620
  %v773 = vpack.c.b16 %v629, %v621
  %v774 = vpack.c.b16 %v630, %v622
  %v775 = vpack.c.b16 %v631, %v623
  %v776 = vpack.c.b16 %v640, %v632
  %v777 = vpack.c.b16 %v641, %v633
  %v778 = vpack.c.b16 %v642, %v634
  %v779 = vpack.c.b16 %v643, %v635
  %v780 = vpack.c.b16 %v644, %v636
  %v781 = vpack.c.b16 %v645, %v637
  %v782 = vpack.c.b16 %v646, %v638
  %v783 = vpack.c.b16 %v647, %v639
  %v784 = vpack.c.b16 %v656, %v648
  %v785 = vpack.c.b16 %v657, %v649
  %v786 = vpack.c.b16 %v658, %v650
  %v787 = vpack.c.b16 %v659, %v651
  %v788 = vpack.c.b16 %v660, %v652
  %v789 = vpack.c.b16 %v661, %v653
  %v790 = vpack.c.b16 %v662, %v654
  %v791 = vpack.c.b16 %v663, %v655
  %920 = vmatprep.subr.bf16.mxu0 %v721
  %921 = vmatpush1.bf16.msra.mxu0 %v720
  %922 = vmatprep.subr.bf16.mxu0 %v713
  %923 = vmatpush1.bf16.msra.mxu0 %v712
  %924 = vmatprep.subr.bf16.mxu0 %v705
  %925 = vmatpush1.bf16.msra.mxu0 %v704
  %926 = vmatprep.subr.bf16.mxu0 %v697
  %927 = vmatpush1.bf16.msra.mxu0 %v696
  %928 = vmatprep.subr.bf16.mxu0 %v689
  %929 = vmatpush1.bf16.msra.mxu0 %v688
  %930 = vmatprep.subr.bf16.mxu0 %v681
  %931 = vmatpush1.bf16.msra.mxu0 %v680
  %932 = vmatprep.subr.bf16.mxu0 %v673
  %933 = vmatpush1.bf16.msra.mxu0 %v672
  %934 = vmatprep.subr.bf16.mxu0 %v665
  %935 = vmatpush1.bf16.msra.mxu0 %v664
  %936 = vmatprep.subr.bf16.mxu0 %v785
  %937 = vmatpush2.bf16.msra.mxu0 %v784
  %938 = vmatprep.subr.bf16.mxu0 %v777
  %939 = vmatpush2.bf16.msra.mxu0 %v776
  %940 = vmatprep.subr.bf16.mxu0 %v769
  %941 = vmatpush2.bf16.msra.mxu0 %v768
  %942 = vmatprep.subr.bf16.mxu0 %v761
  %943 = vmatpush2.bf16.msra.mxu0 %v760
  %944 = vmatprep.subr.bf16.mxu0 %v753
  %945 = vmatpush2.bf16.msra.mxu0 %v752
  %946 = vmatprep.subr.bf16.mxu0 %v745
  %947 = vmatpush2.bf16.msra.mxu0 %v744
  %948 = vmatprep.subr.bf16.mxu0 %v737
  %949 = vmatpush2.bf16.msra.mxu0 %v736
  %950 = vmatprep.subr.bf16.mxu0 %v729
  %951 = vmatpush2.bf16.msra.mxu0 %v728
  %952 = vmatprep.mubr.bf16.mxu0 %v249
  %953 = vmatmul.mubr.bf16.gmra.mxu0 %v248
  %v954 = vpop.f32.mrf.mxu0
  %v955 = vadd.f32 %v163, %v954
  %v956 = vpop.f32.mrf.mxu0
  %v957 = vadd.f32 %v167, %v956
  %v958 = vpop.f32.mrf.mxu0
  %v959 = vadd.f32 %v163, %v958
  %v960 = vpop.f32.mrf.mxu0
  %v961 = vadd.f32 %v167, %v960
  %962 = vmatprep.mubr.bf16.mxu0 %v251
  %963 = vmatmul.mubr.bf16.gmra.mxu0 %v250
  %v964 = vpop.f32.mrf.mxu0
  %v965 = vadd.f32 %v163, %v964
  %v966 = vpop.f32.mrf.mxu0
  %v967 = vadd.f32 %v167, %v966
  %v968 = vpop.f32.mrf.mxu0
  %v969 = vadd.f32 %v163, %v968
  %v970 = vpop.f32.mrf.mxu0
  %v971 = vadd.f32 %v167, %v970
  %972 = vmatprep.mubr.bf16.mxu0 %v253
  %973 = vmatmul.mubr.bf16.gmra.mxu0 %v252
  %v974 = vpop.f32.mrf.mxu0
  %v975 = vadd.f32 %v163, %v974
  %v976 = vpop.f32.mrf.mxu0
  %v977 = vadd.f32 %v167, %v976
  %v978 = vpop.f32.mrf.mxu0
  %v979 = vadd.f32 %v163, %v978
  %v980 = vpop.f32.mrf.mxu0
  %v981 = vadd.f32 %v167, %v980
  %982 = vmatprep.mubr.bf16.mxu0 %v255
  %983 = vmatmul.mubr.bf16.gmra.mxu0 %v254
  %v984 = vpop.f32.mrf.mxu0
  %v985 = vadd.f32 %v163, %v984
  %v986 = vpop.f32.mrf.mxu0
  %v987 = vadd.f32 %v167, %v986
  %v988 = vpop.f32.mrf.mxu0
  %v989 = vadd.f32 %v163, %v988
  %v990 = vpop.f32.mrf.mxu0
  %v991 = vadd.f32 %v167, %v990
  %992 = vmatprep.mubr.bf16.mxu0 %v257
  %993 = vmatmul.mubr.bf16.gmra.mxu0 %v256
  %v994 = vpop.f32.mrf.mxu0
  %v995 = vadd.f32 %v163, %v994
  %v996 = vpop.f32.mrf.mxu0
  %v997 = vadd.f32 %v167, %v996
  %v998 = vpop.f32.mrf.mxu0
  %v999 = vadd.f32 %v163, %v998
  %v1000 = vpop.f32.mrf.mxu0
  %v1001 = vadd.f32 %v167, %v1000
  %1002 = vmatprep.mubr.bf16.mxu0 %v259
  %1003 = vmatmul.mubr.bf16.gmra.mxu0 %v258
  %v1004 = vpop.f32.mrf.mxu0
  %v1005 = vadd.f32 %v163, %v1004
  %v1006 = vpop.f32.mrf.mxu0
  %v1007 = vadd.f32 %v167, %v1006
  %v1008 = vpop.f32.mrf.mxu0
  %v1009 = vadd.f32 %v163, %v1008
  %v1010 = vpop.f32.mrf.mxu0
  %v1011 = vadd.f32 %v167, %v1010
  %1012 = vmatprep.mubr.bf16.mxu0 %v261
  %1013 = vmatmul.mubr.bf16.gmra.mxu0 %v260
  %v1014 = vpop.f32.mrf.mxu0
  %v1015 = vadd.f32 %v163, %v1014
  %v1016 = vpop.f32.mrf.mxu0
  %v1017 = vadd.f32 %v167, %v1016
  %v1018 = vpop.f32.mrf.mxu0
  %v1019 = vadd.f32 %v163, %v1018
  %v1020 = vpop.f32.mrf.mxu0
  %v1021 = vadd.f32 %v167, %v1020
  %1022 = vmatprep.mubr.bf16.mxu0 %v263
  %1023 = vmatmul.mubr.bf16.gmra.mxu0 %v262
  %v1024 = vpop.f32.mrf.mxu0
  %v1025 = vadd.f32 %v163, %v1024
  %v1026 = vpop.f32.mrf.mxu0
  %v1027 = vadd.f32 %v167, %v1026
  %v1028 = vpop.f32.mrf.mxu0
  %v1029 = vadd.f32 %v163, %v1028
  %v1030 = vpop.f32.mrf.mxu0
  %v1031 = vadd.f32 %v167, %v1030
  %1032 = vdwg.mxu0
  %1033 = vmatprep.subr.bf16.mxu0 %v723
  %1034 = vmatpush1.bf16.msra.mxu0 %v722
  %1035 = vmatprep.subr.bf16.mxu0 %v715
  %1036 = vmatpush1.bf16.msra.mxu0 %v714
  %1037 = vmatprep.subr.bf16.mxu0 %v707
  %1038 = vmatpush1.bf16.msra.mxu0 %v706
  %1039 = vmatprep.subr.bf16.mxu0 %v699
  %1040 = vmatpush1.bf16.msra.mxu0 %v698
  %1041 = vmatprep.subr.bf16.mxu0 %v691
  %1042 = vmatpush1.bf16.msra.mxu0 %v690
  %1043 = vmatprep.subr.bf16.mxu0 %v683
  %1044 = vmatpush1.bf16.msra.mxu0 %v682
  %1045 = vmatprep.subr.bf16.mxu0 %v675
  %1046 = vmatpush1.bf16.msra.mxu0 %v674
  %1047 = vmatprep.subr.bf16.mxu0 %v667
  %1048 = vmatpush1.bf16.msra.mxu0 %v666
  %1049 = vmatprep.subr.bf16.mxu0 %v787
  %1050 = vmatpush2.bf16.msra.mxu0 %v786
  %1051 = vmatprep.subr.bf16.mxu0 %v779
  %1052 = vmatpush2.bf16.msra.mxu0 %v778
  %1053 = vmatprep.subr.bf16.mxu0 %v771
  %1054 = vmatpush2.bf16.msra.mxu0 %v770
  %1055 = vmatprep.subr.bf16.mxu0 %v763
  %1056 = vmatpush2.bf16.msra.mxu0 %v762
  %1057 = vmatprep.subr.bf16.mxu0 %v755
  %1058 = vmatpush2.bf16.msra.mxu0 %v754
  %1059 = vmatprep.subr.bf16.mxu0 %v747
  %1060 = vmatpush2.bf16.msra.mxu0 %v746
  %1061 = vmatprep.subr.bf16.mxu0 %v739
  %1062 = vmatpush2.bf16.msra.mxu0 %v738
  %1063 = vmatprep.subr.bf16.mxu0 %v731
  %1064 = vmatpush2.bf16.msra.mxu0 %v730
  %1065 = vmatprep.mubr.bf16.mxu0 %v249
  %1066 = vmatmul.mubr.bf16.gmra.mxu0 %v248
  %v1067 = vpop.f32.mrf.mxu0
  %v1068 = vadd.f32 %v171, %v1067
  %v1069 = vpop.f32.mrf.mxu0
  %v1070 = vadd.f32 %v175, %v1069
  %v1071 = vpop.f32.mrf.mxu0
  %v1072 = vadd.f32 %v171, %v1071
  %v1073 = vpop.f32.mrf.mxu0
  %v1074 = vadd.f32 %v175, %v1073
  %1075 = vmatprep.mubr.bf16.mxu0 %v251
  %1076 = vmatmul.mubr.bf16.gmra.mxu0 %v250
  %v1077 = vpop.f32.mrf.mxu0
  %v1078 = vadd.f32 %v171, %v1077
  %v1079 = vpop.f32.mrf.mxu0
  %v1080 = vadd.f32 %v175, %v1079
  %v1081 = vpop.f32.mrf.mxu0
  %v1082 = vadd.f32 %v171, %v1081
  %v1083 = vpop.f32.mrf.mxu0
  %v1084 = vadd.f32 %v175, %v1083
  %1085 = vmatprep.mubr.bf16.mxu0 %v253
  %1086 = vmatmul.mubr.bf16.gmra.mxu0 %v252
  %v1087 = vpop.f32.mrf.mxu0
  %v1088 = vadd.f32 %v171, %v1087
  %v1089 = vpop.f32.mrf.mxu0
  %v1090 = vadd.f32 %v175, %v1089
  %v1091 = vpop.f32.mrf.mxu0
  %v1092 = vadd.f32 %v171, %v1091
  %v1093 = vpop.f32.mrf.mxu0
  %v1094 = vadd.f32 %v175, %v1093
  %1095 = vmatprep.mubr.bf16.mxu0 %v255
  %1096 = vmatmul.mubr.bf16.gmra.mxu0 %v254
  %v1097 = vpop.f32.mrf.mxu0
  %v1098 = vadd.f32 %v171, %v1097
  %v1099 = vpop.f32.mrf.mxu0
  %v1100 = vadd.f32 %v175, %v1099
  %v1101 = vpop.f32.mrf.mxu0
  %v1102 = vadd.f32 %v171, %v1101
  %v1103 = vpop.f32.mrf.mxu0
  %v1104 = vadd.f32 %v175, %v1103
  %1105 = vmatprep.mubr.bf16.mxu0 %v257
  %1106 = vmatmul.mubr.bf16.gmra.mxu0 %v256
  %v1107 = vpop.f32.mrf.mxu0
  %v1108 = vadd.f32 %v171, %v1107
  %v1109 = vpop.f32.mrf.mxu0
  %v1110 = vadd.f32 %v175, %v1109
  %v1111 = vpop.f32.mrf.mxu0
  %v1112 = vadd.f32 %v171, %v1111
  %v1113 = vpop.f32.mrf.mxu0
  %v1114 = vadd.f32 %v175, %v1113
  %1115 = vmatprep.mubr.bf16.mxu0 %v259
  %1116 = vmatmul.mubr.bf16.gmra.mxu0 %v258
  %v1117 = vpop.f32.mrf.mxu0
  %v1118 = vadd.f32 %v171, %v1117
  %v1119 = vpop.f32.mrf.mxu0
  %v1120 = vadd.f32 %v175, %v1119
  %v1121 = vpop.f32.mrf.mxu0
  %v1122 = vadd.f32 %v171, %v1121
  %v1123 = vpop.f32.mrf.mxu0
  %v1124 = vadd.f32 %v175, %v1123
  %1125 = vmatprep.mubr.bf16.mxu0 %v261
  %1126 = vmatmul.mubr.bf16.gmra.mxu0 %v260
  %v1127 = vpop.f32.mrf.mxu0
  %v1128 = vadd.f32 %v171, %v1127
  %v1129 = vpop.f32.mrf.mxu0
  %v1130 = vadd.f32 %v175, %v1129
  %v1131 = vpop.f32.mrf.mxu0
  %v1132 = vadd.f32 %v171, %v1131
  %v1133 = vpop.f32.mrf.mxu0
  %v1134 = vadd.f32 %v175, %v1133
  %1135 = vmatprep.mubr.bf16.mxu0 %v263
  %1136 = vmatmul.mubr.bf16.gmra.mxu0 %v262
  %v1137 = vpop.f32.mrf.mxu0
  %v1138 = vadd.f32 %v171, %v1137
  %v1139 = vpop.f32.mrf.mxu0
  %v1140 = vadd.f32 %v175, %v1139
  %v1141 = vpop.f32.mrf.mxu0
  %v1142 = vadd.f32 %v171, %v1141
  %v1143 = vpop.f32.mrf.mxu0
  %v1144 = vadd.f32 %v175, %v1143
  %1145 = vdwg.mxu0
  %1146 = vmatprep.subr.bf16.mxu0 %v725
  %1147 = vmatpush1.bf16.msra.mxu0 %v724
  %1148 = vmatprep.subr.bf16.mxu0 %v717
  %1149 = vmatpush1.bf16.msra.mxu0 %v716
  %1150 = vmatprep.subr.bf16.mxu0 %v709
  %1151 = vmatpush1.bf16.msra.mxu0 %v708
  %1152 = vmatprep.subr.bf16.mxu0 %v701
  %1153 = vmatpush1.bf16.msra.mxu0 %v700
  %1154 = vmatprep.subr.bf16.mxu0 %v693
  %1155 = vmatpush1.bf16.msra.mxu0 %v692
  %1156 = vmatprep.subr.bf16.mxu0 %v685
  %1157 = vmatpush1.bf16.msra.mxu0 %v684
  %1158 = vmatprep.subr.bf16.mxu0 %v677
  %1159 = vmatpush1.bf16.msra.mxu0 %v676
  %1160 = vmatprep.subr.bf16.mxu0 %v669
  %1161 = vmatpush1.bf16.msra.mxu0 %v668
  %1162 = vmatprep.subr.bf16.mxu0 %v789
  %1163 = vmatpush2.bf16.msra.mxu0 %v788
  %1164 = vmatprep.subr.bf16.mxu0 %v781
  %1165 = vmatpush2.bf16.msra.mxu0 %v780
  %1166 = vmatprep.subr.bf16.mxu0 %v773
  %1167 = vmatpush2.bf16.msra.mxu0 %v772
  %1168 = vmatprep.subr.bf16.mxu0 %v765
  %1169 = vmatpush2.bf16.msra.mxu0 %v764
  %1170 = vmatprep.subr.bf16.mxu0 %v757
  %1171 = vmatpush2.bf16.msra.mxu0 %v756
  %1172 = vmatprep.subr.bf16.mxu0 %v749
  %1173 = vmatpush2.bf16.msra.mxu0 %v748
  %1174 = vmatprep.subr.bf16.mxu0 %v741
  %1175 = vmatpush2.bf16.msra.mxu0 %v740
  %1176 = vmatprep.subr.bf16.mxu0 %v733
  %1177 = vmatpush2.bf16.msra.mxu0 %v732
  %1178 = vmatprep.mubr.bf16.mxu0 %v249
  %1179 = vmatmul.mubr.bf16.gmra.mxu0 %v248
  %v1180 = vpop.f32.mrf.mxu0
  %v1181 = vadd.f32 %v179, %v1180
  %v1182 = vpop.f32.mrf.mxu0
  %v1183 = vadd.f32 %v183, %v1182
  %v1184 = vpop.f32.mrf.mxu0
  %v1185 = vadd.f32 %v179, %v1184
  %v1186 = vpop.f32.mrf.mxu0
  %v1187 = vadd.f32 %v183, %v1186
  %1188 = vmatprep.mubr.bf16.mxu0 %v251
  %1189 = vmatmul.mubr.bf16.gmra.mxu0 %v250
  %v1190 = vpop.f32.mrf.mxu0
  %v1191 = vadd.f32 %v179, %v1190
  %v1192 = vpop.f32.mrf.mxu0
  %v1193 = vadd.f32 %v183, %v1192
  %v1194 = vpop.f32.mrf.mxu0
  %v1195 = vadd.f32 %v179, %v1194
  %v1196 = vpop.f32.mrf.mxu0
  %v1197 = vadd.f32 %v183, %v1196
  %1198 = vmatprep.mubr.bf16.mxu0 %v253
  %1199 = vmatmul.mubr.bf16.gmra.mxu0 %v252
  %v1200 = vpop.f32.mrf.mxu0
  %v1201 = vadd.f32 %v179, %v1200
  %v1202 = vpop.f32.mrf.mxu0
  %v1203 = vadd.f32 %v183, %v1202
  %v1204 = vpop.f32.mrf.mxu0
  %v1205 = vadd.f32 %v179, %v1204
  %v1206 = vpop.f32.mrf.mxu0
  %v1207 = vadd.f32 %v183, %v1206
  %1208 = vmatprep.mubr.bf16.mxu0 %v255
  %1209 = vmatmul.mubr.bf16.gmra.mxu0 %v254
  %v1210 = vpop.f32.mrf.mxu0
  %v1211 = vadd.f32 %v179, %v1210
  %v1212 = vpop.f32.mrf.mxu0
  %v1213 = vadd.f32 %v183, %v1212
  %v1214 = vpop.f32.mrf.mxu0
  %v1215 = vadd.f32 %v179, %v1214
  %v1216 = vpop.f32.mrf.mxu0
  %v1217 = vadd.f32 %v183, %v1216
  %1218 = vmatprep.mubr.bf16.mxu0 %v257
  %1219 = vmatmul.mubr.bf16.gmra.mxu0 %v256
  %v1220 = vpop.f32.mrf.mxu0
  %v1221 = vadd.f32 %v179, %v1220
  %v1222 = vpop.f32.mrf.mxu0
  %v1223 = vadd.f32 %v183, %v1222
  %v1224 = vpop.f32.mrf.mxu0
  %v1225 = vadd.f32 %v179, %v1224
  %v1226 = vpop.f32.mrf.mxu0
  %v1227 = vadd.f32 %v183, %v1226
  %1228 = vmatprep.mubr.bf16.mxu0 %v259
  %1229 = vmatmul.mubr.bf16.gmra.mxu0 %v258
  %v1230 = vpop.f32.mrf.mxu0
  %v1231 = vadd.f32 %v179, %v1230
  %v1232 = vpop.f32.mrf.mxu0
  %v1233 = vadd.f32 %v183, %v1232
  %v1234 = vpop.f32.mrf.mxu0
  %v1235 = vadd.f32 %v179, %v1234
  %v1236 = vpop.f32.mrf.mxu0
  %v1237 = vadd.f32 %v183, %v1236
  %1238 = vmatprep.mubr.bf16.mxu0 %v261
  %1239 = vmatmul.mubr.bf16.gmra.mxu0 %v260
  %v1240 = vpop.f32.mrf.mxu0
  %v1241 = vadd.f32 %v179, %v1240
  %v1242 = vpop.f32.mrf.mxu0
  %v1243 = vadd.f32 %v183, %v1242
  %v1244 = vpop.f32.mrf.mxu0
  %v1245 = vadd.f32 %v179, %v1244
  %v1246 = vpop.f32.mrf.mxu0
  %v1247 = vadd.f32 %v183, %v1246
  %1248 = vmatprep.mubr.bf16.mxu0 %v263
  %1249 = vmatmul.mubr.bf16.gmra.mxu0 %v262
  %v1250 = vpop.f32.mrf.mxu0
  %v1251 = vadd.f32 %v179, %v1250
  %v1252 = vpop.f32.mrf.mxu0
  %v1253 = vadd.f32 %v183, %v1252
  %v1254 = vpop.f32.mrf.mxu0
  %v1255 = vadd.f32 %v179, %v1254
  %v1256 = vpop.f32.mrf.mxu0
  %v1257 = vadd.f32 %v183, %v1256
  %1258 = vdwg.mxu0
  %1259 = vmatprep.subr.bf16.mxu0 %v727
  %1260 = vmatpush1.bf16.msra.mxu0 %v726
  %1261 = vmatprep.subr.bf16.mxu0 %v719
  %1262 = vmatpush1.bf16.msra.mxu0 %v718
  %1263 = vmatprep.subr.bf16.mxu0 %v711
  %1264 = vmatpush1.bf16.msra.mxu0 %v710
  %1265 = vmatprep.subr.bf16.mxu0 %v703
  %1266 = vmatpush1.bf16.msra.mxu0 %v702
  %1267 = vmatprep.subr.bf16.mxu0 %v695
  %1268 = vmatpush1.bf16.msra.mxu0 %v694
  %1269 = vmatprep.subr.bf16.mxu0 %v687
  %1270 = vmatpush1.bf16.msra.mxu0 %v686
  %1271 = vmatprep.subr.bf16.mxu0 %v679
  %1272 = vmatpush1.bf16.msra.mxu0 %v678
  %1273 = vmatprep.subr.bf16.mxu0 %v671
  %1274 = vmatpush1.bf16.msra.mxu0 %v670
  %1275 = vmatprep.subr.bf16.mxu0 %v791
  %1276 = vmatpush2.bf16.msra.mxu0 %v790
  %1277 = vmatprep.subr.bf16.mxu0 %v783
  %1278 = vmatpush2.bf16.msra.mxu0 %v782
  %1279 = vmatprep.subr.bf16.mxu0 %v775
  %1280 = vmatpush2.bf16.msra.mxu0 %v774
  %1281 = vmatprep.subr.bf16.mxu0 %v767
  %1282 = vmatpush2.bf16.msra.mxu0 %v766
  %1283 = vmatprep.subr.bf16.mxu0 %v759
  %1284 = vmatpush2.bf16.msra.mxu0 %v758
  %1285 = vmatprep.subr.bf16.mxu0 %v751
  %1286 = vmatpush2.bf16.msra.mxu0 %v750
  %1287 = vmatprep.subr.bf16.mxu0 %v743
  %1288 = vmatpush2.bf16.msra.mxu0 %v742
  %1289 = vmatprep.subr.bf16.mxu0 %v735
  %1290 = vmatpush2.bf16.msra.mxu0 %v734
  %1291 = vmatprep.mubr.bf16.mxu0 %v249
  %1292 = vmatmul.mubr.bf16.gmra.mxu0 %v248
  %v1293 = vpop.f32.mrf.mxu0
  %v1294 = vadd.f32 %v187, %v1293
  %v1295 = vpop.f32.mrf.mxu0
  %v1296 = vadd.f32 %v191, %v1295
  %v1297 = vpop.f32.mrf.mxu0
  %v1298 = vadd.f32 %v187, %v1297
  %v1299 = vpop.f32.mrf.mxu0
  %v1300 = vadd.f32 %v191, %v1299
  %1301 = vmatprep.mubr.bf16.mxu0 %v251
  %1302 = vmatmul.mubr.bf16.gmra.mxu0 %v250
  %v1303 = vpop.f32.mrf.mxu0
  %v1304 = vadd.f32 %v187, %v1303
  %v1305 = vpop.f32.mrf.mxu0
  %v1306 = vadd.f32 %v191, %v1305
  %v1307 = vpop.f32.mrf.mxu0
  %v1308 = vadd.f32 %v187, %v1307
  %v1309 = vpop.f32.mrf.mxu0
  %v1310 = vadd.f32 %v191, %v1309
  %1311 = vmatprep.mubr.bf16.mxu0 %v253
  %1312 = vmatmul.mubr.bf16.gmra.mxu0 %v252
  %v1313 = vpop.f32.mrf.mxu0
  %v1314 = vadd.f32 %v187, %v1313
  %v1315 = vpop.f32.mrf.mxu0
  %v1316 = vadd.f32 %v191, %v1315
  %v1317 = vpop.f32.mrf.mxu0
  %v1318 = vadd.f32 %v187, %v1317
  %v1319 = vpop.f32.mrf.mxu0
  %v1320 = vadd.f32 %v191, %v1319
  %1321 = vmatprep.mubr.bf16.mxu0 %v255
  %1322 = vmatmul.mubr.bf16.gmra.mxu0 %v254
  %v1323 = vpop.f32.mrf.mxu0
  %v1324 = vadd.f32 %v187, %v1323
  %v1325 = vpop.f32.mrf.mxu0
  %v1326 = vadd.f32 %v191, %v1325
  %v1327 = vpop.f32.mrf.mxu0
  %v1328 = vadd.f32 %v187, %v1327
  %v1329 = vpop.f32.mrf.mxu0
  %v1330 = vadd.f32 %v191, %v1329
  %1331 = vmatprep.mubr.bf16.mxu0 %v257
  %1332 = vmatmul.mubr.bf16.gmra.mxu0 %v256
  %v1333 = vpop.f32.mrf.mxu0
  %v1334 = vadd.f32 %v187, %v1333
  %v1335 = vpop.f32.mrf.mxu0
  %v1336 = vadd.f32 %v191, %v1335
  %v1337 = vpop.f32.mrf.mxu0
  %v1338 = vadd.f32 %v187, %v1337
  %v1339 = vpop.f32.mrf.mxu0
  %v1340 = vadd.f32 %v191, %v1339
  %1341 = vmatprep.mubr.bf16.mxu0 %v259
  %1342 = vmatmul.mubr.bf16.gmra.mxu0 %v258
  %v1343 = vpop.f32.mrf.mxu0
  %v1344 = vadd.f32 %v187, %v1343
  %v1345 = vpop.f32.mrf.mxu0
  %v1346 = vadd.f32 %v191, %v1345
  %v1347 = vpop.f32.mrf.mxu0
  %v1348 = vadd.f32 %v187, %v1347
  %v1349 = vpop.f32.mrf.mxu0
  %v1350 = vadd.f32 %v191, %v1349
  %1351 = vmatprep.mubr.bf16.mxu0 %v261
  %1352 = vmatmul.mubr.bf16.gmra.mxu0 %v260
  %v1353 = vpop.f32.mrf.mxu0
  %v1354 = vadd.f32 %v187, %v1353
  %v1355 = vpop.f32.mrf.mxu0
  %v1356 = vadd.f32 %v191, %v1355
  %v1357 = vpop.f32.mrf.mxu0
  %v1358 = vadd.f32 %v187, %v1357
  %v1359 = vpop.f32.mrf.mxu0
  %v1360 = vadd.f32 %v191, %v1359
  %1361 = vmatprep.mubr.bf16.mxu0 %v263
  %1362 = vmatmul.mubr.bf16.gmra.mxu0 %v262
  %v1363 = vpop.f32.mrf.mxu0
  %v1364 = vadd.f32 %v187, %v1363
  %v1365 = vpop.f32.mrf.mxu0
  %v1366 = vadd.f32 %v191, %v1365
  %v1367 = vpop.f32.mrf.mxu0
  %v1368 = vadd.f32 %v187, %v1367
  %v1369 = vpop.f32.mrf.mxu0
  %v1370 = vadd.f32 %v191, %v1369
  %1371 = vdwg.mxu0
  %v1372 = vmul.f32 %v955, %v955
  %v1373 = vmul.f32 %v957, %v957
  %v1374 = vmul.f32 %v1068, %v1068
  %v1375 = vmul.f32 %v1070, %v1070
  %v1376 = vmul.f32 %v1181, %v1181
  %v1377 = vmul.f32 %v1183, %v1183
  %v1378 = vmul.f32 %v1294, %v1294
  %v1379 = vmul.f32 %v1296, %v1296
  %v1380 = vmul.f32 %v959, %v959
  %v1381 = vmul.f32 %v961, %v961
  %v1382 = vmul.f32 %v1072, %v1072
  %v1383 = vmul.f32 %v1074, %v1074
  %v1384 = vmul.f32 %v1185, %v1185
  %v1385 = vmul.f32 %v1187, %v1187
  %v1386 = vmul.f32 %v1298, %v1298
  %v1387 = vmul.f32 %v1300, %v1300
  %v1388 = vmul.f32 %v965, %v965
  %v1389 = vmul.f32 %v967, %v967
  %v1390 = vmul.f32 %v1078, %v1078
  %v1391 = vmul.f32 %v1080, %v1080
  %v1392 = vmul.f32 %v1191, %v1191
  %v1393 = vmul.f32 %v1193, %v1193
  %v1394 = vmul.f32 %v1304, %v1304
  %v1395 = vmul.f32 %v1306, %v1306
  %v1396 = vmul.f32 %v969, %v969
  %v1397 = vmul.f32 %v971, %v971
  %v1398 = vmul.f32 %v1082, %v1082
  %v1399 = vmul.f32 %v1084, %v1084
  %v1400 = vmul.f32 %v1195, %v1195
  %v1401 = vmul.f32 %v1197, %v1197
  %v1402 = vmul.f32 %v1308, %v1308
  %v1403 = vmul.f32 %v1310, %v1310
  %v1404 = vmul.f32 %v975, %v975
  %v1405 = vmul.f32 %v977, %v977
  %v1406 = vmul.f32 %v1088, %v1088
  %v1407 = vmul.f32 %v1090, %v1090
  %v1408 = vmul.f32 %v1201, %v1201
  %v1409 = vmul.f32 %v1203, %v1203
  %v1410 = vmul.f32 %v1314, %v1314
  %v1411 = vmul.f32 %v1316, %v1316
  %v1412 = vmul.f32 %v979, %v979
  %v1413 = vmul.f32 %v981, %v981
  %v1414 = vmul.f32 %v1092, %v1092
  %v1415 = vmul.f32 %v1094, %v1094
  %v1416 = vmul.f32 %v1205, %v1205
  %v1417 = vmul.f32 %v1207, %v1207
  %v1418 = vmul.f32 %v1318, %v1318
  %v1419 = vmul.f32 %v1320, %v1320
  %v1420 = vmul.f32 %v985, %v985
  %v1421 = vmul.f32 %v987, %v987
  %v1422 = vmul.f32 %v1098, %v1098
  %v1423 = vmul.f32 %v1100, %v1100
  %v1424 = vmul.f32 %v1211, %v1211
  %v1425 = vmul.f32 %v1213, %v1213
  %v1426 = vmul.f32 %v1324, %v1324
  %v1427 = vmul.f32 %v1326, %v1326
  %v1428 = vmul.f32 %v989, %v989
  %v1429 = vmul.f32 %v991, %v991
  %v1430 = vmul.f32 %v1102, %v1102
  %v1431 = vmul.f32 %v1104, %v1104
  %v1432 = vmul.f32 %v1215, %v1215
  %v1433 = vmul.f32 %v1217, %v1217
  %v1434 = vmul.f32 %v1328, %v1328
  %v1435 = vmul.f32 %v1330, %v1330
  %v1436 = vmul.f32 %v995, %v995
  %v1437 = vmul.f32 %v997, %v997
  %v1438 = vmul.f32 %v1108, %v1108
  %v1439 = vmul.f32 %v1110, %v1110
  %v1440 = vmul.f32 %v1221, %v1221
  %v1441 = vmul.f32 %v1223, %v1223
  %v1442 = vmul.f32 %v1334, %v1334
  %v1443 = vmul.f32 %v1336, %v1336
  %v1444 = vmul.f32 %v999, %v999
  %v1445 = vmul.f32 %v1001, %v1001
  %v1446 = vmul.f32 %v1112, %v1112
  %v1447 = vmul.f32 %v1114, %v1114
  %v1448 = vmul.f32 %v1225, %v1225
  %v1449 = vmul.f32 %v1227, %v1227
  %v1450 = vmul.f32 %v1338, %v1338
  %v1451 = vmul.f32 %v1340, %v1340
  %v1452 = vmul.f32 %v1005, %v1005
  %v1453 = vmul.f32 %v1007, %v1007
  %v1454 = vmul.f32 %v1118, %v1118
  %v1455 = vmul.f32 %v1120, %v1120
  %v1456 = vmul.f32 %v1231, %v1231
  %v1457 = vmul.f32 %v1233, %v1233
  %v1458 = vmul.f32 %v1344, %v1344
  %v1459 = vmul.f32 %v1346, %v1346
  %v1460 = vmul.f32 %v1009, %v1009
  %v1461 = vmul.f32 %v1011, %v1011
  %v1462 = vmul.f32 %v1122, %v1122
  %v1463 = vmul.f32 %v1124, %v1124
  %v1464 = vmul.f32 %v1235, %v1235
  %v1465 = vmul.f32 %v1237, %v1237
  %v1466 = vmul.f32 %v1348, %v1348
  %v1467 = vmul.f32 %v1350, %v1350
  %v1468 = vmul.f32 %v1015, %v1015
  %v1469 = vmul.f32 %v1017, %v1017
  %v1470 = vmul.f32 %v1128, %v1128
  %v1471 = vmul.f32 %v1130, %v1130
  %v1472 = vmul.f32 %v1241, %v1241
  %v1473 = vmul.f32 %v1243, %v1243
  %v1474 = vmul.f32 %v1354, %v1354
  %v1475 = vmul.f32 %v1356, %v1356
  %v1476 = vmul.f32 %v1019, %v1019
  %v1477 = vmul.f32 %v1021, %v1021
  %v1478 = vmul.f32 %v1132, %v1132
  %v1479 = vmul.f32 %v1134, %v1134
  %v1480 = vmul.f32 %v1245, %v1245
  %v1481 = vmul.f32 %v1247, %v1247
  %v1482 = vmul.f32 %v1358, %v1358
  %v1483 = vmul.f32 %v1360, %v1360
  %v1484 = vmul.f32 %v1025, %v1025
  %v1485 = vmul.f32 %v1027, %v1027
  %v1486 = vmul.f32 %v1138, %v1138
  %v1487 = vmul.f32 %v1140, %v1140
  %v1488 = vmul.f32 %v1251, %v1251
  %v1489 = vmul.f32 %v1253, %v1253
  %v1490 = vmul.f32 %v1364, %v1364
  %v1491 = vmul.f32 %v1366, %v1366
  %v1492 = vmul.f32 %v1029, %v1029
  %v1493 = vmul.f32 %v1031, %v1031
  %v1494 = vmul.f32 %v1142, %v1142
  %v1495 = vmul.f32 %v1144, %v1144
  %v1496 = vmul.f32 %v1255, %v1255
  %v1497 = vmul.f32 %v1257, %v1257
  %v1498 = vmul.f32 %v1368, %v1368
  %v1499 = vmul.f32 %v1370, %v1370
  %v1500 = vmul.f32 %v955, %v1372
  %v1501 = vmul.f32 %v957, %v1373
  %v1502 = vmul.f32 %v1068, %v1374
  %v1503 = vmul.f32 %v1070, %v1375
  %v1504 = vmul.f32 %v1181, %v1376
  %v1505 = vmul.f32 %v1183, %v1377
  %v1506 = vmul.f32 %v1294, %v1378
  %v1507 = vmul.f32 %v1296, %v1379
  %v1508 = vmul.f32 %v959, %v1380
  %v1509 = vmul.f32 %v961, %v1381
  %v1510 = vmul.f32 %v1072, %v1382
  %v1511 = vmul.f32 %v1074, %v1383
  %v1512 = vmul.f32 %v1185, %v1384
  %v1513 = vmul.f32 %v1187, %v1385
  %v1514 = vmul.f32 %v1298, %v1386
  %v1515 = vmul.f32 %v1300, %v1387
  %v1516 = vmul.f32 %v965, %v1388
  %v1517 = vmul.f32 %v967, %v1389
  %v1518 = vmul.f32 %v1078, %v1390
  %v1519 = vmul.f32 %v1080, %v1391
  %v1520 = vmul.f32 %v1191, %v1392
  %v1521 = vmul.f32 %v1193, %v1393
  %v1522 = vmul.f32 %v1304, %v1394
  %v1523 = vmul.f32 %v1306, %v1395
  %v1524 = vmul.f32 %v969, %v1396
  %v1525 = vmul.f32 %v971, %v1397
  %v1526 = vmul.f32 %v1082, %v1398
  %v1527 = vmul.f32 %v1084, %v1399
  %v1528 = vmul.f32 %v1195, %v1400
  %v1529 = vmul.f32 %v1197, %v1401
  %v1530 = vmul.f32 %v1308, %v1402
  %v1531 = vmul.f32 %v1310, %v1403
  %v1532 = vmul.f32 %v975, %v1404
  %v1533 = vmul.f32 %v977, %v1405
  %v1534 = vmul.f32 %v1088, %v1406
  %v1535 = vmul.f32 %v1090, %v1407
  %v1536 = vmul.f32 %v1201, %v1408
  %v1537 = vmul.f32 %v1203, %v1409
  %v1538 = vmul.f32 %v1314, %v1410
  %v1539 = vmul.f32 %v1316, %v1411
  %v1540 = vmul.f32 %v979, %v1412
  %v1541 = vmul.f32 %v981, %v1413
  %v1542 = vmul.f32 %v1092, %v1414
  %v1543 = vmul.f32 %v1094, %v1415
  %v1544 = vmul.f32 %v1205, %v1416
  %v1545 = vmul.f32 %v1207, %v1417
  %v1546 = vmul.f32 %v1318, %v1418
  %v1547 = vmul.f32 %v1320, %v1419
  %v1548 = vmul.f32 %v985, %v1420
  %v1549 = vmul.f32 %v987, %v1421
  %v1550 = vmul.f32 %v1098, %v1422
  %v1551 = vmul.f32 %v1100, %v1423
  %v1552 = vmul.f32 %v1211, %v1424
  %v1553 = vmul.f32 %v1213, %v1425
  %v1554 = vmul.f32 %v1324, %v1426
  %v1555 = vmul.f32 %v1326, %v1427
  %v1556 = vmul.f32 %v989, %v1428
  %v1557 = vmul.f32 %v991, %v1429
  %v1558 = vmul.f32 %v1102, %v1430
  %v1559 = vmul.f32 %v1104, %v1431
  %v1560 = vmul.f32 %v1215, %v1432
  %v1561 = vmul.f32 %v1217, %v1433
  %v1562 = vmul.f32 %v1328, %v1434
  %v1563 = vmul.f32 %v1330, %v1435
  %v1564 = vmul.f32 %v995, %v1436
  %v1565 = vmul.f32 %v997, %v1437
  %v1566 = vmul.f32 %v1108, %v1438
  %v1567 = vmul.f32 %v1110, %v1439
  %v1568 = vmul.f32 %v1221, %v1440
  %v1569 = vmul.f32 %v1223, %v1441
  %v1570 = vmul.f32 %v1334, %v1442
  %v1571 = vmul.f32 %v1336, %v1443
  %v1572 = vmul.f32 %v999, %v1444
  %v1573 = vmul.f32 %v1001, %v1445
  %v1574 = vmul.f32 %v1112, %v1446
  %v1575 = vmul.f32 %v1114, %v1447
  %v1576 = vmul.f32 %v1225, %v1448
  %v1577 = vmul.f32 %v1227, %v1449
  %v1578 = vmul.f32 %v1338, %v1450
  %v1579 = vmul.f32 %v1340, %v1451
  %v1580 = vmul.f32 %v1005, %v1452
  %v1581 = vmul.f32 %v1007, %v1453
  %v1582 = vmul.f32 %v1118, %v1454
  %v1583 = vmul.f32 %v1120, %v1455
  %v1584 = vmul.f32 %v1231, %v1456
  %v1585 = vmul.f32 %v1233, %v1457
  %v1586 = vmul.f32 %v1344, %v1458
  %v1587 = vmul.f32 %v1346, %v1459
  %v1588 = vmul.f32 %v1009, %v1460
  %v1589 = vmul.f32 %v1011, %v1461
  %v1590 = vmul.f32 %v1122, %v1462
  %v1591 = vmul.f32 %v1124, %v1463
  %v1592 = vmul.f32 %v1235, %v1464
  %v1593 = vmul.f32 %v1237, %v1465
  %v1594 = vmul.f32 %v1348, %v1466
  %v1595 = vmul.f32 %v1350, %v1467
  %v1596 = vmul.f32 %v1015, %v1468
  %v1597 = vmul.f32 %v1017, %v1469
  %v1598 = vmul.f32 %v1128, %v1470
  %v1599 = vmul.f32 %v1130, %v1471
  %v1600 = vmul.f32 %v1241, %v1472
  %v1601 = vmul.f32 %v1243, %v1473
  %v1602 = vmul.f32 %v1354, %v1474
  %v1603 = vmul.f32 %v1356, %v1475
  %v1604 = vmul.f32 %v1019, %v1476
  %v1605 = vmul.f32 %v1021, %v1477
  %v1606 = vmul.f32 %v1132, %v1478
  %v1607 = vmul.f32 %v1134, %v1479
  %v1608 = vmul.f32 %v1245, %v1480
  %v1609 = vmul.f32 %v1247, %v1481
  %v1610 = vmul.f32 %v1358, %v1482
  %v1611 = vmul.f32 %v1360, %v1483
  %v1612 = vmul.f32 %v1025, %v1484
  %v1613 = vmul.f32 %v1027, %v1485
  %v1614 = vmul.f32 %v1138, %v1486
  %v1615 = vmul.f32 %v1140, %v1487
  %v1616 = vmul.f32 %v1251, %v1488
  %v1617 = vmul.f32 %v1253, %v1489
  %v1618 = vmul.f32 %v1364, %v1490
  %v1619 = vmul.f32 %v1366, %v1491
  %v1620 = vmul.f32 %v1029, %v1492
  %v1621 = vmul.f32 %v1031, %v1493
  %v1622 = vmul.f32 %v1142, %v1494
  %v1623 = vmul.f32 %v1144, %v1495
  %v1624 = vmul.f32 %v1255, %v1496
  %v1625 = vmul.f32 %v1257, %v1497
  %v1626 = vmul.f32 %v1368, %v1498
  %v1627 = vmul.f32 %v1370, %v1499
  %v1628 = vmul.f32 %v1500, 0.044715
  %v1629 = vmul.f32 %v1501, 0.044715
  %v1630 = vmul.f32 %v1502, 0.044715
  %v1631 = vmul.f32 %v1503, 0.044715
  %v1632 = vmul.f32 %v1504, 0.044715
  %v1633 = vmul.f32 %v1505, 0.044715
  %v1634 = vmul.f32 %v1506, 0.044715
  %v1635 = vmul.f32 %v1507, 0.044715
  %v1636 = vmul.f32 %v1508, 0.044715
  %v1637 = vmul.f32 %v1509, 0.044715
  %v1638 = vmul.f32 %v1510, 0.044715
  %v1639 = vmul.f32 %v1511, 0.044715
  %v1640 = vmul.f32 %v1512, 0.044715
  %v1641 = vmul.f32 %v1513, 0.044715
  %v1642 = vmul.f32 %v1514, 0.044715
  %v1643 = vmul.f32 %v1515, 0.044715
  %v1644 = vmul.f32 %v1516, 0.044715
  %v1645 = vmul.f32 %v1517, 0.044715
  %v1646 = vmul.f32 %v1518, 0.044715
  %v1647 = vmul.f32 %v1519, 0.044715
  %v1648 = vmul.f32 %v1520, 0.044715
  %v1649 = vmul.f32 %v1521, 0.044715
  %v1650 = vmul.f32 %v1522, 0.044715
  %v1651 = vmul.f32 %v1523, 0.044715
  %v1652 = vmul.f32 %v1524, 0.044715
  %v1653 = vmul.f32 %v1525, 0.044715
  %v1654 = vmul.f32 %v1526, 0.044715
  %v1655 = vmul.f32 %v1527, 0.044715
  %v1656 = vmul.f32 %v1528, 0.044715
  %v1657 = vmul.f32 %v1529, 0.044715
  %v1658 = vmul.f32 %v1530, 0.044715
  %v1659 = vmul.f32 %v1531, 0.044715
  %v1660 = vmul.f32 %v1532, 0.044715
  %v1661 = vmul.f32 %v1533, 0.044715
  %v1662 = vmul.f32 %v1534, 0.044715
  %v1663 = vmul.f32 %v1535, 0.044715
  %v1664 = vmul.f32 %v1536, 0.044715
  %v1665 = vmul.f32 %v1537, 0.044715
  %v1666 = vmul.f32 %v1538, 0.044715
  %v1667 = vmul.f32 %v1539, 0.044715
  %v1668 = vmul.f32 %v1540, 0.044715
  %v1669 = vmul.f32 %v1541, 0.044715
  %v1670 = vmul.f32 %v1542, 0.044715
  %v1671 = vmul.f32 %v1543, 0.044715
  %v1672 = vmul.f32 %v1544, 0.044715
  %v1673 = vmul.f32 %v1545, 0.044715
  %v1674 = vmul.f32 %v1546, 0.044715
  %v1675 = vmul.f32 %v1547, 0.044715
  %v1676 = vmul.f32 %v1548, 0.044715
  %v1677 = vmul.f32 %v1549, 0.044715
  %v1678 = vmul.f32 %v1550, 0.044715
  %v1679 = vmul.f32 %v1551, 0.044715
  %v1680 = vmul.f32 %v1552, 0.044715
  %v1681 = vmul.f32 %v1553, 0.044715
  %v1682 = vmul.f32 %v1554, 0.044715
  %v1683 = vmul.f32 %v1555, 0.044715
  %v1684 = vmul.f32 %v1556, 0.044715
  %v1685 = vmul.f32 %v1557, 0.044715
  %v1686 = vmul.f32 %v1558, 0.044715
  %v1687 = vmul.f32 %v1559, 0.044715
  %v1688 = vmul.f32 %v1560, 0.044715
  %v1689 = vmul.f32 %v1561, 0.044715
  %v1690 = vmul.f32 %v1562, 0.044715
  %v1691 = vmul.f32 %v1563, 0.044715
  %v1692 = vmul.f32 %v1564, 0.044715
  %v1693 = vmul.f32 %v1565, 0.044715
  %v1694 = vmul.f32 %v1566, 0.044715
  %v1695 = vmul.f32 %v1567, 0.044715
  %v1696 = vmul.f32 %v1568, 0.044715
  %v1697 = vmul.f32 %v1569, 0.044715
  %v1698 = vmul.f32 %v1570, 0.044715
  %v1699 = vmul.f32 %v1571, 0.044715
  %v1700 = vmul.f32 %v1572, 0.044715
  %v1701 = vmul.f32 %v1573, 0.044715
  %v1702 = vmul.f32 %v1574, 0.044715
  %v1703 = vmul.f32 %v1575, 0.044715
  %v1704 = vmul.f32 %v1576, 0.044715
  %v1705 = vmul.f32 %v1577, 0.044715
  %v1706 = vmul.f32 %v1578, 0.044715
  %v1707 = vmul.f32 %v1579, 0.044715
  %v1708 = vmul.f32 %v1580, 0.044715
  %v1709 = vmul.f32 %v1581, 0.044715
  %v1710 = vmul.f32 %v1582, 0.044715
  %v1711 = vmul.f32 %v1583, 0.044715
  %v1712 = vmul.f32 %v1584, 0.044715
  %v1713 = vmul.f32 %v1585, 0.044715
  %v1714 = vmul.f32 %v1586, 0.044715
  %v1715 = vmul.f32 %v1587, 0.044715
  %v1716 = vmul.f32 %v1588, 0.044715
  %v1717 = vmul.f32 %v1589, 0.044715
  %v1718 = vmul.f32 %v1590, 0.044715
  %v1719 = vmul.f32 %v1591, 0.044715
  %v1720 = vmul.f32 %v1592, 0.044715
  %v1721 = vmul.f32 %v1593, 0.044715
  %v1722 = vmul.f32 %v1594, 0.044715
  %v1723 = vmul.f32 %v1595, 0.044715
  %v1724 = vmul.f32 %v1596, 0.044715
  %v1725 = vmul.f32 %v1597, 0.044715
  %v1726 = vmul.f32 %v1598, 0.044715
  %v1727 = vmul.f32 %v1599, 0.044715
  %v1728 = vmul.f32 %v1600, 0.044715
  %v1729 = vmul.f32 %v1601, 0.044715
  %v1730 = vmul.f32 %v1602, 0.044715
  %v1731 = vmul.f32 %v1603, 0.044715
  %v1732 = vmul.f32 %v1604, 0.044715
  %v1733 = vmul.f32 %v1605, 0.044715
  %v1734 = vmul.f32 %v1606, 0.044715
  %v1735 = vmul.f32 %v1607, 0.044715
  %v1736 = vmul.f32 %v1608, 0.044715
  %v1737 = vmul.f32 %v1609, 0.044715
  %v1738 = vmul.f32 %v1610, 0.044715
  %v1739 = vmul.f32 %v1611, 0.044715
  %v1740 = vmul.f32 %v1612, 0.044715
  %v1741 = vmul.f32 %v1613, 0.044715
  %v1742 = vmul.f32 %v1614, 0.044715
  %v1743 = vmul.f32 %v1615, 0.044715
  %v1744 = vmul.f32 %v1616, 0.044715
  %v1745 = vmul.f32 %v1617, 0.044715
  %v1746 = vmul.f32 %v1618, 0.044715
  %v1747 = vmul.f32 %v1619, 0.044715
  %v1748 = vmul.f32 %v1620, 0.044715
  %v1749 = vmul.f32 %v1621, 0.044715
  %v1750 = vmul.f32 %v1622, 0.044715
  %v1751 = vmul.f32 %v1623, 0.044715
  %v1752 = vmul.f32 %v1624, 0.044715
  %v1753 = vmul.f32 %v1625, 0.044715
  %v1754 = vmul.f32 %v1626, 0.044715
  %v1755 = vmul.f32 %v1627, 0.044715
  %v1756 = vadd.f32 %v955, %v1628
  %v1757 = vadd.f32 %v957, %v1629
  %v1758 = vadd.f32 %v1068, %v1630
  %v1759 = vadd.f32 %v1070, %v1631
  %v1760 = vadd.f32 %v1181, %v1632
  %v1761 = vadd.f32 %v1183, %v1633
  %v1762 = vadd.f32 %v1294, %v1634
  %v1763 = vadd.f32 %v1296, %v1635
  %v1764 = vadd.f32 %v959, %v1636
  %v1765 = vadd.f32 %v961, %v1637
  %v1766 = vadd.f32 %v1072, %v1638
  %v1767 = vadd.f32 %v1074, %v1639
  %v1768 = vadd.f32 %v1185, %v1640
  %v1769 = vadd.f32 %v1187, %v1641
  %v1770 = vadd.f32 %v1298, %v1642
  %v1771 = vadd.f32 %v1300, %v1643
  %v1772 = vadd.f32 %v965, %v1644
  %v1773 = vadd.f32 %v967, %v1645
  %v1774 = vadd.f32 %v1078, %v1646
  %v1775 = vadd.f32 %v1080, %v1647
  %v1776 = vadd.f32 %v1191, %v1648
  %v1777 = vadd.f32 %v1193, %v1649
  %v1778 = vadd.f32 %v1304, %v1650
  %v1779 = vadd.f32 %v1306, %v1651
  %v1780 = vadd.f32 %v969, %v1652
  %v1781 = vadd.f32 %v971, %v1653
  %v1782 = vadd.f32 %v1082, %v1654
  %v1783 = vadd.f32 %v1084, %v1655
  %v1784 = vadd.f32 %v1195, %v1656
  %v1785 = vadd.f32 %v1197, %v1657
  %v1786 = vadd.f32 %v1308, %v1658
  %v1787 = vadd.f32 %v1310, %v1659
  %v1788 = vadd.f32 %v975, %v1660
  %v1789 = vadd.f32 %v977, %v1661
  %v1790 = vadd.f32 %v1088, %v1662
  %v1791 = vadd.f32 %v1090, %v1663
  %v1792 = vadd.f32 %v1201, %v1664
  %v1793 = vadd.f32 %v1203, %v1665
  %v1794 = vadd.f32 %v1314, %v1666
  %v1795 = vadd.f32 %v1316, %v1667
  %v1796 = vadd.f32 %v979, %v1668
  %v1797 = vadd.f32 %v981, %v1669
  %v1798 = vadd.f32 %v1092, %v1670
  %v1799 = vadd.f32 %v1094, %v1671
  %v1800 = vadd.f32 %v1205, %v1672
  %v1801 = vadd.f32 %v1207, %v1673
  %v1802 = vadd.f32 %v1318, %v1674
  %v1803 = vadd.f32 %v1320, %v1675
  %v1804 = vadd.f32 %v985, %v1676
  %v1805 = vadd.f32 %v987, %v1677
  %v1806 = vadd.f32 %v1098, %v1678
  %v1807 = vadd.f32 %v1100, %v1679
  %v1808 = vadd.f32 %v1211, %v1680
  %v1809 = vadd.f32 %v1213, %v1681
  %v1810 = vadd.f32 %v1324, %v1682
  %v1811 = vadd.f32 %v1326, %v1683
  %v1812 = vadd.f32 %v989, %v1684
  %v1813 = vadd.f32 %v991, %v1685
  %v1814 = vadd.f32 %v1102, %v1686
  %v1815 = vadd.f32 %v1104, %v1687
  %v1816 = vadd.f32 %v1215, %v1688
  %v1817 = vadd.f32 %v1217, %v1689
  %v1818 = vadd.f32 %v1328, %v1690
  %v1819 = vadd.f32 %v1330, %v1691
  %v1820 = vadd.f32 %v995, %v1692
  %v1821 = vadd.f32 %v997, %v1693
  %v1822 = vadd.f32 %v1108, %v1694
  %v1823 = vadd.f32 %v1110, %v1695
  %v1824 = vadd.f32 %v1221, %v1696
  %v1825 = vadd.f32 %v1223, %v1697
  %v1826 = vadd.f32 %v1334, %v1698
  %v1827 = vadd.f32 %v1336, %v1699
  %v1828 = vadd.f32 %v999, %v1700
  %v1829 = vadd.f32 %v1001, %v1701
  %v1830 = vadd.f32 %v1112, %v1702
  %v1831 = vadd.f32 %v1114, %v1703
  %v1832 = vadd.f32 %v1225, %v1704
  %v1833 = vadd.f32 %v1227, %v1705
  %v1834 = vadd.f32 %v1338, %v1706
  %v1835 = vadd.f32 %v1340, %v1707
  %v1836 = vadd.f32 %v1005, %v1708
  %v1837 = vadd.f32 %v1007, %v1709
  %v1838 = vadd.f32 %v1118, %v1710
  %v1839 = vadd.f32 %v1120, %v1711
  %v1840 = vadd.f32 %v1231, %v1712
  %v1841 = vadd.f32 %v1233, %v1713
  %v1842 = vadd.f32 %v1344, %v1714
  %v1843 = vadd.f32 %v1346, %v1715
  %v1844 = vadd.f32 %v1009, %v1716
  %v1845 = vadd.f32 %v1011, %v1717
  %v1846 = vadd.f32 %v1122, %v1718
  %v1847 = vadd.f32 %v1124, %v1719
  %v1848 = vadd.f32 %v1235, %v1720
  %v1849 = vadd.f32 %v1237, %v1721
  %v1850 = vadd.f32 %v1348, %v1722
  %v1851 = vadd.f32 %v1350, %v1723
  %v1852 = vadd.f32 %v1015, %v1724
  %v1853 = vadd.f32 %v1017, %v1725
  %v1854 = vadd.f32 %v1128, %v1726
  %v1855 = vadd.f32 %v1130, %v1727
  %v1856 = vadd.f32 %v1241, %v1728
  %v1857 = vadd.f32 %v1243, %v1729
  %v1858 = vadd.f32 %v1354, %v1730
  %v1859 = vadd.f32 %v1356, %v1731
  %v1860 = vadd.f32 %v1019, %v1732
  %v1861 = vadd.f32 %v1021, %v1733
  %v1862 = vadd.f32 %v1132, %v1734
  %v1863 = vadd.f32 %v1134, %v1735
  %v1864 = vadd.f32 %v1245, %v1736
  %v1865 = vadd.f32 %v1247, %v1737
  %v1866 = vadd.f32 %v1358, %v1738
  %v1867 = vadd.f32 %v1360, %v1739
  %v1868 = vadd.f32 %v1025, %v1740
  %v1869 = vadd.f32 %v1027, %v1741
  %v1870 = vadd.f32 %v1138, %v1742
  %v1871 = vadd.f32 %v1140, %v1743
  %v1872 = vadd.f32 %v1251, %v1744
  %v1873 = vadd.f32 %v1253, %v1745
  %v1874 = vadd.f32 %v1364, %v1746
  %v1875 = vadd.f32 %v1366, %v1747
  %v1876 = vadd.f32 %v1029, %v1748
  %v1877 = vadd.f32 %v1031, %v1749
  %v1878 = vadd.f32 %v1142, %v1750
  %v1879 = vadd.f32 %v1144, %v1751
  %v1880 = vadd.f32 %v1255, %v1752
  %v1881 = vadd.f32 %v1257, %v1753
  %v1882 = vadd.f32 %v1368, %v1754
  %v1883 = vadd.f32 %v1370, %v1755
  %v1884 = vmul.f32 %v1756, 0.7978846
  %v1885 = vmul.f32 %v1757, 0.7978846
  %v1886 = vmul.f32 %v1758, 0.7978846
  %v1887 = vmul.f32 %v1759, 0.7978846
  %v1888 = vmul.f32 %v1760, 0.7978846
  %v1889 = vmul.f32 %v1761, 0.7978846
  %v1890 = vmul.f32 %v1762, 0.7978846
  %v1891 = vmul.f32 %v1763, 0.7978846
  %v1892 = vmul.f32 %v1764, 0.7978846
  %v1893 = vmul.f32 %v1765, 0.7978846
  %v1894 = vmul.f32 %v1766, 0.7978846
  %v1895 = vmul.f32 %v1767, 0.7978846
  %v1896 = vmul.f32 %v1768, 0.7978846
  %v1897 = vmul.f32 %v1769, 0.7978846
  %v1898 = vmul.f32 %v1770, 0.7978846
  %v1899 = vmul.f32 %v1771, 0.7978846
  %v1900 = vmul.f32 %v1772, 0.7978846
  %v1901 = vmul.f32 %v1773, 0.7978846
  %v1902 = vmul.f32 %v1774, 0.7978846
  %v1903 = vmul.f32 %v1775, 0.7978846
  %v1904 = vmul.f32 %v1776, 0.7978846
  %v1905 = vmul.f32 %v1777, 0.7978846
  %v1906 = vmul.f32 %v1778, 0.7978846
  %v1907 = vmul.f32 %v1779, 0.7978846
  %v1908 = vmul.f32 %v1780, 0.7978846
  %v1909 = vmul.f32 %v1781, 0.7978846
  %v1910 = vmul.f32 %v1782, 0.7978846
  %v1911 = vmul.f32 %v1783, 0.7978846
  %v1912 = vmul.f32 %v1784, 0.7978846
  %v1913 = vmul.f32 %v1785, 0.7978846
  %v1914 = vmul.f32 %v1786, 0.7978846
  %v1915 = vmul.f32 %v1787, 0.7978846
  %v1916 = vmul.f32 %v1788, 0.7978846
  %v1917 = vmul.f32 %v1789, 0.7978846
  %v1918 = vmul.f32 %v1790, 0.7978846
  %v1919 = vmul.f32 %v1791, 0.7978846
  %v1920 = vmul.f32 %v1792, 0.7978846
  %v1921 = vmul.f32 %v1793, 0.7978846
  %v1922 = vmul.f32 %v1794, 0.7978846
  %v1923 = vmul.f32 %v1795, 0.7978846
  %v1924 = vmul.f32 %v1796, 0.7978846
  %v1925 = vmul.f32 %v1797, 0.7978846
  %v1926 = vmul.f32 %v1798, 0.7978846
  %v1927 = vmul.f32 %v1799, 0.7978846
  %v1928 = vmul.f32 %v1800, 0.7978846
  %v1929 = vmul.f32 %v1801, 0.7978846
  %v1930 = vmul.f32 %v1802, 0.7978846
  %v1931 = vmul.f32 %v1803, 0.7978846
  %v1932 = vmul.f32 %v1804, 0.7978846
  %v1933 = vmul.f32 %v1805, 0.7978846
  %v1934 = vmul.f32 %v1806, 0.7978846
  %v1935 = vmul.f32 %v1807, 0.7978846
  %v1936 = vmul.f32 %v1808, 0.7978846
  %v1937 = vmul.f32 %v1809, 0.7978846
  %v1938 = vmul.f32 %v1810, 0.7978846
  %v1939 = vmul.f32 %v1811, 0.7978846
  %v1940 = vmul.f32 %v1812, 0.7978846
  %v1941 = vmul.f32 %v1813, 0.7978846
  %v1942 = vmul.f32 %v1814, 0.7978846
  %v1943 = vmul.f32 %v1815, 0.7978846
  %v1944 = vmul.f32 %v1816, 0.7978846
  %v1945 = vmul.f32 %v1817, 0.7978846
  %v1946 = vmul.f32 %v1818, 0.7978846
  %v1947 = vmul.f32 %v1819, 0.7978846
  %v1948 = vmul.f32 %v1820, 0.7978846
  %v1949 = vmul.f32 %v1821, 0.7978846
  %v1950 = vmul.f32 %v1822, 0.7978846
  %v1951 = vmul.f32 %v1823, 0.7978846
  %v1952 = vmul.f32 %v1824, 0.7978846
  %v1953 = vmul.f32 %v1825, 0.7978846
  %v1954 = vmul.f32 %v1826, 0.7978846
  %v1955 = vmul.f32 %v1827, 0.7978846
  %v1956 = vmul.f32 %v1828, 0.7978846
  %v1957 = vmul.f32 %v1829, 0.7978846
  %v1958 = vmul.f32 %v1830, 0.7978846
  %v1959 = vmul.f32 %v1831, 0.7978846
  %v1960 = vmul.f32 %v1832, 0.7978846
  %v1961 = vmul.f32 %v1833, 0.7978846
  %v1962 = vmul.f32 %v1834, 0.7978846
  %v1963 = vmul.f32 %v1835, 0.7978846
  %v1964 = vmul.f32 %v1836, 0.7978846
  %v1965 = vmul.f32 %v1837, 0.7978846
  %v1966 = vmul.f32 %v1838, 0.7978846
  %v1967 = vmul.f32 %v1839, 0.7978846
  %v1968 = vmul.f32 %v1840, 0.7978846
  %v1969 = vmul.f32 %v1841, 0.7978846
  %v1970 = vmul.f32 %v1842, 0.7978846
  %v1971 = vmul.f32 %v1843, 0.7978846
  %v1972 = vmul.f32 %v1844, 0.7978846
  %v1973 = vmul.f32 %v1845, 0.7978846
  %v1974 = vmul.f32 %v1846, 0.7978846
  %v1975 = vmul.f32 %v1847, 0.7978846
  %v1976 = vmul.f32 %v1848, 0.7978846
  %v1977 = vmul.f32 %v1849, 0.7978846
  %v1978 = vmul.f32 %v1850, 0.7978846
  %v1979 = vmul.f32 %v1851, 0.7978846
  %v1980 = vmul.f32 %v1852, 0.7978846
  %v1981 = vmul.f32 %v1853, 0.7978846
  %v1982 = vmul.f32 %v1854, 0.7978846
  %v1983 = vmul.f32 %v1855, 0.7978846
  %v1984 = vmul.f32 %v1856, 0.7978846
  %v1985 = vmul.f32 %v1857, 0.7978846
  %v1986 = vmul.f32 %v1858, 0.7978846
  %v1987 = vmul.f32 %v1859, 0.7978846
  %v1988 = vmul.f32 %v1860, 0.7978846
  %v1989 = vmul.f32 %v1861, 0.7978846
  %v1990 = vmul.f32 %v1862, 0.7978846
  %v1991 = vmul.f32 %v1863, 0.7978846
  %v1992 = vmul.f32 %v1864, 0.7978846
  %v1993 = vmul.f32 %v1865, 0.7978846
  %v1994 = vmul.f32 %v1866, 0.7978846
  %v1995 = vmul.f32 %v1867, 0.7978846
  %v1996 = vmul.f32 %v1868, 0.7978846
  %v1997 = vmul.f32 %v1869, 0.7978846
  %v1998 = vmul.f32 %v1870, 0.7978846
  %v1999 = vmul.f32 %v1871, 0.7978846
  %v2000 = vmul.f32 %v1872, 0.7978846
  %v2001 = vmul.f32 %v1873, 0.7978846
  %v2002 = vmul.f32 %v1874, 0.7978846
  %v2003 = vmul.f32 %v1875, 0.7978846
  %v2004 = vmul.f32 %v1876, 0.7978846
  %v2005 = vmul.f32 %v1877, 0.7978846
  %v2006 = vmul.f32 %v1878, 0.7978846
  %v2007 = vmul.f32 %v1879, 0.7978846
  %v2008 = vmul.f32 %v1880, 0.7978846
  %v2009 = vmul.f32 %v1881, 0.7978846
  %v2010 = vmul.f32 %v1882, 0.7978846
  %v2011 = vmul.f32 %v1883, 0.7978846
  %v2012 = vtanh.pop %v1884
  %v2013 = vtanh.pop %v1885
  %v2014 = vtanh.pop %v1886
  %v2015 = vtanh.pop %v1887
  %v2016 = vtanh.pop %v1888
  %v2017 = vtanh.pop %v1889
  %v2018 = vtanh.pop %v1890
  %v2019 = vtanh.pop %v1891
  %v2020 = vtanh.pop %v1892
  %v2021 = vtanh.pop %v1893
  %v2022 = vtanh.pop %v1894
  %v2023 = vtanh.pop %v1895
  %v2024 = vtanh.pop %v1896
  %v2025 = vtanh.pop %v1897
  %v2026 = vtanh.pop %v1898
  %v2027 = vtanh.pop %v1899
  %v2028 = vtanh.pop %v1900
  %v2029 = vtanh.pop %v1901
  %v2030 = vtanh.pop %v1902
  %v2031 = vtanh.pop %v1903
  %v2032 = vtanh.pop %v1904
  %v2033 = vtanh.pop %v1905
  %v2034 = vtanh.pop %v1906
  %v2035 = vtanh.pop %v1907
  %v2036 = vtanh.pop %v1908
  %v2037 = vtanh.pop %v1909
  %v2038 = vtanh.pop %v1910
  %v2039 = vtanh.pop %v1911
  %v2040 = vtanh.pop %v1912
  %v2041 = vtanh.pop %v1913
  %v2042 = vtanh.pop %v1914
  %v2043 = vtanh.pop %v1915
  %v2044 = vtanh.pop %v1916
  %v2045 = vtanh.pop %v1917
  %v2046 = vtanh.pop %v1918
  %v2047 = vtanh.pop %v1919
  %v2048 = vtanh.pop %v1920
  %v2049 = vtanh.pop %v1921
  %v2050 = vtanh.pop %v1922
  %v2051 = vtanh.pop %v1923
  %v2052 = vtanh.pop %v1924
  %v2053 = vtanh.pop %v1925
  %v2054 = vtanh.pop %v1926
  %v2055 = vtanh.pop %v1927
  %v2056 = vtanh.pop %v1928
  %v2057 = vtanh.pop %v1929
  %v2058 = vtanh.pop %v1930
  %v2059 = vtanh.pop %v1931
  %v2060 = vtanh.pop %v1932
  %v2061 = vtanh.pop %v1933
  %v2062 = vtanh.pop %v1934
  %v2063 = vtanh.pop %v1935
  %v2064 = vtanh.pop %v1936
  %v2065 = vtanh.pop %v1937
  %v2066 = vtanh.pop %v1938
  %v2067 = vtanh.pop %v1939
  %v2068 = vtanh.pop %v1940
  %v2069 = vtanh.pop %v1941
  %v2070 = vtanh.pop %v1942
  %v2071 = vtanh.pop %v1943
  %v2072 = vtanh.pop %v1944
  %v2073 = vtanh.pop %v1945
  %v2074 = vtanh.pop %v1946
  %v2075 = vtanh.pop %v1947
  %v2076 = vtanh.pop %v1948
  %v2077 = vtanh.pop %v1949
  %v2078 = vtanh.pop %v1950
  %v2079 = vtanh.pop %v1951
  %v2080 = vtanh.pop %v1952
  %v2081 = vtanh.pop %v1953
  %v2082 = vtanh.pop %v1954
  %v2083 = vtanh.pop %v1955
  %v2084 = vtanh.pop %v1956
  %v2085 = vtanh.pop %v1957
  %v2086 = vtanh.pop %v1958
  %v2087 = vtanh.pop %v1959
  %v2088 = vtanh.pop %v1960
  %v2089 = vtanh.pop %v1961
  %v2090 = vtanh.pop %v1962
  %v2091 = vtanh.pop %v1963
  %v2092 = vtanh.pop %v1964
  %v2093 = vtanh.pop %v1965
  %v2094 = vtanh.pop %v1966
  %v2095 = vtanh.pop %v1967
  %v2096 = vtanh.pop %v1968
  %v2097 = vtanh.pop %v1969
  %v2098 = vtanh.pop %v1970
  %v2099 = vtanh.pop %v1971
  %v2100 = vtanh.pop %v1972
  %v2101 = vtanh.pop %v1973
  %v2102 = vtanh.pop %v1974
  %v2103 = vtanh.pop %v1975
  %v2104 = vtanh.pop %v1976
  %v2105 = vtanh.pop %v1977
  %v2106 = vtanh.pop %v1978
  %v2107 = vtanh.pop %v1979
  %v2108 = vtanh.pop %v1980
  %v2109 = vtanh.pop %v1981
  %v2110 = vtanh.pop %v1982
  %v2111 = vtanh.pop %v1983
  %v2112 = vtanh.pop %v1984
  %v2113 = vtanh.pop %v1985
  %v2114 = vtanh.pop %v1986
  %v2115 = vtanh.pop %v1987
  %v2116 = vtanh.pop %v1988
  %v2117 = vtanh.pop %v1989
  %v2118 = vtanh.pop %v1990
  %v2119 = vtanh.pop %v1991
  %v2120 = vtanh.pop %v1992
  %v2121 = vtanh.pop %v1993
  %v2122 = vtanh.pop %v1994
  %v2123 = vtanh.pop %v1995
  %v2124 = vtanh.pop %v1996
  %v2125 = vtanh.pop %v1997
  %v2126 = vtanh.pop %v1998
  %v2127 = vtanh.pop %v1999
  %v2128 = vtanh.pop %v2000
  %v2129 = vtanh.pop %v2001
  %v2130 = vtanh.pop %v2002
  %v2131 = vtanh.pop %v2003
  %v2132 = vtanh.pop %v2004
  %v2133 = vtanh.pop %v2005
  %v2134 = vtanh.pop %v2006
  %v2135 = vtanh.pop %v2007
  %v2136 = vtanh.pop %v2008
  %v2137 = vtanh.pop %v2009
  %v2138 = vtanh.pop %v2010
  %v2139 = vtanh.pop %v2011
  %v2140 = vadd.f32 %v2012, 1.0
  %v2141 = vadd.f32 %v2013, 1.0
  %v2142 = vadd.f32 %v2014, 1.0
  %v2143 = vadd.f32 %v2015, 1.0
  %v2144 = vadd.f32 %v2016, 1.0
  %v2145 = vadd.f32 %v2017, 1.0
  %v2146 = vadd.f32 %v2018, 1.0
  %v2147 = vadd.f32 %v2019, 1.0
  %v2148 = vadd.f32 %v2020, 1.0
  %v2149 = vadd.f32 %v2021, 1.0
  %v2150 = vadd.f32 %v2022, 1.0
  %v2151 = vadd.f32 %v2023, 1.0
  %v2152 = vadd.f32 %v2024, 1.0
  %v2153 = vadd.f32 %v2025, 1.0
  %v2154 = vadd.f32 %v2026, 1.0
  %v2155 = vadd.f32 %v2027, 1.0
  %v2156 = vadd.f32 %v2028, 1.0
  %v2157 = vadd.f32 %v2029, 1.0
  %v2158 = vadd.f32 %v2030, 1.0
  %v2159 = vadd.f32 %v2031, 1.0
  %v2160 = vadd.f32 %v2032, 1.0
  %v2161 = vadd.f32 %v2033, 1.0
  %v2162 = vadd.f32 %v2034, 1.0
  %v2163 = vadd.f32 %v2035, 1.0
  %v2164 = vadd.f32 %v2036, 1.0
  %v2165 = vadd.f32 %v2037, 1.0
  %v2166 = vadd.f32 %v2038, 1.0
  %v2167 = vadd.f32 %v2039, 1.0
  %v2168 = vadd.f32 %v2040, 1.0
  %v2169 = vadd.f32 %v2041, 1.0
  %v2170 = vadd.f32 %v2042, 1.0
  %v2171 = vadd.f32 %v2043, 1.0
  %v2172 = vadd.f32 %v2044, 1.0
  %v2173 = vadd.f32 %v2045, 1.0
  %v2174 = vadd.f32 %v2046, 1.0
  %v2175 = vadd.f32 %v2047, 1.0
  %v2176 = vadd.f32 %v2048, 1.0
  %v2177 = vadd.f32 %v2049, 1.0
  %v2178 = vadd.f32 %v2050, 1.0
  %v2179 = vadd.f32 %v2051, 1.0
  %v2180 = vadd.f32 %v2052, 1.0
  %v2181 = vadd.f32 %v2053, 1.0
  %v2182 = vadd.f32 %v2054, 1.0
  %v2183 = vadd.f32 %v2055, 1.0
  %v2184 = vadd.f32 %v2056, 1.0
  %v2185 = vadd.f32 %v2057, 1.0
  %v2186 = vadd.f32 %v2058, 1.0
  %v2187 = vadd.f32 %v2059, 1.0
  %v2188 = vadd.f32 %v2060, 1.0
  %v2189 = vadd.f32 %v2061, 1.0
  %v2190 = vadd.f32 %v2062, 1.0
  %v2191 = vadd.f32 %v2063, 1.0
  %v2192 = vadd.f32 %v2064, 1.0
  %v2193 = vadd.f32 %v2065, 1.0
  %v2194 = vadd.f32 %v2066, 1.0
  %v2195 = vadd.f32 %v2067, 1.0
  %v2196 = vadd.f32 %v2068, 1.0
  %v2197 = vadd.f32 %v2069, 1.0
  %v2198 = vadd.f32 %v2070, 1.0
  %v2199 = vadd.f32 %v2071, 1.0
  %v2200 = vadd.f32 %v2072, 1.0
  %v2201 = vadd.f32 %v2073, 1.0
  %v2202 = vadd.f32 %v2074, 1.0
  %v2203 = vadd.f32 %v2075, 1.0
  %v2204 = vadd.f32 %v2076, 1.0
  %v2205 = vadd.f32 %v2077, 1.0
  %v2206 = vadd.f32 %v2078, 1.0
  %v2207 = vadd.f32 %v2079, 1.0
  %v2208 = vadd.f32 %v2080, 1.0
  %v2209 = vadd.f32 %v2081, 1.0
  %v2210 = vadd.f32 %v2082, 1.0
  %v2211 = vadd.f32 %v2083, 1.0
  %v2212 = vadd.f32 %v2084, 1.0
  %v2213 = vadd.f32 %v2085, 1.0
  %v2214 = vadd.f32 %v2086, 1.0
  %v2215 = vadd.f32 %v2087, 1.0
  %v2216 = vadd.f32 %v2088, 1.0
  %v2217 = vadd.f32 %v2089, 1.0
  %v2218 = vadd.f32 %v2090, 1.0
  %v2219 = vadd.f32 %v2091, 1.0
  %v2220 = vadd.f32 %v2092, 1.0
  %v2221 = vadd.f32 %v2093, 1.0
  %v2222 = vadd.f32 %v2094, 1.0
  %v2223 = vadd.f32 %v2095, 1.0
  %v2224 = vadd.f32 %v2096, 1.0
  %v2225 = vadd.f32 %v2097, 1.0
  %v2226 = vadd.f32 %v2098, 1.0
  %v2227 = vadd.f32 %v2099, 1.0
  %v2228 = vadd.f32 %v2100, 1.0
  %v2229 = vadd.f32 %v2101, 1.0
  %v2230 = vadd.f32 %v2102, 1.0
  %v2231 = vadd.f32 %v2103, 1.0
  %v2232 = vadd.f32 %v2104, 1.0
  %v2233 = vadd.f32 %v2105, 1.0
  %v2234 = vadd.f32 %v2106, 1.0
  %v2235 = vadd.f32 %v2107, 1.0
  %v2236 = vadd.f32 %v2108, 1.0
  %v2237 = vadd.f32 %v2109, 1.0
  %v2238 = vadd.f32 %v2110, 1.0
  %v2239 = vadd.f32 %v2111, 1.0
  %v2240 = vadd.f32 %v2112, 1.0
  %v2241 = vadd.f32 %v2113, 1.0
  %v2242 = vadd.f32 %v2114, 1.0
  %v2243 = vadd.f32 %v2115, 1.0
  %v2244 = vadd.f32 %v2116, 1.0
  %v2245 = vadd.f32 %v2117, 1.0
  %v2246 = vadd.f32 %v2118, 1.0
  %v2247 = vadd.f32 %v2119, 1.0
  %v2248 = vadd.f32 %v2120, 1.0
  %v2249 = vadd.f32 %v2121, 1.0
  %v2250 = vadd.f32 %v2122, 1.0
  %v2251 = vadd.f32 %v2123, 1.0
  %v2252 = vadd.f32 %v2124, 1.0
  %v2253 = vadd.f32 %v2125, 1.0
  %v2254 = vadd.f32 %v2126, 1.0
  %v2255 = vadd.f32 %v2127, 1.0
  %v2256 = vadd.f32 %v2128, 1.0
  %v2257 = vadd.f32 %v2129, 1.0
  %v2258 = vadd.f32 %v2130, 1.0
  %v2259 = vadd.f32 %v2131, 1.0
  %v2260 = vadd.f32 %v2132, 1.0
  %v2261 = vadd.f32 %v2133, 1.0
  %v2262 = vadd.f32 %v2134, 1.0
  %v2263 = vadd.f32 %v2135, 1.0
  %v2264 = vadd.f32 %v2136, 1.0
  %v2265 = vadd.f32 %v2137, 1.0
  %v2266 = vadd.f32 %v2138, 1.0
  %v2267 = vadd.f32 %v2139, 1.0
  %v2268 = vmul.f32 %v2140, 0.5
  %v2269 = vmul.f32 %v2141, 0.5
  %v2270 = vmul.f32 %v2142, 0.5
  %v2271 = vmul.f32 %v2143, 0.5
  %v2272 = vmul.f32 %v2144, 0.5
  %v2273 = vmul.f32 %v2145, 0.5
  %v2274 = vmul.f32 %v2146, 0.5
  %v2275 = vmul.f32 %v2147, 0.5
  %v2276 = vmul.f32 %v2148, 0.5
  %v2277 = vmul.f32 %v2149, 0.5
  %v2278 = vmul.f32 %v2150, 0.5
  %v2279 = vmul.f32 %v2151, 0.5
  %v2280 = vmul.f32 %v2152, 0.5
  %v2281 = vmul.f32 %v2153, 0.5
  %v2282 = vmul.f32 %v2154, 0.5
  %v2283 = vmul.f32 %v2155, 0.5
  %v2284 = vmul.f32 %v2156, 0.5
  %v2285 = vmul.f32 %v2157, 0.5
  %v2286 = vmul.f32 %v2158, 0.5
  %v2287 = vmul.f32 %v2159, 0.5
  %v2288 = vmul.f32 %v2160, 0.5
  %v2289 = vmul.f32 %v2161, 0.5
  %v2290 = vmul.f32 %v2162, 0.5
  %v2291 = vmul.f32 %v2163, 0.5
  %v2292 = vmul.f32 %v2164, 0.5
  %v2293 = vmul.f32 %v2165, 0.5
  %v2294 = vmul.f32 %v2166, 0.5
  %v2295 = vmul.f32 %v2167, 0.5
  %v2296 = vmul.f32 %v2168, 0.5
  %v2297 = vmul.f32 %v2169, 0.5
  %v2298 = vmul.f32 %v2170, 0.5
  %v2299 = vmul.f32 %v2171, 0.5
  %v2300 = vmul.f32 %v2172, 0.5
  %v2301 = vmul.f32 %v2173, 0.5
  %v2302 = vmul.f32 %v2174, 0.5
  %v2303 = vmul.f32 %v2175, 0.5
  %v2304 = vmul.f32 %v2176, 0.5
  %v2305 = vmul.f32 %v2177, 0.5
  %v2306 = vmul.f32 %v2178, 0.5
  %v2307 = vmul.f32 %v2179, 0.5
  %v2308 = vmul.f32 %v2180, 0.5
  %v2309 = vmul.f32 %v2181, 0.5
  %v2310 = vmul.f32 %v2182, 0.5
  %v2311 = vmul.f32 %v2183, 0.5
  %v2312 = vmul.f32 %v2184, 0.5
  %v2313 = vmul.f32 %v2185, 0.5
  %v2314 = vmul.f32 %v2186, 0.5
  %v2315 = vmul.f32 %v2187, 0.5
  %v2316 = vmul.f32 %v2188, 0.5
  %v2317 = vmul.f32 %v2189, 0.5
  %v2318 = vmul.f32 %v2190, 0.5
  %v2319 = vmul.f32 %v2191, 0.5
  %v2320 = vmul.f32 %v2192, 0.5
  %v2321 = vmul.f32 %v2193, 0.5
  %v2322 = vmul.f32 %v2194, 0.5
  %v2323 = vmul.f32 %v2195, 0.5
  %v2324 = vmul.f32 %v2196, 0.5
  %v2325 = vmul.f32 %v2197, 0.5
  %v2326 = vmul.f32 %v2198, 0.5
  %v2327 = vmul.f32 %v2199, 0.5
  %v2328 = vmul.f32 %v2200, 0.5
  %v2329 = vmul.f32 %v2201, 0.5
  %v2330 = vmul.f32 %v2202, 0.5
  %v2331 = vmul.f32 %v2203, 0.5
  %v2332 = vmul.f32 %v2204, 0.5
  %v2333 = vmul.f32 %v2205, 0.5
  %v2334 = vmul.f32 %v2206, 0.5
  %v2335 = vmul.f32 %v2207, 0.5
  %v2336 = vmul.f32 %v2208, 0.5
  %v2337 = vmul.f32 %v2209, 0.5
  %v2338 = vmul.f32 %v2210, 0.5
  %v2339 = vmul.f32 %v2211, 0.5
  %v2340 = vmul.f32 %v2212, 0.5
  %v2341 = vmul.f32 %v2213, 0.5
  %v2342 = vmul.f32 %v2214, 0.5
  %v2343 = vmul.f32 %v2215, 0.5
  %v2344 = vmul.f32 %v2216, 0.5
  %v2345 = vmul.f32 %v2217, 0.5
  %v2346 = vmul.f32 %v2218, 0.5
  %v2347 = vmul.f32 %v2219, 0.5
  %v2348 = vmul.f32 %v2220, 0.5
  %v2349 = vmul.f32 %v2221, 0.5
  %v2350 = vmul.f32 %v2222, 0.5
  %v2351 = vmul.f32 %v2223, 0.5
  %v2352 = vmul.f32 %v2224, 0.5
  %v2353 = vmul.f32 %v2225, 0.5
  %v2354 = vmul.f32 %v2226, 0.5
  %v2355 = vmul.f32 %v2227, 0.5
  %v2356 = vmul.f32 %v2228, 0.5
  %v2357 = vmul.f32 %v2229, 0.5
  %v2358 = vmul.f32 %v2230, 0.5
  %v2359 = vmul.f32 %v2231, 0.5
  %v2360 = vmul.f32 %v2232, 0.5
  %v2361 = vmul.f32 %v2233, 0.5
  %v2362 = vmul.f32 %v2234, 0.5
  %v2363 = vmul.f32 %v2235, 0.5
  %v2364 = vmul.f32 %v2236, 0.5
  %v2365 = vmul.f32 %v2237, 0.5
  %v2366 = vmul.f32 %v2238, 0.5
  %v2367 = vmul.f32 %v2239, 0.5
  %v2368 = vmul.f32 %v2240, 0.5
  %v2369 = vmul.f32 %v2241, 0.5
  %v2370 = vmul.f32 %v2242, 0.5
  %v2371 = vmul.f32 %v2243, 0.5
  %v2372 = vmul.f32 %v2244, 0.5
  %v2373 = vmul.f32 %v2245, 0.5
  %v2374 = vmul.f32 %v2246, 0.5
  %v2375 = vmul.f32 %v2247, 0.5
  %v2376 = vmul.f32 %v2248, 0.5
  %v2377 = vmul.f32 %v2249, 0.5
  %v2378 = vmul.f32 %v2250, 0.5
  %v2379 = vmul.f32 %v2251, 0.5
  %v2380 = vmul.f32 %v2252, 0.5
  %v2381 = vmul.f32 %v2253, 0.5
  %v2382 = vmul.f32 %v2254, 0.5
  %v2383 = vmul.f32 %v2255, 0.5
  %v2384 = vmul.f32 %v2256, 0.5
  %v2385 = vmul.f32 %v2257, 0.5
  %v2386 = vmul.f32 %v2258, 0.5
  %v2387 = vmul.f32 %v2259, 0.5
  %v2388 = vmul.f32 %v2260, 0.5
  %v2389 = vmul.f32 %v2261, 0.5
  %v2390 = vmul.f32 %v2262, 0.5
  %v2391 = vmul.f32 %v2263, 0.5
  %v2392 = vmul.f32 %v2264, 0.5
  %v2393 = vmul.f32 %v2265, 0.5
  %v2394 = vmul.f32 %v2266, 0.5
  %v2395 = vmul.f32 %v2267, 0.5
  %v2396 = vmul.f32 %v955, %v2268
  %v2397 = vmul.f32 %v957, %v2269
  %v2398 = vmul.f32 %v1068, %v2270
  %v2399 = vmul.f32 %v1070, %v2271
  %v2400 = vmul.f32 %v1181, %v2272
  %v2401 = vmul.f32 %v1183, %v2273
  %v2402 = vmul.f32 %v1294, %v2274
  %v2403 = vmul.f32 %v1296, %v2275
  %v2404 = vmul.f32 %v959, %v2276
  %v2405 = vmul.f32 %v961, %v2277
  %v2406 = vmul.f32 %v1072, %v2278
  %v2407 = vmul.f32 %v1074, %v2279
  %v2408 = vmul.f32 %v1185, %v2280
  %v2409 = vmul.f32 %v1187, %v2281
  %v2410 = vmul.f32 %v1298, %v2282
  %v2411 = vmul.f32 %v1300, %v2283
  %v2412 = vmul.f32 %v965, %v2284
  %v2413 = vmul.f32 %v967, %v2285
  %v2414 = vmul.f32 %v1078, %v2286
  %v2415 = vmul.f32 %v1080, %v2287
  %v2416 = vmul.f32 %v1191, %v2288
  %v2417 = vmul.f32 %v1193, %v2289
  %v2418 = vmul.f32 %v1304, %v2290
  %v2419 = vmul.f32 %v1306, %v2291
  %v2420 = vmul.f32 %v969, %v2292
  %v2421 = vmul.f32 %v971, %v2293
  %v2422 = vmul.f32 %v1082, %v2294
  %v2423 = vmul.f32 %v1084, %v2295
  %v2424 = vmul.f32 %v1195, %v2296
  %v2425 = vmul.f32 %v1197, %v2297
  %v2426 = vmul.f32 %v1308, %v2298
  %v2427 = vmul.f32 %v1310, %v2299
  %v2428 = vmul.f32 %v975, %v2300
  %v2429 = vmul.f32 %v977, %v2301
  %v2430 = vmul.f32 %v1088, %v2302
  %v2431 = vmul.f32 %v1090, %v2303
  %v2432 = vmul.f32 %v1201, %v2304
  %v2433 = vmul.f32 %v1203, %v2305
  %v2434 = vmul.f32 %v1314, %v2306
  %v2435 = vmul.f32 %v1316, %v2307
  %v2436 = vmul.f32 %v979, %v2308
  %v2437 = vmul.f32 %v981, %v2309
  %v2438 = vmul.f32 %v1092, %v2310
  %v2439 = vmul.f32 %v1094, %v2311
  %v2440 = vmul.f32 %v1205, %v2312
  %v2441 = vmul.f32 %v1207, %v2313
  %v2442 = vmul.f32 %v1318, %v2314
  %v2443 = vmul.f32 %v1320, %v2315
  %v2444 = vmul.f32 %v985, %v2316
  %v2445 = vmul.f32 %v987, %v2317
  %v2446 = vmul.f32 %v1098, %v2318
  %v2447 = vmul.f32 %v1100, %v2319
  %v2448 = vmul.f32 %v1211, %v2320
  %v2449 = vmul.f32 %v1213, %v2321
  %v2450 = vmul.f32 %v1324, %v2322
  %v2451 = vmul.f32 %v1326, %v2323
  %v2452 = vmul.f32 %v989, %v2324
  %v2453 = vmul.f32 %v991, %v2325
  %v2454 = vmul.f32 %v1102, %v2326
  %v2455 = vmul.f32 %v1104, %v2327
  %v2456 = vmul.f32 %v1215, %v2328
  %v2457 = vmul.f32 %v1217, %v2329
  %v2458 = vmul.f32 %v1328, %v2330
  %v2459 = vmul.f32 %v1330, %v2331
  %v2460 = vmul.f32 %v995, %v2332
  %v2461 = vmul.f32 %v997, %v2333
  %v2462 = vmul.f32 %v1108, %v2334
  %v2463 = vmul.f32 %v1110, %v2335
  %v2464 = vmul.f32 %v1221, %v2336
  %v2465 = vmul.f32 %v1223, %v2337
  %v2466 = vmul.f32 %v1334, %v2338
  %v2467 = vmul.f32 %v1336, %v2339
  %v2468 = vmul.f32 %v999, %v2340
  %v2469 = vmul.f32 %v1001, %v2341
  %v2470 = vmul.f32 %v1112, %v2342
  %v2471 = vmul.f32 %v1114, %v2343
  %v2472 = vmul.f32 %v1225, %v2344
  %v2473 = vmul.f32 %v1227, %v2345
  %v2474 = vmul.f32 %v1338, %v2346
  %v2475 = vmul.f32 %v1340, %v2347
  %v2476 = vmul.f32 %v1005, %v2348
  %v2477 = vmul.f32 %v1007, %v2349
  %v2478 = vmul.f32 %v1118, %v2350
  %v2479 = vmul.f32 %v1120, %v2351
  %v2480 = vmul.f32 %v1231, %v2352
  %v2481 = vmul.f32 %v1233, %v2353
  %v2482 = vmul.f32 %v1344, %v2354
  %v2483 = vmul.f32 %v1346, %v2355
  %v2484 = vmul.f32 %v1009, %v2356
  %v2485 = vmul.f32 %v1011, %v2357
  %v2486 = vmul.f32 %v1122, %v2358
  %v2487 = vmul.f32 %v1124, %v2359
  %v2488 = vmul.f32 %v1235, %v2360
  %v2489 = vmul.f32 %v1237, %v2361
  %v2490 = vmul.f32 %v1348, %v2362
  %v2491 = vmul.f32 %v1350, %v2363
  %v2492 = vmul.f32 %v1015, %v2364
  %v2493 = vmul.f32 %v1017, %v2365
  %v2494 = vmul.f32 %v1128, %v2366
  %v2495 = vmul.f32 %v1130, %v2367
  %v2496 = vmul.f32 %v1241, %v2368
  %v2497 = vmul.f32 %v1243, %v2369
  %v2498 = vmul.f32 %v1354, %v2370
  %v2499 = vmul.f32 %v1356, %v2371
  %v2500 = vmul.f32 %v1019, %v2372
  %v2501 = vmul.f32 %v1021, %v2373
  %v2502 = vmul.f32 %v1132, %v2374
  %v2503 = vmul.f32 %v1134, %v2375
  %v2504 = vmul.f32 %v1245, %v2376
  %v2505 = vmul.f32 %v1247, %v2377
  %v2506 = vmul.f32 %v1358, %v2378
  %v2507 = vmul.f32 %v1360, %v2379
  %v2508 = vmul.f32 %v1025, %v2380
  %v2509 = vmul.f32 %v1027, %v2381
  %v2510 = vmul.f32 %v1138, %v2382
  %v2511 = vmul.f32 %v1140, %v2383
  %v2512 = vmul.f32 %v1251, %v2384
  %v2513 = vmul.f32 %v1253, %v2385
  %v2514 = vmul.f32 %v1364, %v2386
  %v2515 = vmul.f32 %v1366, %v2387
  %v2516 = vmul.f32 %v1029, %v2388
  %v2517 = vmul.f32 %v1031, %v2389
  %v2518 = vmul.f32 %v1142, %v2390
  %v2519 = vmul.f32 %v1144, %v2391
  %v2520 = vmul.f32 %v1255, %v2392
  %v2521 = vmul.f32 %v1257, %v2393
  %v2522 = vmul.f32 %v1368, %v2394
  %v2523 = vmul.f32 %v1370, %v2395
  %2524 = vst [vmem:[%s3] sm:$0xff] %v2396
  %2525 = vst [vmem:[%s3 + $0x8] sm:$0xff] %v2397
  %2526 = vst [vmem:[%s3 + $0x10] sm:$0xff] %v2398
  %2527 = vst [vmem:[%s3 + $0x18] sm:$0xff] %v2399
  %2528 = vst [vmem:[%s3 + $0x20] sm:$0xff] %v2400
  %2529 = vst [vmem:[%s3 + $0x28] sm:$0xff] %v2401
  %2530 = vst [vmem:[%s3 + $0x30] sm:$0xff] %v2402
  %2531 = vst [vmem:[%s3 + $0x38] sm:$0xff] %v2403
  %2532 = vst [vmem:[%s3 + $0x40] sm:$0xff] %v2404
  %2533 = vst [vmem:[%s3 + $0x48] sm:$0xff] %v2405
  %2534 = vst [vmem:[%s3 + $0x50] sm:$0xff] %v2406
  %2535 = vst [vmem:[%s3 + $0x58] sm:$0xff] %v2407
  %2536 = vst [vmem:[%s3 + $0x60] sm:$0xff] %v2408
  %2537 = vst [vmem:[%s3 + $0x68] sm:$0xff] %v2409
  %2538 = vst [vmem:[%s3 + $0x70] sm:$0xff] %v2410
  %2539 = vst [vmem:[%s3 + $0x78] sm:$0xff] %v2411
  %2540 = vst [vmem:[%s3 + $0x80] sm:$0xff] %v2412
  %2541 = vst [vmem:[%s3 + $0x88] sm:$0xff] %v2413
  %2542 = vst [vmem:[%s3 + $0x90] sm:$0xff] %v2414
  %2543 = vst [vmem:[%s3 + $0x98] sm:$0xff] %v2415
  %2544 = vst [vmem:[%s3 + $0xa0] sm:$0xff] %v2416
  %2545 = vst [vmem:[%s3 + $0xa8] sm:$0xff] %v2417
  %2546 = vst [vmem:[%s3 + $0xb0] sm:$0xff] %v2418
  %2547 = vst [vmem:[%s3 + $0xb8] sm:$0xff] %v2419
  %2548 = vst [vmem:[%s3 + $0xc0] sm:$0xff] %v2420
  %2549 = vst [vmem:[%s3 + $0xc8] sm:$0xff] %v2421
  %2550 = vst [vmem:[%s3 + $0xd0] sm:$0xff] %v2422
  %2551 = vst [vmem:[%s3 + $0xd8] sm:$0xff] %v2423
  %2552 = vst [vmem:[%s3 + $0xe0] sm:$0xff] %v2424
  %2553 = vst [vmem:[%s3 + $0xe8] sm:$0xff] %v2425
  %2554 = vst [vmem:[%s3 + $0xf0] sm:$0xff] %v2426
  %2555 = vst [vmem:[%s3 + $0xf8] sm:$0xff] %v2427
  %2556 = vst [vmem:[%s3 + $0x100] sm:$0xff] %v2428
  %2557 = vst [vmem:[%s3 + $0x108] sm:$0xff] %v2429
  %2558 = vst [vmem:[%s3 + $0x110] sm:$0xff] %v2430
  %2559 = vst [vmem:[%s3 + $0x118] sm:$0xff] %v2431
  %2560 = vst [vmem:[%s3 + $0x120] sm:$0xff] %v2432
  %2561 = vst [vmem:[%s3 + $0x128] sm:$0xff] %v2433
  %2562 = vst [vmem:[%s3 + $0x130] sm:$0xff] %v2434
  %2563 = vst [vmem:[%s3 + $0x138] sm:$0xff] %v2435
  %2564 = vst [vmem:[%s3 + $0x140] sm:$0xff] %v2436
  %2565 = vst [vmem:[%s3 + $0x148] sm:$0xff] %v2437
  %2566 = vst [vmem:[%s3 + $0x150] sm:$0xff] %v2438
  %2567 = vst [vmem:[%s3 + $0x158] sm:$0xff] %v2439
  %2568 = vst [vmem:[%s3 + $0x160] sm:$0xff] %v2440
  %2569 = vst [vmem:[%s3 + $0x168] sm:$0xff] %v2441
  %2570 = vst [vmem:[%s3 + $0x170] sm:$0xff] %v2442
  %2571 = vst [vmem:[%s3 + $0x178] sm:$0xff] %v2443
  %2572 = vst [vmem:[%s3 + $0x180] sm:$0xff] %v2444
  %2573 = vst [vmem:[%s3 + $0x188] sm:$0xff] %v2445
  %2574 = vst [vmem:[%s3 + $0x190] sm:$0xff] %v2446
  %2575 = vst [vmem:[%s3 + $0x198] sm:$0xff] %v2447
  %2576 = vst [vmem:[%s3 + $0x1a0] sm:$0xff] %v2448
  %2577 = vst [vmem:[%s3 + $0x1a8] sm:$0xff] %v2449
  %2578 = vst [vmem:[%s3 + $0x1b0] sm:$0xff] %v2450
  %2579 = vst [vmem:[%s3 + $0x1b8] sm:$0xff] %v2451
  %2580 = vst [vmem:[%s3 + $0x1c0] sm:$0xff] %v2452
  %2581 = vst [vmem:[%s3 + $0x1c8] sm:$0xff] %v2453
  %2582 = vst [vmem:[%s3 + $0x1d0] sm:$0xff] %v2454
  %2583 = vst [vmem:[%s3 + $0x1d8] sm:$0xff] %v2455
  %2584 = vst [vmem:[%s3 + $0x1e0] sm:$0xff] %v2456
  %2585 = vst [vmem:[%s3 + $0x1e8] sm:$0xff] %v2457
  %2586 = vst [vmem:[%s3 + $0x1f0] sm:$0xff] %v2458
  %2587 = vst [vmem:[%s3 + $0x1f8] sm:$0xff] %v2459
  %2588 = vst [vmem:[%s3 + $0x200] sm:$0xff] %v2460
  %2589 = vst [vmem:[%s3 + $0x208] sm:$0xff] %v2461
  %2590 = vst [vmem:[%s3 + $0x210] sm:$0xff] %v2462
  %2591 = vst [vmem:[%s3 + $0x218] sm:$0xff] %v2463
  %2592 = vst [vmem:[%s3 + $0x220] sm:$0xff] %v2464
  %2593 = vst [vmem:[%s3 + $0x228] sm:$0xff] %v2465
  %2594 = vst [vmem:[%s3 + $0x230] sm:$0xff] %v2466
  %2595 = vst [vmem:[%s3 + $0x238] sm:$0xff] %v2467
  %2596 = vst [vmem:[%s3 + $0x240] sm:$0xff] %v2468
  %2597 = vst [vmem:[%s3 + $0x248] sm:$0xff] %v2469
  %2598 = vst [vmem:[%s3 + $0x250] sm:$0xff] %v2470
  %2599 = vst [vmem:[%s3 + $0x258] sm:$0xff] %v2471
  %2600 = vst [vmem:[%s3 + $0x260] sm:$0xff] %v2472
  %2601 = vst [vmem:[%s3 + $0x268] sm:$0xff] %v2473
  %2602 = vst [vmem:[%s3 + $0x270] sm:$0xff] %v2474
  %2603 = vst [vmem:[%s3 + $0x278] sm:$0xff] %v2475
  %2604 = vst [vmem:[%s3 + $0x280] sm:$0xff] %v2476
  %2605 = vst [vmem:[%s3 + $0x288] sm:$0xff] %v2477
  %2606 = vst [vmem:[%s3 + $0x290] sm:$0xff] %v2478
  %2607 = vst [vmem:[%s3 + $0x298] sm:$0xff] %v2479
  %2608 = vst [vmem:[%s3 + $0x2a0] sm:$0xff] %v2480
  %2609 = vst [vmem:[%s3 + $0x2a8] sm:$0xff] %v2481
  %2610 = vst [vmem:[%s3 + $0x2b0] sm:$0xff] %v2482
  %2611 = vst [vmem:[%s3 + $0x2b8] sm:$0xff] %v2483
  %2612 = vst [vmem:[%s3 + $0x2c0] sm:$0xff] %v2484
  %2613 = vst [vmem:[%s3 + $0x2c8] sm:$0xff] %v2485
  %2614 = vst [vmem:[%s3 + $0x2d0] sm:$0xff] %v2486
  %2615 = vst [vmem:[%s3 + $0x2d8] sm:$0xff] %v2487
  %2616 = vst [vmem:[%s3 + $0x2e0] sm:$0xff] %v2488
  %2617 = vst [vmem:[%s3 + $0x2e8] sm:$0xff] %v2489
  %2618 = vst [vmem:[%s3 + $0x2f0] sm:$0xff] %v2490
  %2619 = vst [vmem:[%s3 + $0x2f8] sm:$0xff] %v2491
  %2620 = vst [vmem:[%s3 + $0x300] sm:$0xff] %v2492
  %2621 = vst [vmem:[%s3 + $0x308] sm:$0xff] %v2493
  %2622 = vst [vmem:[%s3 + $0x310] sm:$0xff] %v2494
  %2623 = vst [vmem:[%s3 + $0x318] sm:$0xff] %v2495
  %2624 = vst [vmem:[%s3 + $0x320] sm:$0xff] %v2496
  %2625 = vst [vmem:[%s3 + $0x328] sm:$0xff] %v2497
  %2626 = vst [vmem:[%s3 + $0x330] sm:$0xff] %v2498
  %2627 = vst [vmem:[%s3 + $0x338] sm:$0xff] %v2499
  %2628 = vst [vmem:[%s3 + $0x340] sm:$0xff] %v2500
  %2629 = vst [vmem:[%s3 + $0x348] sm:$0xff] %v2501
  %2630 = vst [vmem:[%s3 + $0x350] sm:$0xff] %v2502
  %2631 = vst [vmem:[%s3 + $0x358] sm:$0xff] %v2503
  %2632 = vst [vmem:[%s3 + $0x360] sm:$0xff] %v2504
  %2633 = vst [vmem:[%s3 + $0x368] sm:$0xff] %v2505
  %2634 = vst [vmem:[%s3 + $0x370] sm:$0xff] %v2506
  %2635 = vst [vmem:[%s3 + $0x378] sm:$0xff] %v2507
  %2636 = vst [vmem:[%s3 + $0x380] sm:$0xff] %v2508
  %2637 = vst [vmem:[%s3 + $0x388] sm:$0xff] %v2509
  %2638 = vst [vmem:[%s3 + $0x390] sm:$0xff] %v2510
  %2639 = vst [vmem:[%s3 + $0x398] sm:$0xff] %v2511
  %2640 = vst [vmem:[%s3 + $0x3a0] sm:$0xff] %v2512
  %2641 = vst [vmem:[%s3 + $0x3a8] sm:$0xff] %v2513
  %2642 = vst [vmem:[%s3 + $0x3b0] sm:$0xff] %v2514
  %2643 = vst [vmem:[%s3 + $0x3b8] sm:$0xff] %v2515
  %2644 = vst [vmem:[%s3 + $0x3c0] sm:$0xff] %v2516
  %2645 = vst [vmem:[%s3 + $0x3c8] sm:$0xff] %v2517
  %2646 = vst [vmem:[%s3 + $0x3d0] sm:$0xff] %v2518
  %2647 = vst [vmem:[%s3 + $0x3d8] sm:$0xff] %v2519
  %2648 = vst [vmem:[%s3 + $0x3e0] sm:$0xff] %v2520
  %2649 = vst [vmem:[%s3 + $0x3e8] sm:$0xff] %v2521
  %2650 = vst [vmem:[%s3 + $0x3f0] sm:$0xff] %v2522
  %2651 = vst [vmem:[%s3 + $0x3f8] sm:$0xff] %v2523
  // Predicated region
  $region14: #{encode.21} parent=0 // pred_check
    _
  $region15: #{encode.21} parent=0 // pred_check_branch
    %2653 = sbr.rel (0) target = $region17
  $region16: #{encode.21} parent=0 // pred_region
    _
  $region17: #{encode.21} parent=0 // pred_fallthru
    _
  // Predicated region
  $region18: #{encode.21} parent=0 // pred_check
    _
  $region19: #{encode.21} parent=0 // pred_check_branch
    %2655 = sbr.rel (0) target = $region21
  $region20: #{encode.21} parent=0 // pred_region
    _
  $region21: #{encode.21} parent=0 // pred_fallthru
    _

// kernel: encode.22
$region0: #{encode.22}
  #allocation0 [shape = 'u32[]', space=smem, size = 0x4, offset = 0x4, fixed_abs, tag = 'smem constant byte address 0x4 - core index']
  #allocation1 [shape = 'u32[144,128]{1,0:T(1,128)}', space=vmem, size = 0x12000, scoped, tag = 'internal scratch']
  %s0 = inlined_call_operand.vmem [shape: bf16[128,1024], index: 0, kind: input, shape index: {}]
  %s1 = inlined_call_operand.vmem [shape: bf16[1024,256], index: 1, kind: input, shape index: {}]
  %s2 = inlined_call_operand.vmem [shape: f32[1,256], index: 2, kind: input, shape index: {}]
  %s3 = inlined_call_operand.vmem [shape: f32[128,256], index: 3, kind: input, shape index: {}]
  %s4 = inlined_call_operand.vmem [shape: f32[128,256], index: 4, kind: output, shape index: {}]
  %s5 = sld [smem:[#allocation0]]
  $region26: #{encode.22} parent=0
    _
  %s7 = ssub.s32 1, %s5
  %s8 = scalar_select 0, %s7, %s5
  // Predicated region
  $region2: #{encode.22} parent=0 // pred_check
    _
  $region3: #{encode.22} parent=0 // pred_check_branch
    %10 = sbr.rel (0) target = $region5
  $region4: #{encode.22} parent=0 // pred_region
    _
  $region5: #{encode.22} parent=0 // pred_fallthru
    _
  // Predicated region
  $region6: #{encode.22} parent=0 // pred_check
    _
  $region7: #{encode.22} parent=0 // pred_check_branch
    %12 = sbr.rel (0) target = $region9
  $region8: #{encode.22} parent=0 // pred_region
    _
  $region9: #{encode.22} parent=0 // pred_fallthru
    _
  // Predicated region
  $region10: #{encode.22} parent=0 // pred_check
    _
  $region11: #{encode.22} parent=0 // pred_check_branch
    %14 = sbr.rel (0) target = $region13
  $region12: #{encode.22} parent=0 // pred_region
    _
  $region13: #{encode.22} parent=0 // pred_fallthru
    _
  // Predicated region
  $region14: #{encode.22} parent=0 // pred_check
    _
  $region15: #{encode.22} parent=0 // pred_check_branch
    %16 = sbr.rel (0) target = $region17
  $region16: #{encode.22} parent=0 // pred_region
    _
  $region17: #{encode.22} parent=0 // pred_fallthru
    _
  %v17 = vld [vmem:[%s0] sm:$0xff]
  %v18 = vld [vmem:[%s0 + $0x8] sm:$0xff]
  %v19 = vld [vmem:[%s0 + $0x10] sm:$0xff]
  %v20 = vld [vmem:[%s0 + $0x18] sm:$0xff]
  %v21 = vld [vmem:[%s0 + $0x20] sm:$0xff]
  %v22 = vld [vmem:[%s0 + $0x28] sm:$0xff]
  %v23 = vld [vmem:[%s0 + $0x30] sm:$0xff]
  %v24 = vld [vmem:[%s0 + $0x38] sm:$0xff]
  %v25 = vld [vmem:[%s0 + $0x40] sm:$0xff]
  %v26 = vld [vmem:[%s0 + $0x48] sm:$0xff]
  %v27 = vld [vmem:[%s0 + $0x50] sm:$0xff]
  %v28 = vld [vmem:[%s0 + $0x58] sm:$0xff]
  %v29 = vld [vmem:[%s0 + $0x60] sm:$0xff]
  %v30 = vld [vmem:[%s0 + $0x68] sm:$0xff]
  %v31 = vld [vmem:[%s0 + $0x70] sm:$0xff]
  %v32 = vld [vmem:[%s0 + $0x78] sm:$0xff]
  %v33 = vld [vmem:[%s0 + $0x80] sm:$0xff]
  %v34 = vld [vmem:[%s0 + $0x88] sm:$0xff]
  %v35 = vld [vmem:[%s0 + $0x90] sm:$0xff]
  %v36 = vld [vmem:[%s0 + $0x98] sm:$0xff]
  %v37 = vld [vmem:[%s0 + $0xa0] sm:$0xff]
  %v38 = vld [vmem:[%s0 + $0xa8] sm:$0xff]
  %v39 = vld [vmem:[%s0 + $0xb0] sm:$0xff]
  %v40 = vld [vmem:[%s0 + $0xb8] sm:$0xff]
  %v41 = vld [vmem:[%s0 + $0xc0] sm:$0xff]
  %v42 = vld [vmem:[%s0 + $0xc8] sm:$0xff]
  %v43 = vld [vmem:[%s0 + $0xd0] sm:$0xff]
  %v44 = vld [vmem:[%s0 + $0xd8] sm:$0xff]
  %v45 = vld [vmem:[%s0 + $0xe0] sm:$0xff]
  %v46 = vld [vmem:[%s0 + $0xe8] sm:$0xff]
  %v47 = vld [vmem:[%s0 + $0xf0] sm:$0xff]
  %v48 = vld [vmem:[%s0 + $0xf8] sm:$0xff]
  %v49 = vld [vmem:[%s0 + $0x100] sm:$0xff]
  %v50 = vld [vmem:[%s0 + $0x108] sm:$0xff]
  %v51 = vld [vmem:[%s0 + $0x110] sm:$0xff]
  %v52 = vld [vmem:[%s0 + $0x118] sm:$0xff]
  %v53 = vld [vmem:[%s0 + $0x120] sm:$0xff]
  %v54 = vld [vmem:[%s0 + $0x128] sm:$0xff]
  %v55 = vld [vmem:[%s0 + $0x130] sm:$0xff]
  %v56 = vld [vmem:[%s0 + $0x138] sm:$0xff]
  %v57 = vld [vmem:[%s0 + $0x140] sm:$0xff]
  %v58 = vld [vmem:[%s0 + $0x148] sm:$0xff]
  %v59 = vld [vmem:[%s0 + $0x150] sm:$0xff]
  %v60 = vld [vmem:[%s0 + $0x158] sm:$0xff]
  %v61 = vld [vmem:[%s0 + $0x160] sm:$0xff]
  %v62 = vld [vmem:[%s0 + $0x168] sm:$0xff]
  %v63 = vld [vmem:[%s0 + $0x170] sm:$0xff]
  %v64 = vld [vmem:[%s0 + $0x178] sm:$0xff]
  %v65 = vld [vmem:[%s0 + $0x180] sm:$0xff]
  %v66 = vld [vmem:[%s0 + $0x188] sm:$0xff]
  %v67 = vld [vmem:[%s0 + $0x190] sm:$0xff]
  %v68 = vld [vmem:[%s0 + $0x198] sm:$0xff]
  %v69 = vld [vmem:[%s0 + $0x1a0] sm:$0xff]
  %v70 = vld [vmem:[%s0 + $0x1a8] sm:$0xff]
  %v71 = vld [vmem:[%s0 + $0x1b0] sm:$0xff]
  %v72 = vld [vmem:[%s0 + $0x1b8] sm:$0xff]
  %v73 = vld [vmem:[%s0 + $0x1c0] sm:$0xff]
  %v74 = vld [vmem:[%s0 + $0x1c8] sm:$0xff]
  %v75 = vld [vmem:[%s0 + $0x1d0] sm:$0xff]
  %v76 = vld [vmem:[%s0 + $0x1d8] sm:$0xff]
  %v77 = vld [vmem:[%s0 + $0x1e0] sm:$0xff]
  %v78 = vld [vmem:[%s0 + $0x1e8] sm:$0xff]
  %v79 = vld [vmem:[%s0 + $0x1f0] sm:$0xff]
  %v80 = vld [vmem:[%s0 + $0x1f8] sm:$0xff]
  %v81 = vld [vmem:[%s1] sm:$0xff]
  %v82 = vld [vmem:[%s1 + $0x8] sm:$0xff]
  %v83 = vld [vmem:[%s1 + $0x10] sm:$0xff]
  %v84 = vld [vmem:[%s1 + $0x18] sm:$0xff]
  %v85 = vld [vmem:[%s1 + $0x20] sm:$0xff]
  %v86 = vld [vmem:[%s1 + $0x28] sm:$0xff]
  %v87 = vld [vmem:[%s1 + $0x30] sm:$0xff]
  %v88 = vld [vmem:[%s1 + $0x38] sm:$0xff]
  %v89 = vld [vmem:[%s1 + $0x40] sm:$0xff]
  %v90 = vld [vmem:[%s1 + $0x48] sm:$0xff]
  %v91 = vld [vmem:[%s1 + $0x50] sm:$0xff]
  %v92 = vld [vmem:[%s1 + $0x58] sm:$0xff]
  %v93 = vld [vmem:[%s1 + $0x60] sm:$0xff]
  %v94 = vld [vmem:[%s1 + $0x68] sm:$0xff]
  %v95 = vld [vmem:[%s1 + $0x70] sm:$0xff]
  %v96 = vld [vmem:[%s1 + $0x78] sm:$0xff]
  %v97 = vld [vmem:[%s1 + $0x80] sm:$0xff]
  %v98 = vld [vmem:[%s1 + $0x88] sm:$0xff]
  %v99 = vld [vmem:[%s1 + $0x90] sm:$0xff]
  %v100 = vld [vmem:[%s1 + $0x98] sm:$0xff]
  %v101 = vld [vmem:[%s1 + $0xa0] sm:$0xff]
  %v102 = vld [vmem:[%s1 + $0xa8] sm:$0xff]
  %v103 = vld [vmem:[%s1 + $0xb0] sm:$0xff]
  %v104 = vld [vmem:[%s1 + $0xb8] sm:$0xff]
  %v105 = vld [vmem:[%s1 + $0xc0] sm:$0xff]
  %v106 = vld [vmem:[%s1 + $0xc8] sm:$0xff]
  %v107 = vld [vmem:[%s1 + $0xd0] sm:$0xff]
  %v108 = vld [vmem:[%s1 + $0xd8] sm:$0xff]
  %v109 = vld [vmem:[%s1 + $0xe0] sm:$0xff]
  %v110 = vld [vmem:[%s1 + $0xe8] sm:$0xff]
  %v111 = vld [vmem:[%s1 + $0xf0] sm:$0xff]
  %v112 = vld [vmem:[%s1 + $0xf8] sm:$0xff]
  %v113 = vld [vmem:[%s1 + $0x100] sm:$0xff]
  %v114 = vld [vmem:[%s1 + $0x108] sm:$0xff]
  %v115 = vld [vmem:[%s1 + $0x110] sm:$0xff]
  %v116 = vld [vmem:[%s1 + $0x118] sm:$0xff]
  %v117 = vld [vmem:[%s1 + $0x120] sm:$0xff]
  %v118 = vld [vmem:[%s1 + $0x128] sm:$0xff]
  %v119 = vld [vmem:[%s1 + $0x130] sm:$0xff]
  %v120 = vld [vmem:[%s1 + $0x138] sm:$0xff]
  %v121 = vld [vmem:[%s1 + $0x140] sm:$0xff]
  %v122 = vld [vmem:[%s1 + $0x148] sm:$0xff]
  %v123 = vld [vmem:[%s1 + $0x150] sm:$0xff]
  %v124 = vld [vmem:[%s1 + $0x158] sm:$0xff]
  %v125 = vld [vmem:[%s1 + $0x160] sm:$0xff]
  %v126 = vld [vmem:[%s1 + $0x168] sm:$0xff]
  %v127 = vld [vmem:[%s1 + $0x170] sm:$0xff]
  %v128 = vld [vmem:[%s1 + $0x178] sm:$0xff]
  %v129 = vld [vmem:[%s1 + $0x180] sm:$0xff]
  %v130 = vld [vmem:[%s1 + $0x188] sm:$0xff]
  %v131 = vld [vmem:[%s1 + $0x190] sm:$0xff]
  %v132 = vld [vmem:[%s1 + $0x198] sm:$0xff]
  %v133 = vld [vmem:[%s1 + $0x1a0] sm:$0xff]
  %v134 = vld [vmem:[%s1 + $0x1a8] sm:$0xff]
  %v135 = vld [vmem:[%s1 + $0x1b0] sm:$0xff]
  %v136 = vld [vmem:[%s1 + $0x1b8] sm:$0xff]
  %v137 = vld [vmem:[%s1 + $0x1c0] sm:$0xff]
  %v138 = vld [vmem:[%s1 + $0x1c8] sm:$0xff]
  %v139 = vld [vmem:[%s1 + $0x1d0] sm:$0xff]
  %v140 = vld [vmem:[%s1 + $0x1d8] sm:$0xff]
  %v141 = vld [vmem:[%s1 + $0x1e0] sm:$0xff]
  %v142 = vld [vmem:[%s1 + $0x1e8] sm:$0xff]
  %v143 = vld [vmem:[%s1 + $0x1f0] sm:$0xff]
  %v144 = vld [vmem:[%s1 + $0x1f8] sm:$0xff]
  %v145 = vld [vmem:[%s1 + $0x200] sm:$0xff]
  %v146 = vld [vmem:[%s1 + $0x208] sm:$0xff]
  %v147 = vld [vmem:[%s1 + $0x210] sm:$0xff]
  %v148 = vld [vmem:[%s1 + $0x218] sm:$0xff]
  %v149 = vld [vmem:[%s1 + $0x220] sm:$0xff]
  %v150 = vld [vmem:[%s1 + $0x228] sm:$0xff]
  %v151 = vld [vmem:[%s1 + $0x230] sm:$0xff]
  %v152 = vld [vmem:[%s1 + $0x238] sm:$0xff]
  %v153 = vld [vmem:[%s1 + $0x240] sm:$0xff]
  %v154 = vld [vmem:[%s1 + $0x248] sm:$0xff]
  %v155 = vld [vmem:[%s1 + $0x250] sm:$0xff]
  %v156 = vld [vmem:[%s1 + $0x258] sm:$0xff]
  %v157 = vld [vmem:[%s1 + $0x260] sm:$0xff]
  %v158 = vld [vmem:[%s1 + $0x268] sm:$0xff]
  %v159 = vld [vmem:[%s1 + $0x270] sm:$0xff]
  %v160 = vld [vmem:[%s1 + $0x278] sm:$0xff]
  %v161 = vld [vmem:[%s1 + $0x280] sm:$0xff]
  %v162 = vld [vmem:[%s1 + $0x288] sm:$0xff]
  %v163 = vld [vmem:[%s1 + $0x290] sm:$0xff]
  %v164 = vld [vmem:[%s1 + $0x298] sm:$0xff]
  %v165 = vld [vmem:[%s1 + $0x2a0] sm:$0xff]
  %v166 = vld [vmem:[%s1 + $0x2a8] sm:$0xff]
  %v167 = vld [vmem:[%s1 + $0x2b0] sm:$0xff]
  %v168 = vld [vmem:[%s1 + $0x2b8] sm:$0xff]
  %v169 = vld [vmem:[%s1 + $0x2c0] sm:$0xff]
  %v170 = vld [vmem:[%s1 + $0x2c8] sm:$0xff]
  %v171 = vld [vmem:[%s1 + $0x2d0] sm:$0xff]
  %v172 = vld [vmem:[%s1 + $0x2d8] sm:$0xff]
  %v173 = vld [vmem:[%s1 + $0x2e0] sm:$0xff]
  %v174 = vld [vmem:[%s1 + $0x2e8] sm:$0xff]
  %v175 = vld [vmem:[%s1 + $0x2f0] sm:$0xff]
  %v176 = vld [vmem:[%s1 + $0x2f8] sm:$0xff]
  %v177 = vld [vmem:[%s1 + $0x300] sm:$0xff]
  %v178 = vld [vmem:[%s1 + $0x308] sm:$0xff]
  %v179 = vld [vmem:[%s1 + $0x310] sm:$0xff]
  %v180 = vld [vmem:[%s1 + $0x318] sm:$0xff]
  %v181 = vld [vmem:[%s1 + $0x320] sm:$0xff]
  %v182 = vld [vmem:[%s1 + $0x328] sm:$0xff]
  %v183 = vld [vmem:[%s1 + $0x330] sm:$0xff]
  %v184 = vld [vmem:[%s1 + $0x338] sm:$0xff]
  %v185 = vld [vmem:[%s1 + $0x340] sm:$0xff]
  %v186 = vld [vmem:[%s1 + $0x348] sm:$0xff]
  %v187 = vld [vmem:[%s1 + $0x350] sm:$0xff]
  %v188 = vld [vmem:[%s1 + $0x358] sm:$0xff]
  %v189 = vld [vmem:[%s1 + $0x360] sm:$0xff]
  %v190 = vld [vmem:[%s1 + $0x368] sm:$0xff]
  %v191 = vld [vmem:[%s1 + $0x370] sm:$0xff]
  %v192 = vld [vmem:[%s1 + $0x378] sm:$0xff]
  %v193 = vld [vmem:[%s1 + $0x380] sm:$0xff]
  %v194 = vld [vmem:[%s1 + $0x388] sm:$0xff]
  %v195 = vld [vmem:[%s1 + $0x390] sm:$0xff]
  %v196 = vld [vmem:[%s1 + $0x398] sm:$0xff]
  %v197 = vld [vmem:[%s1 + $0x3a0] sm:$0xff]
  %v198 = vld [vmem:[%s1 + $0x3a8] sm:$0xff]
  %v199 = vld [vmem:[%s1 + $0x3b0] sm:$0xff]
  %v200 = vld [vmem:[%s1 + $0x3b8] sm:$0xff]
  %v201 = vld [vmem:[%s1 + $0x3c0] sm:$0xff]
  %v202 = vld [vmem:[%s1 + $0x3c8] sm:$0xff]
  %v203 = vld [vmem:[%s1 + $0x3d0] sm:$0xff]
  %v204 = vld [vmem:[%s1 + $0x3d8] sm:$0xff]
  %v205 = vld [vmem:[%s1 + $0x3e0] sm:$0xff]
  %v206 = vld [vmem:[%s1 + $0x3e8] sm:$0xff]
  %v207 = vld [vmem:[%s1 + $0x3f0] sm:$0xff]
  %v208 = vld [vmem:[%s1 + $0x3f8] sm:$0xff]
  %v209 = vld [vmem:[%s2] sm:$0x3]
  %v211 = vlaneseq
  %v212 = vshrl.u32 %v211, 7
  %v213 = vsub.s32 0, %v212
  %v214 = vrot.slane %v209, %v213
  %v215 = vlaneseq
  %v216 = vshrl.u32 %v215, 7
  %v217 = vsub.s32 1, %v216
  %v218 = vrot.slane %v209, %v217
  %v285 = vunpack.c.l.b16 %v17
  %v286 = vunpack.c.h.b16 %v17
  %v287 = vunpack.c.l.b16 %v18
  %v288 = vunpack.c.h.b16 %v18
  %v289 = vunpack.c.l.b16 %v19
  %v290 = vunpack.c.h.b16 %v19
  %v291 = vunpack.c.l.b16 %v20
  %v292 = vunpack.c.h.b16 %v20
  %v293 = vunpack.c.l.b16 %v21
  %v294 = vunpack.c.h.b16 %v21
  %v295 = vunpack.c.l.b16 %v22
  %v296 = vunpack.c.h.b16 %v22
  %v297 = vunpack.c.l.b16 %v23
  %v298 = vunpack.c.h.b16 %v23
  %v299 = vunpack.c.l.b16 %v24
  %v300 = vunpack.c.h.b16 %v24
  %v301 = vunpack.c.l.b16 %v25
  %v302 = vunpack.c.h.b16 %v25
  %v303 = vunpack.c.l.b16 %v26
  %v304 = vunpack.c.h.b16 %v26
  %v305 = vunpack.c.l.b16 %v27
  %v306 = vunpack.c.h.b16 %v27
  %v307 = vunpack.c.l.b16 %v28
  %v308 = vunpack.c.h.b16 %v28
  %v309 = vunpack.c.l.b16 %v29
  %v310 = vunpack.c.h.b16 %v29
  %v311 = vunpack.c.l.b16 %v30
  %v312 = vunpack.c.h.b16 %v30
  %v313 = vunpack.c.l.b16 %v31
  %v314 = vunpack.c.h.b16 %v31
  %v315 = vunpack.c.l.b16 %v32
  %v316 = vunpack.c.h.b16 %v32
  %v317 = vunpack.c.l.b16 %v33
  %v318 = vunpack.c.h.b16 %v33
  %v319 = vunpack.c.l.b16 %v34
  %v320 = vunpack.c.h.b16 %v34
  %v321 = vunpack.c.l.b16 %v35
  %v322 = vunpack.c.h.b16 %v35
  %v323 = vunpack.c.l.b16 %v36
  %v324 = vunpack.c.h.b16 %v36
  %v325 = vunpack.c.l.b16 %v37
  %v326 = vunpack.c.h.b16 %v37
  %v327 = vunpack.c.l.b16 %v38
  %v328 = vunpack.c.h.b16 %v38
  %v329 = vunpack.c.l.b16 %v39
  %v330 = vunpack.c.h.b16 %v39
  %v331 = vunpack.c.l.b16 %v40
  %v332 = vunpack.c.h.b16 %v40
  %v333 = vunpack.c.l.b16 %v41
  %v334 = vunpack.c.h.b16 %v41
  %v335 = vunpack.c.l.b16 %v42
  %v336 = vunpack.c.h.b16 %v42
  %v337 = vunpack.c.l.b16 %v43
  %v338 = vunpack.c.h.b16 %v43
  %v339 = vunpack.c.l.b16 %v44
  %v340 = vunpack.c.h.b16 %v44
  %v341 = vunpack.c.l.b16 %v45
  %v342 = vunpack.c.h.b16 %v45
  %v343 = vunpack.c.l.b16 %v46
  %v344 = vunpack.c.h.b16 %v46
  %v345 = vunpack.c.l.b16 %v47
  %v346 = vunpack.c.h.b16 %v47
  %v347 = vunpack.c.l.b16 %v48
  %v348 = vunpack.c.h.b16 %v48
  %v349 = vunpack.c.l.b16 %v49
  %v350 = vunpack.c.h.b16 %v49
  %v351 = vunpack.c.l.b16 %v50
  %v352 = vunpack.c.h.b16 %v50
  %v353 = vunpack.c.l.b16 %v51
  %v354 = vunpack.c.h.b16 %v51
  %v355 = vunpack.c.l.b16 %v52
  %v356 = vunpack.c.h.b16 %v52
  %v357 = vunpack.c.l.b16 %v53
  %v358 = vunpack.c.h.b16 %v53
  %v359 = vunpack.c.l.b16 %v54
  %v360 = vunpack.c.h.b16 %v54
  %v361 = vunpack.c.l.b16 %v55
  %v362 = vunpack.c.h.b16 %v55
  %v363 = vunpack.c.l.b16 %v56
  %v364 = vunpack.c.h.b16 %v56
  %v365 = vunpack.c.l.b16 %v57
  %v366 = vunpack.c.h.b16 %v57
  %v367 = vunpack.c.l.b16 %v58
  %v368 = vunpack.c.h.b16 %v58
  %v369 = vunpack.c.l.b16 %v59
  %v370 = vunpack.c.h.b16 %v59
  %v371 = vunpack.c.l.b16 %v60
  %v372 = vunpack.c.h.b16 %v60
  %v373 = vunpack.c.l.b16 %v61
  %v374 = vunpack.c.h.b16 %v61
  %v375 = vunpack.c.l.b16 %v62
  %v376 = vunpack.c.h.b16 %v62
  %v377 = vunpack.c.l.b16 %v63
  %v378 = vunpack.c.h.b16 %v63
  %v379 = vunpack.c.l.b16 %v64
  %v380 = vunpack.c.h.b16 %v64
  %v381 = vunpack.c.l.b16 %v65
  %v382 = vunpack.c.h.b16 %v65
  %v383 = vunpack.c.l.b16 %v66
  %v384 = vunpack.c.h.b16 %v66
  %v385 = vunpack.c.l.b16 %v67
  %v386 = vunpack.c.h.b16 %v67
  %v387 = vunpack.c.l.b16 %v68
  %v388 = vunpack.c.h.b16 %v68
  %v389 = vunpack.c.l.b16 %v69
  %v390 = vunpack.c.h.b16 %v69
  %v391 = vunpack.c.l.b16 %v70
  %v392 = vunpack.c.h.b16 %v70
  %v393 = vunpack.c.l.b16 %v71
  %v394 = vunpack.c.h.b16 %v71
  %v395 = vunpack.c.l.b16 %v72
  %v396 = vunpack.c.h.b16 %v72
  %v397 = vunpack.c.l.b16 %v73
  %v398 = vunpack.c.h.b16 %v73
  %v399 = vunpack.c.l.b16 %v74
  %v400 = vunpack.c.h.b16 %v74
  %v401 = vunpack.c.l.b16 %v75
  %v402 = vunpack.c.h.b16 %v75
  %v403 = vunpack.c.l.b16 %v76
  %v404 = vunpack.c.h.b16 %v76
  %v405 = vunpack.c.l.b16 %v77
  %v406 = vunpack.c.h.b16 %v77
  %v407 = vunpack.c.l.b16 %v78
  %v408 = vunpack.c.h.b16 %v78
  %v409 = vunpack.c.l.b16 %v79
  %v410 = vunpack.c.h.b16 %v79
  %v411 = vunpack.c.l.b16 %v80
  %v412 = vunpack.c.h.b16 %v80
  %v413 = vpack.c.b16 %v293, %v285
  %v414 = vpack.c.b16 %v294, %v286
  %v415 = vpack.c.b16 %v295, %v287
  %v416 = vpack.c.b16 %v296, %v288
  %v417 = vpack.c.b16 %v297, %v289
  %v418 = vpack.c.b16 %v298, %v290
  %v419 = vpack.c.b16 %v299, %v291
  %v420 = vpack.c.b16 %v300, %v292
  %v421 = vpack.c.b16 %v309, %v301
  %v422 = vpack.c.b16 %v310, %v302
  %v423 = vpack.c.b16 %v311, %v303
  %v424 = vpack.c.b16 %v312, %v304
  %v425 = vpack.c.b16 %v313, %v305
  %v426 = vpack.c.b16 %v314, %v306
  %v427 = vpack.c.b16 %v315, %v307
  %v428 = vpack.c.b16 %v316, %v308
  %v429 = vpack.c.b16 %v325, %v317
  %v430 = vpack.c.b16 %v326, %v318
  %v431 = vpack.c.b16 %v327, %v319
  %v432 = vpack.c.b16 %v328, %v320
  %v433 = vpack.c.b16 %v329, %v321
  %v434 = vpack.c.b16 %v330, %v322
  %v435 = vpack.c.b16 %v331, %v323
  %v436 = vpack.c.b16 %v332, %v324
  %v437 = vpack.c.b16 %v341, %v333
  %v438 = vpack.c.b16 %v342, %v334
  %v439 = vpack.c.b16 %v343, %v335
  %v440 = vpack.c.b16 %v344, %v336
  %v441 = vpack.c.b16 %v345, %v337
  %v442 = vpack.c.b16 %v346, %v338
  %v443 = vpack.c.b16 %v347, %v339
  %v444 = vpack.c.b16 %v348, %v340
  %v445 = vpack.c.b16 %v357, %v349
  %v446 = vpack.c.b16 %v358, %v350
  %v447 = vpack.c.b16 %v359, %v351
  %v448 = vpack.c.b16 %v360, %v352
  %v449 = vpack.c.b16 %v361, %v353
  %v450 = vpack.c.b16 %v362, %v354
  %v451 = vpack.c.b16 %v363, %v355
  %v452 = vpack.c.b16 %v364, %v356
  %v453 = vpack.c.b16 %v373, %v365
  %v454 = vpack.c.b16 %v374, %v366
  %v455 = vpack.c.b16 %v375, %v367
  %v456 = vpack.c.b16 %v376, %v368
  %v457 = vpack.c.b16 %v377, %v369
  %v458 = vpack.c.b16 %v378, %v370
  %v459 = vpack.c.b16 %v379, %v371
  %v460 = vpack.c.b16 %v380, %v372
  %v461 = vpack.c.b16 %v389, %v381
  %v462 = vpack.c.b16 %v390, %v382
  %v463 = vpack.c.b16 %v391, %v383
  %v464 = vpack.c.b16 %v392, %v384
  %v465 = vpack.c.b16 %v393, %v385
  %v466 = vpack.c.b16 %v394, %v386
  %v467 = vpack.c.b16 %v395, %v387
  %v468 = vpack.c.b16 %v396, %v388
  %v469 = vpack.c.b16 %v405, %v397
  %v470 = vpack.c.b16 %v406, %v398
  %v471 = vpack.c.b16 %v407, %v399
  %v472 = vpack.c.b16 %v408, %v400
  %v473 = vpack.c.b16 %v409, %v401
  %v474 = vpack.c.b16 %v410, %v402
  %v475 = vpack.c.b16 %v411, %v403
  %v476 = vpack.c.b16 %v412, %v404
  %v669 = vunpack.c.l.b16 %v81
  %v670 = vunpack.c.h.b16 %v81
  %v671 = vunpack.c.l.b16 %v82
  %v672 = vunpack.c.h.b16 %v82
  %v673 = vunpack.c.l.b16 %v83
  %v674 = vunpack.c.h.b16 %v83
  %v675 = vunpack.c.l.b16 %v84
  %v676 = vunpack.c.h.b16 %v84
  %v677 = vunpack.c.l.b16 %v85
  %v678 = vunpack.c.h.b16 %v85
  %v679 = vunpack.c.l.b16 %v86
  %v680 = vunpack.c.h.b16 %v86
  %v681 = vunpack.c.l.b16 %v87
  %v682 = vunpack.c.h.b16 %v87
  %v683 = vunpack.c.l.b16 %v88
  %v684 = vunpack.c.h.b16 %v88
  %v685 = vunpack.c.l.b16 %v89
  %v686 = vunpack.c.h.b16 %v89
  %v687 = vunpack.c.l.b16 %v90
  %v688 = vunpack.c.h.b16 %v90
  %v689 = vunpack.c.l.b16 %v91
  %v690 = vunpack.c.h.b16 %v91
  %v691 = vunpack.c.l.b16 %v92
  %v692 = vunpack.c.h.b16 %v92
  %v693 = vunpack.c.l.b16 %v93
  %v694 = vunpack.c.h.b16 %v93
  %v695 = vunpack.c.l.b16 %v94
  %v696 = vunpack.c.h.b16 %v94
  %v697 = vunpack.c.l.b16 %v95
  %v698 = vunpack.c.h.b16 %v95
  %v699 = vunpack.c.l.b16 %v96
  %v700 = vunpack.c.h.b16 %v96
  %v701 = vunpack.c.l.b16 %v97
  %v702 = vunpack.c.h.b16 %v97
  %v703 = vunpack.c.l.b16 %v98
  %v704 = vunpack.c.h.b16 %v98
  %v705 = vunpack.c.l.b16 %v99
  %v706 = vunpack.c.h.b16 %v99
  %v707 = vunpack.c.l.b16 %v100
  %v708 = vunpack.c.h.b16 %v100
  %v709 = vunpack.c.l.b16 %v101
  %v710 = vunpack.c.h.b16 %v101
  %v711 = vunpack.c.l.b16 %v102
  %v712 = vunpack.c.h.b16 %v102
  %v713 = vunpack.c.l.b16 %v103
  %v714 = vunpack.c.h.b16 %v103
  %v715 = vunpack.c.l.b16 %v104
  %v716 = vunpack.c.h.b16 %v104
  %v717 = vunpack.c.l.b16 %v105
  %v718 = vunpack.c.h.b16 %v105
  %v719 = vunpack.c.l.b16 %v106
  %v720 = vunpack.c.h.b16 %v106
  %v721 = vunpack.c.l.b16 %v107
  %v722 = vunpack.c.h.b16 %v107
  %v723 = vunpack.c.l.b16 %v108
  %v724 = vunpack.c.h.b16 %v108
  %v725 = vunpack.c.l.b16 %v109
  %v726 = vunpack.c.h.b16 %v109
  %v727 = vunpack.c.l.b16 %v110
  %v728 = vunpack.c.h.b16 %v110
  %v729 = vunpack.c.l.b16 %v111
  %v730 = vunpack.c.h.b16 %v111
  %v731 = vunpack.c.l.b16 %v112
  %v732 = vunpack.c.h.b16 %v112
  %v733 = vunpack.c.l.b16 %v113
  %v734 = vunpack.c.h.b16 %v113
  %v735 = vunpack.c.l.b16 %v114
  %v736 = vunpack.c.h.b16 %v114
  %v737 = vunpack.c.l.b16 %v115
  %v738 = vunpack.c.h.b16 %v115
  %v739 = vunpack.c.l.b16 %v116
  %v740 = vunpack.c.h.b16 %v116
  %v741 = vunpack.c.l.b16 %v117
  %v742 = vunpack.c.h.b16 %v117
  %v743 = vunpack.c.l.b16 %v118
  %v744 = vunpack.c.h.b16 %v118
  %v745 = vunpack.c.l.b16 %v119
  %v746 = vunpack.c.h.b16 %v119
  %v747 = vunpack.c.l.b16 %v120
  %v748 = vunpack.c.h.b16 %v120
  %v749 = vunpack.c.l.b16 %v121
  %v750 = vunpack.c.h.b16 %v121
  %v751 = vunpack.c.l.b16 %v122
  %v752 = vunpack.c.h.b16 %v122
  %v753 = vunpack.c.l.b16 %v123
  %v754 = vunpack.c.h.b16 %v123
  %v755 = vunpack.c.l.b16 %v124
  %v756 = vunpack.c.h.b16 %v124
  %v757 = vunpack.c.l.b16 %v125
  %v758 = vunpack.c.h.b16 %v125
  %v759 = vunpack.c.l.b16 %v126
  %v760 = vunpack.c.h.b16 %v126
  %v761 = vunpack.c.l.b16 %v127
  %v762 = vunpack.c.h.b16 %v127
  %v763 = vunpack.c.l.b16 %v128
  %v764 = vunpack.c.h.b16 %v128
  %v765 = vunpack.c.l.b16 %v129
  %v766 = vunpack.c.h.b16 %v129
  %v767 = vunpack.c.l.b16 %v130
  %v768 = vunpack.c.h.b16 %v130
  %v769 = vunpack.c.l.b16 %v131
  %v770 = vunpack.c.h.b16 %v131
  %v771 = vunpack.c.l.b16 %v132
  %v772 = vunpack.c.h.b16 %v132
  %v773 = vunpack.c.l.b16 %v133
  %v774 = vunpack.c.h.b16 %v133
  %v775 = vunpack.c.l.b16 %v134
  %v776 = vunpack.c.h.b16 %v134
  %v777 = vunpack.c.l.b16 %v135
  %v778 = vunpack.c.h.b16 %v135
  %v779 = vunpack.c.l.b16 %v136
  %v780 = vunpack.c.h.b16 %v136
  %v781 = vunpack.c.l.b16 %v137
  %v782 = vunpack.c.h.b16 %v137
  %v783 = vunpack.c.l.b16 %v138
  %v784 = vunpack.c.h.b16 %v138
  %v785 = vunpack.c.l.b16 %v139
  %v786 = vunpack.c.h.b16 %v139
  %v787 = vunpack.c.l.b16 %v140
  %v788 = vunpack.c.h.b16 %v140
  %v789 = vunpack.c.l.b16 %v141
  %v790 = vunpack.c.h.b16 %v141
  %v791 = vunpack.c.l.b16 %v142
  %v792 = vunpack.c.h.b16 %v142
  %v793 = vunpack.c.l.b16 %v143
  %v794 = vunpack.c.h.b16 %v143
  %v795 = vunpack.c.l.b16 %v144
  %v796 = vunpack.c.h.b16 %v144
  %v797 = vunpack.c.l.b16 %v145
  %v798 = vunpack.c.h.b16 %v145
  %v799 = vunpack.c.l.b16 %v146
  %v800 = vunpack.c.h.b16 %v146
  %v801 = vunpack.c.l.b16 %v147
  %v802 = vunpack.c.h.b16 %v147
  %v803 = vunpack.c.l.b16 %v148
  %v804 = vunpack.c.h.b16 %v148
  %v805 = vunpack.c.l.b16 %v149
  %v806 = vunpack.c.h.b16 %v149
  %v807 = vunpack.c.l.b16 %v150
  %v808 = vunpack.c.h.b16 %v150
  %v809 = vunpack.c.l.b16 %v151
  %v810 = vunpack.c.h.b16 %v151
  %v811 = vunpack.c.l.b16 %v152
  %v812 = vunpack.c.h.b16 %v152
  %v813 = vunpack.c.l.b16 %v153
  %v814 = vunpack.c.h.b16 %v153
  %v815 = vunpack.c.l.b16 %v154
  %v816 = vunpack.c.h.b16 %v154
  %v817 = vunpack.c.l.b16 %v155
  %v818 = vunpack.c.h.b16 %v155
  %v819 = vunpack.c.l.b16 %v156
  %v820 = vunpack.c.h.b16 %v156
  %v821 = vunpack.c.l.b16 %v157
  %v822 = vunpack.c.h.b16 %v157
  %v823 = vunpack.c.l.b16 %v158
  %v824 = vunpack.c.h.b16 %v158
  %v825 = vunpack.c.l.b16 %v159
  %v826 = vunpack.c.h.b16 %v159
  %v827 = vunpack.c.l.b16 %v160
  %v828 = vunpack.c.h.b16 %v160
  %v829 = vunpack.c.l.b16 %v161
  %v830 = vunpack.c.h.b16 %v161
  %v831 = vunpack.c.l.b16 %v162
  %v832 = vunpack.c.h.b16 %v162
  %v833 = vunpack.c.l.b16 %v163
  %v834 = vunpack.c.h.b16 %v163
  %v835 = vunpack.c.l.b16 %v164
  %v836 = vunpack.c.h.b16 %v164
  %v837 = vunpack.c.l.b16 %v165
  %v838 = vunpack.c.h.b16 %v165
  %v839 = vunpack.c.l.b16 %v166
  %v840 = vunpack.c.h.b16 %v166
  %v841 = vunpack.c.l.b16 %v167
  %v842 = vunpack.c.h.b16 %v167
  %v843 = vunpack.c.l.b16 %v168
  %v844 = vunpack.c.h.b16 %v168
  %v845 = vunpack.c.l.b16 %v169
  %v846 = vunpack.c.h.b16 %v169
  %v847 = vunpack.c.l.b16 %v170
  %v848 = vunpack.c.h.b16 %v170
  %v849 = vunpack.c.l.b16 %v171
  %v850 = vunpack.c.h.b16 %v171
  %v851 = vunpack.c.l.b16 %v172
  %v852 = vunpack.c.h.b16 %v172
  %v853 = vunpack.c.l.b16 %v173
  %v854 = vunpack.c.h.b16 %v173
  %v855 = vunpack.c.l.b16 %v174
  %v856 = vunpack.c.h.b16 %v174
  %v857 = vunpack.c.l.b16 %v175
  %v858 = vunpack.c.h.b16 %v175
  %v859 = vunpack.c.l.b16 %v176
  %v860 = vunpack.c.h.b16 %v176
  %v861 = vunpack.c.l.b16 %v177
  %v862 = vunpack.c.h.b16 %v177
  %v863 = vunpack.c.l.b16 %v178
  %v864 = vunpack.c.h.b16 %v178
  %v865 = vunpack.c.l.b16 %v179
  %v866 = vunpack.c.h.b16 %v179
  %v867 = vunpack.c.l.b16 %v180
  %v868 = vunpack.c.h.b16 %v180
  %v869 = vunpack.c.l.b16 %v181
  %v870 = vunpack.c.h.b16 %v181
  %v871 = vunpack.c.l.b16 %v182
  %v872 = vunpack.c.h.b16 %v182
  %v873 = vunpack.c.l.b16 %v183
  %v874 = vunpack.c.h.b16 %v183
  %v875 = vunpack.c.l.b16 %v184
  %v876 = vunpack.c.h.b16 %v184
  %v877 = vunpack.c.l.b16 %v185
  %v878 = vunpack.c.h.b16 %v185
  %v879 = vunpack.c.l.b16 %v186
  %v880 = vunpack.c.h.b16 %v186
  %v881 = vunpack.c.l.b16 %v187
  %v882 = vunpack.c.h.b16 %v187
  %v883 = vunpack.c.l.b16 %v188
  %v884 = vunpack.c.h.b16 %v188
  %v885 = vunpack.c.l.b16 %v189
  %v886 = vunpack.c.h.b16 %v189
  %v887 = vunpack.c.l.b16 %v190
  %v888 = vunpack.c.h.b16 %v190
  %v889 = vunpack.c.l.b16 %v191
  %v890 = vunpack.c.h.b16 %v191
  %v891 = vunpack.c.l.b16 %v192
  %v892 = vunpack.c.h.b16 %v192
  %v893 = vunpack.c.l.b16 %v193
  %v894 = vunpack.c.h.b16 %v193
  %v895 = vunpack.c.l.b16 %v194
  %v896 = vunpack.c.h.b16 %v194
  %v897 = vunpack.c.l.b16 %v195
  %v898 = vunpack.c.h.b16 %v195
  %v899 = vunpack.c.l.b16 %v196
  %v900 = vunpack.c.h.b16 %v196
  %v901 = vunpack.c.l.b16 %v197
  %v902 = vunpack.c.h.b16 %v197
  %v903 = vunpack.c.l.b16 %v198
  %v904 = vunpack.c.h.b16 %v198
  %v905 = vunpack.c.l.b16 %v199
  %v906 = vunpack.c.h.b16 %v199
  %v907 = vunpack.c.l.b16 %v200
  %v908 = vunpack.c.h.b16 %v200
  %v909 = vunpack.c.l.b16 %v201
  %v910 = vunpack.c.h.b16 %v201
  %v911 = vunpack.c.l.b16 %v202
  %v912 = vunpack.c.h.b16 %v202
  %v913 = vunpack.c.l.b16 %v203
  %v914 = vunpack.c.h.b16 %v203
  %v915 = vunpack.c.l.b16 %v204
  %v916 = vunpack.c.h.b16 %v204
  %v917 = vunpack.c.l.b16 %v205
  %v918 = vunpack.c.h.b16 %v205
  %v919 = vunpack.c.l.b16 %v206
  %v920 = vunpack.c.h.b16 %v206
  %v921 = vunpack.c.l.b16 %v207
  %v922 = vunpack.c.h.b16 %v207
  %v923 = vunpack.c.l.b16 %v208
  %v924 = vunpack.c.h.b16 %v208
  %v925 = vpack.c.b16 %v671, %v669
  %v926 = vpack.c.b16 %v672, %v670
  %v927 = vpack.c.b16 %v675, %v673
  %v928 = vpack.c.b16 %v676, %v674
  %v929 = vpack.c.b16 %v679, %v677
  %v930 = vpack.c.b16 %v680, %v678
  %v931 = vpack.c.b16 %v683, %v681
  %v932 = vpack.c.b16 %v684, %v682
  %v933 = vpack.c.b16 %v687, %v685
  %v934 = vpack.c.b16 %v688, %v686
  %v935 = vpack.c.b16 %v691, %v689
  %v936 = vpack.c.b16 %v692, %v690
  %v937 = vpack.c.b16 %v695, %v693
  %v938 = vpack.c.b16 %v696, %v694
  %v939 = vpack.c.b16 %v699, %v697
  %v940 = vpack.c.b16 %v700, %v698
  %v941 = vpack.c.b16 %v703, %v701
  %v942 = vpack.c.b16 %v704, %v702
  %v943 = vpack.c.b16 %v707, %v705
  %v944 = vpack.c.b16 %v708, %v706
  %v945 = vpack.c.b16 %v711, %v709
  %v946 = vpack.c.b16 %v712, %v710
  %v947 = vpack.c.b16 %v715, %v713
  %v948 = vpack.c.b16 %v716, %v714
  %v949 = vpack.c.b16 %v719, %v717
  %v950 = vpack.c.b16 %v720, %v718
  %v951 = vpack.c.b16 %v723, %v721
  %v952 = vpack.c.b16 %v724, %v722
  %v953 = vpack.c.b16 %v727, %v725
  %v954 = vpack.c.b16 %v728, %v726
  %v955 = vpack.c.b16 %v731, %v729
  %v956 = vpack.c.b16 %v732, %v730
  %v957 = vpack.c.b16 %v735, %v733
  %v958 = vpack.c.b16 %v736, %v734
  %v959 = vpack.c.b16 %v739, %v737
  %v960 = vpack.c.b16 %v740, %v738
  %v961 = vpack.c.b16 %v743, %v741
  %v962 = vpack.c.b16 %v744, %v742
  %v963 = vpack.c.b16 %v747, %v745
  %v964 = vpack.c.b16 %v748, %v746
  %v965 = vpack.c.b16 %v751, %v749
  %v966 = vpack.c.b16 %v752, %v750
  %v967 = vpack.c.b16 %v755, %v753
  %v968 = vpack.c.b16 %v756, %v754
  %v969 = vpack.c.b16 %v759, %v757
  %v970 = vpack.c.b16 %v760, %v758
  %v971 = vpack.c.b16 %v763, %v761
  %v972 = vpack.c.b16 %v764, %v762
  %v973 = vpack.c.b16 %v767, %v765
  %v974 = vpack.c.b16 %v768, %v766
  %v975 = vpack.c.b16 %v771, %v769
  %v976 = vpack.c.b16 %v772, %v770
  %v977 = vpack.c.b16 %v775, %v773
  %v978 = vpack.c.b16 %v776, %v774
  %v979 = vpack.c.b16 %v779, %v777
  %v980 = vpack.c.b16 %v780, %v778
  %v981 = vpack.c.b16 %v783, %v781
  %v982 = vpack.c.b16 %v784, %v782
  %v983 = vpack.c.b16 %v787, %v785
  %v984 = vpack.c.b16 %v788, %v786
  %v985 = vpack.c.b16 %v791, %v789
  %v986 = vpack.c.b16 %v792, %v790
  %v987 = vpack.c.b16 %v795, %v793
  %v988 = vpack.c.b16 %v796, %v794
  %v989 = vpack.c.b16 %v799, %v797
  %v990 = vpack.c.b16 %v800, %v798
  %v991 = vpack.c.b16 %v803, %v801
  %v992 = vpack.c.b16 %v804, %v802
  %v993 = vpack.c.b16 %v807, %v805
  %v994 = vpack.c.b16 %v808, %v806
  %v995 = vpack.c.b16 %v811, %v809
  %v996 = vpack.c.b16 %v812, %v810
  %v997 = vpack.c.b16 %v815, %v813
  %v998 = vpack.c.b16 %v816, %v814
  %v999 = vpack.c.b16 %v819, %v817
  %v1000 = vpack.c.b16 %v820, %v818
  %v1001 = vpack.c.b16 %v823, %v821
  %v1002 = vpack.c.b16 %v824, %v822
  %v1003 = vpack.c.b16 %v827, %v825
  %v1004 = vpack.c.b16 %v828, %v826
  %v1005 = vpack.c.b16 %v831, %v829
  %v1006 = vpack.c.b16 %v832, %v830
  %v1007 = vpack.c.b16 %v835, %v833
  %v1008 = vpack.c.b16 %v836, %v834
  %v1009 = vpack.c.b16 %v839, %v837
  %v1010 = vpack.c.b16 %v840, %v838
  %v1011 = vpack.c.b16 %v843, %v841
  %v1012 = vpack.c.b16 %v844, %v842
  %v1013 = vpack.c.b16 %v847, %v845
  %v1014 = vpack.c.b16 %v848, %v846
  %v1015 = vpack.c.b16 %v851, %v849
  %v1016 = vpack.c.b16 %v852, %v850
  %v1017 = vpack.c.b16 %v855, %v853
  %v1018 = vpack.c.b16 %v856, %v854
  %v1019 = vpack.c.b16 %v859, %v857
  %v1020 = vpack.c.b16 %v860, %v858
  %v1021 = vpack.c.b16 %v863, %v861
  %v1022 = vpack.c.b16 %v864, %v862
  %v1023 = vpack.c.b16 %v867, %v865
  %v1024 = vpack.c.b16 %v868, %v866
  %v1025 = vpack.c.b16 %v871, %v869
  %v1026 = vpack.c.b16 %v872, %v870
  %v1027 = vpack.c.b16 %v875, %v873
  %v1028 = vpack.c.b16 %v876, %v874
  %v1029 = vpack.c.b16 %v879, %v877
  %v1030 = vpack.c.b16 %v880, %v878
  %v1031 = vpack.c.b16 %v883, %v881
  %v1032 = vpack.c.b16 %v884, %v882
  %v1033 = vpack.c.b16 %v887, %v885
  %v1034 = vpack.c.b16 %v888, %v886
  %v1035 = vpack.c.b16 %v891, %v889
  %v1036 = vpack.c.b16 %v892, %v890
  %v1037 = vpack.c.b16 %v895, %v893
  %v1038 = vpack.c.b16 %v896, %v894
  %v1039 = vpack.c.b16 %v899, %v897
  %v1040 = vpack.c.b16 %v900, %v898
  %v1041 = vpack.c.b16 %v903, %v901
  %v1042 = vpack.c.b16 %v904, %v902
  %v1043 = vpack.c.b16 %v907, %v905
  %v1044 = vpack.c.b16 %v908, %v906
  %v1045 = vpack.c.b16 %v911, %v909
  %v1046 = vpack.c.b16 %v912, %v910
  %v1047 = vpack.c.b16 %v915, %v913
  %v1048 = vpack.c.b16 %v916, %v914
  %v1049 = vpack.c.b16 %v919, %v917
  %v1050 = vpack.c.b16 %v920, %v918
  %v1051 = vpack.c.b16 %v923, %v921
  %v1052 = vpack.c.b16 %v924, %v922
  %1181 = vmatprep.subr.bf16.mxu0 %v940
  %1182 = vmatpush1.bf16.msra.mxu0 %v939
  %1183 = vmatprep.subr.bf16.mxu0 %v938
  %1184 = vmatpush1.bf16.msra.mxu0 %v937
  %1185 = vmatprep.subr.bf16.mxu0 %v936
  %1186 = vmatpush1.bf16.msra.mxu0 %v935
  %1187 = vmatprep.subr.bf16.mxu0 %v934
  %1188 = vmatpush1.bf16.msra.mxu0 %v933
  %1189 = vmatprep.subr.bf16.mxu0 %v932
  %1190 = vmatpush1.bf16.msra.mxu0 %v931
  %1191 = vmatprep.subr.bf16.mxu0 %v930
  %1192 = vmatpush1.bf16.msra.mxu0 %v929
  %1193 = vmatprep.subr.bf16.mxu0 %v928
  %1194 = vmatpush1.bf16.msra.mxu0 %v927
  %1195 = vmatprep.subr.bf16.mxu0 %v926
  %1196 = vmatpush1.bf16.msra.mxu0 %v925
  %1197 = vmatprep.subr.bf16.mxu0 %v956
  %1198 = vmatpush2.bf16.msra.mxu0 %v955
  %1199 = vmatprep.subr.bf16.mxu0 %v954
  %1200 = vmatpush2.bf16.msra.mxu0 %v953
  %1201 = vmatprep.subr.bf16.mxu0 %v952
  %1202 = vmatpush2.bf16.msra.mxu0 %v951
  %1203 = vmatprep.subr.bf16.mxu0 %v950
  %1204 = vmatpush2.bf16.msra.mxu0 %v949
  %1205 = vmatprep.subr.bf16.mxu0 %v948
  %1206 = vmatpush2.bf16.msra.mxu0 %v947
  %1207 = vmatprep.subr.bf16.mxu0 %v946
  %1208 = vmatpush2.bf16.msra.mxu0 %v945
  %1209 = vmatprep.subr.bf16.mxu0 %v944
  %1210 = vmatpush2.bf16.msra.mxu0 %v943
  %1211 = vmatprep.subr.bf16.mxu0 %v942
  %1212 = vmatpush2.bf16.msra.mxu0 %v941
  %1213 = vmatprep.mubr.bf16.mxu0 %v414
  %1214 = vmatmul.mubr.bf16.gmra.mxu0 %v413
  %v1215 = vpop.f32.mrf.mxu0
  %v1216 = vadd.f32 %v214, %v1215
  %v1217 = vpop.f32.mrf.mxu0
  %v1218 = vadd.f32 %v218, %v1217
  %v1219 = vpop.f32.mrf.mxu0
  %v1220 = vadd.f32 %v214, %v1219
  %v1221 = vpop.f32.mrf.mxu0
  %v1222 = vadd.f32 %v218, %v1221
  %1223 = vmatprep.mubr.bf16.mxu0 %v422
  %1224 = vmatmul.mubr.bf16.gmra.mxu0 %v421
  %v1225 = vpop.f32.mrf.mxu0
  %v1226 = vadd.f32 %v214, %v1225
  %v1227 = vpop.f32.mrf.mxu0
  %v1228 = vadd.f32 %v218, %v1227
  %v1229 = vpop.f32.mrf.mxu0
  %v1230 = vadd.f32 %v214, %v1229
  %v1231 = vpop.f32.mrf.mxu0
  %v1232 = vadd.f32 %v218, %v1231
  %1233 = vmatprep.mubr.bf16.mxu0 %v430
  %1234 = vmatmul.mubr.bf16.gmra.mxu0 %v429
  %v1235 = vpop.f32.mrf.mxu0
  %v1236 = vadd.f32 %v214, %v1235
  %v1237 = vpop.f32.mrf.mxu0
  %v1238 = vadd.f32 %v218, %v1237
  %v1239 = vpop.f32.mrf.mxu0
  %v1240 = vadd.f32 %v214, %v1239
  %v1241 = vpop.f32.mrf.mxu0
  %v1242 = vadd.f32 %v218, %v1241
  %1243 = vmatprep.mubr.bf16.mxu0 %v438
  %1244 = vmatmul.mubr.bf16.gmra.mxu0 %v437
  %v1245 = vpop.f32.mrf.mxu0
  %v1246 = vadd.f32 %v214, %v1245
  %v1247 = vpop.f32.mrf.mxu0
  %v1248 = vadd.f32 %v218, %v1247
  %v1249 = vpop.f32.mrf.mxu0
  %v1250 = vadd.f32 %v214, %v1249
  %v1251 = vpop.f32.mrf.mxu0
  %v1252 = vadd.f32 %v218, %v1251
  %1253 = vmatprep.mubr.bf16.mxu0 %v446
  %1254 = vmatmul.mubr.bf16.gmra.mxu0 %v445
  %v1255 = vpop.f32.mrf.mxu0
  %v1256 = vadd.f32 %v214, %v1255
  %v1257 = vpop.f32.mrf.mxu0
  %v1258 = vadd.f32 %v218, %v1257
  %v1259 = vpop.f32.mrf.mxu0
  %v1260 = vadd.f32 %v214, %v1259
  %v1261 = vpop.f32.mrf.mxu0
  %v1262 = vadd.f32 %v218, %v1261
  %1263 = vmatprep.mubr.bf16.mxu0 %v454
  %1264 = vmatmul.mubr.bf16.gmra.mxu0 %v453
  %v1265 = vpop.f32.mrf.mxu0
  %v1266 = vadd.f32 %v214, %v1265
  %v1267 = vpop.f32.mrf.mxu0
  %v1268 = vadd.f32 %v218, %v1267
  %v1269 = vpop.f32.mrf.mxu0
  %v1270 = vadd.f32 %v214, %v1269
  %v1271 = vpop.f32.mrf.mxu0
  %v1272 = vadd.f32 %v218, %v1271
  %1273 = vmatprep.mubr.bf16.mxu0 %v462
  %1274 = vmatmul.mubr.bf16.gmra.mxu0 %v461
  %v1275 = vpop.f32.mrf.mxu0
  %v1276 = vadd.f32 %v214, %v1275
  %v1277 = vpop.f32.mrf.mxu0
  %v1278 = vadd.f32 %v218, %v1277
  %v1279 = vpop.f32.mrf.mxu0
  %v1280 = vadd.f32 %v214, %v1279
  %v1281 = vpop.f32.mrf.mxu0
  %v1282 = vadd.f32 %v218, %v1281
  %1283 = vmatprep.mubr.bf16.mxu0 %v470
  %1284 = vmatmul.mubr.bf16.gmra.mxu0 %v469
  %v1285 = vpop.f32.mrf.mxu0
  %v1286 = vadd.f32 %v214, %v1285
  %v1287 = vpop.f32.mrf.mxu0
  %v1288 = vadd.f32 %v218, %v1287
  %v1289 = vpop.f32.mrf.mxu0
  %v1290 = vadd.f32 %v214, %v1289
  %v1291 = vpop.f32.mrf.mxu0
  %v1292 = vadd.f32 %v218, %v1291
  %1293 = vdwg.mxu0
  %1294 = vmatprep.subr.bf16.mxu0 %v972
  %1295 = vmatpush1.bf16.msra.mxu0 %v971
  %1296 = vmatprep.subr.bf16.mxu0 %v970
  %1297 = vmatpush1.bf16.msra.mxu0 %v969
  %1298 = vmatprep.subr.bf16.mxu0 %v968
  %1299 = vmatpush1.bf16.msra.mxu0 %v967
  %1300 = vmatprep.subr.bf16.mxu0 %v966
  %1301 = vmatpush1.bf16.msra.mxu0 %v965
  %1302 = vmatprep.subr.bf16.mxu0 %v964
  %1303 = vmatpush1.bf16.msra.mxu0 %v963
  %1304 = vmatprep.subr.bf16.mxu0 %v962
  %1305 = vmatpush1.bf16.msra.mxu0 %v961
  %1306 = vmatprep.subr.bf16.mxu0 %v960
  %1307 = vmatpush1.bf16.msra.mxu0 %v959
  %1308 = vmatprep.subr.bf16.mxu0 %v958
  %1309 = vmatpush1.bf16.msra.mxu0 %v957
  %1310 = vmatprep.subr.bf16.mxu0 %v988
  %1311 = vmatpush2.bf16.msra.mxu0 %v987
  %1312 = vmatprep.subr.bf16.mxu0 %v986
  %1313 = vmatpush2.bf16.msra.mxu0 %v985
  %1314 = vmatprep.subr.bf16.mxu0 %v984
  %1315 = vmatpush2.bf16.msra.mxu0 %v983
  %1316 = vmatprep.subr.bf16.mxu0 %v982
  %1317 = vmatpush2.bf16.msra.mxu0 %v981
  %1318 = vmatprep.subr.bf16.mxu0 %v980
  %1319 = vmatpush2.bf16.msra.mxu0 %v979
  %1320 = vmatprep.subr.bf16.mxu0 %v978
  %1321 = vmatpush2.bf16.msra.mxu0 %v977
  %1322 = vmatprep.subr.bf16.mxu0 %v976
  %1323 = vmatpush2.bf16.msra.mxu0 %v975
  %1324 = vmatprep.subr.bf16.mxu0 %v974
  %1325 = vmatpush2.bf16.msra.mxu0 %v973
  %1326 = vmatprep.mubr.bf16.mxu0 %v416
  %1327 = vmatmul.mubr.bf16.gmra.mxu0 %v415
  %v1328 = vpop.f32.mrf.mxu0
  %v1329 = vadd.f32 %v1216, %v1328
  %v1330 = vpop.f32.mrf.mxu0
  %v1331 = vadd.f32 %v1218, %v1330
  %v1332 = vpop.f32.mrf.mxu0
  %v1333 = vadd.f32 %v1220, %v1332
  %v1334 = vpop.f32.mrf.mxu0
  %v1335 = vadd.f32 %v1222, %v1334
  %1336 = vmatprep.mubr.bf16.mxu0 %v424
  %1337 = vmatmul.mubr.bf16.gmra.mxu0 %v423
  %v1338 = vpop.f32.mrf.mxu0
  %v1339 = vadd.f32 %v1226, %v1338
  %v1340 = vpop.f32.mrf.mxu0
  %v1341 = vadd.f32 %v1228, %v1340
  %v1342 = vpop.f32.mrf.mxu0
  %v1343 = vadd.f32 %v1230, %v1342
  %v1344 = vpop.f32.mrf.mxu0
  %v1345 = vadd.f32 %v1232, %v1344
  %1346 = vmatprep.mubr.bf16.mxu0 %v432
  %1347 = vmatmul.mubr.bf16.gmra.mxu0 %v431
  %v1348 = vpop.f32.mrf.mxu0
  %v1349 = vadd.f32 %v1236, %v1348
  %v1350 = vpop.f32.mrf.mxu0
  %v1351 = vadd.f32 %v1238, %v1350
  %v1352 = vpop.f32.mrf.mxu0
  %v1353 = vadd.f32 %v1240, %v1352
  %v1354 = vpop.f32.mrf.mxu0
  %v1355 = vadd.f32 %v1242, %v1354
  %1356 = vmatprep.mubr.bf16.mxu0 %v440
  %1357 = vmatmul.mubr.bf16.gmra.mxu0 %v439
  %v1358 = vpop.f32.mrf.mxu0
  %v1359 = vadd.f32 %v1246, %v1358
  %v1360 = vpop.f32.mrf.mxu0
  %v1361 = vadd.f32 %v1248, %v1360
  %v1362 = vpop.f32.mrf.mxu0
  %v1363 = vadd.f32 %v1250, %v1362
  %v1364 = vpop.f32.mrf.mxu0
  %v1365 = vadd.f32 %v1252, %v1364
  %1366 = vmatprep.mubr.bf16.mxu0 %v448
  %1367 = vmatmul.mubr.bf16.gmra.mxu0 %v447
  %v1368 = vpop.f32.mrf.mxu0
  %v1369 = vadd.f32 %v1256, %v1368
  %v1370 = vpop.f32.mrf.mxu0
  %v1371 = vadd.f32 %v1258, %v1370
  %v1372 = vpop.f32.mrf.mxu0
  %v1373 = vadd.f32 %v1260, %v1372
  %v1374 = vpop.f32.mrf.mxu0
  %v1375 = vadd.f32 %v1262, %v1374
  %1376 = vmatprep.mubr.bf16.mxu0 %v456
  %1377 = vmatmul.mubr.bf16.gmra.mxu0 %v455
  %v1378 = vpop.f32.mrf.mxu0
  %v1379 = vadd.f32 %v1266, %v1378
  %v1380 = vpop.f32.mrf.mxu0
  %v1381 = vadd.f32 %v1268, %v1380
  %v1382 = vpop.f32.mrf.mxu0
  %v1383 = vadd.f32 %v1270, %v1382
  %v1384 = vpop.f32.mrf.mxu0
  %v1385 = vadd.f32 %v1272, %v1384
  %1386 = vmatprep.mubr.bf16.mxu0 %v464
  %1387 = vmatmul.mubr.bf16.gmra.mxu0 %v463
  %v1388 = vpop.f32.mrf.mxu0
  %v1389 = vadd.f32 %v1276, %v1388
  %v1390 = vpop.f32.mrf.mxu0
  %v1391 = vadd.f32 %v1278, %v1390
  %v1392 = vpop.f32.mrf.mxu0
  %v1393 = vadd.f32 %v1280, %v1392
  %v1394 = vpop.f32.mrf.mxu0
  %v1395 = vadd.f32 %v1282, %v1394
  %1396 = vmatprep.mubr.bf16.mxu0 %v472
  %1397 = vmatmul.mubr.bf16.gmra.mxu0 %v471
  %v1398 = vpop.f32.mrf.mxu0
  %v1399 = vadd.f32 %v1286, %v1398
  %v1400 = vpop.f32.mrf.mxu0
  %v1401 = vadd.f32 %v1288, %v1400
  %v1402 = vpop.f32.mrf.mxu0
  %v1403 = vadd.f32 %v1290, %v1402
  %v1404 = vpop.f32.mrf.mxu0
  %v1405 = vadd.f32 %v1292, %v1404
  %1406 = vdwg.mxu0
  %1407 = vmatprep.subr.bf16.mxu0 %v1004
  %1408 = vmatpush1.bf16.msra.mxu0 %v1003
  %1409 = vmatprep.subr.bf16.mxu0 %v1002
  %1410 = vmatpush1.bf16.msra.mxu0 %v1001
  %1411 = vmatprep.subr.bf16.mxu0 %v1000
  %1412 = vmatpush1.bf16.msra.mxu0 %v999
  %1413 = vmatprep.subr.bf16.mxu0 %v998
  %1414 = vmatpush1.bf16.msra.mxu0 %v997
  %1415 = vmatprep.subr.bf16.mxu0 %v996
  %1416 = vmatpush1.bf16.msra.mxu0 %v995
  %1417 = vmatprep.subr.bf16.mxu0 %v994
  %1418 = vmatpush1.bf16.msra.mxu0 %v993
  %1419 = vmatprep.subr.bf16.mxu0 %v992
  %1420 = vmatpush1.bf16.msra.mxu0 %v991
  %1421 = vmatprep.subr.bf16.mxu0 %v990
  %1422 = vmatpush1.bf16.msra.mxu0 %v989
  %1423 = vmatprep.subr.bf16.mxu0 %v1020
  %1424 = vmatpush2.bf16.msra.mxu0 %v1019
  %1425 = vmatprep.subr.bf16.mxu0 %v1018
  %1426 = vmatpush2.bf16.msra.mxu0 %v1017
  %1427 = vmatprep.subr.bf16.mxu0 %v1016
  %1428 = vmatpush2.bf16.msra.mxu0 %v1015
  %1429 = vmatprep.subr.bf16.mxu0 %v1014
  %1430 = vmatpush2.bf16.msra.mxu0 %v1013
  %1431 = vmatprep.subr.bf16.mxu0 %v1012
  %1432 = vmatpush2.bf16.msra.mxu0 %v1011
  %1433 = vmatprep.subr.bf16.mxu0 %v1010
  %1434 = vmatpush2.bf16.msra.mxu0 %v1009
  %1435 = vmatprep.subr.bf16.mxu0 %v1008
  %1436 = vmatpush2.bf16.msra.mxu0 %v1007
  %1437 = vmatprep.subr.bf16.mxu0 %v1006
  %1438 = vmatpush2.bf16.msra.mxu0 %v1005
  %1439 = vmatprep.mubr.bf16.mxu0 %v418
  %1440 = vmatmul.mubr.bf16.gmra.mxu0 %v417
  %v1441 = vpop.f32.mrf.mxu0
  %v1442 = vadd.f32 %v1329, %v1441
  %v1443 = vpop.f32.mrf.mxu0
  %v1444 = vadd.f32 %v1331, %v1443
  %v1445 = vpop.f32.mrf.mxu0
  %v1446 = vadd.f32 %v1333, %v1445
  %v1447 = vpop.f32.mrf.mxu0
  %v1448 = vadd.f32 %v1335, %v1447
  %1449 = vmatprep.mubr.bf16.mxu0 %v426
  %1450 = vmatmul.mubr.bf16.gmra.mxu0 %v425
  %v1451 = vpop.f32.mrf.mxu0
  %v1452 = vadd.f32 %v1339, %v1451
  %v1453 = vpop.f32.mrf.mxu0
  %v1454 = vadd.f32 %v1341, %v1453
  %v1455 = vpop.f32.mrf.mxu0
  %v1456 = vadd.f32 %v1343, %v1455
  %v1457 = vpop.f32.mrf.mxu0
  %v1458 = vadd.f32 %v1345, %v1457
  %1459 = vmatprep.mubr.bf16.mxu0 %v434
  %1460 = vmatmul.mubr.bf16.gmra.mxu0 %v433
  %v1461 = vpop.f32.mrf.mxu0
  %v1462 = vadd.f32 %v1349, %v1461
  %v1463 = vpop.f32.mrf.mxu0
  %v1464 = vadd.f32 %v1351, %v1463
  %v1465 = vpop.f32.mrf.mxu0
  %v1466 = vadd.f32 %v1353, %v1465
  %v1467 = vpop.f32.mrf.mxu0
  %v1468 = vadd.f32 %v1355, %v1467
  %1469 = vmatprep.mubr.bf16.mxu0 %v442
  %1470 = vmatmul.mubr.bf16.gmra.mxu0 %v441
  %v1471 = vpop.f32.mrf.mxu0
  %v1472 = vadd.f32 %v1359, %v1471
  %v1473 = vpop.f32.mrf.mxu0
  %v1474 = vadd.f32 %v1361, %v1473
  %v1475 = vpop.f32.mrf.mxu0
  %v1476 = vadd.f32 %v1363, %v1475
  %v1477 = vpop.f32.mrf.mxu0
  %v1478 = vadd.f32 %v1365, %v1477
  %1479 = vmatprep.mubr.bf16.mxu0 %v450
  %1480 = vmatmul.mubr.bf16.gmra.mxu0 %v449
  %v1481 = vpop.f32.mrf.mxu0
  %v1482 = vadd.f32 %v1369, %v1481
  %v1483 = vpop.f32.mrf.mxu0
  %v1484 = vadd.f32 %v1371, %v1483
  %v1485 = vpop.f32.mrf.mxu0
  %v1486 = vadd.f32 %v1373, %v1485
  %v1487 = vpop.f32.mrf.mxu0
  %v1488 = vadd.f32 %v1375, %v1487
  %1489 = vmatprep.mubr.bf16.mxu0 %v458
  %1490 = vmatmul.mubr.bf16.gmra.mxu0 %v457
  %v1491 = vpop.f32.mrf.mxu0
  %v1492 = vadd.f32 %v1379, %v1491
  %v1493 = vpop.f32.mrf.mxu0
  %v1494 = vadd.f32 %v1381, %v1493
  %v1495 = vpop.f32.mrf.mxu0
  %v1496 = vadd.f32 %v1383, %v1495
  %v1497 = vpop.f32.mrf.mxu0
  %v1498 = vadd.f32 %v1385, %v1497
  %1499 = vmatprep.mubr.bf16.mxu0 %v466
  %1500 = vmatmul.mubr.bf16.gmra.mxu0 %v465
  %v1501 = vpop.f32.mrf.mxu0
  %v1502 = vadd.f32 %v1389, %v1501
  %v1503 = vpop.f32.mrf.mxu0
  %v1504 = vadd.f32 %v1391, %v1503
  %v1505 = vpop.f32.mrf.mxu0
  %v1506 = vadd.f32 %v1393, %v1505
  %v1507 = vpop.f32.mrf.mxu0
  %v1508 = vadd.f32 %v1395, %v1507
  %1509 = vmatprep.mubr.bf16.mxu0 %v474
  %1510 = vmatmul.mubr.bf16.gmra.mxu0 %v473
  %v1511 = vpop.f32.mrf.mxu0
  %v1512 = vadd.f32 %v1399, %v1511
  %v1513 = vpop.f32.mrf.mxu0
  %v1514 = vadd.f32 %v1401, %v1513
  %v1515 = vpop.f32.mrf.mxu0
  %v1516 = vadd.f32 %v1403, %v1515
  %v1517 = vpop.f32.mrf.mxu0
  %v1518 = vadd.f32 %v1405, %v1517
  %1519 = vdwg.mxu0
  %1520 = vmatprep.subr.bf16.mxu0 %v1036
  %1521 = vmatpush1.bf16.msra.mxu0 %v1035
  %1522 = vmatprep.subr.bf16.mxu0 %v1034
  %1523 = vmatpush1.bf16.msra.mxu0 %v1033
  %1524 = vmatprep.subr.bf16.mxu0 %v1032
  %1525 = vmatpush1.bf16.msra.mxu0 %v1031
  %1526 = vmatprep.subr.bf16.mxu0 %v1030
  %1527 = vmatpush1.bf16.msra.mxu0 %v1029
  %1528 = vmatprep.subr.bf16.mxu0 %v1028
  %1529 = vmatpush1.bf16.msra.mxu0 %v1027
  %1530 = vmatprep.subr.bf16.mxu0 %v1026
  %1531 = vmatpush1.bf16.msra.mxu0 %v1025
  %1532 = vmatprep.subr.bf16.mxu0 %v1024
  %1533 = vmatpush1.bf16.msra.mxu0 %v1023
  %1534 = vmatprep.subr.bf16.mxu0 %v1022
  %1535 = vmatpush1.bf16.msra.mxu0 %v1021
  %1536 = vmatprep.subr.bf16.mxu0 %v1052
  %1537 = vmatpush2.bf16.msra.mxu0 %v1051
  %1538 = vmatprep.subr.bf16.mxu0 %v1050
  %1539 = vmatpush2.bf16.msra.mxu0 %v1049
  %1540 = vmatprep.subr.bf16.mxu0 %v1048
  %1541 = vmatpush2.bf16.msra.mxu0 %v1047
  %1542 = vmatprep.subr.bf16.mxu0 %v1046
  %1543 = vmatpush2.bf16.msra.mxu0 %v1045
  %1544 = vmatprep.subr.bf16.mxu0 %v1044
  %1545 = vmatpush2.bf16.msra.mxu0 %v1043
  %1546 = vmatprep.subr.bf16.mxu0 %v1042
  %1547 = vmatpush2.bf16.msra.mxu0 %v1041
  %1548 = vmatprep.subr.bf16.mxu0 %v1040
  %1549 = vmatpush2.bf16.msra.mxu0 %v1039
  %1550 = vmatprep.subr.bf16.mxu0 %v1038
  %1551 = vmatpush2.bf16.msra.mxu0 %v1037
  %1552 = vmatprep.mubr.bf16.mxu0 %v420
  %1553 = vmatmul.mubr.bf16.gmra.mxu0 %v419
  %v1554 = vpop.f32.mrf.mxu0
  %v1555 = vadd.f32 %v1442, %v1554
  %v1556 = vpop.f32.mrf.mxu0
  %v1557 = vadd.f32 %v1444, %v1556
  %v1558 = vpop.f32.mrf.mxu0
  %v1559 = vadd.f32 %v1446, %v1558
  %v1560 = vpop.f32.mrf.mxu0
  %v1561 = vadd.f32 %v1448, %v1560
  %1562 = vmatprep.mubr.bf16.mxu0 %v428
  %1563 = vmatmul.mubr.bf16.gmra.mxu0 %v427
  %v1564 = vpop.f32.mrf.mxu0
  %v1565 = vadd.f32 %v1452, %v1564
  %v1566 = vpop.f32.mrf.mxu0
  %v1567 = vadd.f32 %v1454, %v1566
  %v1568 = vpop.f32.mrf.mxu0
  %v1569 = vadd.f32 %v1456, %v1568
  %v1570 = vpop.f32.mrf.mxu0
  %v1571 = vadd.f32 %v1458, %v1570
  %1572 = vmatprep.mubr.bf16.mxu0 %v436
  %1573 = vmatmul.mubr.bf16.gmra.mxu0 %v435
  %v1574 = vpop.f32.mrf.mxu0
  %v1575 = vadd.f32 %v1462, %v1574
  %v1576 = vpop.f32.mrf.mxu0
  %v1577 = vadd.f32 %v1464, %v1576
  %v1578 = vpop.f32.mrf.mxu0
  %v1579 = vadd.f32 %v1466, %v1578
  %v1580 = vpop.f32.mrf.mxu0
  %v1581 = vadd.f32 %v1468, %v1580
  %1582 = vmatprep.mubr.bf16.mxu0 %v444
  %1583 = vmatmul.mubr.bf16.gmra.mxu0 %v443
  %v1584 = vpop.f32.mrf.mxu0
  %v1585 = vadd.f32 %v1472, %v1584
  %v1586 = vpop.f32.mrf.mxu0
  %v1587 = vadd.f32 %v1474, %v1586
  %v1588 = vpop.f32.mrf.mxu0
  %v1589 = vadd.f32 %v1476, %v1588
  %v1590 = vpop.f32.mrf.mxu0
  %v1591 = vadd.f32 %v1478, %v1590
  %1592 = vmatprep.mubr.bf16.mxu0 %v452
  %1593 = vmatmul.mubr.bf16.gmra.mxu0 %v451
  %v1594 = vpop.f32.mrf.mxu0
  %v1595 = vadd.f32 %v1482, %v1594
  %v1596 = vpop.f32.mrf.mxu0
  %v1597 = vadd.f32 %v1484, %v1596
  %v1598 = vpop.f32.mrf.mxu0
  %v1599 = vadd.f32 %v1486, %v1598
  %v1600 = vpop.f32.mrf.mxu0
  %v1601 = vadd.f32 %v1488, %v1600
  %1602 = vmatprep.mubr.bf16.mxu0 %v460
  %1603 = vmatmul.mubr.bf16.gmra.mxu0 %v459
  %v1604 = vpop.f32.mrf.mxu0
  %v1605 = vadd.f32 %v1492, %v1604
  %v1606 = vpop.f32.mrf.mxu0
  %v1607 = vadd.f32 %v1494, %v1606
  %v1608 = vpop.f32.mrf.mxu0
  %v1609 = vadd.f32 %v1496, %v1608
  %v1610 = vpop.f32.mrf.mxu0
  %v1611 = vadd.f32 %v1498, %v1610
  %1612 = vmatprep.mubr.bf16.mxu0 %v468
  %1613 = vmatmul.mubr.bf16.gmra.mxu0 %v467
  %v1614 = vpop.f32.mrf.mxu0
  %v1615 = vadd.f32 %v1502, %v1614
  %v1616 = vpop.f32.mrf.mxu0
  %v1617 = vadd.f32 %v1504, %v1616
  %v1618 = vpop.f32.mrf.mxu0
  %v1619 = vadd.f32 %v1506, %v1618
  %v1620 = vpop.f32.mrf.mxu0
  %v1621 = vadd.f32 %v1508, %v1620
  %1622 = vmatprep.mubr.bf16.mxu0 %v476
  %1623 = vmatmul.mubr.bf16.gmra.mxu0 %v475
  %v1624 = vpop.f32.mrf.mxu0
  %v1625 = vadd.f32 %v1512, %v1624
  %v1626 = vpop.f32.mrf.mxu0
  %v1627 = vadd.f32 %v1514, %v1626
  %v1628 = vpop.f32.mrf.mxu0
  %v1629 = vadd.f32 %v1516, %v1628
  %v1630 = vpop.f32.mrf.mxu0
  %v1631 = vadd.f32 %v1518, %v1630
  %1632 = vdwg.mxu0
  %v1633 = vld [vmem:[%s3] sm:$0xff]
  %v1634 = vld [vmem:[%s3 + $0x8] sm:$0xff]
  %v1635 = vld [vmem:[%s3 + $0x10] sm:$0xff]
  %v1636 = vld [vmem:[%s3 + $0x18] sm:$0xff]
  %v1637 = vld [vmem:[%s3 + $0x20] sm:$0xff]
  %v1638 = vld [vmem:[%s3 + $0x28] sm:$0xff]
  %v1639 = vld [vmem:[%s3 + $0x30] sm:$0xff]
  %v1640 = vld [vmem:[%s3 + $0x38] sm:$0xff]
  %v1641 = vld [vmem:[%s3 + $0x40] sm:$0xff]
  %v1642 = vld [vmem:[%s3 + $0x48] sm:$0xff]
  %v1643 = vld [vmem:[%s3 + $0x50] sm:$0xff]
  %v1644 = vld [vmem:[%s3 + $0x58] sm:$0xff]
  %v1645 = vld [vmem:[%s3 + $0x60] sm:$0xff]
  %v1646 = vld [vmem:[%s3 + $0x68] sm:$0xff]
  %v1647 = vld [vmem:[%s3 + $0x70] sm:$0xff]
  %v1648 = vld [vmem:[%s3 + $0x78] sm:$0xff]
  %v1649 = vld [vmem:[%s3 + $0x80] sm:$0xff]
  %v1650 = vld [vmem:[%s3 + $0x88] sm:$0xff]
  %v1651 = vld [vmem:[%s3 + $0x90] sm:$0xff]
  %v1652 = vld [vmem:[%s3 + $0x98] sm:$0xff]
  %v1653 = vld [vmem:[%s3 + $0xa0] sm:$0xff]
  %v1654 = vld [vmem:[%s3 + $0xa8] sm:$0xff]
  %v1655 = vld [vmem:[%s3 + $0xb0] sm:$0xff]
  %v1656 = vld [vmem:[%s3 + $0xb8] sm:$0xff]
  %v1657 = vld [vmem:[%s3 + $0xc0] sm:$0xff]
  %v1658 = vld [vmem:[%s3 + $0xc8] sm:$0xff]
  %v1659 = vld [vmem:[%s3 + $0xd0] sm:$0xff]
  %v1660 = vld [vmem:[%s3 + $0xd8] sm:$0xff]
  %v1661 = vld [vmem:[%s3 + $0xe0] sm:$0xff]
  %v1662 = vld [vmem:[%s3 + $0xe8] sm:$0xff]
  %v1663 = vld [vmem:[%s3 + $0xf0] sm:$0xff]
  %v1664 = vld [vmem:[%s3 + $0xf8] sm:$0xff]
  %v1665 = vadd.f32 %v1555, %v1633
  %v1666 = vadd.f32 %v1557, %v1634
  %v1667 = vadd.f32 %v1559, %v1635
  %v1668 = vadd.f32 %v1561, %v1636
  %v1669 = vadd.f32 %v1565, %v1637
  %v1670 = vadd.f32 %v1567, %v1638
  %v1671 = vadd.f32 %v1569, %v1639
  %v1672 = vadd.f32 %v1571, %v1640
  %v1673 = vadd.f32 %v1575, %v1641
  %v1674 = vadd.f32 %v1577, %v1642
  %v1675 = vadd.f32 %v1579, %v1643
  %v1676 = vadd.f32 %v1581, %v1644
  %v1677 = vadd.f32 %v1585, %v1645
  %v1678 = vadd.f32 %v1587, %v1646
  %v1679 = vadd.f32 %v1589, %v1647
  %v1680 = vadd.f32 %v1591, %v1648
  %v1681 = vadd.f32 %v1595, %v1649
  %v1682 = vadd.f32 %v1597, %v1650
  %v1683 = vadd.f32 %v1599, %v1651
  %v1684 = vadd.f32 %v1601, %v1652
  %v1685 = vadd.f32 %v1605, %v1653
  %v1686 = vadd.f32 %v1607, %v1654
  %v1687 = vadd.f32 %v1609, %v1655
  %v1688 = vadd.f32 %v1611, %v1656
  %v1689 = vadd.f32 %v1615, %v1657
  %v1690 = vadd.f32 %v1617, %v1658
  %v1691 = vadd.f32 %v1619, %v1659
  %v1692 = vadd.f32 %v1621, %v1660
  %v1693 = vadd.f32 %v1625, %v1661
  %v1694 = vadd.f32 %v1627, %v1662
  %v1695 = vadd.f32 %v1629, %v1663
  %v1696 = vadd.f32 %v1631, %v1664
  %1697 = vst [vmem:[%s4] sm:$0xff] %v1665
  %1698 = vst [vmem:[%s4 + $0x8] sm:$0xff] %v1666
  %1699 = vst [vmem:[%s4 + $0x10] sm:$0xff] %v1667
  %1700 = vst [vmem:[%s4 + $0x18] sm:$0xff] %v1668
  %1701 = vst [vmem:[%s4 + $0x20] sm:$0xff] %v1669
  %1702 = vst [vmem:[%s4 + $0x28] sm:$0xff] %v1670
  %1703 = vst [vmem:[%s4 + $0x30] sm:$0xff] %v1671
  %1704 = vst [vmem:[%s4 + $0x38] sm:$0xff] %v1672
  %1705 = vst [vmem:[%s4 + $0x40] sm:$0xff] %v1673
  %1706 = vst [vmem:[%s4 + $0x48] sm:$0xff] %v1674
  %1707 = vst [vmem:[%s4 + $0x50] sm:$0xff] %v1675
  %1708 = vst [vmem:[%s4 + $0x58] sm:$0xff] %v1676
  %1709 = vst [vmem:[%s4 + $0x60] sm:$0xff] %v1677
  %1710 = vst [vmem:[%s4 + $0x68] sm:$0xff] %v1678
  %1711 = vst [vmem:[%s4 + $0x70] sm:$0xff] %v1679
  %1712 = vst [vmem:[%s4 + $0x78] sm:$0xff] %v1680
  %1713 = vst [vmem:[%s4 + $0x80] sm:$0xff] %v1681
  %1714 = vst [vmem:[%s4 + $0x88] sm:$0xff] %v1682
  %1715 = vst [vmem:[%s4 + $0x90] sm:$0xff] %v1683
  %1716 = vst [vmem:[%s4 + $0x98] sm:$0xff] %v1684
  %1717 = vst [vmem:[%s4 + $0xa0] sm:$0xff] %v1685
  %1718 = vst [vmem:[%s4 + $0xa8] sm:$0xff] %v1686
  %1719 = vst [vmem:[%s4 + $0xb0] sm:$0xff] %v1687
  %1720 = vst [vmem:[%s4 + $0xb8] sm:$0xff] %v1688
  %1721 = vst [vmem:[%s4 + $0xc0] sm:$0xff] %v1689
  %1722 = vst [vmem:[%s4 + $0xc8] sm:$0xff] %v1690
  %1723 = vst [vmem:[%s4 + $0xd0] sm:$0xff] %v1691
  %1724 = vst [vmem:[%s4 + $0xd8] sm:$0xff] %v1692
  %1725 = vst [vmem:[%s4 + $0xe0] sm:$0xff] %v1693
  %1726 = vst [vmem:[%s4 + $0xe8] sm:$0xff] %v1694
  %1727 = vst [vmem:[%s4 + $0xf0] sm:$0xff] %v1695
  %1728 = vst [vmem:[%s4 + $0xf8] sm:$0xff] %v1696
  // Predicated region
  $region18: #{encode.22} parent=0 // pred_check
    _
  $region19: #{encode.22} parent=0 // pred_check_branch
    %1730 = sbr.rel (0) target = $region21
  $region20: #{encode.22} parent=0 // pred_region
    _
  $region21: #{encode.22} parent=0 // pred_fallthru
    _
  // Predicated region
  $region22: #{encode.22} parent=0 // pred_check
    _
  $region23: #{encode.22} parent=0 // pred_check_branch
    %1732 = sbr.rel (0) target = $region25
  $region24: #{encode.22} parent=0 // pred_region
    _
  $region25: #{encode.22} parent=0 // pred_fallthru
    _

// kernel: encode.25
$region0: #{encode.25}
  #allocation0 [shape = 'u32[]', space=smem, size = 0x4, offset = 0x4, fixed_abs, tag = 'smem constant byte address 0x4 - core index']
  #allocation1 [shape = 'u32[144,128]{1,0:T(1,128)}', space=vmem, size = 0x12000, scoped, tag = 'internal scratch']
  %s0 = inlined_call_operand.vmem [shape: bf16[64,16,32], index: 0, kind: input, shape index: {}]
  %s1 = inlined_call_operand.vmem [shape: bf16[64,16,32], index: 1, kind: input, shape index: {}]
  %s2 = inlined_call_operand.vmem [shape: bf16[64,16,32], index: 2, kind: input, shape index: {}]
  %s3 = inlined_call_operand.vmem [shape: f32[64,16,16], index: 3, kind: input, shape index: {}]
  %s4 = inlined_call_operand.vmem [shape: f32[64,16,32], index: 4, kind: output, shape index: {}]
  %s5 = sld [smem:[#allocation0]]
  $region49: #{encode.25} parent=0
    _
  %s7 = ssub.s32 1, %s5
  %s8 = scalar_select 0, %s7, %s5
  loop: start=0, step=1, limit=66
  $region2: #{encode.25} parent=0 // loop_pre_header
    _
  $region3: #{encode.25} parent=0 // loop_header
    %s10 = sphi 0, %s14
    %p11 = scmp.ge.s32.totalorder %s10, 66
    %s20 = sphi 0, %s22
    %s23 = sphi 0, %s20
    %s24 = sphi 0, %s23
    %s40 = sphi 0, %s24
    %s46 = sphi 0, %s48
    %s49 = sphi 0, %s46
    %s50 = sphi 0, %s49
    %s66 = sphi 0, %s50
    %s72 = sphi 0, %s74
    %s75 = sphi 0, %s72
    %s76 = sphi 0, %s75
    %s92 = sphi 0, %s76
    %s98 = sphi 0, %s100
    %s101 = sphi 0, %s98
    %s102 = sphi 0, %s101
    %s118 = sphi 0, %s102
    %s124 = sphi 0, %s126
    %s127 = sphi 0, %s124
    %s128 = sphi 0, %s127
    %s144 = sphi 0, %s128
  $region4: #{encode.25} parent=0 // loop_header_branch
    %13 = sbr.rel (%p11) target = $region8
  $region5: #{encode.25} parent=0 // loop_body
    %s15 = ssub.s32 %s10, 1
    %s16 = ssub.s32 %s10, 2
    %s17 = sadd.s32 %s10, 1
    %s18 = ssub.s32 %s10, %s17
    %p19 = scmp.eq.s32.totalorder %s18, 0
    %s21 = sadd.s32 %s20, 1
    %s22 = scalar_select %p19, %s20, %s21
    %p25 = pneg %p19
    %p26 = scmp.eq.s32.totalorder %s10, 63
    %p27 = por %p25, %p26
    %p28 = scmp.ne.s32.totalorder %s20, %s23
    %p29 = scmp.eq.s32.totalorder %s10, 0
    %p30 = por %p28, %p29
    %p31 = scmp.ne.s32.totalorder %s20, %s23
    %p32 = scmp.eq.s32.totalorder %s15, 63
    %p33 = por %p31, %p32
    %p34 = scmp.ne.s32.totalorder %s23, %s24
    %p35 = scmp.eq.s32.totalorder %s15, 0
    %p36 = por %p34, %p35
    %p37 = scmp.ne.s32.totalorder %s23, %s24
    %p38 = scmp.eq.s32.totalorder %s16, 63
    %p39 = por %p37, %p38
    %p41 = scmp.ne.s32.totalorder %s24, %s40
    %p42 = scmp.eq.s32.totalorder %s16, 0
    %p43 = por %p41, %p42
    %s44 = ssub.s32 %s10, %s17
    %p45 = scmp.eq.s32.totalorder %s44, 0
    %s47 = sadd.s32 %s46, 1
    %s48 = scalar_select %p45, %s46, %s47
    %p51 = pneg %p45
    %p52 = scmp.eq.s32.totalorder %s10, 63
    %p53 = por %p51, %p52
    %p54 = scmp.ne.s32.totalorder %s46, %s49
    %p55 = scmp.eq.s32.totalorder %s10, 0
    %p56 = por %p54, %p55
    %p57 = scmp.ne.s32.totalorder %s46, %s49
    %p58 = scmp.eq.s32.totalorder %s15, 63
    %p59 = por %p57, %p58
    %p60 = scmp.ne.s32.totalorder %s49, %s50
    %p61 = scmp.eq.s32.totalorder %s15, 0
    %p62 = por %p60, %p61
    %p63 = scmp.ne.s32.totalorder %s49, %s50
    %p64 = scmp.eq.s32.totalorder %s16, 63
    %p65 = por %p63, %p64
    %p67 = scmp.ne.s32.totalorder %s50, %s66
    %p68 = scmp.eq.s32.totalorder %s16, 0
    %p69 = por %p67, %p68
    %s70 = ssub.s32 %s10, %s17
    %p71 = scmp.eq.s32.totalorder %s70, 0
    %s73 = sadd.s32 %s72, 1
    %s74 = scalar_select %p71, %s72, %s73
    %p77 = pneg %p71
    %p78 = scmp.eq.s32.totalorder %s10, 63
    %p79 = por %p77, %p78
    %p80 = scmp.ne.s32.totalorder %s72, %s75
    %p81 = scmp.eq.s32.totalorder %s10, 0
    %p82 = por %p80, %p81
    %p83 = scmp.ne.s32.totalorder %s72, %s75
    %p84 = scmp.eq.s32.totalorder %s15, 63
    %p85 = por %p83, %p84
    %p86 = scmp.ne.s32.totalorder %s75, %s76
    %p87 = scmp.eq.s32.totalorder %s15, 0
    %p88 = por %p86, %p87
    %p89 = scmp.ne.s32.totalorder %s75, %s76
    %p90 = scmp.eq.s32.totalorder %s16, 63
    %p91 = por %p89, %p90
    %p93 = scmp.ne.s32.totalorder %s76, %s92
    %p94 = scmp.eq.s32.totalorder %s16, 0
    %p95 = por %p93, %p94
    %s96 = ssub.s32 %s10, %s17
    %p97 = scmp.eq.s32.totalorder %s96, 0
    %s99 = sadd.s32 %s98, 1
    %s100 = scalar_select %p97, %s98, %s99
    %p103 = pneg %p97
    %p104 = scmp.eq.s32.totalorder %s10, 63
    %p105 = por %p103, %p104
    %p106 = scmp.ne.s32.totalorder %s98, %s101
    %p107 = scmp.eq.s32.totalorder %s10, 0
    %p108 = por %p106, %p107
    %p109 = scmp.ne.s32.totalorder %s98, %s101
    %p110 = scmp.eq.s32.totalorder %s15, 63
    %p111 = por %p109, %p110
    %p112 = scmp.ne.s32.totalorder %s101, %s102
    %p113 = scmp.eq.s32.totalorder %s15, 0
    %p114 = por %p112, %p113
    %p115 = scmp.ne.s32.totalorder %s101, %s102
    %p116 = scmp.eq.s32.totalorder %s16, 63
    %p117 = por %p115, %p116
    %p119 = scmp.ne.s32.totalorder %s102, %s118
    %p120 = scmp.eq.s32.totalorder %s16, 0
    %p121 = por %p119, %p120
    %s122 = ssub.s32 %s10, %s17
    %p123 = scmp.eq.s32.totalorder %s122, 0
    %s125 = sadd.s32 %s124, 1
    %s126 = scalar_select %p123, %s124, %s125
    %p129 = pneg %p123
    %p130 = scmp.eq.s32.totalorder %s10, 63
    %p131 = por %p129, %p130
    %p132 = scmp.ne.s32.totalorder %s124, %s127
    %p133 = scmp.eq.s32.totalorder %s10, 0
    %p134 = por %p132, %p133
    %p135 = scmp.ne.s32.totalorder %s124, %s127
    %p136 = scmp.eq.s32.totalorder %s15, 63
    %p137 = por %p135, %p136
    %p138 = scmp.ne.s32.totalorder %s127, %s128
    %p139 = scmp.eq.s32.totalorder %s15, 0
    %p140 = por %p138, %p139
    %p141 = scmp.ne.s32.totalorder %s127, %s128
    %p142 = scmp.eq.s32.totalorder %s16, 63
    %p143 = por %p141, %p142
    %p145 = scmp.ne.s32.totalorder %s128, %s144
    %p146 = scmp.eq.s32.totalorder %s16, 0
    %p147 = por %p145, %p146
    %p148 = scmp.le.s32.totalorder 1, %s10
    %p149 = scmp.lt.s32.totalorder %s10, 65
    %p150 = pnand %p148, %p149
    %p151 = pneg %p150
    // Predicated region
    $region9: #{encode.25} parent=5 // pred_check
      _
    $region10: #{encode.25} parent=5 // pred_check_branch
      %153 = sbr.rel (%p150) target = $region12
    $region11: #{encode.25} parent=5 // pred_region
      %s154 = ssub.s32 %s10, 1
    $region12: #{encode.25} parent=5 // pred_fallthru
      _
    %p155 = scmp.lt.s32.totalorder %s10, 64
    // Predicated region
    $region13: #{encode.25} parent=5 // pred_check
      %p156 = pneg %p155
    $region14: #{encode.25} parent=5 // pred_check_branch
      %158 = sbr.rel (%p156) target = $region16
    $region15: #{encode.25} parent=5 // pred_region
      // Predicated region
      $region17: #{encode.25} parent=15 // pred_check
        %p159 = pneg %p30
      $region18: #{encode.25} parent=15 // pred_check_branch
        %161 = sbr.rel (%p159) target = $region20
      $region19: #{encode.25} parent=15 // pred_region
        %p162 = scmp.lt.s32.totalorder %s10, 63
        %s163 = scalar_select %p162, %s10, 63
        %s164 = smul.addr %s163, 2
        %s165 = smul.addr %s164, 4
        %s166 = scalar_lea.vmem %s0, %s165
      $region20: #{encode.25} parent=15 // pred_fallthru
        _
      // Predicated region
      $region21: #{encode.25} parent=15 // pred_check
        %p167 = pneg %p56
      $region22: #{encode.25} parent=15 // pred_check_branch
        %169 = sbr.rel (%p167) target = $region24
      $region23: #{encode.25} parent=15 // pred_region
        %p170 = scmp.lt.s32.totalorder %s10, 63
        %s171 = scalar_select %p170, %s10, 63
        %s172 = smul.addr %s171, 2
        %s173 = smul.addr %s172, 4
        %s174 = scalar_lea.vmem %s1, %s173
      $region24: #{encode.25} parent=15 // pred_fallthru
        _
      // Predicated region
      $region25: #{encode.25} parent=15 // pred_check
        %p175 = pneg %p82
      $region26: #{encode.25} parent=15 // pred_check_branch
        %177 = sbr.rel (%p175) target = $region28
      $region27: #{encode.25} parent=15 // pred_region
        %p178 = scmp.lt.s32.totalorder %s10, 63
        %s179 = scalar_select %p178, %s10, 63
        %s180 = smul.addr %s179, 2
        %s181 = smul.addr %s180, 4
        %s182 = scalar_lea.vmem %s2, %s181
      $region28: #{encode.25} parent=15 // pred_fallthru
        _
      // Predicated region
      $region29: #{encode.25} parent=15 // pred_check
        %p183 = pneg %p108
      $region30: #{encode.25} parent=15 // pred_check_branch
        %185 = sbr.rel (%p183) target = $region32
      $region31: #{encode.25} parent=15 // pred_region
        %p186 = scmp.lt.s32.totalorder %s10, 63
        %s187 = scalar_select %p186, %s10, 63
        %s188 = smul.addr %s187, 2
        %s189 = smul.addr %s188, 8
        %s190 = scalar_lea.vmem %s3, %s189
      $region32: #{encode.25} parent=15 // pred_fallthru
        _
    $region16: #{encode.25} parent=5 // pred_fallthru
      _
    %p191 = scmp.le.s32.totalorder 1, %s10
    %p192 = scmp.lt.s32.totalorder %s10, 65
    %p193 = pnand %p191, %p192
    %p194 = pneg %p193
    // Predicated region
    $region33: #{encode.25} parent=5 // pred_check
      _
    $region34: #{encode.25} parent=5 // pred_check_branch
      %196 = sbr.rel (%p193) target = $region36
    $region35: #{encode.25} parent=5 // pred_region
      %s197 = ssub.s32 %s10, 1
      %p198 = scmp.lt.s32.totalorder %s15, 63
      %s199 = scalar_select %p198, %s15, 63
      %s200 = smul.addr %s199, 2
      %s201 = smul.addr %s200, 4
      %s202 = scalar_lea.vmem %s0, %s201
      %p203 = pneg %p36
      %p204 = pneg %p33
      %p205 = scmp.lt.s32.totalorder %s15, 63
      %s206 = scalar_select %p205, %s15, 63
      %s207 = smul.addr %s206, 2
      %s208 = smul.addr %s207, 4
      %s209 = scalar_lea.vmem %s1, %s208
      %p210 = pneg %p62
      %p211 = pneg %p59
      %p212 = scmp.lt.s32.totalorder %s15, 63
      %s213 = scalar_select %p212, %s15, 63
      %s214 = smul.addr %s213, 2
      %s215 = smul.addr %s214, 4
      %s216 = scalar_lea.vmem %s2, %s215
      %p217 = pneg %p88
      %p218 = pneg %p85
      %p219 = scmp.lt.s32.totalorder %s15, 63
      %s220 = scalar_select %p219, %s15, 63
      %s221 = smul.addr %s220, 2
      %s222 = smul.addr %s221, 8
      %s223 = scalar_lea.vmem %s3, %s222
      %p224 = pneg %p114
      %p225 = pneg %p111
      %p226 = pneg %p140
      %p227 = pneg %p137
      %p228 = scmp.lt.s32.totalorder %s15, 63
      %s229 = scalar_select %p228, %s15, 63
      %s230 = smul.addr %s229, 2
      %s231 = smul.addr %s230, 8
      %s232 = scalar_lea.vmem %s4, %s231
      %p233 = scmp.lt.s32.totalorder %s15, 63
      %s234 = scalar_select %p233, %s15, 63
      %s235 = smul.addr %s234, 2
      %s236 = smul.addr %s235, 4
      %s237 = scalar_lea.vmem %s0, %s236
      %p238 = scmp.lt.s32.totalorder %s15, 63
      %s239 = scalar_select %p238, %s15, 63
      %s240 = smul.addr %s239, 2
      %s241 = smul.addr %s240, 4
      %s242 = scalar_lea.vmem %s1, %s241
      %p243 = scmp.lt.s32.totalorder %s15, 63
      %s244 = scalar_select %p243, %s15, 63
      %s245 = smul.addr %s244, 2
      %s246 = smul.addr %s245, 4
      %s247 = scalar_lea.vmem %s2, %s246
      %p248 = scmp.lt.s32.totalorder %s15, 63
      %s249 = scalar_select %p248, %s15, 63
      %s250 = smul.addr %s249, 2
      %s251 = smul.addr %s250, 8
      %s252 = scalar_lea.vmem %s3, %s251
      %p253 = scmp.lt.s32.totalorder %s15, 63
      %s254 = scalar_select %p253, %s15, 63
      %s255 = smul.addr %s254, 2
      %s256 = smul.addr %s255, 8
      %s257 = scalar_lea.vmem %s4, %s256
      %v259 = vld [vmem:[%s237] sm:$0xf]
      %v260 = vld [vmem:[%s237 + $0x4] sm:$0xf]
      %v261 = vld [vmem:[%s242] sm:$0xf]
      %v262 = vld [vmem:[%s242 + $0x4] sm:$0xf]
      %v265 = vunpack.c.l.b16 %v259
      %v266 = vunpack.c.l.b16 %v260
      %v267 = vpack.c.b16 %v266, %v265
      %v270 = vunpack.c.l.b16 %v261
      %v271 = vunpack.c.l.b16 %v262
      %v272 = vpack.c.b16 %v271, %v270
      %vm273 = vcmask 261120
      %v275 = vsel %vm273, %v267, 0
      %v278 = vsel %vm273, %v272, 0
      %280 = vmatprep.subr.bf16.mxu0 0
      %281 = vmatpush1.bf16.xpose.msra.mxu0 0
      %282 = vmatprep.subr.bf16.mxu0 0
      %283 = vmatpush1.bf16.xpose.msra.mxu0 0
      %284 = vmatprep.subr.bf16.mxu0 0
      %285 = vmatpush1.bf16.xpose.msra.mxu0 0
      %286 = vmatprep.subr.bf16.mxu0 0
      %287 = vmatpush1.bf16.xpose.msra.mxu0 0
      %288 = vmatprep.subr.bf16.mxu0 0
      %289 = vmatpush1.bf16.xpose.msra.mxu0 0
      %290 = vmatprep.subr.bf16.mxu0 0
      %291 = vmatpush1.bf16.xpose.msra.mxu0 0
      %292 = vmatprep.subr.bf16.mxu0 0
      %293 = vmatpush1.bf16.xpose.msra.mxu0 0
      %294 = vmatprep.subr.bf16.mxu0 0
      %295 = vmatpush1.bf16.xpose.msra.mxu0 %v278
      %296 = vmatprep.subr.bf16.mxu0 0
      %297 = vmatpush2.bf16.xpose.msra.mxu0 0
      %298 = vmatprep.subr.bf16.mxu0 0
      %299 = vmatpush2.bf16.xpose.msra.mxu0 0
      %300 = vmatprep.subr.bf16.mxu0 0
      %301 = vmatpush2.bf16.xpose.msra.mxu0 0
      %302 = vmatprep.subr.bf16.mxu0 0
      %303 = vmatpush2.bf16.xpose.msra.mxu0 0
      %304 = vmatprep.subr.bf16.mxu0 0
      %305 = vmatpush2.bf16.xpose.msra.mxu0 0
      %306 = vmatprep.subr.bf16.mxu0 0
      %307 = vmatpush2.bf16.xpose.msra.mxu0 0
      %308 = vmatprep.subr.bf16.mxu0 0
      %309 = vmatpush2.bf16.xpose.msra.mxu0 0
      %310 = vmatprep.subr.bf16.mxu0 0
      %311 = vmatpush2.bf16.xpose.msra.mxu0 0
      %312 = vmatprep.mubr.bf16.mxu0 0
      %313 = vmatmul.mubr.bf16.gmra.mxu0 %v275
      %v314 = vpop.f32.mrf.mxu0
      %v315 = vadd.f32 0.0, %v314
      %v316 = vpop.f32.mrf.mxu0
      %v317 = vpop.f32.mrf.mxu0
      %v318 = vadd.f32 0.0, %v317
      %v319 = vpop.f32.mrf.mxu0
      %320 = vdwg.mxu0
      %v321 = vmul.f32 %v315, 0.17677669
      %v322 = vmul.f32 %v318, 0.17677669
      %v323 = vld [vmem:[%s252] sm:$0xff]
      %v324 = vld [vmem:[%s252 + $0x8] sm:$0xff]
      %v325 = vadd.f32 %v321, %v323
      %v326 = vadd.f32 %v322, %v324
      %vm327 = vcmask 130048
      %v328 = vsel %vm327, %v325, -inf
      %329 = vmax.xlane.f32.xlu0 %v328
      %v330 = vpop.xlane.xlu0 %329
      %v331 = vsel %vm327, %v326, -inf
      %332 = vmax.xlane.f32.xlu0 %v331
      %v333 = vpop.xlane.xlu0 %332
      %v334 = vsub.f32 %v325, %v330
      %v335 = vsub.f32 %v326, %v333
      %v336 = vmul.f32 %v334, 1.442695
      %v337 = vpow.pop %v336
      %v338 = vmul.f32 %v335, 1.442695
      %v339 = vpow.pop %v338
      %v340 = vsel %vm327, %v337, 0.0
      %341 = vadd.xlane.f32.xlu0 %v340
      %v342 = vpop.xlane.xlu0 %341
      %v343 = vsel %vm327, %v339, 0.0
      %344 = vadd.xlane.f32.xlu0 %v343
      %v345 = vpop.xlane.xlu0 %344
      %v346 = vrcp.pop %v342
      %v347 = vmul.f32 %v337, %v346
      %v348 = vrcp.pop %v345
      %v349 = vmul.f32 %v339, %v348
      %v350 = vpack.c.bf16 %v349, %v347
      %v351 = vld [vmem:[%s247] sm:$0xf]
      %v352 = vld [vmem:[%s247 + $0x4] sm:$0xf]
      %v355 = vunpack.c.l.b16 %v351
      %v356 = vunpack.c.l.b16 %v352
      %v357 = vpack.c.b16 %v356, %v355
      %v360 = vsel %vm327, %v350, 0
      %362 = vmatprep.subr.bf16.mxu0 0
      %363 = vmatpush1.bf16.msra.mxu0 0
      %364 = vmatprep.subr.bf16.mxu0 0
      %365 = vmatpush1.bf16.msra.mxu0 0
      %366 = vmatprep.subr.bf16.mxu0 0
      %367 = vmatpush1.bf16.msra.mxu0 0
      %368 = vmatprep.subr.bf16.mxu0 0
      %369 = vmatpush1.bf16.msra.mxu0 0
      %370 = vmatprep.subr.bf16.mxu0 0
      %371 = vmatpush1.bf16.msra.mxu0 0
      %372 = vmatprep.subr.bf16.mxu0 0
      %373 = vmatpush1.bf16.msra.mxu0 0
      %374 = vmatprep.subr.bf16.mxu0 0
      %375 = vmatpush1.bf16.msra.mxu0 0
      %376 = vmatprep.subr.bf16.mxu0 0
      %377 = vmatpush1.bf16.msra.mxu0 %v357
      %378 = vmatprep.subr.bf16.mxu0 0
      %379 = vmatpush2.bf16.msra.mxu0 0
      %380 = vmatprep.subr.bf16.mxu0 0
      %381 = vmatpush2.bf16.msra.mxu0 0
      %382 = vmatprep.subr.bf16.mxu0 0
      %383 = vmatpush2.bf16.msra.mxu0 0
      %384 = vmatprep.subr.bf16.mxu0 0
      %385 = vmatpush2.bf16.msra.mxu0 0
      %386 = vmatprep.subr.bf16.mxu0 0
      %387 = vmatpush2.bf16.msra.mxu0 0
      %388 = vmatprep.subr.bf16.mxu0 0
      %389 = vmatpush2.bf16.msra.mxu0 0
      %390 = vmatprep.subr.bf16.mxu0 0
      %391 = vmatpush2.bf16.msra.mxu0 0
      %392 = vmatprep.subr.bf16.mxu0 0
      %393 = vmatpush2.bf16.msra.mxu0 0
      %394 = vmatprep.mubr.bf16.mxu0 0
      %395 = vmatmul.mubr.bf16.gmra.mxu0 %v360
      %v396 = vpop.f32.mrf.mxu0
      %v397 = vadd.f32 0.0, %v396
      %v398 = vpop.f32.mrf.mxu0
      %v399 = vpop.f32.mrf.mxu0
      %v400 = vadd.f32 0.0, %v399
      %v401 = vpop.f32.mrf.mxu0
      %402 = vdwg.mxu0
      %403 = vst.msk [vmem:[%s257] sm:$0xff] %vm273, %v397
      %404 = vst.msk [vmem:[%s257 + $0x8] sm:$0xff] %vm273, %v400
      %p405 = scmp.lt.s32.totalorder %s15, 63
      %s406 = scalar_select %p405, %s15, 63
      %s407 = smul.addr %s406, 2
      %s408 = smul.addr %s407, 8
      %s409 = scalar_lea.vmem %s4, %s408
      // Predicated region
      $region37: #{encode.25} parent=35 // pred_check
        %p410 = pneg %p137
      $region38: #{encode.25} parent=35 // pred_check_branch
        %412 = sbr.rel (%p410) target = $region40
      $region39: #{encode.25} parent=35 // pred_region
        _
      $region40: #{encode.25} parent=35 // pred_fallthru
        _
    $region36: #{encode.25} parent=5 // pred_fallthru
      _
    %p413 = scmp.le.s32.totalorder 2, %s10
    // Predicated region
    $region41: #{encode.25} parent=5 // pred_check
      %p414 = pneg %p413
    $region42: #{encode.25} parent=5 // pred_check_branch
      %416 = sbr.rel (%p414) target = $region44
    $region43: #{encode.25} parent=5 // pred_region
      %s417 = ssub.s32 %s10, 2
      // Predicated region
      $region45: #{encode.25} parent=43 // pred_check
        %p418 = pneg %p143
      $region46: #{encode.25} parent=43 // pred_check_branch
        %420 = sbr.rel (%p418) target = $region48
      $region47: #{encode.25} parent=43 // pred_region
        %p421 = scmp.lt.s32.totalorder %s16, 63
        %s422 = scalar_select %p421, %s16, 63
        %s423 = smul.addr %s422, 2
        %s424 = smul.addr %s423, 8
        %s425 = scalar_lea.vmem %s4, %s424
      $region48: #{encode.25} parent=43 // pred_fallthru
        _
    $region44: #{encode.25} parent=5 // pred_fallthru
      _
  $region6: #{encode.25} parent=0 // loop_footer
    %s14 = sadd.s32 1, %s10
  $region7: #{encode.25} parent=0 // loop_footer_branch
    %9 = sbr.rel target = $region3
  $region8: #{encode.25} parent=0 // loop_exit
    _

// kernel: encode.29
$region0: #{encode.29}
  #allocation0 [shape = 'u32[]', space=smem, size = 0x4, offset = 0x4, fixed_abs, tag = 'smem constant byte address 0x4 - core index']
  #allocation1 [shape = 'u32[144,128]{1,0:T(1,128)}', space=vmem, size = 0x12000, scoped, tag = 'internal scratch']
  %s0 = inlined_call_operand.vmem [shape: bf16[128,1024], index: 0, kind: input, shape index: {}]
  %s1 = inlined_call_operand.vmem [shape: bf16[1024,256], index: 1, kind: input, shape index: {}]
  %s2 = inlined_call_operand.vmem [shape: f32[1,256], index: 2, kind: input, shape index: {}]
  %s3 = inlined_call_operand.vmem [shape: f32[128,256], index: 3, kind: input, shape index: {}]
  %s4 = inlined_call_operand.hbm [shape: f32[128,256], index: 4, kind: output, shape index: {}]
  %s5 = sld [smem:[#allocation0]]
  $region26: #{encode.29} parent=0
    _
  %s7 = ssub.s32 1, %s5
  %s8 = scalar_select 0, %s7, %s5
  $region1: #{encode.29} parent=0
    #allocation2 [shape = 'u8[131072]{0}', space=vmem, size = 0x20000, scoped, tag = 'output window, operand 0, single buffered']
    #allocation3 [shape = 's32[1]{0}', space=sflag, size = 0x4, scoped, tag = 'scoped memory for encode.29']
    %9 = vsyncpa [#allocation3], 0
    // Predicated region
    $region2: #{encode.29} parent=1 // pred_check
      _
    $region3: #{encode.29} parent=1 // pred_check_branch
      %11 = sbr.rel (0) target = $region5
    $region4: #{encode.29} parent=1 // pred_region
      _
    $region5: #{encode.29} parent=1 // pred_fallthru
      _
    // Predicated region
    $region6: #{encode.29} parent=1 // pred_check
      _
    $region7: #{encode.29} parent=1 // pred_check_branch
      %13 = sbr.rel (0) target = $region9
    $region8: #{encode.29} parent=1 // pred_region
      _
    $region9: #{encode.29} parent=1 // pred_fallthru
      _
    // Predicated region
    $region10: #{encode.29} parent=1 // pred_check
      _
    $region11: #{encode.29} parent=1 // pred_check_branch
      %15 = sbr.rel (0) target = $region13
    $region12: #{encode.29} parent=1 // pred_region
      _
    $region13: #{encode.29} parent=1 // pred_fallthru
      _
    // Predicated region
    $region14: #{encode.29} parent=1 // pred_check
      _
    $region15: #{encode.29} parent=1 // pred_check_branch
      %17 = sbr.rel (0) target = $region17
    $region16: #{encode.29} parent=1 // pred_region
      _
    $region17: #{encode.29} parent=1 // pred_fallthru
      _
    %v18 = vld [vmem:[%s0] sm:$0xff]
    %v19 = vld [vmem:[%s0 + $0x8] sm:$0xff]
    %v20 = vld [vmem:[%s0 + $0x10] sm:$0xff]
    %v21 = vld [vmem:[%s0 + $0x18] sm:$0xff]
    %v22 = vld [vmem:[%s0 + $0x20] sm:$0xff]
    %v23 = vld [vmem:[%s0 + $0x28] sm:$0xff]
    %v24 = vld [vmem:[%s0 + $0x30] sm:$0xff]
    %v25 = vld [vmem:[%s0 + $0x38] sm:$0xff]
    %v26 = vld [vmem:[%s0 + $0x40] sm:$0xff]
    %v27 = vld [vmem:[%s0 + $0x48] sm:$0xff]
    %v28 = vld [vmem:[%s0 + $0x50] sm:$0xff]
    %v29 = vld [vmem:[%s0 + $0x58] sm:$0xff]
    %v30 = vld [vmem:[%s0 + $0x60] sm:$0xff]
    %v31 = vld [vmem:[%s0 + $0x68] sm:$0xff]
    %v32 = vld [vmem:[%s0 + $0x70] sm:$0xff]
    %v33 = vld [vmem:[%s0 + $0x78] sm:$0xff]
    %v34 = vld [vmem:[%s0 + $0x80] sm:$0xff]
    %v35 = vld [vmem:[%s0 + $0x88] sm:$0xff]
    %v36 = vld [vmem:[%s0 + $0x90] sm:$0xff]
    %v37 = vld [vmem:[%s0 + $0x98] sm:$0xff]
    %v38 = vld [vmem:[%s0 + $0xa0] sm:$0xff]
    %v39 = vld [vmem:[%s0 + $0xa8] sm:$0xff]
    %v40 = vld [vmem:[%s0 + $0xb0] sm:$0xff]
    %v41 = vld [vmem:[%s0 + $0xb8] sm:$0xff]
    %v42 = vld [vmem:[%s0 + $0xc0] sm:$0xff]
    %v43 = vld [vmem:[%s0 + $0xc8] sm:$0xff]
    %v44 = vld [vmem:[%s0 + $0xd0] sm:$0xff]
    %v45 = vld [vmem:[%s0 + $0xd8] sm:$0xff]
    %v46 = vld [vmem:[%s0 + $0xe0] sm:$0xff]
    %v47 = vld [vmem:[%s0 + $0xe8] sm:$0xff]
    %v48 = vld [vmem:[%s0 + $0xf0] sm:$0xff]
    %v49 = vld [vmem:[%s0 + $0xf8] sm:$0xff]
    %v50 = vld [vmem:[%s0 + $0x100] sm:$0xff]
    %v51 = vld [vmem:[%s0 + $0x108] sm:$0xff]
    %v52 = vld [vmem:[%s0 + $0x110] sm:$0xff]
    %v53 = vld [vmem:[%s0 + $0x118] sm:$0xff]
    %v54 = vld [vmem:[%s0 + $0x120] sm:$0xff]
    %v55 = vld [vmem:[%s0 + $0x128] sm:$0xff]
    %v56 = vld [vmem:[%s0 + $0x130] sm:$0xff]
    %v57 = vld [vmem:[%s0 + $0x138] sm:$0xff]
    %v58 = vld [vmem:[%s0 + $0x140] sm:$0xff]
    %v59 = vld [vmem:[%s0 + $0x148] sm:$0xff]
    %v60 = vld [vmem:[%s0 + $0x150] sm:$0xff]
    %v61 = vld [vmem:[%s0 + $0x158] sm:$0xff]
    %v62 = vld [vmem:[%s0 + $0x160] sm:$0xff]
    %v63 = vld [vmem:[%s0 + $0x168] sm:$0xff]
    %v64 = vld [vmem:[%s0 + $0x170] sm:$0xff]
    %v65 = vld [vmem:[%s0 + $0x178] sm:$0xff]
    %v66 = vld [vmem:[%s0 + $0x180] sm:$0xff]
    %v67 = vld [vmem:[%s0 + $0x188] sm:$0xff]
    %v68 = vld [vmem:[%s0 + $0x190] sm:$0xff]
    %v69 = vld [vmem:[%s0 + $0x198] sm:$0xff]
    %v70 = vld [vmem:[%s0 + $0x1a0] sm:$0xff]
    %v71 = vld [vmem:[%s0 + $0x1a8] sm:$0xff]
    %v72 = vld [vmem:[%s0 + $0x1b0] sm:$0xff]
    %v73 = vld [vmem:[%s0 + $0x1b8] sm:$0xff]
    %v74 = vld [vmem:[%s0 + $0x1c0] sm:$0xff]
    %v75 = vld [vmem:[%s0 + $0x1c8] sm:$0xff]
    %v76 = vld [vmem:[%s0 + $0x1d0] sm:$0xff]
    %v77 = vld [vmem:[%s0 + $0x1d8] sm:$0xff]
    %v78 = vld [vmem:[%s0 + $0x1e0] sm:$0xff]
    %v79 = vld [vmem:[%s0 + $0x1e8] sm:$0xff]
    %v80 = vld [vmem:[%s0 + $0x1f0] sm:$0xff]
    %v81 = vld [vmem:[%s0 + $0x1f8] sm:$0xff]
    %v82 = vld [vmem:[%s1] sm:$0xff]
    %v83 = vld [vmem:[%s1 + $0x8] sm:$0xff]
    %v84 = vld [vmem:[%s1 + $0x10] sm:$0xff]
    %v85 = vld [vmem:[%s1 + $0x18] sm:$0xff]
    %v86 = vld [vmem:[%s1 + $0x20] sm:$0xff]
    %v87 = vld [vmem:[%s1 + $0x28] sm:$0xff]
    %v88 = vld [vmem:[%s1 + $0x30] sm:$0xff]
    %v89 = vld [vmem:[%s1 + $0x38] sm:$0xff]
    %v90 = vld [vmem:[%s1 + $0x40] sm:$0xff]
    %v91 = vld [vmem:[%s1 + $0x48] sm:$0xff]
    %v92 = vld [vmem:[%s1 + $0x50] sm:$0xff]
    %v93 = vld [vmem:[%s1 + $0x58] sm:$0xff]
    %v94 = vld [vmem:[%s1 + $0x60] sm:$0xff]
    %v95 = vld [vmem:[%s1 + $0x68] sm:$0xff]
    %v96 = vld [vmem:[%s1 + $0x70] sm:$0xff]
    %v97 = vld [vmem:[%s1 + $0x78] sm:$0xff]
    %v98 = vld [vmem:[%s1 + $0x80] sm:$0xff]
    %v99 = vld [vmem:[%s1 + $0x88] sm:$0xff]
    %v100 = vld [vmem:[%s1 + $0x90] sm:$0xff]
    %v101 = vld [vmem:[%s1 + $0x98] sm:$0xff]
    %v102 = vld [vmem:[%s1 + $0xa0] sm:$0xff]
    %v103 = vld [vmem:[%s1 + $0xa8] sm:$0xff]
    %v104 = vld [vmem:[%s1 + $0xb0] sm:$0xff]
    %v105 = vld [vmem:[%s1 + $0xb8] sm:$0xff]
    %v106 = vld [vmem:[%s1 + $0xc0] sm:$0xff]
    %v107 = vld [vmem:[%s1 + $0xc8] sm:$0xff]
    %v108 = vld [vmem:[%s1 + $0xd0] sm:$0xff]
    %v109 = vld [vmem:[%s1 + $0xd8] sm:$0xff]
    %v110 = vld [vmem:[%s1 + $0xe0] sm:$0xff]
    %v111 = vld [vmem:[%s1 + $0xe8] sm:$0xff]
    %v112 = vld [vmem:[%s1 + $0xf0] sm:$0xff]
    %v113 = vld [vmem:[%s1 + $0xf8] sm:$0xff]
    %v114 = vld [vmem:[%s1 + $0x100] sm:$0xff]
    %v115 = vld [vmem:[%s1 + $0x108] sm:$0xff]
    %v116 = vld [vmem:[%s1 + $0x110] sm:$0xff]
    %v117 = vld [vmem:[%s1 + $0x118] sm:$0xff]
    %v118 = vld [vmem:[%s1 + $0x120] sm:$0xff]
    %v119 = vld [vmem:[%s1 + $0x128] sm:$0xff]
    %v120 = vld [vmem:[%s1 + $0x130] sm:$0xff]
    %v121 = vld [vmem:[%s1 + $0x138] sm:$0xff]
    %v122 = vld [vmem:[%s1 + $0x140] sm:$0xff]
    %v123 = vld [vmem:[%s1 + $0x148] sm:$0xff]
    %v124 = vld [vmem:[%s1 + $0x150] sm:$0xff]
    %v125 = vld [vmem:[%s1 + $0x158] sm:$0xff]
    %v126 = vld [vmem:[%s1 + $0x160] sm:$0xff]
    %v127 = vld [vmem:[%s1 + $0x168] sm:$0xff]
    %v128 = vld [vmem:[%s1 + $0x170] sm:$0xff]
    %v129 = vld [vmem:[%s1 + $0x178] sm:$0xff]
    %v130 = vld [vmem:[%s1 + $0x180] sm:$0xff]
    %v131 = vld [vmem:[%s1 + $0x188] sm:$0xff]
    %v132 = vld [vmem:[%s1 + $0x190] sm:$0xff]
    %v133 = vld [vmem:[%s1 + $0x198] sm:$0xff]
    %v134 = vld [vmem:[%s1 + $0x1a0] sm:$0xff]
    %v135 = vld [vmem:[%s1 + $0x1a8] sm:$0xff]
    %v136 = vld [vmem:[%s1 + $0x1b0] sm:$0xff]
    %v137 = vld [vmem:[%s1 + $0x1b8] sm:$0xff]
    %v138 = vld [vmem:[%s1 + $0x1c0] sm:$0xff]
    %v139 = vld [vmem:[%s1 + $0x1c8] sm:$0xff]
    %v140 = vld [vmem:[%s1 + $0x1d0] sm:$0xff]
    %v141 = vld [vmem:[%s1 + $0x1d8] sm:$0xff]
    %v142 = vld [vmem:[%s1 + $0x1e0] sm:$0xff]
    %v143 = vld [vmem:[%s1 + $0x1e8] sm:$0xff]
    %v144 = vld [vmem:[%s1 + $0x1f0] sm:$0xff]
    %v145 = vld [vmem:[%s1 + $0x1f8] sm:$0xff]
    %v146 = vld [vmem:[%s1 + $0x200] sm:$0xff]
    %v147 = vld [vmem:[%s1 + $0x208] sm:$0xff]
    %v148 = vld [vmem:[%s1 + $0x210] sm:$0xff]
    %v149 = vld [vmem:[%s1 + $0x218] sm:$0xff]
    %v150 = vld [vmem:[%s1 + $0x220] sm:$0xff]
    %v151 = vld [vmem:[%s1 + $0x228] sm:$0xff]
    %v152 = vld [vmem:[%s1 + $0x230] sm:$0xff]
    %v153 = vld [vmem:[%s1 + $0x238] sm:$0xff]
    %v154 = vld [vmem:[%s1 + $0x240] sm:$0xff]
    %v155 = vld [vmem:[%s1 + $0x248] sm:$0xff]
    %v156 = vld [vmem:[%s1 + $0x250] sm:$0xff]
    %v157 = vld [vmem:[%s1 + $0x258] sm:$0xff]
    %v158 = vld [vmem:[%s1 + $0x260] sm:$0xff]
    %v159 = vld [vmem:[%s1 + $0x268] sm:$0xff]
    %v160 = vld [vmem:[%s1 + $0x270] sm:$0xff]
    %v161 = vld [vmem:[%s1 + $0x278] sm:$0xff]
    %v162 = vld [vmem:[%s1 + $0x280] sm:$0xff]
    %v163 = vld [vmem:[%s1 + $0x288] sm:$0xff]
    %v164 = vld [vmem:[%s1 + $0x290] sm:$0xff]
    %v165 = vld [vmem:[%s1 + $0x298] sm:$0xff]
    %v166 = vld [vmem:[%s1 + $0x2a0] sm:$0xff]
    %v167 = vld [vmem:[%s1 + $0x2a8] sm:$0xff]
    %v168 = vld [vmem:[%s1 + $0x2b0] sm:$0xff]
    %v169 = vld [vmem:[%s1 + $0x2b8] sm:$0xff]
    %v170 = vld [vmem:[%s1 + $0x2c0] sm:$0xff]
    %v171 = vld [vmem:[%s1 + $0x2c8] sm:$0xff]
    %v172 = vld [vmem:[%s1 + $0x2d0] sm:$0xff]
    %v173 = vld [vmem:[%s1 + $0x2d8] sm:$0xff]
    %v174 = vld [vmem:[%s1 + $0x2e0] sm:$0xff]
    %v175 = vld [vmem:[%s1 + $0x2e8] sm:$0xff]
    %v176 = vld [vmem:[%s1 + $0x2f0] sm:$0xff]
    %v177 = vld [vmem:[%s1 + $0x2f8] sm:$0xff]
    %v178 = vld [vmem:[%s1 + $0x300] sm:$0xff]
    %v179 = vld [vmem:[%s1 + $0x308] sm:$0xff]
    %v180 = vld [vmem:[%s1 + $0x310] sm:$0xff]
    %v181 = vld [vmem:[%s1 + $0x318] sm:$0xff]
    %v182 = vld [vmem:[%s1 + $0x320] sm:$0xff]
    %v183 = vld [vmem:[%s1 + $0x328] sm:$0xff]
    %v184 = vld [vmem:[%s1 + $0x330] sm:$0xff]
    %v185 = vld [vmem:[%s1 + $0x338] sm:$0xff]
    %v186 = vld [vmem:[%s1 + $0x340] sm:$0xff]
    %v187 = vld [vmem:[%s1 + $0x348] sm:$0xff]
    %v188 = vld [vmem:[%s1 + $0x350] sm:$0xff]
    %v189 = vld [vmem:[%s1 + $0x358] sm:$0xff]
    %v190 = vld [vmem:[%s1 + $0x360] sm:$0xff]
    %v191 = vld [vmem:[%s1 + $0x368] sm:$0xff]
    %v192 = vld [vmem:[%s1 + $0x370] sm:$0xff]
    %v193 = vld [vmem:[%s1 + $0x378] sm:$0xff]
    %v194 = vld [vmem:[%s1 + $0x380] sm:$0xff]
    %v195 = vld [vmem:[%s1 + $0x388] sm:$0xff]
    %v196 = vld [vmem:[%s1 + $0x390] sm:$0xff]
    %v197 = vld [vmem:[%s1 + $0x398] sm:$0xff]
    %v198 = vld [vmem:[%s1 + $0x3a0] sm:$0xff]
    %v199 = vld [vmem:[%s1 + $0x3a8] sm:$0xff]
    %v200 = vld [vmem:[%s1 + $0x3b0] sm:$0xff]
    %v201 = vld [vmem:[%s1 + $0x3b8] sm:$0xff]
    %v202 = vld [vmem:[%s1 + $0x3c0] sm:$0xff]
    %v203 = vld [vmem:[%s1 + $0x3c8] sm:$0xff]
    %v204 = vld [vmem:[%s1 + $0x3d0] sm:$0xff]
    %v205 = vld [vmem:[%s1 + $0x3d8] sm:$0xff]
    %v206 = vld [vmem:[%s1 + $0x3e0] sm:$0xff]
    %v207 = vld [vmem:[%s1 + $0x3e8] sm:$0xff]
    %v208 = vld [vmem:[%s1 + $0x3f0] sm:$0xff]
    %v209 = vld [vmem:[%s1 + $0x3f8] sm:$0xff]
    %v210 = vld [vmem:[%s2] sm:$0x3]
    %v212 = vlaneseq
    %v213 = vshrl.u32 %v212, 7
    %v214 = vsub.s32 0, %v213
    %v215 = vrot.slane %v210, %v214
    %v216 = vlaneseq
    %v217 = vshrl.u32 %v216, 7
    %v218 = vsub.s32 1, %v217
    %v219 = vrot.slane %v210, %v218
    %v286 = vunpack.c.l.b16 %v18
    %v287 = vunpack.c.h.b16 %v18
    %v288 = vunpack.c.l.b16 %v19
    %v289 = vunpack.c.h.b16 %v19
    %v290 = vunpack.c.l.b16 %v20
    %v291 = vunpack.c.h.b16 %v20
    %v292 = vunpack.c.l.b16 %v21
    %v293 = vunpack.c.h.b16 %v21
    %v294 = vunpack.c.l.b16 %v22
    %v295 = vunpack.c.h.b16 %v22
    %v296 = vunpack.c.l.b16 %v23
    %v297 = vunpack.c.h.b16 %v23
    %v298 = vunpack.c.l.b16 %v24
    %v299 = vunpack.c.h.b16 %v24
    %v300 = vunpack.c.l.b16 %v25
    %v301 = vunpack.c.h.b16 %v25
    %v302 = vunpack.c.l.b16 %v26
    %v303 = vunpack.c.h.b16 %v26
    %v304 = vunpack.c.l.b16 %v27
    %v305 = vunpack.c.h.b16 %v27
    %v306 = vunpack.c.l.b16 %v28
    %v307 = vunpack.c.h.b16 %v28
    %v308 = vunpack.c.l.b16 %v29
    %v309 = vunpack.c.h.b16 %v29
    %v310 = vunpack.c.l.b16 %v30
    %v311 = vunpack.c.h.b16 %v30
    %v312 = vunpack.c.l.b16 %v31
    %v313 = vunpack.c.h.b16 %v31
    %v314 = vunpack.c.l.b16 %v32
    %v315 = vunpack.c.h.b16 %v32
    %v316 = vunpack.c.l.b16 %v33
    %v317 = vunpack.c.h.b16 %v33
    %v318 = vunpack.c.l.b16 %v34
    %v319 = vunpack.c.h.b16 %v34
    %v320 = vunpack.c.l.b16 %v35
    %v321 = vunpack.c.h.b16 %v35
    %v322 = vunpack.c.l.b16 %v36
    %v323 = vunpack.c.h.b16 %v36
    %v324 = vunpack.c.l.b16 %v37
    %v325 = vunpack.c.h.b16 %v37
    %v326 = vunpack.c.l.b16 %v38
    %v327 = vunpack.c.h.b16 %v38
    %v328 = vunpack.c.l.b16 %v39
    %v329 = vunpack.c.h.b16 %v39
    %v330 = vunpack.c.l.b16 %v40
    %v331 = vunpack.c.h.b16 %v40
    %v332 = vunpack.c.l.b16 %v41
    %v333 = vunpack.c.h.b16 %v41
    %v334 = vunpack.c.l.b16 %v42
    %v335 = vunpack.c.h.b16 %v42
    %v336 = vunpack.c.l.b16 %v43
    %v337 = vunpack.c.h.b16 %v43
    %v338 = vunpack.c.l.b16 %v44
    %v339 = vunpack.c.h.b16 %v44
    %v340 = vunpack.c.l.b16 %v45
    %v341 = vunpack.c.h.b16 %v45
    %v342 = vunpack.c.l.b16 %v46
    %v343 = vunpack.c.h.b16 %v46
    %v344 = vunpack.c.l.b16 %v47
    %v345 = vunpack.c.h.b16 %v47
    %v346 = vunpack.c.l.b16 %v48
    %v347 = vunpack.c.h.b16 %v48
    %v348 = vunpack.c.l.b16 %v49
    %v349 = vunpack.c.h.b16 %v49
    %v350 = vunpack.c.l.b16 %v50
    %v351 = vunpack.c.h.b16 %v50
    %v352 = vunpack.c.l.b16 %v51
    %v353 = vunpack.c.h.b16 %v51
    %v354 = vunpack.c.l.b16 %v52
    %v355 = vunpack.c.h.b16 %v52
    %v356 = vunpack.c.l.b16 %v53
    %v357 = vunpack.c.h.b16 %v53
    %v358 = vunpack.c.l.b16 %v54
    %v359 = vunpack.c.h.b16 %v54
    %v360 = vunpack.c.l.b16 %v55
    %v361 = vunpack.c.h.b16 %v55
    %v362 = vunpack.c.l.b16 %v56
    %v363 = vunpack.c.h.b16 %v56
    %v364 = vunpack.c.l.b16 %v57
    %v365 = vunpack.c.h.b16 %v57
    %v366 = vunpack.c.l.b16 %v58
    %v367 = vunpack.c.h.b16 %v58
    %v368 = vunpack.c.l.b16 %v59
    %v369 = vunpack.c.h.b16 %v59
    %v370 = vunpack.c.l.b16 %v60
    %v371 = vunpack.c.h.b16 %v60
    %v372 = vunpack.c.l.b16 %v61
    %v373 = vunpack.c.h.b16 %v61
    %v374 = vunpack.c.l.b16 %v62
    %v375 = vunpack.c.h.b16 %v62
    %v376 = vunpack.c.l.b16 %v63
    %v377 = vunpack.c.h.b16 %v63
    %v378 = vunpack.c.l.b16 %v64
    %v379 = vunpack.c.h.b16 %v64
    %v380 = vunpack.c.l.b16 %v65
    %v381 = vunpack.c.h.b16 %v65
    %v382 = vunpack.c.l.b16 %v66
    %v383 = vunpack.c.h.b16 %v66
    %v384 = vunpack.c.l.b16 %v67
    %v385 = vunpack.c.h.b16 %v67
    %v386 = vunpack.c.l.b16 %v68
    %v387 = vunpack.c.h.b16 %v68
    %v388 = vunpack.c.l.b16 %v69
    %v389 = vunpack.c.h.b16 %v69
    %v390 = vunpack.c.l.b16 %v70
    %v391 = vunpack.c.h.b16 %v70
    %v392 = vunpack.c.l.b16 %v71
    %v393 = vunpack.c.h.b16 %v71
    %v394 = vunpack.c.l.b16 %v72
    %v395 = vunpack.c.h.b16 %v72
    %v396 = vunpack.c.l.b16 %v73
    %v397 = vunpack.c.h.b16 %v73
    %v398 = vunpack.c.l.b16 %v74
    %v399 = vunpack.c.h.b16 %v74
    %v400 = vunpack.c.l.b16 %v75
    %v401 = vunpack.c.h.b16 %v75
    %v402 = vunpack.c.l.b16 %v76
    %v403 = vunpack.c.h.b16 %v76
    %v404 = vunpack.c.l.b16 %v77
    %v405 = vunpack.c.h.b16 %v77
    %v406 = vunpack.c.l.b16 %v78
    %v407 = vunpack.c.h.b16 %v78
    %v408 = vunpack.c.l.b16 %v79
    %v409 = vunpack.c.h.b16 %v79
    %v410 = vunpack.c.l.b16 %v80
    %v411 = vunpack.c.h.b16 %v80
    %v412 = vunpack.c.l.b16 %v81
    %v413 = vunpack.c.h.b16 %v81
    %v414 = vpack.c.b16 %v294, %v286
    %v415 = vpack.c.b16 %v295, %v287
    %v416 = vpack.c.b16 %v296, %v288
    %v417 = vpack.c.b16 %v297, %v289
    %v418 = vpack.c.b16 %v298, %v290
    %v419 = vpack.c.b16 %v299, %v291
    %v420 = vpack.c.b16 %v300, %v292
    %v421 = vpack.c.b16 %v301, %v293
    %v422 = vpack.c.b16 %v310, %v302
    %v423 = vpack.c.b16 %v311, %v303
    %v424 = vpack.c.b16 %v312, %v304
    %v425 = vpack.c.b16 %v313, %v305
    %v426 = vpack.c.b16 %v314, %v306
    %v427 = vpack.c.b16 %v315, %v307
    %v428 = vpack.c.b16 %v316, %v308
    %v429 = vpack.c.b16 %v317, %v309
    %v430 = vpack.c.b16 %v326, %v318
    %v431 = vpack.c.b16 %v327, %v319
    %v432 = vpack.c.b16 %v328, %v320
    %v433 = vpack.c.b16 %v329, %v321
    %v434 = vpack.c.b16 %v330, %v322
    %v435 = vpack.c.b16 %v331, %v323
    %v436 = vpack.c.b16 %v332, %v324
    %v437 = vpack.c.b16 %v333, %v325
    %v438 = vpack.c.b16 %v342, %v334
    %v439 = vpack.c.b16 %v343, %v335
    %v440 = vpack.c.b16 %v344, %v336
    %v441 = vpack.c.b16 %v345, %v337
    %v442 = vpack.c.b16 %v346, %v338
    %v443 = vpack.c.b16 %v347, %v339
    %v444 = vpack.c.b16 %v348, %v340
    %v445 = vpack.c.b16 %v349, %v341
    %v446 = vpack.c.b16 %v358, %v350
    %v447 = vpack.c.b16 %v359, %v351
    %v448 = vpack.c.b16 %v360, %v352
    %v449 = vpack.c.b16 %v361, %v353
    %v450 = vpack.c.b16 %v362, %v354
    %v451 = vpack.c.b16 %v363, %v355
    %v452 = vpack.c.b16 %v364, %v356
    %v453 = vpack.c.b16 %v365, %v357
    %v454 = vpack.c.b16 %v374, %v366
    %v455 = vpack.c.b16 %v375, %v367
    %v456 = vpack.c.b16 %v376, %v368
    %v457 = vpack.c.b16 %v377, %v369
    %v458 = vpack.c.b16 %v378, %v370
    %v459 = vpack.c.b16 %v379, %v371
    %v460 = vpack.c.b16 %v380, %v372
    %v461 = vpack.c.b16 %v381, %v373
    %v462 = vpack.c.b16 %v390, %v382
    %v463 = vpack.c.b16 %v391, %v383
    %v464 = vpack.c.b16 %v392, %v384
    %v465 = vpack.c.b16 %v393, %v385
    %v466 = vpack.c.b16 %v394, %v386
    %v467 = vpack.c.b16 %v395, %v387
    %v468 = vpack.c.b16 %v396, %v388
    %v469 = vpack.c.b16 %v397, %v389
    %v470 = vpack.c.b16 %v406, %v398
    %v471 = vpack.c.b16 %v407, %v399
    %v472 = vpack.c.b16 %v408, %v400
    %v473 = vpack.c.b16 %v409, %v401
    %v474 = vpack.c.b16 %v410, %v402
    %v475 = vpack.c.b16 %v411, %v403
    %v476 = vpack.c.b16 %v412, %v404
    %v477 = vpack.c.b16 %v413, %v405
    %v670 = vunpack.c.l.b16 %v82
    %v671 = vunpack.c.h.b16 %v82
    %v672 = vunpack.c.l.b16 %v83
    %v673 = vunpack.c.h.b16 %v83
    %v674 = vunpack.c.l.b16 %v84
    %v675 = vunpack.c.h.b16 %v84
    %v676 = vunpack.c.l.b16 %v85
    %v677 = vunpack.c.h.b16 %v85
    %v678 = vunpack.c.l.b16 %v86
    %v679 = vunpack.c.h.b16 %v86
    %v680 = vunpack.c.l.b16 %v87
    %v681 = vunpack.c.h.b16 %v87
    %v682 = vunpack.c.l.b16 %v88
    %v683 = vunpack.c.h.b16 %v88
    %v684 = vunpack.c.l.b16 %v89
    %v685 = vunpack.c.h.b16 %v89
    %v686 = vunpack.c.l.b16 %v90
    %v687 = vunpack.c.h.b16 %v90
    %v688 = vunpack.c.l.b16 %v91
    %v689 = vunpack.c.h.b16 %v91
    %v690 = vunpack.c.l.b16 %v92
    %v691 = vunpack.c.h.b16 %v92
    %v692 = vunpack.c.l.b16 %v93
    %v693 = vunpack.c.h.b16 %v93
    %v694 = vunpack.c.l.b16 %v94
    %v695 = vunpack.c.h.b16 %v94
    %v696 = vunpack.c.l.b16 %v95
    %v697 = vunpack.c.h.b16 %v95
    %v698 = vunpack.c.l.b16 %v96
    %v699 = vunpack.c.h.b16 %v96
    %v700 = vunpack.c.l.b16 %v97
    %v701 = vunpack.c.h.b16 %v97
    %v702 = vunpack.c.l.b16 %v98
    %v703 = vunpack.c.h.b16 %v98
    %v704 = vunpack.c.l.b16 %v99
    %v705 = vunpack.c.h.b16 %v99
    %v706 = vunpack.c.l.b16 %v100
    %v707 = vunpack.c.h.b16 %v100
    %v708 = vunpack.c.l.b16 %v101
    %v709 = vunpack.c.h.b16 %v101
    %v710 = vunpack.c.l.b16 %v102
    %v711 = vunpack.c.h.b16 %v102
    %v712 = vunpack.c.l.b16 %v103
    %v713 = vunpack.c.h.b16 %v103
    %v714 = vunpack.c.l.b16 %v104
    %v715 = vunpack.c.h.b16 %v104
    %v716 = vunpack.c.l.b16 %v105
    %v717 = vunpack.c.h.b16 %v105
    %v718 = vunpack.c.l.b16 %v106
    %v719 = vunpack.c.h.b16 %v106
    %v720 = vunpack.c.l.b16 %v107
    %v721 = vunpack.c.h.b16 %v107
    %v722 = vunpack.c.l.b16 %v108
    %v723 = vunpack.c.h.b16 %v108
    %v724 = vunpack.c.l.b16 %v109
    %v725 = vunpack.c.h.b16 %v109
    %v726 = vunpack.c.l.b16 %v110
    %v727 = vunpack.c.h.b16 %v110
    %v728 = vunpack.c.l.b16 %v111
    %v729 = vunpack.c.h.b16 %v111
    %v730 = vunpack.c.l.b16 %v112
    %v731 = vunpack.c.h.b16 %v112
    %v732 = vunpack.c.l.b16 %v113
    %v733 = vunpack.c.h.b16 %v113
    %v734 = vunpack.c.l.b16 %v114
    %v735 = vunpack.c.h.b16 %v114
    %v736 = vunpack.c.l.b16 %v115
    %v737 = vunpack.c.h.b16 %v115
    %v738 = vunpack.c.l.b16 %v116
    %v739 = vunpack.c.h.b16 %v116
    %v740 = vunpack.c.l.b16 %v117
    %v741 = vunpack.c.h.b16 %v117
    %v742 = vunpack.c.l.b16 %v118
    %v743 = vunpack.c.h.b16 %v118
    %v744 = vunpack.c.l.b16 %v119
    %v745 = vunpack.c.h.b16 %v119
    %v746 = vunpack.c.l.b16 %v120
    %v747 = vunpack.c.h.b16 %v120
    %v748 = vunpack.c.l.b16 %v121
    %v749 = vunpack.c.h.b16 %v121
    %v750 = vunpack.c.l.b16 %v122
    %v751 = vunpack.c.h.b16 %v122
    %v752 = vunpack.c.l.b16 %v123
    %v753 = vunpack.c.h.b16 %v123
    %v754 = vunpack.c.l.b16 %v124
    %v755 = vunpack.c.h.b16 %v124
    %v756 = vunpack.c.l.b16 %v125
    %v757 = vunpack.c.h.b16 %v125
    %v758 = vunpack.c.l.b16 %v126
    %v759 = vunpack.c.h.b16 %v126
    %v760 = vunpack.c.l.b16 %v127
    %v761 = vunpack.c.h.b16 %v127
    %v762 = vunpack.c.l.b16 %v128
    %v763 = vunpack.c.h.b16 %v128
    %v764 = vunpack.c.l.b16 %v129
    %v765 = vunpack.c.h.b16 %v129
    %v766 = vunpack.c.l.b16 %v130
    %v767 = vunpack.c.h.b16 %v130
    %v768 = vunpack.c.l.b16 %v131
    %v769 = vunpack.c.h.b16 %v131
    %v770 = vunpack.c.l.b16 %v132
    %v771 = vunpack.c.h.b16 %v132
    %v772 = vunpack.c.l.b16 %v133
    %v773 = vunpack.c.h.b16 %v133
    %v774 = vunpack.c.l.b16 %v134
    %v775 = vunpack.c.h.b16 %v134
    %v776 = vunpack.c.l.b16 %v135
    %v777 = vunpack.c.h.b16 %v135
    %v778 = vunpack.c.l.b16 %v136
    %v779 = vunpack.c.h.b16 %v136
    %v780 = vunpack.c.l.b16 %v137
    %v781 = vunpack.c.h.b16 %v137
    %v782 = vunpack.c.l.b16 %v138
    %v783 = vunpack.c.h.b16 %v138
    %v784 = vunpack.c.l.b16 %v139
    %v785 = vunpack.c.h.b16 %v139
    %v786 = vunpack.c.l.b16 %v140
    %v787 = vunpack.c.h.b16 %v140
    %v788 = vunpack.c.l.b16 %v141
    %v789 = vunpack.c.h.b16 %v141
    %v790 = vunpack.c.l.b16 %v142
    %v791 = vunpack.c.h.b16 %v142
    %v792 = vunpack.c.l.b16 %v143
    %v793 = vunpack.c.h.b16 %v143
    %v794 = vunpack.c.l.b16 %v144
    %v795 = vunpack.c.h.b16 %v144
    %v796 = vunpack.c.l.b16 %v145
    %v797 = vunpack.c.h.b16 %v145
    %v798 = vunpack.c.l.b16 %v146
    %v799 = vunpack.c.h.b16 %v146
    %v800 = vunpack.c.l.b16 %v147
    %v801 = vunpack.c.h.b16 %v147
    %v802 = vunpack.c.l.b16 %v148
    %v803 = vunpack.c.h.b16 %v148
    %v804 = vunpack.c.l.b16 %v149
    %v805 = vunpack.c.h.b16 %v149
    %v806 = vunpack.c.l.b16 %v150
    %v807 = vunpack.c.h.b16 %v150
    %v808 = vunpack.c.l.b16 %v151
    %v809 = vunpack.c.h.b16 %v151
    %v810 = vunpack.c.l.b16 %v152
    %v811 = vunpack.c.h.b16 %v152
    %v812 = vunpack.c.l.b16 %v153
    %v813 = vunpack.c.h.b16 %v153
    %v814 = vunpack.c.l.b16 %v154
    %v815 = vunpack.c.h.b16 %v154
    %v816 = vunpack.c.l.b16 %v155
    %v817 = vunpack.c.h.b16 %v155
    %v818 = vunpack.c.l.b16 %v156
    %v819 = vunpack.c.h.b16 %v156
    %v820 = vunpack.c.l.b16 %v157
    %v821 = vunpack.c.h.b16 %v157
    %v822 = vunpack.c.l.b16 %v158
    %v823 = vunpack.c.h.b16 %v158
    %v824 = vunpack.c.l.b16 %v159
    %v825 = vunpack.c.h.b16 %v159
    %v826 = vunpack.c.l.b16 %v160
    %v827 = vunpack.c.h.b16 %v160
    %v828 = vunpack.c.l.b16 %v161
    %v829 = vunpack.c.h.b16 %v161
    %v830 = vunpack.c.l.b16 %v162
    %v831 = vunpack.c.h.b16 %v162
    %v832 = vunpack.c.l.b16 %v163
    %v833 = vunpack.c.h.b16 %v163
    %v834 = vunpack.c.l.b16 %v164
    %v835 = vunpack.c.h.b16 %v164
    %v836 = vunpack.c.l.b16 %v165
    %v837 = vunpack.c.h.b16 %v165
    %v838 = vunpack.c.l.b16 %v166
    %v839 = vunpack.c.h.b16 %v166
    %v840 = vunpack.c.l.b16 %v167
    %v841 = vunpack.c.h.b16 %v167
    %v842 = vunpack.c.l.b16 %v168
    %v843 = vunpack.c.h.b16 %v168
    %v844 = vunpack.c.l.b16 %v169
    %v845 = vunpack.c.h.b16 %v169
    %v846 = vunpack.c.l.b16 %v170
    %v847 = vunpack.c.h.b16 %v170
    %v848 = vunpack.c.l.b16 %v171
    %v849 = vunpack.c.h.b16 %v171
    %v850 = vunpack.c.l.b16 %v172
    %v851 = vunpack.c.h.b16 %v172
    %v852 = vunpack.c.l.b16 %v173
    %v853 = vunpack.c.h.b16 %v173
    %v854 = vunpack.c.l.b16 %v174
    %v855 = vunpack.c.h.b16 %v174
    %v856 = vunpack.c.l.b16 %v175
    %v857 = vunpack.c.h.b16 %v175
    %v858 = vunpack.c.l.b16 %v176
    %v859 = vunpack.c.h.b16 %v176
    %v860 = vunpack.c.l.b16 %v177
    %v861 = vunpack.c.h.b16 %v177
    %v862 = vunpack.c.l.b16 %v178
    %v863 = vunpack.c.h.b16 %v178
    %v864 = vunpack.c.l.b16 %v179
    %v865 = vunpack.c.h.b16 %v179
    %v866 = vunpack.c.l.b16 %v180
    %v867 = vunpack.c.h.b16 %v180
    %v868 = vunpack.c.l.b16 %v181
    %v869 = vunpack.c.h.b16 %v181
    %v870 = vunpack.c.l.b16 %v182
    %v871 = vunpack.c.h.b16 %v182
    %v872 = vunpack.c.l.b16 %v183
    %v873 = vunpack.c.h.b16 %v183
    %v874 = vunpack.c.l.b16 %v184
    %v875 = vunpack.c.h.b16 %v184
    %v876 = vunpack.c.l.b16 %v185
    %v877 = vunpack.c.h.b16 %v185
    %v878 = vunpack.c.l.b16 %v186
    %v879 = vunpack.c.h.b16 %v186
    %v880 = vunpack.c.l.b16 %v187
    %v881 = vunpack.c.h.b16 %v187
    %v882 = vunpack.c.l.b16 %v188
    %v883 = vunpack.c.h.b16 %v188
    %v884 = vunpack.c.l.b16 %v189
    %v885 = vunpack.c.h.b16 %v189
    %v886 = vunpack.c.l.b16 %v190
    %v887 = vunpack.c.h.b16 %v190
    %v888 = vunpack.c.l.b16 %v191
    %v889 = vunpack.c.h.b16 %v191
    %v890 = vunpack.c.l.b16 %v192
    %v891 = vunpack.c.h.b16 %v192
    %v892 = vunpack.c.l.b16 %v193
    %v893 = vunpack.c.h.b16 %v193
    %v894 = vunpack.c.l.b16 %v194
    %v895 = vunpack.c.h.b16 %v194
    %v896 = vunpack.c.l.b16 %v195
    %v897 = vunpack.c.h.b16 %v195
    %v898 = vunpack.c.l.b16 %v196
    %v899 = vunpack.c.h.b16 %v196
    %v900 = vunpack.c.l.b16 %v197
    %v901 = vunpack.c.h.b16 %v197
    %v902 = vunpack.c.l.b16 %v198
    %v903 = vunpack.c.h.b16 %v198
    %v904 = vunpack.c.l.b16 %v199
    %v905 = vunpack.c.h.b16 %v199
    %v906 = vunpack.c.l.b16 %v200
    %v907 = vunpack.c.h.b16 %v200
    %v908 = vunpack.c.l.b16 %v201
    %v909 = vunpack.c.h.b16 %v201
    %v910 = vunpack.c.l.b16 %v202
    %v911 = vunpack.c.h.b16 %v202
    %v912 = vunpack.c.l.b16 %v203
    %v913 = vunpack.c.h.b16 %v203
    %v914 = vunpack.c.l.b16 %v204
    %v915 = vunpack.c.h.b16 %v204
    %v916 = vunpack.c.l.b16 %v205
    %v917 = vunpack.c.h.b16 %v205
    %v918 = vunpack.c.l.b16 %v206
    %v919 = vunpack.c.h.b16 %v206
    %v920 = vunpack.c.l.b16 %v207
    %v921 = vunpack.c.h.b16 %v207
    %v922 = vunpack.c.l.b16 %v208
    %v923 = vunpack.c.h.b16 %v208
    %v924 = vunpack.c.l.b16 %v209
    %v925 = vunpack.c.h.b16 %v209
    %v926 = vpack.c.b16 %v672, %v670
    %v927 = vpack.c.b16 %v673, %v671
    %v928 = vpack.c.b16 %v676, %v674
    %v929 = vpack.c.b16 %v677, %v675
    %v930 = vpack.c.b16 %v680, %v678
    %v931 = vpack.c.b16 %v681, %v679
    %v932 = vpack.c.b16 %v684, %v682
    %v933 = vpack.c.b16 %v685, %v683
    %v934 = vpack.c.b16 %v688, %v686
    %v935 = vpack.c.b16 %v689, %v687
    %v936 = vpack.c.b16 %v692, %v690
    %v937 = vpack.c.b16 %v693, %v691
    %v938 = vpack.c.b16 %v696, %v694
    %v939 = vpack.c.b16 %v697, %v695
    %v940 = vpack.c.b16 %v700, %v698
    %v941 = vpack.c.b16 %v701, %v699
    %v942 = vpack.c.b16 %v704, %v702
    %v943 = vpack.c.b16 %v705, %v703
    %v944 = vpack.c.b16 %v708, %v706
    %v945 = vpack.c.b16 %v709, %v707
    %v946 = vpack.c.b16 %v712, %v710
    %v947 = vpack.c.b16 %v713, %v711
    %v948 = vpack.c.b16 %v716, %v714
    %v949 = vpack.c.b16 %v717, %v715
    %v950 = vpack.c.b16 %v720, %v718
    %v951 = vpack.c.b16 %v721, %v719
    %v952 = vpack.c.b16 %v724, %v722
    %v953 = vpack.c.b16 %v725, %v723
    %v954 = vpack.c.b16 %v728, %v726
    %v955 = vpack.c.b16 %v729, %v727
    %v956 = vpack.c.b16 %v732, %v730
    %v957 = vpack.c.b16 %v733, %v731
    %v958 = vpack.c.b16 %v736, %v734
    %v959 = vpack.c.b16 %v737, %v735
    %v960 = vpack.c.b16 %v740, %v738
    %v961 = vpack.c.b16 %v741, %v739
    %v962 = vpack.c.b16 %v744, %v742
    %v963 = vpack.c.b16 %v745, %v743
    %v964 = vpack.c.b16 %v748, %v746
    %v965 = vpack.c.b16 %v749, %v747
    %v966 = vpack.c.b16 %v752, %v750
    %v967 = vpack.c.b16 %v753, %v751
    %v968 = vpack.c.b16 %v756, %v754
    %v969 = vpack.c.b16 %v757, %v755
    %v970 = vpack.c.b16 %v760, %v758
    %v971 = vpack.c.b16 %v761, %v759
    %v972 = vpack.c.b16 %v764, %v762
    %v973 = vpack.c.b16 %v765, %v763
    %v974 = vpack.c.b16 %v768, %v766
    %v975 = vpack.c.b16 %v769, %v767
    %v976 = vpack.c.b16 %v772, %v770
    %v977 = vpack.c.b16 %v773, %v771
    %v978 = vpack.c.b16 %v776, %v774
    %v979 = vpack.c.b16 %v777, %v775
    %v980 = vpack.c.b16 %v780, %v778
    %v981 = vpack.c.b16 %v781, %v779
    %v982 = vpack.c.b16 %v784, %v782
    %v983 = vpack.c.b16 %v785, %v783
    %v984 = vpack.c.b16 %v788, %v786
    %v985 = vpack.c.b16 %v789, %v787
    %v986 = vpack.c.b16 %v792, %v790
    %v987 = vpack.c.b16 %v793, %v791
    %v988 = vpack.c.b16 %v796, %v794
    %v989 = vpack.c.b16 %v797, %v795
    %v990 = vpack.c.b16 %v800, %v798
    %v991 = vpack.c.b16 %v801, %v799
    %v992 = vpack.c.b16 %v804, %v802
    %v993 = vpack.c.b16 %v805, %v803
    %v994 = vpack.c.b16 %v808, %v806
    %v995 = vpack.c.b16 %v809, %v807
    %v996 = vpack.c.b16 %v812, %v810
    %v997 = vpack.c.b16 %v813, %v811
    %v998 = vpack.c.b16 %v816, %v814
    %v999 = vpack.c.b16 %v817, %v815
    %v1000 = vpack.c.b16 %v820, %v818
    %v1001 = vpack.c.b16 %v821, %v819
    %v1002 = vpack.c.b16 %v824, %v822
    %v1003 = vpack.c.b16 %v825, %v823
    %v1004 = vpack.c.b16 %v828, %v826
    %v1005 = vpack.c.b16 %v829, %v827
    %v1006 = vpack.c.b16 %v832, %v830
    %v1007 = vpack.c.b16 %v833, %v831
    %v1008 = vpack.c.b16 %v836, %v834
    %v1009 = vpack.c.b16 %v837, %v835
    %v1010 = vpack.c.b16 %v840, %v838
    %v1011 = vpack.c.b16 %v841, %v839
    %v1012 = vpack.c.b16 %v844, %v842
    %v1013 = vpack.c.b16 %v845, %v843
    %v1014 = vpack.c.b16 %v848, %v846
    %v1015 = vpack.c.b16 %v849, %v847
    %v1016 = vpack.c.b16 %v852, %v850
    %v1017 = vpack.c.b16 %v853, %v851
    %v1018 = vpack.c.b16 %v856, %v854
    %v1019 = vpack.c.b16 %v857, %v855
    %v1020 = vpack.c.b16 %v860, %v858
    %v1021 = vpack.c.b16 %v861, %v859
    %v1022 = vpack.c.b16 %v864, %v862
    %v1023 = vpack.c.b16 %v865, %v863
    %v1024 = vpack.c.b16 %v868, %v866
    %v1025 = vpack.c.b16 %v869, %v867
    %v1026 = vpack.c.b16 %v872, %v870
    %v1027 = vpack.c.b16 %v873, %v871
    %v1028 = vpack.c.b16 %v876, %v874
    %v1029 = vpack.c.b16 %v877, %v875
    %v1030 = vpack.c.b16 %v880, %v878
    %v1031 = vpack.c.b16 %v881, %v879
    %v1032 = vpack.c.b16 %v884, %v882
    %v1033 = vpack.c.b16 %v885, %v883
    %v1034 = vpack.c.b16 %v888, %v886
    %v1035 = vpack.c.b16 %v889, %v887
    %v1036 = vpack.c.b16 %v892, %v890
    %v1037 = vpack.c.b16 %v893, %v891
    %v1038 = vpack.c.b16 %v896, %v894
    %v1039 = vpack.c.b16 %v897, %v895
    %v1040 = vpack.c.b16 %v900, %v898
    %v1041 = vpack.c.b16 %v901, %v899
    %v1042 = vpack.c.b16 %v904, %v902
    %v1043 = vpack.c.b16 %v905, %v903
    %v1044 = vpack.c.b16 %v908, %v906
    %v1045 = vpack.c.b16 %v909, %v907
    %v1046 = vpack.c.b16 %v912, %v910
    %v1047 = vpack.c.b16 %v913, %v911
    %v1048 = vpack.c.b16 %v916, %v914
    %v1049 = vpack.c.b16 %v917, %v915
    %v1050 = vpack.c.b16 %v920, %v918
    %v1051 = vpack.c.b16 %v921, %v919
    %v1052 = vpack.c.b16 %v924, %v922
    %v1053 = vpack.c.b16 %v925, %v923
    %1182 = vmatprep.subr.bf16.mxu0 %v941
    %1183 = vmatpush1.bf16.msra.mxu0 %v940
    %1184 = vmatprep.subr.bf16.mxu0 %v939
    %1185 = vmatpush1.bf16.msra.mxu0 %v938
    %1186 = vmatprep.subr.bf16.mxu0 %v937
    %1187 = vmatpush1.bf16.msra.mxu0 %v936
    %1188 = vmatprep.subr.bf16.mxu0 %v935
    %1189 = vmatpush1.bf16.msra.mxu0 %v934
    %1190 = vmatprep.subr.bf16.mxu0 %v933
    %1191 = vmatpush1.bf16.msra.mxu0 %v932
    %1192 = vmatprep.subr.bf16.mxu0 %v931
    %1193 = vmatpush1.bf16.msra.mxu0 %v930
    %1194 = vmatprep.subr.bf16.mxu0 %v929
    %1195 = vmatpush1.bf16.msra.mxu0 %v928
    %1196 = vmatprep.subr.bf16.mxu0 %v927
    %1197 = vmatpush1.bf16.msra.mxu0 %v926
    %1198 = vmatprep.subr.bf16.mxu0 %v957
    %1199 = vmatpush2.bf16.msra.mxu0 %v956
    %1200 = vmatprep.subr.bf16.mxu0 %v955
    %1201 = vmatpush2.bf16.msra.mxu0 %v954
    %1202 = vmatprep.subr.bf16.mxu0 %v953
    %1203 = vmatpush2.bf16.msra.mxu0 %v952
    %1204 = vmatprep.subr.bf16.mxu0 %v951
    %1205 = vmatpush2.bf16.msra.mxu0 %v950
    %1206 = vmatprep.subr.bf16.mxu0 %v949
    %1207 = vmatpush2.bf16.msra.mxu0 %v948
    %1208 = vmatprep.subr.bf16.mxu0 %v947
    %1209 = vmatpush2.bf16.msra.mxu0 %v946
    %1210 = vmatprep.subr.bf16.mxu0 %v945
    %1211 = vmatpush2.bf16.msra.mxu0 %v944
    %1212 = vmatprep.subr.bf16.mxu0 %v943
    %1213 = vmatpush2.bf16.msra.mxu0 %v942
    %1214 = vmatprep.mubr.bf16.mxu0 %v415
    %1215 = vmatmul.mubr.bf16.gmra.mxu0 %v414
    %v1216 = vpop.f32.mrf.mxu0
    %v1217 = vadd.f32 %v215, %v1216
    %v1218 = vpop.f32.mrf.mxu0
    %v1219 = vadd.f32 %v219, %v1218
    %v1220 = vpop.f32.mrf.mxu0
    %v1221 = vadd.f32 %v215, %v1220
    %v1222 = vpop.f32.mrf.mxu0
    %v1223 = vadd.f32 %v219, %v1222
    %1224 = vmatprep.mubr.bf16.mxu0 %v423
    %1225 = vmatmul.mubr.bf16.gmra.mxu0 %v422
    %v1226 = vpop.f32.mrf.mxu0
    %v1227 = vadd.f32 %v215, %v1226
    %v1228 = vpop.f32.mrf.mxu0
    %v1229 = vadd.f32 %v219, %v1228
    %v1230 = vpop.f32.mrf.mxu0
    %v1231 = vadd.f32 %v215, %v1230
    %v1232 = vpop.f32.mrf.mxu0
    %v1233 = vadd.f32 %v219, %v1232
    %1234 = vmatprep.mubr.bf16.mxu0 %v431
    %1235 = vmatmul.mubr.bf16.gmra.mxu0 %v430
    %v1236 = vpop.f32.mrf.mxu0
    %v1237 = vadd.f32 %v215, %v1236
    %v1238 = vpop.f32.mrf.mxu0
    %v1239 = vadd.f32 %v219, %v1238
    %v1240 = vpop.f32.mrf.mxu0
    %v1241 = vadd.f32 %v215, %v1240
    %v1242 = vpop.f32.mrf.mxu0
    %v1243 = vadd.f32 %v219, %v1242
    %1244 = vmatprep.mubr.bf16.mxu0 %v439
    %1245 = vmatmul.mubr.bf16.gmra.mxu0 %v438
    %v1246 = vpop.f32.mrf.mxu0
    %v1247 = vadd.f32 %v215, %v1246
    %v1248 = vpop.f32.mrf.mxu0
    %v1249 = vadd.f32 %v219, %v1248
    %v1250 = vpop.f32.mrf.mxu0
    %v1251 = vadd.f32 %v215, %v1250
    %v1252 = vpop.f32.mrf.mxu0
    %v1253 = vadd.f32 %v219, %v1252
    %1254 = vmatprep.mubr.bf16.mxu0 %v447
    %1255 = vmatmul.mubr.bf16.gmra.mxu0 %v446
    %v1256 = vpop.f32.mrf.mxu0
    %v1257 = vadd.f32 %v215, %v1256
    %v1258 = vpop.f32.mrf.mxu0
    %v1259 = vadd.f32 %v219, %v1258
    %v1260 = vpop.f32.mrf.mxu0
    %v1261 = vadd.f32 %v215, %v1260
    %v1262 = vpop.f32.mrf.mxu0
    %v1263 = vadd.f32 %v219, %v1262
    %1264 = vmatprep.mubr.bf16.mxu0 %v455
    %1265 = vmatmul.mubr.bf16.gmra.mxu0 %v454
    %v1266 = vpop.f32.mrf.mxu0
    %v1267 = vadd.f32 %v215, %v1266
    %v1268 = vpop.f32.mrf.mxu0
    %v1269 = vadd.f32 %v219, %v1268
    %v1270 = vpop.f32.mrf.mxu0
    %v1271 = vadd.f32 %v215, %v1270
    %v1272 = vpop.f32.mrf.mxu0
    %v1273 = vadd.f32 %v219, %v1272
    %1274 = vmatprep.mubr.bf16.mxu0 %v463
    %1275 = vmatmul.mubr.bf16.gmra.mxu0 %v462
    %v1276 = vpop.f32.mrf.mxu0
    %v1277 = vadd.f32 %v215, %v1276
    %v1278 = vpop.f32.mrf.mxu0
    %v1279 = vadd.f32 %v219, %v1278
    %v1280 = vpop.f32.mrf.mxu0
    %v1281 = vadd.f32 %v215, %v1280
    %v1282 = vpop.f32.mrf.mxu0
    %v1283 = vadd.f32 %v219, %v1282
    %1284 = vmatprep.mubr.bf16.mxu0 %v471
    %1285 = vmatmul.mubr.bf16.gmra.mxu0 %v470
    %v1286 = vpop.f32.mrf.mxu0
    %v1287 = vadd.f32 %v215, %v1286
    %v1288 = vpop.f32.mrf.mxu0
    %v1289 = vadd.f32 %v219, %v1288
    %v1290 = vpop.f32.mrf.mxu0
    %v1291 = vadd.f32 %v215, %v1290
    %v1292 = vpop.f32.mrf.mxu0
    %v1293 = vadd.f32 %v219, %v1292
    %1294 = vdwg.mxu0
    %1295 = vmatprep.subr.bf16.mxu0 %v973
    %1296 = vmatpush1.bf16.msra.mxu0 %v972
    %1297 = vmatprep.subr.bf16.mxu0 %v971
    %1298 = vmatpush1.bf16.msra.mxu0 %v970
    %1299 = vmatprep.subr.bf16.mxu0 %v969
    %1300 = vmatpush1.bf16.msra.mxu0 %v968
    %1301 = vmatprep.subr.bf16.mxu0 %v967
    %1302 = vmatpush1.bf16.msra.mxu0 %v966
    %1303 = vmatprep.subr.bf16.mxu0 %v965
    %1304 = vmatpush1.bf16.msra.mxu0 %v964
    %1305 = vmatprep.subr.bf16.mxu0 %v963
    %1306 = vmatpush1.bf16.msra.mxu0 %v962
    %1307 = vmatprep.subr.bf16.mxu0 %v961
    %1308 = vmatpush1.bf16.msra.mxu0 %v960
    %1309 = vmatprep.subr.bf16.mxu0 %v959
    %1310 = vmatpush1.bf16.msra.mxu0 %v958
    %1311 = vmatprep.subr.bf16.mxu0 %v989
    %1312 = vmatpush2.bf16.msra.mxu0 %v988
    %1313 = vmatprep.subr.bf16.mxu0 %v987
    %1314 = vmatpush2.bf16.msra.mxu0 %v986
    %1315 = vmatprep.subr.bf16.mxu0 %v985
    %1316 = vmatpush2.bf16.msra.mxu0 %v984
    %1317 = vmatprep.subr.bf16.mxu0 %v983
    %1318 = vmatpush2.bf16.msra.mxu0 %v982
    %1319 = vmatprep.subr.bf16.mxu0 %v981
    %1320 = vmatpush2.bf16.msra.mxu0 %v980
    %1321 = vmatprep.subr.bf16.mxu0 %v979
    %1322 = vmatpush2.bf16.msra.mxu0 %v978
    %1323 = vmatprep.subr.bf16.mxu0 %v977
    %1324 = vmatpush2.bf16.msra.mxu0 %v976
    %1325 = vmatprep.subr.bf16.mxu0 %v975
    %1326 = vmatpush2.bf16.msra.mxu0 %v974
    %1327 = vmatprep.mubr.bf16.mxu0 %v417
    %1328 = vmatmul.mubr.bf16.gmra.mxu0 %v416
    %v1329 = vpop.f32.mrf.mxu0
    %v1330 = vadd.f32 %v1217, %v1329
    %v1331 = vpop.f32.mrf.mxu0
    %v1332 = vadd.f32 %v1219, %v1331
    %v1333 = vpop.f32.mrf.mxu0
    %v1334 = vadd.f32 %v1221, %v1333
    %v1335 = vpop.f32.mrf.mxu0
    %v1336 = vadd.f32 %v1223, %v1335
    %1337 = vmatprep.mubr.bf16.mxu0 %v425
    %1338 = vmatmul.mubr.bf16.gmra.mxu0 %v424
    %v1339 = vpop.f32.mrf.mxu0
    %v1340 = vadd.f32 %v1227, %v1339
    %v1341 = vpop.f32.mrf.mxu0
    %v1342 = vadd.f32 %v1229, %v1341
    %v1343 = vpop.f32.mrf.mxu0
    %v1344 = vadd.f32 %v1231, %v1343
    %v1345 = vpop.f32.mrf.mxu0
    %v1346 = vadd.f32 %v1233, %v1345
    %1347 = vmatprep.mubr.bf16.mxu0 %v433
    %1348 = vmatmul.mubr.bf16.gmra.mxu0 %v432
    %v1349 = vpop.f32.mrf.mxu0
    %v1350 = vadd.f32 %v1237, %v1349
    %v1351 = vpop.f32.mrf.mxu0
    %v1352 = vadd.f32 %v1239, %v1351
    %v1353 = vpop.f32.mrf.mxu0
    %v1354 = vadd.f32 %v1241, %v1353
    %v1355 = vpop.f32.mrf.mxu0
    %v1356 = vadd.f32 %v1243, %v1355
    %1357 = vmatprep.mubr.bf16.mxu0 %v441
    %1358 = vmatmul.mubr.bf16.gmra.mxu0 %v440
    %v1359 = vpop.f32.mrf.mxu0
    %v1360 = vadd.f32 %v1247, %v1359
    %v1361 = vpop.f32.mrf.mxu0
    %v1362 = vadd.f32 %v1249, %v1361
    %v1363 = vpop.f32.mrf.mxu0
    %v1364 = vadd.f32 %v1251, %v1363
    %v1365 = vpop.f32.mrf.mxu0
    %v1366 = vadd.f32 %v1253, %v1365
    %1367 = vmatprep.mubr.bf16.mxu0 %v449
    %1368 = vmatmul.mubr.bf16.gmra.mxu0 %v448
    %v1369 = vpop.f32.mrf.mxu0
    %v1370 = vadd.f32 %v1257, %v1369
    %v1371 = vpop.f32.mrf.mxu0
    %v1372 = vadd.f32 %v1259, %v1371
    %v1373 = vpop.f32.mrf.mxu0
    %v1374 = vadd.f32 %v1261, %v1373
    %v1375 = vpop.f32.mrf.mxu0
    %v1376 = vadd.f32 %v1263, %v1375
    %1377 = vmatprep.mubr.bf16.mxu0 %v457
    %1378 = vmatmul.mubr.bf16.gmra.mxu0 %v456
    %v1379 = vpop.f32.mrf.mxu0
    %v1380 = vadd.f32 %v1267, %v1379
    %v1381 = vpop.f32.mrf.mxu0
    %v1382 = vadd.f32 %v1269, %v1381
    %v1383 = vpop.f32.mrf.mxu0
    %v1384 = vadd.f32 %v1271, %v1383
    %v1385 = vpop.f32.mrf.mxu0
    %v1386 = vadd.f32 %v1273, %v1385
    %1387 = vmatprep.mubr.bf16.mxu0 %v465
    %1388 = vmatmul.mubr.bf16.gmra.mxu0 %v464
    %v1389 = vpop.f32.mrf.mxu0
    %v1390 = vadd.f32 %v1277, %v1389
    %v1391 = vpop.f32.mrf.mxu0
    %v1392 = vadd.f32 %v1279, %v1391
    %v1393 = vpop.f32.mrf.mxu0
    %v1394 = vadd.f32 %v1281, %v1393
    %v1395 = vpop.f32.mrf.mxu0
    %v1396 = vadd.f32 %v1283, %v1395
    %1397 = vmatprep.mubr.bf16.mxu0 %v473
    %1398 = vmatmul.mubr.bf16.gmra.mxu0 %v472
    %v1399 = vpop.f32.mrf.mxu0
    %v1400 = vadd.f32 %v1287, %v1399
    %v1401 = vpop.f32.mrf.mxu0
    %v1402 = vadd.f32 %v1289, %v1401
    %v1403 = vpop.f32.mrf.mxu0
    %v1404 = vadd.f32 %v1291, %v1403
    %v1405 = vpop.f32.mrf.mxu0
    %v1406 = vadd.f32 %v1293, %v1405
    %1407 = vdwg.mxu0
    %1408 = vmatprep.subr.bf16.mxu0 %v1005
    %1409 = vmatpush1.bf16.msra.mxu0 %v1004
    %1410 = vmatprep.subr.bf16.mxu0 %v1003
    %1411 = vmatpush1.bf16.msra.mxu0 %v1002
    %1412 = vmatprep.subr.bf16.mxu0 %v1001
    %1413 = vmatpush1.bf16.msra.mxu0 %v1000
    %1414 = vmatprep.subr.bf16.mxu0 %v999
    %1415 = vmatpush1.bf16.msra.mxu0 %v998
    %1416 = vmatprep.subr.bf16.mxu0 %v997
    %1417 = vmatpush1.bf16.msra.mxu0 %v996
    %1418 = vmatprep.subr.bf16.mxu0 %v995
    %1419 = vmatpush1.bf16.msra.mxu0 %v994
    %1420 = vmatprep.subr.bf16.mxu0 %v993
    %1421 = vmatpush1.bf16.msra.mxu0 %v992
    %1422 = vmatprep.subr.bf16.mxu0 %v991
    %1423 = vmatpush1.bf16.msra.mxu0 %v990
    %1424 = vmatprep.subr.bf16.mxu0 %v1021
    %1425 = vmatpush2.bf16.msra.mxu0 %v1020
    %1426 = vmatprep.subr.bf16.mxu0 %v1019
    %1427 = vmatpush2.bf16.msra.mxu0 %v1018
    %1428 = vmatprep.subr.bf16.mxu0 %v1017
    %1429 = vmatpush2.bf16.msra.mxu0 %v1016
    %1430 = vmatprep.subr.bf16.mxu0 %v1015
    %1431 = vmatpush2.bf16.msra.mxu0 %v1014
    %1432 = vmatprep.subr.bf16.mxu0 %v1013
    %1433 = vmatpush2.bf16.msra.mxu0 %v1012
    %1434 = vmatprep.subr.bf16.mxu0 %v1011
    %1435 = vmatpush2.bf16.msra.mxu0 %v1010
    %1436 = vmatprep.subr.bf16.mxu0 %v1009
    %1437 = vmatpush2.bf16.msra.mxu0 %v1008
    %1438 = vmatprep.subr.bf16.mxu0 %v1007
    %1439 = vmatpush2.bf16.msra.mxu0 %v1006
    %1440 = vmatprep.mubr.bf16.mxu0 %v419
    %1441 = vmatmul.mubr.bf16.gmra.mxu0 %v418
    %v1442 = vpop.f32.mrf.mxu0
    %v1443 = vadd.f32 %v1330, %v1442
    %v1444 = vpop.f32.mrf.mxu0
    %v1445 = vadd.f32 %v1332, %v1444
    %v1446 = vpop.f32.mrf.mxu0
    %v1447 = vadd.f32 %v1334, %v1446
    %v1448 = vpop.f32.mrf.mxu0
    %v1449 = vadd.f32 %v1336, %v1448
    %1450 = vmatprep.mubr.bf16.mxu0 %v427
    %1451 = vmatmul.mubr.bf16.gmra.mxu0 %v426
    %v1452 = vpop.f32.mrf.mxu0
    %v1453 = vadd.f32 %v1340, %v1452
    %v1454 = vpop.f32.mrf.mxu0
    %v1455 = vadd.f32 %v1342, %v1454
    %v1456 = vpop.f32.mrf.mxu0
    %v1457 = vadd.f32 %v1344, %v1456
    %v1458 = vpop.f32.mrf.mxu0
    %v1459 = vadd.f32 %v1346, %v1458
    %1460 = vmatprep.mubr.bf16.mxu0 %v435
    %1461 = vmatmul.mubr.bf16.gmra.mxu0 %v434
    %v1462 = vpop.f32.mrf.mxu0
    %v1463 = vadd.f32 %v1350, %v1462
    %v1464 = vpop.f32.mrf.mxu0
    %v1465 = vadd.f32 %v1352, %v1464
    %v1466 = vpop.f32.mrf.mxu0
    %v1467 = vadd.f32 %v1354, %v1466
    %v1468 = vpop.f32.mrf.mxu0
    %v1469 = vadd.f32 %v1356, %v1468
    %1470 = vmatprep.mubr.bf16.mxu0 %v443
    %1471 = vmatmul.mubr.bf16.gmra.mxu0 %v442
    %v1472 = vpop.f32.mrf.mxu0
    %v1473 = vadd.f32 %v1360, %v1472
    %v1474 = vpop.f32.mrf.mxu0
    %v1475 = vadd.f32 %v1362, %v1474
    %v1476 = vpop.f32.mrf.mxu0
    %v1477 = vadd.f32 %v1364, %v1476
    %v1478 = vpop.f32.mrf.mxu0
    %v1479 = vadd.f32 %v1366, %v1478
    %1480 = vmatprep.mubr.bf16.mxu0 %v451
    %1481 = vmatmul.mubr.bf16.gmra.mxu0 %v450
    %v1482 = vpop.f32.mrf.mxu0
    %v1483 = vadd.f32 %v1370, %v1482
    %v1484 = vpop.f32.mrf.mxu0
    %v1485 = vadd.f32 %v1372, %v1484
    %v1486 = vpop.f32.mrf.mxu0
    %v1487 = vadd.f32 %v1374, %v1486
    %v1488 = vpop.f32.mrf.mxu0
    %v1489 = vadd.f32 %v1376, %v1488
    %1490 = vmatprep.mubr.bf16.mxu0 %v459
    %1491 = vmatmul.mubr.bf16.gmra.mxu0 %v458
    %v1492 = vpop.f32.mrf.mxu0
    %v1493 = vadd.f32 %v1380, %v1492
    %v1494 = vpop.f32.mrf.mxu0
    %v1495 = vadd.f32 %v1382, %v1494
    %v1496 = vpop.f32.mrf.mxu0
    %v1497 = vadd.f32 %v1384, %v1496
    %v1498 = vpop.f32.mrf.mxu0
    %v1499 = vadd.f32 %v1386, %v1498
    %1500 = vmatprep.mubr.bf16.mxu0 %v467
    %1501 = vmatmul.mubr.bf16.gmra.mxu0 %v466
    %v1502 = vpop.f32.mrf.mxu0
    %v1503 = vadd.f32 %v1390, %v1502
    %v1504 = vpop.f32.mrf.mxu0
    %v1505 = vadd.f32 %v1392, %v1504
    %v1506 = vpop.f32.mrf.mxu0
    %v1507 = vadd.f32 %v1394, %v1506
    %v1508 = vpop.f32.mrf.mxu0
    %v1509 = vadd.f32 %v1396, %v1508
    %1510 = vmatprep.mubr.bf16.mxu0 %v475
    %1511 = vmatmul.mubr.bf16.gmra.mxu0 %v474
    %v1512 = vpop.f32.mrf.mxu0
    %v1513 = vadd.f32 %v1400, %v1512
    %v1514 = vpop.f32.mrf.mxu0
    %v1515 = vadd.f32 %v1402, %v1514
    %v1516 = vpop.f32.mrf.mxu0
    %v1517 = vadd.f32 %v1404, %v1516
    %v1518 = vpop.f32.mrf.mxu0
    %v1519 = vadd.f32 %v1406, %v1518
    %1520 = vdwg.mxu0
    %1521 = vmatprep.subr.bf16.mxu0 %v1037
    %1522 = vmatpush1.bf16.msra.mxu0 %v1036
    %1523 = vmatprep.subr.bf16.mxu0 %v1035
    %1524 = vmatpush1.bf16.msra.mxu0 %v1034
    %1525 = vmatprep.subr.bf16.mxu0 %v1033
    %1526 = vmatpush1.bf16.msra.mxu0 %v1032
    %1527 = vmatprep.subr.bf16.mxu0 %v1031
    %1528 = vmatpush1.bf16.msra.mxu0 %v1030
    %1529 = vmatprep.subr.bf16.mxu0 %v1029
    %1530 = vmatpush1.bf16.msra.mxu0 %v1028
    %1531 = vmatprep.subr.bf16.mxu0 %v1027
    %1532 = vmatpush1.bf16.msra.mxu0 %v1026
    %1533 = vmatprep.subr.bf16.mxu0 %v1025
    %1534 = vmatpush1.bf16.msra.mxu0 %v1024
    %1535 = vmatprep.subr.bf16.mxu0 %v1023
    %1536 = vmatpush1.bf16.msra.mxu0 %v1022
    %1537 = vmatprep.subr.bf16.mxu0 %v1053
    %1538 = vmatpush2.bf16.msra.mxu0 %v1052
    %1539 = vmatprep.subr.bf16.mxu0 %v1051
    %1540 = vmatpush2.bf16.msra.mxu0 %v1050
    %1541 = vmatprep.subr.bf16.mxu0 %v1049
    %1542 = vmatpush2.bf16.msra.mxu0 %v1048
    %1543 = vmatprep.subr.bf16.mxu0 %v1047
    %1544 = vmatpush2.bf16.msra.mxu0 %v1046
    %1545 = vmatprep.subr.bf16.mxu0 %v1045
    %1546 = vmatpush2.bf16.msra.mxu0 %v1044
    %1547 = vmatprep.subr.bf16.mxu0 %v1043
    %1548 = vmatpush2.bf16.msra.mxu0 %v1042
    %1549 = vmatprep.subr.bf16.mxu0 %v1041
    %1550 = vmatpush2.bf16.msra.mxu0 %v1040
    %1551 = vmatprep.subr.bf16.mxu0 %v1039
    %1552 = vmatpush2.bf16.msra.mxu0 %v1038
    %1553 = vmatprep.mubr.bf16.mxu0 %v421
    %1554 = vmatmul.mubr.bf16.gmra.mxu0 %v420
    %v1555 = vpop.f32.mrf.mxu0
    %v1556 = vadd.f32 %v1443, %v1555
    %v1557 = vpop.f32.mrf.mxu0
    %v1558 = vadd.f32 %v1445, %v1557
    %v1559 = vpop.f32.mrf.mxu0
    %v1560 = vadd.f32 %v1447, %v1559
    %v1561 = vpop.f32.mrf.mxu0
    %v1562 = vadd.f32 %v1449, %v1561
    %1563 = vmatprep.mubr.bf16.mxu0 %v429
    %1564 = vmatmul.mubr.bf16.gmra.mxu0 %v428
    %v1565 = vpop.f32.mrf.mxu0
    %v1566 = vadd.f32 %v1453, %v1565
    %v1567 = vpop.f32.mrf.mxu0
    %v1568 = vadd.f32 %v1455, %v1567
    %v1569 = vpop.f32.mrf.mxu0
    %v1570 = vadd.f32 %v1457, %v1569
    %v1571 = vpop.f32.mrf.mxu0
    %v1572 = vadd.f32 %v1459, %v1571
    %1573 = vmatprep.mubr.bf16.mxu0 %v437
    %1574 = vmatmul.mubr.bf16.gmra.mxu0 %v436
    %v1575 = vpop.f32.mrf.mxu0
    %v1576 = vadd.f32 %v1463, %v1575
    %v1577 = vpop.f32.mrf.mxu0
    %v1578 = vadd.f32 %v1465, %v1577
    %v1579 = vpop.f32.mrf.mxu0
    %v1580 = vadd.f32 %v1467, %v1579
    %v1581 = vpop.f32.mrf.mxu0
    %v1582 = vadd.f32 %v1469, %v1581
    %1583 = vmatprep.mubr.bf16.mxu0 %v445
    %1584 = vmatmul.mubr.bf16.gmra.mxu0 %v444
    %v1585 = vpop.f32.mrf.mxu0
    %v1586 = vadd.f32 %v1473, %v1585
    %v1587 = vpop.f32.mrf.mxu0
    %v1588 = vadd.f32 %v1475, %v1587
    %v1589 = vpop.f32.mrf.mxu0
    %v1590 = vadd.f32 %v1477, %v1589
    %v1591 = vpop.f32.mrf.mxu0
    %v1592 = vadd.f32 %v1479, %v1591
    %1593 = vmatprep.mubr.bf16.mxu0 %v453
    %1594 = vmatmul.mubr.bf16.gmra.mxu0 %v452
    %v1595 = vpop.f32.mrf.mxu0
    %v1596 = vadd.f32 %v1483, %v1595
    %v1597 = vpop.f32.mrf.mxu0
    %v1598 = vadd.f32 %v1485, %v1597
    %v1599 = vpop.f32.mrf.mxu0
    %v1600 = vadd.f32 %v1487, %v1599
    %v1601 = vpop.f32.mrf.mxu0
    %v1602 = vadd.f32 %v1489, %v1601
    %1603 = vmatprep.mubr.bf16.mxu0 %v461
    %1604 = vmatmul.mubr.bf16.gmra.mxu0 %v460
    %v1605 = vpop.f32.mrf.mxu0
    %v1606 = vadd.f32 %v1493, %v1605
    %v1607 = vpop.f32.mrf.mxu0
    %v1608 = vadd.f32 %v1495, %v1607
    %v1609 = vpop.f32.mrf.mxu0
    %v1610 = vadd.f32 %v1497, %v1609
    %v1611 = vpop.f32.mrf.mxu0
    %v1612 = vadd.f32 %v1499, %v1611
    %1613 = vmatprep.mubr.bf16.mxu0 %v469
    %1614 = vmatmul.mubr.bf16.gmra.mxu0 %v468
    %v1615 = vpop.f32.mrf.mxu0
    %v1616 = vadd.f32 %v1503, %v1615
    %v1617 = vpop.f32.mrf.mxu0
    %v1618 = vadd.f32 %v1505, %v1617
    %v1619 = vpop.f32.mrf.mxu0
    %v1620 = vadd.f32 %v1507, %v1619
    %v1621 = vpop.f32.mrf.mxu0
    %v1622 = vadd.f32 %v1509, %v1621
    %1623 = vmatprep.mubr.bf16.mxu0 %v477
    %1624 = vmatmul.mubr.bf16.gmra.mxu0 %v476
    %v1625 = vpop.f32.mrf.mxu0
    %v1626 = vadd.f32 %v1513, %v1625
    %v1627 = vpop.f32.mrf.mxu0
    %v1628 = vadd.f32 %v1515, %v1627
    %v1629 = vpop.f32.mrf.mxu0
    %v1630 = vadd.f32 %v1517, %v1629
    %v1631 = vpop.f32.mrf.mxu0
    %v1632 = vadd.f32 %v1519, %v1631
    %1633 = vdwg.mxu0
    %v1634 = vld [vmem:[%s3] sm:$0xff]
    %v1635 = vld [vmem:[%s3 + $0x8] sm:$0xff]
    %v1636 = vld [vmem:[%s3 + $0x10] sm:$0xff]
    %v1637 = vld [vmem:[%s3 + $0x18] sm:$0xff]
    %v1638 = vld [vmem:[%s3 + $0x20] sm:$0xff]
    %v1639 = vld [vmem:[%s3 + $0x28] sm:$0xff]
    %v1640 = vld [vmem:[%s3 + $0x30] sm:$0xff]
    %v1641 = vld [vmem:[%s3 + $0x38] sm:$0xff]
    %v1642 = vld [vmem:[%s3 + $0x40] sm:$0xff]
    %v1643 = vld [vmem:[%s3 + $0x48] sm:$0xff]
    %v1644 = vld [vmem:[%s3 + $0x50] sm:$0xff]
    %v1645 = vld [vmem:[%s3 + $0x58] sm:$0xff]
    %v1646 = vld [vmem:[%s3 + $0x60] sm:$0xff]
    %v1647 = vld [vmem:[%s3 + $0x68] sm:$0xff]
    %v1648 = vld [vmem:[%s3 + $0x70] sm:$0xff]
    %v1649 = vld [vmem:[%s3 + $0x78] sm:$0xff]
    %v1650 = vld [vmem:[%s3 + $0x80] sm:$0xff]
    %v1651 = vld [vmem:[%s3 + $0x88] sm:$0xff]
    %v1652 = vld [vmem:[%s3 + $0x90] sm:$0xff]
    %v1653 = vld [vmem:[%s3 + $0x98] sm:$0xff]
    %v1654 = vld [vmem:[%s3 + $0xa0] sm:$0xff]
    %v1655 = vld [vmem:[%s3 + $0xa8] sm:$0xff]
    %v1656 = vld [vmem:[%s3 + $0xb0] sm:$0xff]
    %v1657 = vld [vmem:[%s3 + $0xb8] sm:$0xff]
    %v1658 = vld [vmem:[%s3 + $0xc0] sm:$0xff]
    %v1659 = vld [vmem:[%s3 + $0xc8] sm:$0xff]
    %v1660 = vld [vmem:[%s3 + $0xd0] sm:$0xff]
    %v1661 = vld [vmem:[%s3 + $0xd8] sm:$0xff]
    %v1662 = vld [vmem:[%s3 + $0xe0] sm:$0xff]
    %v1663 = vld [vmem:[%s3 + $0xe8] sm:$0xff]
    %v1664 = vld [vmem:[%s3 + $0xf0] sm:$0xff]
    %v1665 = vld [vmem:[%s3 + $0xf8] sm:$0xff]
    %v1666 = vadd.f32 %v1556, %v1634
    %v1667 = vadd.f32 %v1558, %v1635
    %v1668 = vadd.f32 %v1560, %v1636
    %v1669 = vadd.f32 %v1562, %v1637
    %v1670 = vadd.f32 %v1566, %v1638
    %v1671 = vadd.f32 %v1568, %v1639
    %v1672 = vadd.f32 %v1570, %v1640
    %v1673 = vadd.f32 %v1572, %v1641
    %v1674 = vadd.f32 %v1576, %v1642
    %v1675 = vadd.f32 %v1578, %v1643
    %v1676 = vadd.f32 %v1580, %v1644
    %v1677 = vadd.f32 %v1582, %v1645
    %v1678 = vadd.f32 %v1586, %v1646
    %v1679 = vadd.f32 %v1588, %v1647
    %v1680 = vadd.f32 %v1590, %v1648
    %v1681 = vadd.f32 %v1592, %v1649
    %v1682 = vadd.f32 %v1596, %v1650
    %v1683 = vadd.f32 %v1598, %v1651
    %v1684 = vadd.f32 %v1600, %v1652
    %v1685 = vadd.f32 %v1602, %v1653
    %v1686 = vadd.f32 %v1606, %v1654
    %v1687 = vadd.f32 %v1608, %v1655
    %v1688 = vadd.f32 %v1610, %v1656
    %v1689 = vadd.f32 %v1612, %v1657
    %v1690 = vadd.f32 %v1616, %v1658
    %v1691 = vadd.f32 %v1618, %v1659
    %v1692 = vadd.f32 %v1620, %v1660
    %v1693 = vadd.f32 %v1622, %v1661
    %v1694 = vadd.f32 %v1626, %v1662
    %v1695 = vadd.f32 %v1628, %v1663
    %v1696 = vadd.f32 %v1630, %v1664
    %v1697 = vadd.f32 %v1632, %v1665
    %1698 = vst [vmem:[#allocation2] sm:$0xff] %v1666
    %1699 = vst [vmem:[#allocation2 + $0x8] sm:$0xff] %v1667
    %1700 = vst [vmem:[#allocation2 + $0x10] sm:$0xff] %v1668
    %1701 = vst [vmem:[#allocation2 + $0x18] sm:$0xff] %v1669
    %1702 = vst [vmem:[#allocation2 + $0x20] sm:$0xff] %v1670
    %1703 = vst [vmem:[#allocation2 + $0x28] sm:$0xff] %v1671
    %1704 = vst [vmem:[#allocation2 + $0x30] sm:$0xff] %v1672
    %1705 = vst [vmem:[#allocation2 + $0x38] sm:$0xff] %v1673
    %1706 = vst [vmem:[#allocation2 + $0x40] sm:$0xff] %v1674
    %1707 = vst [vmem:[#allocation2 + $0x48] sm:$0xff] %v1675
    %1708 = vst [vmem:[#allocation2 + $0x50] sm:$0xff] %v1676
    %1709 = vst [vmem:[#allocation2 + $0x58] sm:$0xff] %v1677
    %1710 = vst [vmem:[#allocation2 + $0x60] sm:$0xff] %v1678
    %1711 = vst [vmem:[#allocation2 + $0x68] sm:$0xff] %v1679
    %1712 = vst [vmem:[#allocation2 + $0x70] sm:$0xff] %v1680
    %1713 = vst [vmem:[#allocation2 + $0x78] sm:$0xff] %v1681
    %1714 = vst [vmem:[#allocation2 + $0x80] sm:$0xff] %v1682
    %1715 = vst [vmem:[#allocation2 + $0x88] sm:$0xff] %v1683
    %1716 = vst [vmem:[#allocation2 + $0x90] sm:$0xff] %v1684
    %1717 = vst [vmem:[#allocation2 + $0x98] sm:$0xff] %v1685
    %1718 = vst [vmem:[#allocation2 + $0xa0] sm:$0xff] %v1686
    %1719 = vst [vmem:[#allocation2 + $0xa8] sm:$0xff] %v1687
    %1720 = vst [vmem:[#allocation2 + $0xb0] sm:$0xff] %v1688
    %1721 = vst [vmem:[#allocation2 + $0xb8] sm:$0xff] %v1689
    %1722 = vst [vmem:[#allocation2 + $0xc0] sm:$0xff] %v1690
    %1723 = vst [vmem:[#allocation2 + $0xc8] sm:$0xff] %v1691
    %1724 = vst [vmem:[#allocation2 + $0xd0] sm:$0xff] %v1692
    %1725 = vst [vmem:[#allocation2 + $0xd8] sm:$0xff] %v1693
    %1726 = vst [vmem:[#allocation2 + $0xe0] sm:$0xff] %v1694
    %1727 = vst [vmem:[#allocation2 + $0xe8] sm:$0xff] %v1695
    %1728 = vst [vmem:[#allocation2 + $0xf0] sm:$0xff] %v1696
    %1729 = vst [vmem:[#allocation2 + $0xf8] sm:$0xff] %v1697
    // Predicated region
    $region18: #{encode.29} parent=1 // pred_check
      _
    $region19: #{encode.29} parent=1 // pred_check_branch
      %1731 = sbr.rel (0) target = $region21
    $region20: #{encode.29} parent=1 // pred_region
      %s1733 = ssub.s32 4096, 4096
      %1734 = vsyncadd [#allocation3], %s1733
      %s1735 = sshll.u32 [#allocation2], 4
      %s1736 = int_to_ptr.vmem [resolvable:$true] %s1735
      %1741 = dma.vmem_to_hbm [thread:$0]  %s1736, 4096, %s4, [#allocation3], 256, 256, 16
    $region21: #{encode.29} parent=1 // pred_fallthru
      _
    // Predicated region
    $region22: #{encode.29} parent=1 // pred_check
      _
    $region23: #{encode.29} parent=1 // pred_check_branch
      %1743 = sbr.rel (0) target = $region25
    $region24: #{encode.29} parent=1 // pred_region
      %1744 = dma.done [#allocation3], 4096
    $region25: #{encode.29} parent=1 // pred_fallthru
      _
    %1745 = vsyncpa [#allocation3], 1

</llo_original>
